<compile_context>
chip_gen: v6e
topology: v6e:2x2x1
jax: 0.10.0
libtpu: 0.0.40
codegen_flags: <defaults>
</compile_context>

<pallas_src>
import math

import jax
import jax.numpy as jnp
from jax.experimental import pallas as pl
from jax.experimental.pallas import tpu as pltpu

# ---------------- config (small, shapes consistent with the module) --------
VOCAB_SIZE = 50
PADDING_IDX = 0
N_TAGS = 10
N_TAGS_PAD = 128       # lane-dense classifier output; sliced to N_TAGS in wrapper
EMB_DIM = 32           # embedding_dim
LM_DIM = 64            # pretrained_language_model_dim
D_MODEL = 64           # d_model
N_HEADS = 4
D_HEAD = LM_DIM // N_HEADS      # T5 d_kv
D_HEAD_M = D_MODEL // N_HEADS   # EncoderLayer d_k / d_v
T5_D_FF = 128
ENC_D_FF = 128
N_T5_BLOCKS = 2
REL_BUCKETS = 32
REL_MAX_DIST = 128
B = 2
S = 8
M = B * S


# ======================= the fused Pallas kernel ============================
def _fused_forward_kernel(
    # token-dependent inputs
    x0_ref,        # [M, EMB_DIM]   embedded tokens + sinusoid pos-emb
    mask_ref,      # [B, S]         additive padding mask (-1e9 at padded keys)
    relb_ref,      # [H, S, S]      T5 relative position bias
    # proj_to_language_model
    plm_w_ref, plm_b_ref,
    # T5 blocks (stacked over blocks)
    t5_ln1_ref,    # [NB, D]
    t5_wqkv_ref,   # [NB, D, 3D]
    t5_wo_ref,     # [NB, D, D]
    t5_ln2_ref,    # [NB, D]
    t5_wi_ref,     # [NB, D, FF]
    t5_wof_ref,    # [NB, FF, D]
    t5_fn_ref,     # [1, D]  final RMS norm
    # proj_to_model + LayerNorm
    pm_w_ref, pm_b_ref, ln_g_ref, ln_b_ref,
    # m2 EncoderLayer
    e_wqkv_ref, e_bqkv_ref, e_wo_ref, e_bo_ref,
    e_ln1g_ref, e_ln1b_ref, e_w1_ref, e_b1_ref, e_w2_ref, e_b2_ref,
    e_ln2g_ref, e_ln2b_ref,
    # classifier (padded to 128 lanes)
    fc_w_ref, fc_b_ref,
    # output
    o_ref,         # [M, N_TAGS_PAD]
):
    f32 = jnp.float32

    def matmul(a, w):
        return jnp.dot(a, w, preferred_element_type=f32)

    def rmsnorm(x, w, eps=1e-6):
        var = jnp.mean(x * x, axis=-1, keepdims=True)
        return x * jax.lax.rsqrt(var + eps) * w

    def layernorm(x, g, b, eps=1e-5):
        mu = jnp.mean(x, axis=-1, keepdims=True)
        xc = x - mu
        var = jnp.mean(xc * xc, axis=-1, keepdims=True)
        return xc * jax.lax.rsqrt(var + eps) * g + b

    def softmax_lastdim(s):
        m_ = jnp.max(s, axis=-1, keepdims=True)
        e_ = jnp.exp(s - m_)
        return e_ * pl.reciprocal(jnp.sum(e_, axis=-1, keepdims=True), approx=True)

    def mha_proj(qkv, d_model, d_head, scale, biases, wo):
        # qkv: [M, 3*d_model]; heads & batches handled with static slices.
        # Output projection folded per head: attn @ wo == sum_h head_h @ wo[h-rows].
        row_outs = []
        for b in range(B):
            r0 = b * S
            acc = None
            for h in range(N_HEADS):
                c0 = h * d_head
                qh = qkv[r0:r0 + S, c0:c0 + d_head]
                kh = qkv[r0:r0 + S, d_model + c0:d_model + c0 + d_head]
                vh = qkv[r0:r0 + S, 2 * d_model + c0:2 * d_model + c0 + d_head]
                sc = jax.lax.dot_general(
                    qh, kh, (((1,), (1,)), ((), ())),
                    preferred_element_type=f32) * scale
                sc = sc + biases[b][h]
                p = softmax_lastdim(sc)
                oh = matmul(p, vh)                        # [S, d_head]
                proj = matmul(oh, wo[c0:c0 + d_head, :])  # [S, d_model]
                acc = proj if acc is None else acc + proj
            row_outs.append(acc)
        return jnp.concatenate(row_outs, axis=0)          # [M, d_model]

    mask = mask_ref[...]                                   # [B, S]
    # per-(batch,head) additive biases, formed in VMEM only
    t5_bias = [[relb_ref[h] + mask[b:b + 1, :] for h in range(N_HEADS)]
               for b in range(B)]
    enc_bias = [[mask[b:b + 1, :] for _ in range(N_HEADS)] for b in range(B)]

    # ---- proj_to_language_model ----
    x = matmul(x0_ref[...], plm_w_ref[...]) + plm_b_ref[...]      # [M, LM_DIM]

    # ---- T5 encoder stack (pre-norm, fused QKV, pos-bias reused every block)
    t5_ln1 = t5_ln1_ref[...]
    t5_ln2 = t5_ln2_ref[...]
    for blk in range(N_T5_BLOCKS):
        normed = rmsnorm(x, t5_ln1[blk:blk + 1, :])
        qkv = matmul(normed, t5_wqkv_ref[blk])                    # [M, 3*LM_DIM]
        attn = mha_proj(qkv, LM_DIM, D_HEAD, 1.0, t5_bias, t5_wo_ref[blk])
        x = x + attn
        normed = rmsnorm(x, t5_ln2[blk:blk + 1, :])
        hid = jnp.maximum(matmul(normed, t5_wi_ref[blk]), 0.0)
        x = x + matmul(hid, t5_wof_ref[blk])
    x = rmsnorm(x, t5_fn_ref[...])
    # language_model_dropout: identity in eval

    # ---- proj_to_model + LayerNorm ----
    x = matmul(x, pm_w_ref[...]) + pm_b_ref[...]
    x = layernorm(x, ln_g_ref[...], ln_b_ref[...])

    # ---- m2-style EncoderLayer (ScaledDotProductAttention, post-norm) ----
    qkv = matmul(x, e_wqkv_ref[...]) + e_bqkv_ref[...]
    attn = mha_proj(qkv, D_MODEL, D_HEAD_M, 1.0 / math.sqrt(D_HEAD_M),
                    enc_bias, e_wo_ref[...]) + e_bo_ref[...]
    x = layernorm(x + attn, e_ln1g_ref[...], e_ln1b_ref[...])
    hid = jnp.maximum(matmul(x, e_w1_ref[...]) + e_b1_ref[...], 0.0)
    ff = matmul(hid, e_w2_ref[...]) + e_b2_ref[...]
    x = layernorm(x + ff, e_ln2g_ref[...], e_ln2b_ref[...])

    # ---- classifier head (dropout identity), lane-dense padded logits ----
    o_ref[...] = (matmul(x, fc_w_ref[...]) + fc_b_ref[...]).astype(o_ref.dtype)


def fused_forward(x0, add_mask, rel_bias, p):
    ins = [
        x0, add_mask, rel_bias,
        p['proj_lm_w'], p['proj_lm_b'],
        p['t5_ln1'], p['t5_wqkv'], p['t5_wo'],
        p['t5_ln2'], p['t5_wi'], p['t5_wo_ff'],
        p['t5_final_norm'],
        p['proj_model_w'], p['proj_model_b'], p['ln_g'], p['ln_b'],
        p['enc_wqkv'], p['enc_bqkv'], p['enc_wo'], p['enc_bo'],
        p['enc_ln1_g'], p['enc_ln1_b'], p['enc_w1'], p['enc_b1'],
        p['enc_w2'], p['enc_b2'], p['enc_ln2_g'], p['enc_ln2_b'],
        p['fc_w_pad'], p['fc_b_pad'],
    ]
    # No grid: every operand is a single whole-array VMEM block (total < 1 MiB,
    # far under the scoped VMEM limit on v5e/v6e/v7x).
    return pl.pallas_call(
        _fused_forward_kernel,
        out_shape=jax.ShapeDtypeStruct((M, N_TAGS_PAD), jnp.float32),
    )(*ins)


# ======================= JAX glue (tiny, non-hot-path) ======================
def sinusoid_pos_embedding(seq_len, dim):
    # TODO(synk): exact `normalize=True` semantics of the upstream
    # SinusoidPositionalEmbedding are ambiguous; standard sin/cos encoding used.
    pos = jnp.arange(seq_len, dtype=jnp.float32)[:, None]
    i = jnp.arange(dim // 2, dtype=jnp.float32)[None, :]
    angle = pos / jnp.power(10000.0, 2.0 * i / dim)
    pe = jnp.zeros((seq_len, dim), jnp.float32)
    pe = pe.at[:, 0::2].set(jnp.sin(angle))
    pe = pe.at[:, 1::2].set(jnp.cos(angle))
    return pe


def _rel_position_bucket(rel_pos, num_buckets=REL_BUCKETS, max_distance=REL_MAX_DIST):
    # HF T5 bidirectional bucketing
    num_buckets = num_buckets // 2
    buckets = (rel_pos > 0).astype(jnp.int32) * num_buckets
    n = jnp.abs(rel_pos)
    max_exact = num_buckets // 2
    is_small = n < max_exact
    n_safe = jnp.maximum(n, 1)     # avoid log(0) on the (masked) large branch
    large = max_exact + (
        jnp.log(n_safe.astype(jnp.float32) / max_exact)
        / math.log(max_distance / max_exact)
        * (num_buckets - max_exact)
    ).astype(jnp.int32)
    large = jnp.minimum(large, num_buckets - 1)
    return buckets + jnp.where(is_small, n, large)


def t5_relative_bias(seq_len, rel_emb):
    ctx = jnp.arange(seq_len)[:, None]
    mem = jnp.arange(seq_len)[None, :]
    buckets = _rel_position_bucket(mem - ctx)                # [S,S]
    bias = rel_emb[buckets]                                  # [S,S,H]
    return jnp.transpose(bias, (2, 0, 1))                    # [H,S,S]


def forward(params, tokens):
    b, s = tokens.shape
    add_mask = jnp.where(tokens == PADDING_IDX, -1e9, 0.0).astype(jnp.float32)  # [B,S]

    # embedding + sinusoid positional embedding (tiny gather, stays in wrapper)
    emb = params['embedding'][tokens] + sinusoid_pos_embedding(s, EMB_DIM)[None]
    x0 = emb.reshape(b * s, EMB_DIM).astype(jnp.float32)

    rel_bias = t5_relative_bias(s, params['rel_bias'])       # [H,S,S]

    logits_pad = fused_forward(x0, add_mask, rel_bias, params)  # [M, 128]
    return logits_pad[:, :N_TAGS].reshape(b, s, N_TAGS)


# ======================= deterministic parameter init =======================
def init_params(key):
    def nrm(k, shape, scale=0.02):
        return scale * jax.random.normal(k, shape, jnp.float32)

    keys = iter(jax.random.split(key, 128))
    p = {}
    emb = nrm(next(keys), (VOCAB_SIZE, EMB_DIM), 0.1)
    p['embedding'] = emb.at[PADDING_IDX].set(0.0)            # padding_idx row = 0
    p['proj_lm_w'] = nrm(next(keys), (EMB_DIM, LM_DIM))
    p['proj_lm_b'] = jnp.zeros((1, LM_DIM), jnp.float32)
    p['rel_bias'] = nrm(next(keys), (REL_BUCKETS, N_HEADS))

    ln1, wqkv, wo, ln2, wi, woff = [], [], [], [], [], []
    for _ in range(N_T5_BLOCKS):
        ln1.append(jnp.ones((LM_DIM,), jnp.float32))
        wq = nrm(next(keys), (LM_DIM, LM_DIM))
        wk = nrm(next(keys), (LM_DIM, LM_DIM))
        wv = nrm(next(keys), (LM_DIM, LM_DIM))
        wqkv.append(jnp.concatenate([wq, wk, wv], axis=1))   # fused QKV [D,3D]
        wo.append(nrm(next(keys), (LM_DIM, LM_DIM)))
        ln2.append(jnp.ones((LM_DIM,), jnp.float32))
        wi.append(nrm(next(keys), (LM_DIM, T5_D_FF)))
        woff.append(nrm(next(keys), (T5_D_FF, LM_DIM)))
    p['t5_ln1'] = jnp.stack(ln1)
    p['t5_wqkv'] = jnp.stack(wqkv)
    p['t5_wo'] = jnp.stack(wo)
    p['t5_ln2'] = jnp.stack(ln2)
    p['t5_wi'] = jnp.stack(wi)
    p['t5_wo_ff'] = jnp.stack(woff)
    p['t5_final_norm'] = jnp.ones((1, LM_DIM), jnp.float32)

    p['proj_model_w'] = nrm(next(keys), (LM_DIM, D_MODEL))
    p['proj_model_b'] = jnp.zeros((1, D_MODEL), jnp.float32)
    p['ln_g'] = jnp.ones((1, D_MODEL), jnp.float32)
    p['ln_b'] = jnp.zeros((1, D_MODEL), jnp.float32)

    ewq = nrm(next(keys), (D_MODEL, D_MODEL))
    ewk = nrm(next(keys), (D_MODEL, D_MODEL))
    ewv = nrm(next(keys), (D_MODEL, D_MODEL))
    p['enc_wqkv'] = jnp.concatenate([ewq, ewk, ewv], axis=1)     # [D,3D]
    p['enc_bqkv'] = jnp.zeros((1, 3 * D_MODEL), jnp.float32)
    p['enc_wo'] = nrm(next(keys), (D_MODEL, D_MODEL))
    p['enc_bo'] = jnp.zeros((1, D_MODEL), jnp.float32)
    p['enc_ln1_g'] = jnp.ones((1, D_MODEL), jnp.float32)
    p['enc_ln1_b'] = jnp.zeros((1, D_MODEL), jnp.float32)
    p['enc_w1'] = nrm(next(keys), (D_MODEL, ENC_D_FF))
    p['enc_b1'] = jnp.zeros((1, ENC_D_FF), jnp.float32)
    p['enc_w2'] = nrm(next(keys), (ENC_D_FF, D_MODEL))
    p['enc_b2'] = jnp.zeros((1, D_MODEL), jnp.float32)
    p['enc_ln2_g'] = jnp.ones((1, D_MODEL), jnp.float32)
    p['enc_ln2_b'] = jnp.zeros((1, D_MODEL), jnp.float32)

    fc_w = nrm(next(keys), (D_MODEL, N_TAGS))
    p['fc_w_pad'] = jnp.pad(fc_w, ((0, 0), (0, N_TAGS_PAD - N_TAGS)))  # lane-dense
    p['fc_b_pad'] = jnp.zeros((1, N_TAGS_PAD), jnp.float32)
    return p


if __name__ == "__main__":
    key = jax.random.PRNGKey(0)
    pkey, tkey = jax.random.split(key)
    params = init_params(pkey)

    # tokens [B,S]: non-pad ids in [1, VOCAB), with trailing padding in row 1
    tokens = jax.random.randint(tkey, (B, S), 1, VOCAB_SIZE, dtype=jnp.int32)
    tokens = tokens.at[1, S - 3:].set(PADDING_IDX)

    out = jax.jit(forward)(params, tokens)
    out = jax.block_until_ready(out)
    assert out.shape == (B, S, N_TAGS)
    assert bool(jnp.all(jnp.isfinite(out)))
    print("KERNEL_OK")
</pallas_src>

<mosaic_0001>
module attributes {stable_mosaic.version = 11 : i64} {
  func.func @_fused_forward_kernel(%arg0: memref<16x32xf32, #tpu.memory_space<vmem>>, %arg1: memref<2x8xf32, #tpu.memory_space<vmem>>, %arg2: memref<4x8x8xf32, #tpu.memory_space<vmem>>, %arg3: memref<32x64xf32, #tpu.memory_space<vmem>>, %arg4: memref<1x64xf32, #tpu.memory_space<vmem>>, %arg5: memref<2x64xf32, #tpu.memory_space<vmem>>, %arg6: memref<2x64x192xf32, #tpu.memory_space<vmem>>, %arg7: memref<2x64x64xf32, #tpu.memory_space<vmem>>, %arg8: memref<2x64xf32, #tpu.memory_space<vmem>>, %arg9: memref<2x64x128xf32, #tpu.memory_space<vmem>>, %arg10: memref<2x128x64xf32, #tpu.memory_space<vmem>>, %arg11: memref<1x64xf32, #tpu.memory_space<vmem>>, %arg12: memref<64x64xf32, #tpu.memory_space<vmem>>, %arg13: memref<1x64xf32, #tpu.memory_space<vmem>>, %arg14: memref<1x64xf32, #tpu.memory_space<vmem>>, %arg15: memref<1x64xf32, #tpu.memory_space<vmem>>, %arg16: memref<64x192xf32, #tpu.memory_space<vmem>>, %arg17: memref<1x192xf32, #tpu.memory_space<vmem>>, %arg18: memref<64x64xf32, #tpu.memory_space<vmem>>, %arg19: memref<1x64xf32, #tpu.memory_space<vmem>>, %arg20: memref<1x64xf32, #tpu.memory_space<vmem>>, %arg21: memref<1x64xf32, #tpu.memory_space<vmem>>, %arg22: memref<64x128xf32, #tpu.memory_space<vmem>>, %arg23: memref<1x128xf32, #tpu.memory_space<vmem>>, %arg24: memref<128x64xf32, #tpu.memory_space<vmem>>, %arg25: memref<1x64xf32, #tpu.memory_space<vmem>>, %arg26: memref<1x64xf32, #tpu.memory_space<vmem>>, %arg27: memref<1x64xf32, #tpu.memory_space<vmem>>, %arg28: memref<64x128xf32, #tpu.memory_space<vmem>>, %arg29: memref<1x128xf32, #tpu.memory_space<vmem>>, %arg30: memref<16x128xf32, #tpu.memory_space<vmem>>) attributes {dimension_semantics = [], scalar_prefetch = 0 : i64, scratch_operands = 0 : i64, tpu.core_type = #tpu.core_type<tc>} {
    %c0 = arith.constant 0 : index
    %c0_0 = arith.constant 0 : index
    %0 = vector.load %arg1[%c0, %c0_0] : memref<2x8xf32, #tpu.memory_space<vmem>>, vector<2x8xf32>
    %c0_1 = arith.constant 0 : index
    %c0_2 = arith.constant 0 : index
    %c0_3 = arith.constant 0 : index
    %1 = vector.load %arg2[%c0_1, %c0_2, %c0_3] : memref<4x8x8xf32, #tpu.memory_space<vmem>>, vector<1x8x8xf32>
    %2 = vector.shape_cast %1 : vector<1x8x8xf32> to vector<8x8xf32>
    %3 = vector.extract_strided_slice %0 {offsets = [0, 0], sizes = [1, 8], strides = [1, 1]} : vector<2x8xf32> to vector<1x8xf32>
    %4 = vector.broadcast %3 : vector<1x8xf32> to vector<8x8xf32>
    %5 = arith.addf %2, %4 : vector<8x8xf32>
    %c1 = arith.constant 1 : index
    %c0_4 = arith.constant 0 : index
    %c0_5 = arith.constant 0 : index
    %6 = vector.load %arg2[%c1, %c0_4, %c0_5] : memref<4x8x8xf32, #tpu.memory_space<vmem>>, vector<1x8x8xf32>
    %7 = vector.shape_cast %6 : vector<1x8x8xf32> to vector<8x8xf32>
    %8 = vector.extract_strided_slice %0 {offsets = [0, 0], sizes = [1, 8], strides = [1, 1]} : vector<2x8xf32> to vector<1x8xf32>
    %9 = vector.broadcast %8 : vector<1x8xf32> to vector<8x8xf32>
    %10 = arith.addf %7, %9 : vector<8x8xf32>
    %c2 = arith.constant 2 : index
    %c0_6 = arith.constant 0 : index
    %c0_7 = arith.constant 0 : index
    %11 = vector.load %arg2[%c2, %c0_6, %c0_7] : memref<4x8x8xf32, #tpu.memory_space<vmem>>, vector<1x8x8xf32>
    %12 = vector.shape_cast %11 : vector<1x8x8xf32> to vector<8x8xf32>
    %13 = vector.extract_strided_slice %0 {offsets = [0, 0], sizes = [1, 8], strides = [1, 1]} : vector<2x8xf32> to vector<1x8xf32>
    %14 = vector.broadcast %13 : vector<1x8xf32> to vector<8x8xf32>
    %15 = arith.addf %12, %14 : vector<8x8xf32>
    %c3 = arith.constant 3 : index
    %c0_8 = arith.constant 0 : index
    %c0_9 = arith.constant 0 : index
    %16 = vector.load %arg2[%c3, %c0_8, %c0_9] : memref<4x8x8xf32, #tpu.memory_space<vmem>>, vector<1x8x8xf32>
    %17 = vector.shape_cast %16 : vector<1x8x8xf32> to vector<8x8xf32>
    %18 = vector.extract_strided_slice %0 {offsets = [0, 0], sizes = [1, 8], strides = [1, 1]} : vector<2x8xf32> to vector<1x8xf32>
    %19 = vector.broadcast %18 : vector<1x8xf32> to vector<8x8xf32>
    %20 = arith.addf %17, %19 : vector<8x8xf32>
    %c0_10 = arith.constant 0 : index
    %c0_11 = arith.constant 0 : index
    %c0_12 = arith.constant 0 : index
    %21 = vector.load %arg2[%c0_10, %c0_11, %c0_12] : memref<4x8x8xf32, #tpu.memory_space<vmem>>, vector<1x8x8xf32>
    %22 = vector.shape_cast %21 : vector<1x8x8xf32> to vector<8x8xf32>
    %23 = vector.extract_strided_slice %0 {offsets = [1, 0], sizes = [1, 8], strides = [1, 1]} : vector<2x8xf32> to vector<1x8xf32>
    %24 = vector.broadcast %23 : vector<1x8xf32> to vector<8x8xf32>
    %25 = arith.addf %22, %24 : vector<8x8xf32>
    %c1_13 = arith.constant 1 : index
    %c0_14 = arith.constant 0 : index
    %c0_15 = arith.constant 0 : index
    %26 = vector.load %arg2[%c1_13, %c0_14, %c0_15] : memref<4x8x8xf32, #tpu.memory_space<vmem>>, vector<1x8x8xf32>
    %27 = vector.shape_cast %26 : vector<1x8x8xf32> to vector<8x8xf32>
    %28 = vector.extract_strided_slice %0 {offsets = [1, 0], sizes = [1, 8], strides = [1, 1]} : vector<2x8xf32> to vector<1x8xf32>
    %29 = vector.broadcast %28 : vector<1x8xf32> to vector<8x8xf32>
    %30 = arith.addf %27, %29 : vector<8x8xf32>
    %c2_16 = arith.constant 2 : index
    %c0_17 = arith.constant 0 : index
    %c0_18 = arith.constant 0 : index
    %31 = vector.load %arg2[%c2_16, %c0_17, %c0_18] : memref<4x8x8xf32, #tpu.memory_space<vmem>>, vector<1x8x8xf32>
    %32 = vector.shape_cast %31 : vector<1x8x8xf32> to vector<8x8xf32>
    %33 = vector.extract_strided_slice %0 {offsets = [1, 0], sizes = [1, 8], strides = [1, 1]} : vector<2x8xf32> to vector<1x8xf32>
    %34 = vector.broadcast %33 : vector<1x8xf32> to vector<8x8xf32>
    %35 = arith.addf %32, %34 : vector<8x8xf32>
    %c3_19 = arith.constant 3 : index
    %c0_20 = arith.constant 0 : index
    %c0_21 = arith.constant 0 : index
    %36 = vector.load %arg2[%c3_19, %c0_20, %c0_21] : memref<4x8x8xf32, #tpu.memory_space<vmem>>, vector<1x8x8xf32>
    %37 = vector.shape_cast %36 : vector<1x8x8xf32> to vector<8x8xf32>
    %38 = vector.extract_strided_slice %0 {offsets = [1, 0], sizes = [1, 8], strides = [1, 1]} : vector<2x8xf32> to vector<1x8xf32>
    %39 = vector.broadcast %38 : vector<1x8xf32> to vector<8x8xf32>
    %40 = arith.addf %37, %39 : vector<8x8xf32>
    %41 = vector.extract_strided_slice %0 {offsets = [0, 0], sizes = [1, 8], strides = [1, 1]} : vector<2x8xf32> to vector<1x8xf32>
    %42 = vector.extract_strided_slice %0 {offsets = [0, 0], sizes = [1, 8], strides = [1, 1]} : vector<2x8xf32> to vector<1x8xf32>
    %43 = vector.extract_strided_slice %0 {offsets = [0, 0], sizes = [1, 8], strides = [1, 1]} : vector<2x8xf32> to vector<1x8xf32>
    %44 = vector.extract_strided_slice %0 {offsets = [0, 0], sizes = [1, 8], strides = [1, 1]} : vector<2x8xf32> to vector<1x8xf32>
    %45 = vector.extract_strided_slice %0 {offsets = [1, 0], sizes = [1, 8], strides = [1, 1]} : vector<2x8xf32> to vector<1x8xf32>
    %46 = vector.extract_strided_slice %0 {offsets = [1, 0], sizes = [1, 8], strides = [1, 1]} : vector<2x8xf32> to vector<1x8xf32>
    %47 = vector.extract_strided_slice %0 {offsets = [1, 0], sizes = [1, 8], strides = [1, 1]} : vector<2x8xf32> to vector<1x8xf32>
    %48 = vector.extract_strided_slice %0 {offsets = [1, 0], sizes = [1, 8], strides = [1, 1]} : vector<2x8xf32> to vector<1x8xf32>
    %c0_22 = arith.constant 0 : index
    %c0_23 = arith.constant 0 : index
    %49 = vector.load %arg0[%c0_22, %c0_23] : memref<16x32xf32, #tpu.memory_space<vmem>>, vector<16x32xf32>
    %c0_24 = arith.constant 0 : index
    %c0_25 = arith.constant 0 : index
    %50 = vector.load %arg3[%c0_24, %c0_25] : memref<32x64xf32, #tpu.memory_space<vmem>>, vector<32x64xf32>
    %cst = arith.constant dense<0.000000e+00> : vector<16x64xf32>
    %51 = tpu.matmul %49, %50, %cst {dimension_numbers = #tpu.dot_dimension_numbers<[1], [0], [0], [1], [0, 0, 1, 1], [], []>} : vector<16x32xf32>, vector<32x64xf32>, vector<16x64xf32> -> vector<16x64xf32>
    %c0_26 = arith.constant 0 : index
    %c0_27 = arith.constant 0 : index
    %52 = vector.load %arg4[%c0_26, %c0_27] : memref<1x64xf32, #tpu.memory_space<vmem>>, vector<1x64xf32>
    %53 = vector.broadcast %52 : vector<1x64xf32> to vector<16x64xf32>
    %54 = arith.addf %51, %53 : vector<16x64xf32>
    %c0_28 = arith.constant 0 : index
    %c0_29 = arith.constant 0 : index
    %55 = vector.load %arg5[%c0_28, %c0_29] : memref<2x64xf32, #tpu.memory_space<vmem>>, vector<2x64xf32>
    %c0_30 = arith.constant 0 : index
    %c0_31 = arith.constant 0 : index
    %56 = vector.load %arg8[%c0_30, %c0_31] : memref<2x64xf32, #tpu.memory_space<vmem>>, vector<2x64xf32>
    %57 = vector.extract_strided_slice %55 {offsets = [0, 0], sizes = [1, 64], strides = [1, 1]} : vector<2x64xf32> to vector<1x64xf32>
    %58 = arith.mulf %54, %54 : vector<16x64xf32>
    %cst_32 = arith.constant dense<0.000000e+00> : vector<16xf32>
    %59 = vector.multi_reduction <add>, %58, %cst_32 [1] : vector<16x64xf32> to vector<16xf32>
    %60 = vector.shape_cast %59 : vector<16xf32> to vector<16x1xf32>
    %cst_33 = arith.constant 6.400000e+01 : f32
    %61 = vector.broadcast %cst_33 : f32 to vector<16x1xf32>
    %62 = arith.divf %60, %61 : vector<16x1xf32>
    %cst_34 = arith.constant 9.99999997E-7 : f32
    %63 = vector.broadcast %cst_34 : f32 to vector<16x1xf32>
    %64 = arith.addf %62, %63 : vector<16x1xf32>
    %65 = math.rsqrt %64 : vector<16x1xf32>
    %66 = vector.broadcast %65 : vector<16x1xf32> to vector<16x64xf32>
    %67 = arith.mulf %54, %66 : vector<16x64xf32>
    %68 = vector.broadcast %57 : vector<1x64xf32> to vector<16x64xf32>
    %69 = arith.mulf %67, %68 : vector<16x64xf32>
    %c0_35 = arith.constant 0 : index
    %c0_36 = arith.constant 0 : index
    %c0_37 = arith.constant 0 : index
    %70 = vector.load %arg6[%c0_35, %c0_36, %c0_37] : memref<2x64x192xf32, #tpu.memory_space<vmem>>, vector<1x64x192xf32>
    %71 = vector.shape_cast %70 : vector<1x64x192xf32> to vector<64x192xf32>
    %cst_38 = arith.constant dense<0.000000e+00> : vector<16x192xf32>
    %72 = tpu.matmul %69, %71, %cst_38 {dimension_numbers = #tpu.dot_dimension_numbers<[1], [0], [0], [1], [0, 0, 1, 1], [], []>} : vector<16x64xf32>, vector<64x192xf32>, vector<16x192xf32> -> vector<16x192xf32>
    %c0_39 = arith.constant 0 : index
    %c0_40 = arith.constant 0 : index
    %c0_41 = arith.constant 0 : index
    %73 = vector.load %arg7[%c0_39, %c0_40, %c0_41] : memref<2x64x64xf32, #tpu.memory_space<vmem>>, vector<1x64x64xf32>
    %74 = vector.shape_cast %73 : vector<1x64x64xf32> to vector<64x64xf32>
    %75 = vector.extract_strided_slice %72 {offsets = [0, 0], sizes = [8, 16], strides = [1, 1]} : vector<16x192xf32> to vector<8x16xf32>
    %76 = vector.extract_strided_slice %72 {offsets = [0, 64], sizes = [8, 16], strides = [1, 1]} : vector<16x192xf32> to vector<8x16xf32>
    %77 = vector.extract_strided_slice %72 {offsets = [0, 128], sizes = [8, 16], strides = [1, 1]} : vector<16x192xf32> to vector<8x16xf32>
    %cst_42 = arith.constant dense<0.000000e+00> : vector<8x8xf32>
    %78 = tpu.matmul %75, %76, %cst_42 {dimension_numbers = #tpu.dot_dimension_numbers<[1], [1], [0], [0], [0, 0, 1, 0], [], []>} : vector<8x16xf32>, vector<8x16xf32>, vector<8x8xf32> -> vector<8x8xf32>
    %cst_43 = arith.constant 1.000000e+00 : f32
    %79 = vector.broadcast %cst_43 : f32 to vector<8x8xf32>
    %80 = arith.mulf %78, %79 : vector<8x8xf32>
    %81 = arith.addf %80, %5 : vector<8x8xf32>
    %cst_44 = arith.constant dense<0xFF800000> : vector<8xf32>
    %82 = vector.multi_reduction <maximumf>, %81, %cst_44 [1] : vector<8x8xf32> to vector<8xf32>
    %83 = vector.shape_cast %82 : vector<8xf32> to vector<8x1xf32>
    %84 = vector.broadcast %83 : vector<8x1xf32> to vector<8x8xf32>
    %85 = arith.subf %81, %84 : vector<8x8xf32>
    %86 = math.exp %85 : vector<8x8xf32>
    %cst_45 = arith.constant dense<0.000000e+00> : vector<8xf32>
    %87 = vector.multi_reduction <add>, %86, %cst_45 [1] : vector<8x8xf32> to vector<8xf32>
    %88 = vector.shape_cast %87 : vector<8xf32> to vector<8x1xf32>
    %89 = tpu.reciprocal %88 {approx = true} : vector<8x1xf32> -> vector<8x1xf32>
    %90 = vector.broadcast %89 : vector<8x1xf32> to vector<8x8xf32>
    %91 = arith.mulf %86, %90 : vector<8x8xf32>
    %cst_46 = arith.constant dense<0.000000e+00> : vector<8x16xf32>
    %92 = tpu.matmul %91, %77, %cst_46 {dimension_numbers = #tpu.dot_dimension_numbers<[1], [0], [0], [1], [0, 0, 1, 1], [], []>} : vector<8x8xf32>, vector<8x16xf32>, vector<8x16xf32> -> vector<8x16xf32>
    %93 = vector.extract_strided_slice %74 {offsets = [0, 0], sizes = [16, 64], strides = [1, 1]} : vector<64x64xf32> to vector<16x64xf32>
    %cst_47 = arith.constant dense<0.000000e+00> : vector<8x64xf32>
    %94 = tpu.matmul %92, %93, %cst_47 {dimension_numbers = #tpu.dot_dimension_numbers<[1], [0], [0], [1], [0, 0, 1, 1], [], []>} : vector<8x16xf32>, vector<16x64xf32>, vector<8x64xf32> -> vector<8x64xf32>
    %95 = vector.extract_strided_slice %72 {offsets = [0, 16], sizes = [8, 16], strides = [1, 1]} : vector<16x192xf32> to vector<8x16xf32>
    %96 = vector.extract_strided_slice %72 {offsets = [0, 80], sizes = [8, 16], strides = [1, 1]} : vector<16x192xf32> to vector<8x16xf32>
    %97 = vector.extract_strided_slice %72 {offsets = [0, 144], sizes = [8, 16], strides = [1, 1]} : vector<16x192xf32> to vector<8x16xf32>
    %cst_48 = arith.constant dense<0.000000e+00> : vector<8x8xf32>
    %98 = tpu.matmul %95, %96, %cst_48 {dimension_numbers = #tpu.dot_dimension_numbers<[1], [1], [0], [0], [0, 0, 1, 0], [], []>} : vector<8x16xf32>, vector<8x16xf32>, vector<8x8xf32> -> vector<8x8xf32>
    %cst_49 = arith.constant 1.000000e+00 : f32
    %99 = vector.broadcast %cst_49 : f32 to vector<8x8xf32>
    %100 = arith.mulf %98, %99 : vector<8x8xf32>
    %101 = arith.addf %100, %10 : vector<8x8xf32>
    %cst_50 = arith.constant dense<0xFF800000> : vector<8xf32>
    %102 = vector.multi_reduction <maximumf>, %101, %cst_50 [1] : vector<8x8xf32> to vector<8xf32>
    %103 = vector.shape_cast %102 : vector<8xf32> to vector<8x1xf32>
    %104 = vector.broadcast %103 : vector<8x1xf32> to vector<8x8xf32>
    %105 = arith.subf %101, %104 : vector<8x8xf32>
    %106 = math.exp %105 : vector<8x8xf32>
    %cst_51 = arith.constant dense<0.000000e+00> : vector<8xf32>
    %107 = vector.multi_reduction <add>, %106, %cst_51 [1] : vector<8x8xf32> to vector<8xf32>
    %108 = vector.shape_cast %107 : vector<8xf32> to vector<8x1xf32>
    %109 = tpu.reciprocal %108 {approx = true} : vector<8x1xf32> -> vector<8x1xf32>
    %110 = vector.broadcast %109 : vector<8x1xf32> to vector<8x8xf32>
    %111 = arith.mulf %106, %110 : vector<8x8xf32>
    %cst_52 = arith.constant dense<0.000000e+00> : vector<8x16xf32>
    %112 = tpu.matmul %111, %97, %cst_52 {dimension_numbers = #tpu.dot_dimension_numbers<[1], [0], [0], [1], [0, 0, 1, 1], [], []>} : vector<8x8xf32>, vector<8x16xf32>, vector<8x16xf32> -> vector<8x16xf32>
    %113 = vector.extract_strided_slice %74 {offsets = [16, 0], sizes = [16, 64], strides = [1, 1]} : vector<64x64xf32> to vector<16x64xf32>
    %cst_53 = arith.constant dense<0.000000e+00> : vector<8x64xf32>
    %114 = tpu.matmul %112, %113, %cst_53 {dimension_numbers = #tpu.dot_dimension_numbers<[1], [0], [0], [1], [0, 0, 1, 1], [], []>} : vector<8x16xf32>, vector<16x64xf32>, vector<8x64xf32> -> vector<8x64xf32>
    %115 = arith.addf %94, %114 : vector<8x64xf32>
    %116 = vector.extract_strided_slice %72 {offsets = [0, 32], sizes = [8, 16], strides = [1, 1]} : vector<16x192xf32> to vector<8x16xf32>
    %117 = vector.extract_strided_slice %72 {offsets = [0, 96], sizes = [8, 16], strides = [1, 1]} : vector<16x192xf32> to vector<8x16xf32>
    %118 = vector.extract_strided_slice %72 {offsets = [0, 160], sizes = [8, 16], strides = [1, 1]} : vector<16x192xf32> to vector<8x16xf32>
    %cst_54 = arith.constant dense<0.000000e+00> : vector<8x8xf32>
    %119 = tpu.matmul %116, %117, %cst_54 {dimension_numbers = #tpu.dot_dimension_numbers<[1], [1], [0], [0], [0, 0, 1, 0], [], []>} : vector<8x16xf32>, vector<8x16xf32>, vector<8x8xf32> -> vector<8x8xf32>
    %cst_55 = arith.constant 1.000000e+00 : f32
    %120 = vector.broadcast %cst_55 : f32 to vector<8x8xf32>
    %121 = arith.mulf %119, %120 : vector<8x8xf32>
    %122 = arith.addf %121, %15 : vector<8x8xf32>
    %cst_56 = arith.constant dense<0xFF800000> : vector<8xf32>
    %123 = vector.multi_reduction <maximumf>, %122, %cst_56 [1] : vector<8x8xf32> to vector<8xf32>
    %124 = vector.shape_cast %123 : vector<8xf32> to vector<8x1xf32>
    %125 = vector.broadcast %124 : vector<8x1xf32> to vector<8x8xf32>
    %126 = arith.subf %122, %125 : vector<8x8xf32>
    %127 = math.exp %126 : vector<8x8xf32>
    %cst_57 = arith.constant dense<0.000000e+00> : vector<8xf32>
    %128 = vector.multi_reduction <add>, %127, %cst_57 [1] : vector<8x8xf32> to vector<8xf32>
    %129 = vector.shape_cast %128 : vector<8xf32> to vector<8x1xf32>
    %130 = tpu.reciprocal %129 {approx = true} : vector<8x1xf32> -> vector<8x1xf32>
    %131 = vector.broadcast %130 : vector<8x1xf32> to vector<8x8xf32>
    %132 = arith.mulf %127, %131 : vector<8x8xf32>
    %cst_58 = arith.constant dense<0.000000e+00> : vector<8x16xf32>
    %133 = tpu.matmul %132, %118, %cst_58 {dimension_numbers = #tpu.dot_dimension_numbers<[1], [0], [0], [1], [0, 0, 1, 1], [], []>} : vector<8x8xf32>, vector<8x16xf32>, vector<8x16xf32> -> vector<8x16xf32>
    %134 = vector.extract_strided_slice %74 {offsets = [32, 0], sizes = [16, 64], strides = [1, 1]} : vector<64x64xf32> to vector<16x64xf32>
    %cst_59 = arith.constant dense<0.000000e+00> : vector<8x64xf32>
    %135 = tpu.matmul %133, %134, %cst_59 {dimension_numbers = #tpu.dot_dimension_numbers<[1], [0], [0], [1], [0, 0, 1, 1], [], []>} : vector<8x16xf32>, vector<16x64xf32>, vector<8x64xf32> -> vector<8x64xf32>
    %136 = arith.addf %115, %135 : vector<8x64xf32>
    %137 = vector.extract_strided_slice %72 {offsets = [0, 48], sizes = [8, 16], strides = [1, 1]} : vector<16x192xf32> to vector<8x16xf32>
    %138 = vector.extract_strided_slice %72 {offsets = [0, 112], sizes = [8, 16], strides = [1, 1]} : vector<16x192xf32> to vector<8x16xf32>
    %139 = vector.extract_strided_slice %72 {offsets = [0, 176], sizes = [8, 16], strides = [1, 1]} : vector<16x192xf32> to vector<8x16xf32>
    %cst_60 = arith.constant dense<0.000000e+00> : vector<8x8xf32>
    %140 = tpu.matmul %137, %138, %cst_60 {dimension_numbers = #tpu.dot_dimension_numbers<[1], [1], [0], [0], [0, 0, 1, 0], [], []>} : vector<8x16xf32>, vector<8x16xf32>, vector<8x8xf32> -> vector<8x8xf32>
    %cst_61 = arith.constant 1.000000e+00 : f32
    %141 = vector.broadcast %cst_61 : f32 to vector<8x8xf32>
    %142 = arith.mulf %140, %141 : vector<8x8xf32>
    %143 = arith.addf %142, %20 : vector<8x8xf32>
    %cst_62 = arith.constant dense<0xFF800000> : vector<8xf32>
    %144 = vector.multi_reduction <maximumf>, %143, %cst_62 [1] : vector<8x8xf32> to vector<8xf32>
    %145 = vector.shape_cast %144 : vector<8xf32> to vector<8x1xf32>
    %146 = vector.broadcast %145 : vector<8x1xf32> to vector<8x8xf32>
    %147 = arith.subf %143, %146 : vector<8x8xf32>
    %148 = math.exp %147 : vector<8x8xf32>
    %cst_63 = arith.constant dense<0.000000e+00> : vector<8xf32>
    %149 = vector.multi_reduction <add>, %148, %cst_63 [1] : vector<8x8xf32> to vector<8xf32>
    %150 = vector.shape_cast %149 : vector<8xf32> to vector<8x1xf32>
    %151 = tpu.reciprocal %150 {approx = true} : vector<8x1xf32> -> vector<8x1xf32>
    %152 = vector.broadcast %151 : vector<8x1xf32> to vector<8x8xf32>
    %153 = arith.mulf %148, %152 : vector<8x8xf32>
    %cst_64 = arith.constant dense<0.000000e+00> : vector<8x16xf32>
    %154 = tpu.matmul %153, %139, %cst_64 {dimension_numbers = #tpu.dot_dimension_numbers<[1], [0], [0], [1], [0, 0, 1, 1], [], []>} : vector<8x8xf32>, vector<8x16xf32>, vector<8x16xf32> -> vector<8x16xf32>
    %155 = vector.extract_strided_slice %74 {offsets = [48, 0], sizes = [16, 64], strides = [1, 1]} : vector<64x64xf32> to vector<16x64xf32>
    %cst_65 = arith.constant dense<0.000000e+00> : vector<8x64xf32>
    %156 = tpu.matmul %154, %155, %cst_65 {dimension_numbers = #tpu.dot_dimension_numbers<[1], [0], [0], [1], [0, 0, 1, 1], [], []>} : vector<8x16xf32>, vector<16x64xf32>, vector<8x64xf32> -> vector<8x64xf32>
    %157 = arith.addf %136, %156 : vector<8x64xf32>
    %158 = vector.extract_strided_slice %72 {offsets = [8, 0], sizes = [8, 16], strides = [1, 1]} : vector<16x192xf32> to vector<8x16xf32>
    %159 = vector.extract_strided_slice %72 {offsets = [8, 64], sizes = [8, 16], strides = [1, 1]} : vector<16x192xf32> to vector<8x16xf32>
    %160 = vector.extract_strided_slice %72 {offsets = [8, 128], sizes = [8, 16], strides = [1, 1]} : vector<16x192xf32> to vector<8x16xf32>
    %cst_66 = arith.constant dense<0.000000e+00> : vector<8x8xf32>
    %161 = tpu.matmul %158, %159, %cst_66 {dimension_numbers = #tpu.dot_dimension_numbers<[1], [1], [0], [0], [0, 0, 1, 0], [], []>} : vector<8x16xf32>, vector<8x16xf32>, vector<8x8xf32> -> vector<8x8xf32>
    %cst_67 = arith.constant 1.000000e+00 : f32
    %162 = vector.broadcast %cst_67 : f32 to vector<8x8xf32>
    %163 = arith.mulf %161, %162 : vector<8x8xf32>
    %164 = arith.addf %163, %25 : vector<8x8xf32>
    %cst_68 = arith.constant dense<0xFF800000> : vector<8xf32>
    %165 = vector.multi_reduction <maximumf>, %164, %cst_68 [1] : vector<8x8xf32> to vector<8xf32>
    %166 = vector.shape_cast %165 : vector<8xf32> to vector<8x1xf32>
    %167 = vector.broadcast %166 : vector<8x1xf32> to vector<8x8xf32>
    %168 = arith.subf %164, %167 : vector<8x8xf32>
    %169 = math.exp %168 : vector<8x8xf32>
    %cst_69 = arith.constant dense<0.000000e+00> : vector<8xf32>
    %170 = vector.multi_reduction <add>, %169, %cst_69 [1] : vector<8x8xf32> to vector<8xf32>
    %171 = vector.shape_cast %170 : vector<8xf32> to vector<8x1xf32>
    %172 = tpu.reciprocal %171 {approx = true} : vector<8x1xf32> -> vector<8x1xf32>
    %173 = vector.broadcast %172 : vector<8x1xf32> to vector<8x8xf32>
    %174 = arith.mulf %169, %173 : vector<8x8xf32>
    %cst_70 = arith.constant dense<0.000000e+00> : vector<8x16xf32>
    %175 = tpu.matmul %174, %160, %cst_70 {dimension_numbers = #tpu.dot_dimension_numbers<[1], [0], [0], [1], [0, 0, 1, 1], [], []>} : vector<8x8xf32>, vector<8x16xf32>, vector<8x16xf32> -> vector<8x16xf32>
    %176 = vector.extract_strided_slice %74 {offsets = [0, 0], sizes = [16, 64], strides = [1, 1]} : vector<64x64xf32> to vector<16x64xf32>
    %cst_71 = arith.constant dense<0.000000e+00> : vector<8x64xf32>
    %177 = tpu.matmul %175, %176, %cst_71 {dimension_numbers = #tpu.dot_dimension_numbers<[1], [0], [0], [1], [0, 0, 1, 1], [], []>} : vector<8x16xf32>, vector<16x64xf32>, vector<8x64xf32> -> vector<8x64xf32>
    %178 = vector.extract_strided_slice %72 {offsets = [8, 16], sizes = [8, 16], strides = [1, 1]} : vector<16x192xf32> to vector<8x16xf32>
    %179 = vector.extract_strided_slice %72 {offsets = [8, 80], sizes = [8, 16], strides = [1, 1]} : vector<16x192xf32> to vector<8x16xf32>
    %180 = vector.extract_strided_slice %72 {offsets = [8, 144], sizes = [8, 16], strides = [1, 1]} : vector<16x192xf32> to vector<8x16xf32>
    %cst_72 = arith.constant dense<0.000000e+00> : vector<8x8xf32>
    %181 = tpu.matmul %178, %179, %cst_72 {dimension_numbers = #tpu.dot_dimension_numbers<[1], [1], [0], [0], [0, 0, 1, 0], [], []>} : vector<8x16xf32>, vector<8x16xf32>, vector<8x8xf32> -> vector<8x8xf32>
    %cst_73 = arith.constant 1.000000e+00 : f32
    %182 = vector.broadcast %cst_73 : f32 to vector<8x8xf32>
    %183 = arith.mulf %181, %182 : vector<8x8xf32>
    %184 = arith.addf %183, %30 : vector<8x8xf32>
    %cst_74 = arith.constant dense<0xFF800000> : vector<8xf32>
    %185 = vector.multi_reduction <maximumf>, %184, %cst_74 [1] : vector<8x8xf32> to vector<8xf32>
    %186 = vector.shape_cast %185 : vector<8xf32> to vector<8x1xf32>
    %187 = vector.broadcast %186 : vector<8x1xf32> to vector<8x8xf32>
    %188 = arith.subf %184, %187 : vector<8x8xf32>
    %189 = math.exp %188 : vector<8x8xf32>
    %cst_75 = arith.constant dense<0.000000e+00> : vector<8xf32>
    %190 = vector.multi_reduction <add>, %189, %cst_75 [1] : vector<8x8xf32> to vector<8xf32>
    %191 = vector.shape_cast %190 : vector<8xf32> to vector<8x1xf32>
    %192 = tpu.reciprocal %191 {approx = true} : vector<8x1xf32> -> vector<8x1xf32>
    %193 = vector.broadcast %192 : vector<8x1xf32> to vector<8x8xf32>
    %194 = arith.mulf %189, %193 : vector<8x8xf32>
    %cst_76 = arith.constant dense<0.000000e+00> : vector<8x16xf32>
    %195 = tpu.matmul %194, %180, %cst_76 {dimension_numbers = #tpu.dot_dimension_numbers<[1], [0], [0], [1], [0, 0, 1, 1], [], []>} : vector<8x8xf32>, vector<8x16xf32>, vector<8x16xf32> -> vector<8x16xf32>
    %196 = vector.extract_strided_slice %74 {offsets = [16, 0], sizes = [16, 64], strides = [1, 1]} : vector<64x64xf32> to vector<16x64xf32>
    %cst_77 = arith.constant dense<0.000000e+00> : vector<8x64xf32>
    %197 = tpu.matmul %195, %196, %cst_77 {dimension_numbers = #tpu.dot_dimension_numbers<[1], [0], [0], [1], [0, 0, 1, 1], [], []>} : vector<8x16xf32>, vector<16x64xf32>, vector<8x64xf32> -> vector<8x64xf32>
    %198 = arith.addf %177, %197 : vector<8x64xf32>
    %199 = vector.extract_strided_slice %72 {offsets = [8, 32], sizes = [8, 16], strides = [1, 1]} : vector<16x192xf32> to vector<8x16xf32>
    %200 = vector.extract_strided_slice %72 {offsets = [8, 96], sizes = [8, 16], strides = [1, 1]} : vector<16x192xf32> to vector<8x16xf32>
    %201 = vector.extract_strided_slice %72 {offsets = [8, 160], sizes = [8, 16], strides = [1, 1]} : vector<16x192xf32> to vector<8x16xf32>
    %cst_78 = arith.constant dense<0.000000e+00> : vector<8x8xf32>
    %202 = tpu.matmul %199, %200, %cst_78 {dimension_numbers = #tpu.dot_dimension_numbers<[1], [1], [0], [0], [0, 0, 1, 0], [], []>} : vector<8x16xf32>, vector<8x16xf32>, vector<8x8xf32> -> vector<8x8xf32>
    %cst_79 = arith.constant 1.000000e+00 : f32
    %203 = vector.broadcast %cst_79 : f32 to vector<8x8xf32>
    %204 = arith.mulf %202, %203 : vector<8x8xf32>
    %205 = arith.addf %204, %35 : vector<8x8xf32>
    %cst_80 = arith.constant dense<0xFF800000> : vector<8xf32>
    %206 = vector.multi_reduction <maximumf>, %205, %cst_80 [1] : vector<8x8xf32> to vector<8xf32>
    %207 = vector.shape_cast %206 : vector<8xf32> to vector<8x1xf32>
    %208 = vector.broadcast %207 : vector<8x1xf32> to vector<8x8xf32>
    %209 = arith.subf %205, %208 : vector<8x8xf32>
    %210 = math.exp %209 : vector<8x8xf32>
    %cst_81 = arith.constant dense<0.000000e+00> : vector<8xf32>
    %211 = vector.multi_reduction <add>, %210, %cst_81 [1] : vector<8x8xf32> to vector<8xf32>
    %212 = vector.shape_cast %211 : vector<8xf32> to vector<8x1xf32>
    %213 = tpu.reciprocal %212 {approx = true} : vector<8x1xf32> -> vector<8x1xf32>
    %214 = vector.broadcast %213 : vector<8x1xf32> to vector<8x8xf32>
    %215 = arith.mulf %210, %214 : vector<8x8xf32>
    %cst_82 = arith.constant dense<0.000000e+00> : vector<8x16xf32>
    %216 = tpu.matmul %215, %201, %cst_82 {dimension_numbers = #tpu.dot_dimension_numbers<[1], [0], [0], [1], [0, 0, 1, 1], [], []>} : vector<8x8xf32>, vector<8x16xf32>, vector<8x16xf32> -> vector<8x16xf32>
    %217 = vector.extract_strided_slice %74 {offsets = [32, 0], sizes = [16, 64], strides = [1, 1]} : vector<64x64xf32> to vector<16x64xf32>
    %cst_83 = arith.constant dense<0.000000e+00> : vector<8x64xf32>
    %218 = tpu.matmul %216, %217, %cst_83 {dimension_numbers = #tpu.dot_dimension_numbers<[1], [0], [0], [1], [0, 0, 1, 1], [], []>} : vector<8x16xf32>, vector<16x64xf32>, vector<8x64xf32> -> vector<8x64xf32>
    %219 = arith.addf %198, %218 : vector<8x64xf32>
    %220 = vector.extract_strided_slice %72 {offsets = [8, 48], sizes = [8, 16], strides = [1, 1]} : vector<16x192xf32> to vector<8x16xf32>
    %221 = vector.extract_strided_slice %72 {offsets = [8, 112], sizes = [8, 16], strides = [1, 1]} : vector<16x192xf32> to vector<8x16xf32>
    %222 = vector.extract_strided_slice %72 {offsets = [8, 176], sizes = [8, 16], strides = [1, 1]} : vector<16x192xf32> to vector<8x16xf32>
    %cst_84 = arith.constant dense<0.000000e+00> : vector<8x8xf32>
    %223 = tpu.matmul %220, %221, %cst_84 {dimension_numbers = #tpu.dot_dimension_numbers<[1], [1], [0], [0], [0, 0, 1, 0], [], []>} : vector<8x16xf32>, vector<8x16xf32>, vector<8x8xf32> -> vector<8x8xf32>
    %cst_85 = arith.constant 1.000000e+00 : f32
    %224 = vector.broadcast %cst_85 : f32 to vector<8x8xf32>
    %225 = arith.mulf %223, %224 : vector<8x8xf32>
    %226 = arith.addf %225, %40 : vector<8x8xf32>
    %cst_86 = arith.constant dense<0xFF800000> : vector<8xf32>
    %227 = vector.multi_reduction <maximumf>, %226, %cst_86 [1] : vector<8x8xf32> to vector<8xf32>
    %228 = vector.shape_cast %227 : vector<8xf32> to vector<8x1xf32>
    %229 = vector.broadcast %228 : vector<8x1xf32> to vector<8x8xf32>
    %230 = arith.subf %226, %229 : vector<8x8xf32>
    %231 = math.exp %230 : vector<8x8xf32>
    %cst_87 = arith.constant dense<0.000000e+00> : vector<8xf32>
    %232 = vector.multi_reduction <add>, %231, %cst_87 [1] : vector<8x8xf32> to vector<8xf32>
    %233 = vector.shape_cast %232 : vector<8xf32> to vector<8x1xf32>
    %234 = tpu.reciprocal %233 {approx = true} : vector<8x1xf32> -> vector<8x1xf32>
    %235 = vector.broadcast %234 : vector<8x1xf32> to vector<8x8xf32>
    %236 = arith.mulf %231, %235 : vector<8x8xf32>
    %cst_88 = arith.constant dense<0.000000e+00> : vector<8x16xf32>
    %237 = tpu.matmul %236, %222, %cst_88 {dimension_numbers = #tpu.dot_dimension_numbers<[1], [0], [0], [1], [0, 0, 1, 1], [], []>} : vector<8x8xf32>, vector<8x16xf32>, vector<8x16xf32> -> vector<8x16xf32>
    %238 = vector.extract_strided_slice %74 {offsets = [48, 0], sizes = [16, 64], strides = [1, 1]} : vector<64x64xf32> to vector<16x64xf32>
    %cst_89 = arith.constant dense<0.000000e+00> : vector<8x64xf32>
    %239 = tpu.matmul %237, %238, %cst_89 {dimension_numbers = #tpu.dot_dimension_numbers<[1], [0], [0], [1], [0, 0, 1, 1], [], []>} : vector<8x16xf32>, vector<16x64xf32>, vector<8x64xf32> -> vector<8x64xf32>
    %240 = arith.addf %219, %239 : vector<8x64xf32>
    %241 = tpu.concatenate %157, %240 in 0 : vector<8x64xf32>, vector<8x64xf32> -> vector<16x64xf32>
    %242 = arith.addf %54, %241 : vector<16x64xf32>
    %243 = vector.extract_strided_slice %56 {offsets = [0, 0], sizes = [1, 64], strides = [1, 1]} : vector<2x64xf32> to vector<1x64xf32>
    %244 = arith.mulf %242, %242 : vector<16x64xf32>
    %cst_90 = arith.constant dense<0.000000e+00> : vector<16xf32>
    %245 = vector.multi_reduction <add>, %244, %cst_90 [1] : vector<16x64xf32> to vector<16xf32>
    %246 = vector.shape_cast %245 : vector<16xf32> to vector<16x1xf32>
    %cst_91 = arith.constant 6.400000e+01 : f32
    %247 = vector.broadcast %cst_91 : f32 to vector<16x1xf32>
    %248 = arith.divf %246, %247 : vector<16x1xf32>
    %cst_92 = arith.constant 9.99999997E-7 : f32
    %249 = vector.broadcast %cst_92 : f32 to vector<16x1xf32>
    %250 = arith.addf %248, %249 : vector<16x1xf32>
    %251 = math.rsqrt %250 : vector<16x1xf32>
    %252 = vector.broadcast %251 : vector<16x1xf32> to vector<16x64xf32>
    %253 = arith.mulf %242, %252 : vector<16x64xf32>
    %254 = vector.broadcast %243 : vector<1x64xf32> to vector<16x64xf32>
    %255 = arith.mulf %253, %254 : vector<16x64xf32>
    %c0_93 = arith.constant 0 : index
    %c0_94 = arith.constant 0 : index
    %c0_95 = arith.constant 0 : index
    %256 = vector.load %arg9[%c0_93, %c0_94, %c0_95] : memref<2x64x128xf32, #tpu.memory_space<vmem>>, vector<1x64x128xf32>
    %257 = vector.shape_cast %256 : vector<1x64x128xf32> to vector<64x128xf32>
    %cst_96 = arith.constant dense<0.000000e+00> : vector<16x128xf32>
    %258 = tpu.matmul %255, %257, %cst_96 {dimension_numbers = #tpu.dot_dimension_numbers<[1], [0], [0], [1], [0, 0, 1, 1], [], []>} : vector<16x64xf32>, vector<64x128xf32>, vector<16x128xf32> -> vector<16x128xf32>
    %cst_97 = arith.constant 0.000000e+00 : f32
    %259 = vector.broadcast %cst_97 : f32 to vector<16x128xf32>
    %260 = arith.maximumf %258, %259 : vector<16x128xf32>
    %c0_98 = arith.constant 0 : index
    %c0_99 = arith.constant 0 : index
    %c0_100 = arith.constant 0 : index
    %261 = vector.load %arg10[%c0_98, %c0_99, %c0_100] : memref<2x128x64xf32, #tpu.memory_space<vmem>>, vector<1x128x64xf32>
    %262 = vector.shape_cast %261 : vector<1x128x64xf32> to vector<128x64xf32>
    %cst_101 = arith.constant dense<0.000000e+00> : vector<16x64xf32>
    %263 = tpu.matmul %260, %262, %cst_101 {dimension_numbers = #tpu.dot_dimension_numbers<[1], [0], [0], [1], [0, 0, 1, 1], [], []>} : vector<16x128xf32>, vector<128x64xf32>, vector<16x64xf32> -> vector<16x64xf32>
    %264 = arith.addf %242, %263 : vector<16x64xf32>
    %265 = vector.extract_strided_slice %55 {offsets = [1, 0], sizes = [1, 64], strides = [1, 1]} : vector<2x64xf32> to vector<1x64xf32>
    %266 = arith.mulf %264, %264 : vector<16x64xf32>
    %cst_102 = arith.constant dense<0.000000e+00> : vector<16xf32>
    %267 = vector.multi_reduction <add>, %266, %cst_102 [1] : vector<16x64xf32> to vector<16xf32>
    %268 = vector.shape_cast %267 : vector<16xf32> to vector<16x1xf32>
    %cst_103 = arith.constant 6.400000e+01 : f32
    %269 = vector.broadcast %cst_103 : f32 to vector<16x1xf32>
    %270 = arith.divf %268, %269 : vector<16x1xf32>
    %cst_104 = arith.constant 9.99999997E-7 : f32
    %271 = vector.broadcast %cst_104 : f32 to vector<16x1xf32>
    %272 = arith.addf %270, %271 : vector<16x1xf32>
    %273 = math.rsqrt %272 : vector<16x1xf32>
    %274 = vector.broadcast %273 : vector<16x1xf32> to vector<16x64xf32>
    %275 = arith.mulf %264, %274 : vector<16x64xf32>
    %276 = vector.broadcast %265 : vector<1x64xf32> to vector<16x64xf32>
    %277 = arith.mulf %275, %276 : vector<16x64xf32>
    %c1_105 = arith.constant 1 : index
    %c0_106 = arith.constant 0 : index
    %c0_107 = arith.constant 0 : index
    %278 = vector.load %arg6[%c1_105, %c0_106, %c0_107] : memref<2x64x192xf32, #tpu.memory_space<vmem>>, vector<1x64x192xf32>
    %279 = vector.shape_cast %278 : vector<1x64x192xf32> to vector<64x192xf32>
    %cst_108 = arith.constant dense<0.000000e+00> : vector<16x192xf32>
    %280 = tpu.matmul %277, %279, %cst_108 {dimension_numbers = #tpu.dot_dimension_numbers<[1], [0], [0], [1], [0, 0, 1, 1], [], []>} : vector<16x64xf32>, vector<64x192xf32>, vector<16x192xf32> -> vector<16x192xf32>
    %c1_109 = arith.constant 1 : index
    %c0_110 = arith.constant 0 : index
    %c0_111 = arith.constant 0 : index
    %281 = vector.load %arg7[%c1_109, %c0_110, %c0_111] : memref<2x64x64xf32, #tpu.memory_space<vmem>>, vector<1x64x64xf32>
    %282 = vector.shape_cast %281 : vector<1x64x64xf32> to vector<64x64xf32>
    %283 = vector.extract_strided_slice %280 {offsets = [0, 0], sizes = [8, 16], strides = [1, 1]} : vector<16x192xf32> to vector<8x16xf32>
    %284 = vector.extract_strided_slice %280 {offsets = [0, 64], sizes = [8, 16], strides = [1, 1]} : vector<16x192xf32> to vector<8x16xf32>
    %285 = vector.extract_strided_slice %280 {offsets = [0, 128], sizes = [8, 16], strides = [1, 1]} : vector<16x192xf32> to vector<8x16xf32>
    %cst_112 = arith.constant dense<0.000000e+00> : vector<8x8xf32>
    %286 = tpu.matmul %283, %284, %cst_112 {dimension_numbers = #tpu.dot_dimension_numbers<[1], [1], [0], [0], [0, 0, 1, 0], [], []>} : vector<8x16xf32>, vector<8x16xf32>, vector<8x8xf32> -> vector<8x8xf32>
    %cst_113 = arith.constant 1.000000e+00 : f32
    %287 = vector.broadcast %cst_113 : f32 to vector<8x8xf32>
    %288 = arith.mulf %286, %287 : vector<8x8xf32>
    %289 = arith.addf %288, %5 : vector<8x8xf32>
    %cst_114 = arith.constant dense<0xFF800000> : vector<8xf32>
    %290 = vector.multi_reduction <maximumf>, %289, %cst_114 [1] : vector<8x8xf32> to vector<8xf32>
    %291 = vector.shape_cast %290 : vector<8xf32> to vector<8x1xf32>
    %292 = vector.broadcast %291 : vector<8x1xf32> to vector<8x8xf32>
    %293 = arith.subf %289, %292 : vector<8x8xf32>
    %294 = math.exp %293 : vector<8x8xf32>
    %cst_115 = arith.constant dense<0.000000e+00> : vector<8xf32>
    %295 = vector.multi_reduction <add>, %294, %cst_115 [1] : vector<8x8xf32> to vector<8xf32>
    %296 = vector.shape_cast %295 : vector<8xf32> to vector<8x1xf32>
    %297 = tpu.reciprocal %296 {approx = true} : vector<8x1xf32> -> vector<8x1xf32>
    %298 = vector.broadcast %297 : vector<8x1xf32> to vector<8x8xf32>
    %299 = arith.mulf %294, %298 : vector<8x8xf32>
    %cst_116 = arith.constant dense<0.000000e+00> : vector<8x16xf32>
    %300 = tpu.matmul %299, %285, %cst_116 {dimension_numbers = #tpu.dot_dimension_numbers<[1], [0], [0], [1], [0, 0, 1, 1], [], []>} : vector<8x8xf32>, vector<8x16xf32>, vector<8x16xf32> -> vector<8x16xf32>
    %301 = vector.extract_strided_slice %282 {offsets = [0, 0], sizes = [16, 64], strides = [1, 1]} : vector<64x64xf32> to vector<16x64xf32>
    %cst_117 = arith.constant dense<0.000000e+00> : vector<8x64xf32>
    %302 = tpu.matmul %300, %301, %cst_117 {dimension_numbers = #tpu.dot_dimension_numbers<[1], [0], [0], [1], [0, 0, 1, 1], [], []>} : vector<8x16xf32>, vector<16x64xf32>, vector<8x64xf32> -> vector<8x64xf32>
    %303 = vector.extract_strided_slice %280 {offsets = [0, 16], sizes = [8, 16], strides = [1, 1]} : vector<16x192xf32> to vector<8x16xf32>
    %304 = vector.extract_strided_slice %280 {offsets = [0, 80], sizes = [8, 16], strides = [1, 1]} : vector<16x192xf32> to vector<8x16xf32>
    %305 = vector.extract_strided_slice %280 {offsets = [0, 144], sizes = [8, 16], strides = [1, 1]} : vector<16x192xf32> to vector<8x16xf32>
    %cst_118 = arith.constant dense<0.000000e+00> : vector<8x8xf32>
    %306 = tpu.matmul %303, %304, %cst_118 {dimension_numbers = #tpu.dot_dimension_numbers<[1], [1], [0], [0], [0, 0, 1, 0], [], []>} : vector<8x16xf32>, vector<8x16xf32>, vector<8x8xf32> -> vector<8x8xf32>
    %cst_119 = arith.constant 1.000000e+00 : f32
    %307 = vector.broadcast %cst_119 : f32 to vector<8x8xf32>
    %308 = arith.mulf %306, %307 : vector<8x8xf32>
    %309 = arith.addf %308, %10 : vector<8x8xf32>
    %cst_120 = arith.constant dense<0xFF800000> : vector<8xf32>
    %310 = vector.multi_reduction <maximumf>, %309, %cst_120 [1] : vector<8x8xf32> to vector<8xf32>
    %311 = vector.shape_cast %310 : vector<8xf32> to vector<8x1xf32>
    %312 = vector.broadcast %311 : vector<8x1xf32> to vector<8x8xf32>
    %313 = arith.subf %309, %312 : vector<8x8xf32>
    %314 = math.exp %313 : vector<8x8xf32>
    %cst_121 = arith.constant dense<0.000000e+00> : vector<8xf32>
    %315 = vector.multi_reduction <add>, %314, %cst_121 [1] : vector<8x8xf32> to vector<8xf32>
    %316 = vector.shape_cast %315 : vector<8xf32> to vector<8x1xf32>
    %317 = tpu.reciprocal %316 {approx = true} : vector<8x1xf32> -> vector<8x1xf32>
    %318 = vector.broadcast %317 : vector<8x1xf32> to vector<8x8xf32>
    %319 = arith.mulf %314, %318 : vector<8x8xf32>
    %cst_122 = arith.constant dense<0.000000e+00> : vector<8x16xf32>
    %320 = tpu.matmul %319, %305, %cst_122 {dimension_numbers = #tpu.dot_dimension_numbers<[1], [0], [0], [1], [0, 0, 1, 1], [], []>} : vector<8x8xf32>, vector<8x16xf32>, vector<8x16xf32> -> vector<8x16xf32>
    %321 = vector.extract_strided_slice %282 {offsets = [16, 0], sizes = [16, 64], strides = [1, 1]} : vector<64x64xf32> to vector<16x64xf32>
    %cst_123 = arith.constant dense<0.000000e+00> : vector<8x64xf32>
    %322 = tpu.matmul %320, %321, %cst_123 {dimension_numbers = #tpu.dot_dimension_numbers<[1], [0], [0], [1], [0, 0, 1, 1], [], []>} : vector<8x16xf32>, vector<16x64xf32>, vector<8x64xf32> -> vector<8x64xf32>
    %323 = arith.addf %302, %322 : vector<8x64xf32>
    %324 = vector.extract_strided_slice %280 {offsets = [0, 32], sizes = [8, 16], strides = [1, 1]} : vector<16x192xf32> to vector<8x16xf32>
    %325 = vector.extract_strided_slice %280 {offsets = [0, 96], sizes = [8, 16], strides = [1, 1]} : vector<16x192xf32> to vector<8x16xf32>
    %326 = vector.extract_strided_slice %280 {offsets = [0, 160], sizes = [8, 16], strides = [1, 1]} : vector<16x192xf32> to vector<8x16xf32>
    %cst_124 = arith.constant dense<0.000000e+00> : vector<8x8xf32>
    %327 = tpu.matmul %324, %325, %cst_124 {dimension_numbers = #tpu.dot_dimension_numbers<[1], [1], [0], [0], [0, 0, 1, 0], [], []>} : vector<8x16xf32>, vector<8x16xf32>, vector<8x8xf32> -> vector<8x8xf32>
    %cst_125 = arith.constant 1.000000e+00 : f32
    %328 = vector.broadcast %cst_125 : f32 to vector<8x8xf32>
    %329 = arith.mulf %327, %328 : vector<8x8xf32>
    %330 = arith.addf %329, %15 : vector<8x8xf32>
    %cst_126 = arith.constant dense<0xFF800000> : vector<8xf32>
    %331 = vector.multi_reduction <maximumf>, %330, %cst_126 [1] : vector<8x8xf32> to vector<8xf32>
    %332 = vector.shape_cast %331 : vector<8xf32> to vector<8x1xf32>
    %333 = vector.broadcast %332 : vector<8x1xf32> to vector<8x8xf32>
    %334 = arith.subf %330, %333 : vector<8x8xf32>
    %335 = math.exp %334 : vector<8x8xf32>
    %cst_127 = arith.constant dense<0.000000e+00> : vector<8xf32>
    %336 = vector.multi_reduction <add>, %335, %cst_127 [1] : vector<8x8xf32> to vector<8xf32>
    %337 = vector.shape_cast %336 : vector<8xf32> to vector<8x1xf32>
    %338 = tpu.reciprocal %337 {approx = true} : vector<8x1xf32> -> vector<8x1xf32>
    %339 = vector.broadcast %338 : vector<8x1xf32> to vector<8x8xf32>
    %340 = arith.mulf %335, %339 : vector<8x8xf32>
    %cst_128 = arith.constant dense<0.000000e+00> : vector<8x16xf32>
    %341 = tpu.matmul %340, %326, %cst_128 {dimension_numbers = #tpu.dot_dimension_numbers<[1], [0], [0], [1], [0, 0, 1, 1], [], []>} : vector<8x8xf32>, vector<8x16xf32>, vector<8x16xf32> -> vector<8x16xf32>
    %342 = vector.extract_strided_slice %282 {offsets = [32, 0], sizes = [16, 64], strides = [1, 1]} : vector<64x64xf32> to vector<16x64xf32>
    %cst_129 = arith.constant dense<0.000000e+00> : vector<8x64xf32>
    %343 = tpu.matmul %341, %342, %cst_129 {dimension_numbers = #tpu.dot_dimension_numbers<[1], [0], [0], [1], [0, 0, 1, 1], [], []>} : vector<8x16xf32>, vector<16x64xf32>, vector<8x64xf32> -> vector<8x64xf32>
    %344 = arith.addf %323, %343 : vector<8x64xf32>
    %345 = vector.extract_strided_slice %280 {offsets = [0, 48], sizes = [8, 16], strides = [1, 1]} : vector<16x192xf32> to vector<8x16xf32>
    %346 = vector.extract_strided_slice %280 {offsets = [0, 112], sizes = [8, 16], strides = [1, 1]} : vector<16x192xf32> to vector<8x16xf32>
    %347 = vector.extract_strided_slice %280 {offsets = [0, 176], sizes = [8, 16], strides = [1, 1]} : vector<16x192xf32> to vector<8x16xf32>
    %cst_130 = arith.constant dense<0.000000e+00> : vector<8x8xf32>
    %348 = tpu.matmul %345, %346, %cst_130 {dimension_numbers = #tpu.dot_dimension_numbers<[1], [1], [0], [0], [0, 0, 1, 0], [], []>} : vector<8x16xf32>, vector<8x16xf32>, vector<8x8xf32> -> vector<8x8xf32>
    %cst_131 = arith.constant 1.000000e+00 : f32
    %349 = vector.broadcast %cst_131 : f32 to vector<8x8xf32>
    %350 = arith.mulf %348, %349 : vector<8x8xf32>
    %351 = arith.addf %350, %20 : vector<8x8xf32>
    %cst_132 = arith.constant dense<0xFF800000> : vector<8xf32>
    %352 = vector.multi_reduction <maximumf>, %351, %cst_132 [1] : vector<8x8xf32> to vector<8xf32>
    %353 = vector.shape_cast %352 : vector<8xf32> to vector<8x1xf32>
    %354 = vector.broadcast %353 : vector<8x1xf32> to vector<8x8xf32>
    %355 = arith.subf %351, %354 : vector<8x8xf32>
    %356 = math.exp %355 : vector<8x8xf32>
    %cst_133 = arith.constant dense<0.000000e+00> : vector<8xf32>
    %357 = vector.multi_reduction <add>, %356, %cst_133 [1] : vector<8x8xf32> to vector<8xf32>
    %358 = vector.shape_cast %357 : vector<8xf32> to vector<8x1xf32>
    %359 = tpu.reciprocal %358 {approx = true} : vector<8x1xf32> -> vector<8x1xf32>
    %360 = vector.broadcast %359 : vector<8x1xf32> to vector<8x8xf32>
    %361 = arith.mulf %356, %360 : vector<8x8xf32>
    %cst_134 = arith.constant dense<0.000000e+00> : vector<8x16xf32>
    %362 = tpu.matmul %361, %347, %cst_134 {dimension_numbers = #tpu.dot_dimension_numbers<[1], [0], [0], [1], [0, 0, 1, 1], [], []>} : vector<8x8xf32>, vector<8x16xf32>, vector<8x16xf32> -> vector<8x16xf32>
    %363 = vector.extract_strided_slice %282 {offsets = [48, 0], sizes = [16, 64], strides = [1, 1]} : vector<64x64xf32> to vector<16x64xf32>
    %cst_135 = arith.constant dense<0.000000e+00> : vector<8x64xf32>
    %364 = tpu.matmul %362, %363, %cst_135 {dimension_numbers = #tpu.dot_dimension_numbers<[1], [0], [0], [1], [0, 0, 1, 1], [], []>} : vector<8x16xf32>, vector<16x64xf32>, vector<8x64xf32> -> vector<8x64xf32>
    %365 = arith.addf %344, %364 : vector<8x64xf32>
    %366 = vector.extract_strided_slice %280 {offsets = [8, 0], sizes = [8, 16], strides = [1, 1]} : vector<16x192xf32> to vector<8x16xf32>
    %367 = vector.extract_strided_slice %280 {offsets = [8, 64], sizes = [8, 16], strides = [1, 1]} : vector<16x192xf32> to vector<8x16xf32>
    %368 = vector.extract_strided_slice %280 {offsets = [8, 128], sizes = [8, 16], strides = [1, 1]} : vector<16x192xf32> to vector<8x16xf32>
    %cst_136 = arith.constant dense<0.000000e+00> : vector<8x8xf32>
    %369 = tpu.matmul %366, %367, %cst_136 {dimension_numbers = #tpu.dot_dimension_numbers<[1], [1], [0], [0], [0, 0, 1, 0], [], []>} : vector<8x16xf32>, vector<8x16xf32>, vector<8x8xf32> -> vector<8x8xf32>
    %cst_137 = arith.constant 1.000000e+00 : f32
    %370 = vector.broadcast %cst_137 : f32 to vector<8x8xf32>
    %371 = arith.mulf %369, %370 : vector<8x8xf32>
    %372 = arith.addf %371, %25 : vector<8x8xf32>
    %cst_138 = arith.constant dense<0xFF800000> : vector<8xf32>
    %373 = vector.multi_reduction <maximumf>, %372, %cst_138 [1] : vector<8x8xf32> to vector<8xf32>
    %374 = vector.shape_cast %373 : vector<8xf32> to vector<8x1xf32>
    %375 = vector.broadcast %374 : vector<8x1xf32> to vector<8x8xf32>
    %376 = arith.subf %372, %375 : vector<8x8xf32>
    %377 = math.exp %376 : vector<8x8xf32>
    %cst_139 = arith.constant dense<0.000000e+00> : vector<8xf32>
    %378 = vector.multi_reduction <add>, %377, %cst_139 [1] : vector<8x8xf32> to vector<8xf32>
    %379 = vector.shape_cast %378 : vector<8xf32> to vector<8x1xf32>
    %380 = tpu.reciprocal %379 {approx = true} : vector<8x1xf32> -> vector<8x1xf32>
    %381 = vector.broadcast %380 : vector<8x1xf32> to vector<8x8xf32>
    %382 = arith.mulf %377, %381 : vector<8x8xf32>
    %cst_140 = arith.constant dense<0.000000e+00> : vector<8x16xf32>
    %383 = tpu.matmul %382, %368, %cst_140 {dimension_numbers = #tpu.dot_dimension_numbers<[1], [0], [0], [1], [0, 0, 1, 1], [], []>} : vector<8x8xf32>, vector<8x16xf32>, vector<8x16xf32> -> vector<8x16xf32>
    %384 = vector.extract_strided_slice %282 {offsets = [0, 0], sizes = [16, 64], strides = [1, 1]} : vector<64x64xf32> to vector<16x64xf32>
    %cst_141 = arith.constant dense<0.000000e+00> : vector<8x64xf32>
    %385 = tpu.matmul %383, %384, %cst_141 {dimension_numbers = #tpu.dot_dimension_numbers<[1], [0], [0], [1], [0, 0, 1, 1], [], []>} : vector<8x16xf32>, vector<16x64xf32>, vector<8x64xf32> -> vector<8x64xf32>
    %386 = vector.extract_strided_slice %280 {offsets = [8, 16], sizes = [8, 16], strides = [1, 1]} : vector<16x192xf32> to vector<8x16xf32>
    %387 = vector.extract_strided_slice %280 {offsets = [8, 80], sizes = [8, 16], strides = [1, 1]} : vector<16x192xf32> to vector<8x16xf32>
    %388 = vector.extract_strided_slice %280 {offsets = [8, 144], sizes = [8, 16], strides = [1, 1]} : vector<16x192xf32> to vector<8x16xf32>
    %cst_142 = arith.constant dense<0.000000e+00> : vector<8x8xf32>
    %389 = tpu.matmul %386, %387, %cst_142 {dimension_numbers = #tpu.dot_dimension_numbers<[1], [1], [0], [0], [0, 0, 1, 0], [], []>} : vector<8x16xf32>, vector<8x16xf32>, vector<8x8xf32> -> vector<8x8xf32>
    %cst_143 = arith.constant 1.000000e+00 : f32
    %390 = vector.broadcast %cst_143 : f32 to vector<8x8xf32>
    %391 = arith.mulf %389, %390 : vector<8x8xf32>
    %392 = arith.addf %391, %30 : vector<8x8xf32>
    %cst_144 = arith.constant dense<0xFF800000> : vector<8xf32>
    %393 = vector.multi_reduction <maximumf>, %392, %cst_144 [1] : vector<8x8xf32> to vector<8xf32>
    %394 = vector.shape_cast %393 : vector<8xf32> to vector<8x1xf32>
    %395 = vector.broadcast %394 : vector<8x1xf32> to vector<8x8xf32>
    %396 = arith.subf %392, %395 : vector<8x8xf32>
    %397 = math.exp %396 : vector<8x8xf32>
    %cst_145 = arith.constant dense<0.000000e+00> : vector<8xf32>
    %398 = vector.multi_reduction <add>, %397, %cst_145 [1] : vector<8x8xf32> to vector<8xf32>
    %399 = vector.shape_cast %398 : vector<8xf32> to vector<8x1xf32>
    %400 = tpu.reciprocal %399 {approx = true} : vector<8x1xf32> -> vector<8x1xf32>
    %401 = vector.broadcast %400 : vector<8x1xf32> to vector<8x8xf32>
    %402 = arith.mulf %397, %401 : vector<8x8xf32>
    %cst_146 = arith.constant dense<0.000000e+00> : vector<8x16xf32>
    %403 = tpu.matmul %402, %388, %cst_146 {dimension_numbers = #tpu.dot_dimension_numbers<[1], [0], [0], [1], [0, 0, 1, 1], [], []>} : vector<8x8xf32>, vector<8x16xf32>, vector<8x16xf32> -> vector<8x16xf32>
    %404 = vector.extract_strided_slice %282 {offsets = [16, 0], sizes = [16, 64], strides = [1, 1]} : vector<64x64xf32> to vector<16x64xf32>
    %cst_147 = arith.constant dense<0.000000e+00> : vector<8x64xf32>
    %405 = tpu.matmul %403, %404, %cst_147 {dimension_numbers = #tpu.dot_dimension_numbers<[1], [0], [0], [1], [0, 0, 1, 1], [], []>} : vector<8x16xf32>, vector<16x64xf32>, vector<8x64xf32> -> vector<8x64xf32>
    %406 = arith.addf %385, %405 : vector<8x64xf32>
    %407 = vector.extract_strided_slice %280 {offsets = [8, 32], sizes = [8, 16], strides = [1, 1]} : vector<16x192xf32> to vector<8x16xf32>
    %408 = vector.extract_strided_slice %280 {offsets = [8, 96], sizes = [8, 16], strides = [1, 1]} : vector<16x192xf32> to vector<8x16xf32>
    %409 = vector.extract_strided_slice %280 {offsets = [8, 160], sizes = [8, 16], strides = [1, 1]} : vector<16x192xf32> to vector<8x16xf32>
    %cst_148 = arith.constant dense<0.000000e+00> : vector<8x8xf32>
    %410 = tpu.matmul %407, %408, %cst_148 {dimension_numbers = #tpu.dot_dimension_numbers<[1], [1], [0], [0], [0, 0, 1, 0], [], []>} : vector<8x16xf32>, vector<8x16xf32>, vector<8x8xf32> -> vector<8x8xf32>
    %cst_149 = arith.constant 1.000000e+00 : f32
    %411 = vector.broadcast %cst_149 : f32 to vector<8x8xf32>
    %412 = arith.mulf %410, %411 : vector<8x8xf32>
    %413 = arith.addf %412, %35 : vector<8x8xf32>
    %cst_150 = arith.constant dense<0xFF800000> : vector<8xf32>
    %414 = vector.multi_reduction <maximumf>, %413, %cst_150 [1] : vector<8x8xf32> to vector<8xf32>
    %415 = vector.shape_cast %414 : vector<8xf32> to vector<8x1xf32>
    %416 = vector.broadcast %415 : vector<8x1xf32> to vector<8x8xf32>
    %417 = arith.subf %413, %416 : vector<8x8xf32>
    %418 = math.exp %417 : vector<8x8xf32>
    %cst_151 = arith.constant dense<0.000000e+00> : vector<8xf32>
    %419 = vector.multi_reduction <add>, %418, %cst_151 [1] : vector<8x8xf32> to vector<8xf32>
    %420 = vector.shape_cast %419 : vector<8xf32> to vector<8x1xf32>
    %421 = tpu.reciprocal %420 {approx = true} : vector<8x1xf32> -> vector<8x1xf32>
    %422 = vector.broadcast %421 : vector<8x1xf32> to vector<8x8xf32>
    %423 = arith.mulf %418, %422 : vector<8x8xf32>
    %cst_152 = arith.constant dense<0.000000e+00> : vector<8x16xf32>
    %424 = tpu.matmul %423, %409, %cst_152 {dimension_numbers = #tpu.dot_dimension_numbers<[1], [0], [0], [1], [0, 0, 1, 1], [], []>} : vector<8x8xf32>, vector<8x16xf32>, vector<8x16xf32> -> vector<8x16xf32>
    %425 = vector.extract_strided_slice %282 {offsets = [32, 0], sizes = [16, 64], strides = [1, 1]} : vector<64x64xf32> to vector<16x64xf32>
    %cst_153 = arith.constant dense<0.000000e+00> : vector<8x64xf32>
    %426 = tpu.matmul %424, %425, %cst_153 {dimension_numbers = #tpu.dot_dimension_numbers<[1], [0], [0], [1], [0, 0, 1, 1], [], []>} : vector<8x16xf32>, vector<16x64xf32>, vector<8x64xf32> -> vector<8x64xf32>
    %427 = arith.addf %406, %426 : vector<8x64xf32>
    %428 = vector.extract_strided_slice %280 {offsets = [8, 48], sizes = [8, 16], strides = [1, 1]} : vector<16x192xf32> to vector<8x16xf32>
    %429 = vector.extract_strided_slice %280 {offsets = [8, 112], sizes = [8, 16], strides = [1, 1]} : vector<16x192xf32> to vector<8x16xf32>
    %430 = vector.extract_strided_slice %280 {offsets = [8, 176], sizes = [8, 16], strides = [1, 1]} : vector<16x192xf32> to vector<8x16xf32>
    %cst_154 = arith.constant dense<0.000000e+00> : vector<8x8xf32>
    %431 = tpu.matmul %428, %429, %cst_154 {dimension_numbers = #tpu.dot_dimension_numbers<[1], [1], [0], [0], [0, 0, 1, 0], [], []>} : vector<8x16xf32>, vector<8x16xf32>, vector<8x8xf32> -> vector<8x8xf32>
    %cst_155 = arith.constant 1.000000e+00 : f32
    %432 = vector.broadcast %cst_155 : f32 to vector<8x8xf32>
    %433 = arith.mulf %431, %432 : vector<8x8xf32>
    %434 = arith.addf %433, %40 : vector<8x8xf32>
    %cst_156 = arith.constant dense<0xFF800000> : vector<8xf32>
    %435 = vector.multi_reduction <maximumf>, %434, %cst_156 [1] : vector<8x8xf32> to vector<8xf32>
    %436 = vector.shape_cast %435 : vector<8xf32> to vector<8x1xf32>
    %437 = vector.broadcast %436 : vector<8x1xf32> to vector<8x8xf32>
    %438 = arith.subf %434, %437 : vector<8x8xf32>
    %439 = math.exp %438 : vector<8x8xf32>
    %cst_157 = arith.constant dense<0.000000e+00> : vector<8xf32>
    %440 = vector.multi_reduction <add>, %439, %cst_157 [1] : vector<8x8xf32> to vector<8xf32>
    %441 = vector.shape_cast %440 : vector<8xf32> to vector<8x1xf32>
    %442 = tpu.reciprocal %441 {approx = true} : vector<8x1xf32> -> vector<8x1xf32>
    %443 = vector.broadcast %442 : vector<8x1xf32> to vector<8x8xf32>
    %444 = arith.mulf %439, %443 : vector<8x8xf32>
    %cst_158 = arith.constant dense<0.000000e+00> : vector<8x16xf32>
    %445 = tpu.matmul %444, %430, %cst_158 {dimension_numbers = #tpu.dot_dimension_numbers<[1], [0], [0], [1], [0, 0, 1, 1], [], []>} : vector<8x8xf32>, vector<8x16xf32>, vector<8x16xf32> -> vector<8x16xf32>
    %446 = vector.extract_strided_slice %282 {offsets = [48, 0], sizes = [16, 64], strides = [1, 1]} : vector<64x64xf32> to vector<16x64xf32>
    %cst_159 = arith.constant dense<0.000000e+00> : vector<8x64xf32>
    %447 = tpu.matmul %445, %446, %cst_159 {dimension_numbers = #tpu.dot_dimension_numbers<[1], [0], [0], [1], [0, 0, 1, 1], [], []>} : vector<8x16xf32>, vector<16x64xf32>, vector<8x64xf32> -> vector<8x64xf32>
    %448 = arith.addf %427, %447 : vector<8x64xf32>
    %449 = tpu.concatenate %365, %448 in 0 : vector<8x64xf32>, vector<8x64xf32> -> vector<16x64xf32>
    %450 = arith.addf %264, %449 : vector<16x64xf32>
    %451 = vector.extract_strided_slice %56 {offsets = [1, 0], sizes = [1, 64], strides = [1, 1]} : vector<2x64xf32> to vector<1x64xf32>
    %452 = arith.mulf %450, %450 : vector<16x64xf32>
    %cst_160 = arith.constant dense<0.000000e+00> : vector<16xf32>
    %453 = vector.multi_reduction <add>, %452, %cst_160 [1] : vector<16x64xf32> to vector<16xf32>
    %454 = vector.shape_cast %453 : vector<16xf32> to vector<16x1xf32>
    %cst_161 = arith.constant 6.400000e+01 : f32
    %455 = vector.broadcast %cst_161 : f32 to vector<16x1xf32>
    %456 = arith.divf %454, %455 : vector<16x1xf32>
    %cst_162 = arith.constant 9.99999997E-7 : f32
    %457 = vector.broadcast %cst_162 : f32 to vector<16x1xf32>
    %458 = arith.addf %456, %457 : vector<16x1xf32>
    %459 = math.rsqrt %458 : vector<16x1xf32>
    %460 = vector.broadcast %459 : vector<16x1xf32> to vector<16x64xf32>
    %461 = arith.mulf %450, %460 : vector<16x64xf32>
    %462 = vector.broadcast %451 : vector<1x64xf32> to vector<16x64xf32>
    %463 = arith.mulf %461, %462 : vector<16x64xf32>
    %c1_163 = arith.constant 1 : index
    %c0_164 = arith.constant 0 : index
    %c0_165 = arith.constant 0 : index
    %464 = vector.load %arg9[%c1_163, %c0_164, %c0_165] : memref<2x64x128xf32, #tpu.memory_space<vmem>>, vector<1x64x128xf32>
    %465 = vector.shape_cast %464 : vector<1x64x128xf32> to vector<64x128xf32>
    %cst_166 = arith.constant dense<0.000000e+00> : vector<16x128xf32>
    %466 = tpu.matmul %463, %465, %cst_166 {dimension_numbers = #tpu.dot_dimension_numbers<[1], [0], [0], [1], [0, 0, 1, 1], [], []>} : vector<16x64xf32>, vector<64x128xf32>, vector<16x128xf32> -> vector<16x128xf32>
    %cst_167 = arith.constant 0.000000e+00 : f32
    %467 = vector.broadcast %cst_167 : f32 to vector<16x128xf32>
    %468 = arith.maximumf %466, %467 : vector<16x128xf32>
    %c1_168 = arith.constant 1 : index
    %c0_169 = arith.constant 0 : index
    %c0_170 = arith.constant 0 : index
    %469 = vector.load %arg10[%c1_168, %c0_169, %c0_170] : memref<2x128x64xf32, #tpu.memory_space<vmem>>, vector<1x128x64xf32>
    %470 = vector.shape_cast %469 : vector<1x128x64xf32> to vector<128x64xf32>
    %cst_171 = arith.constant dense<0.000000e+00> : vector<16x64xf32>
    %471 = tpu.matmul %468, %470, %cst_171 {dimension_numbers = #tpu.dot_dimension_numbers<[1], [0], [0], [1], [0, 0, 1, 1], [], []>} : vector<16x128xf32>, vector<128x64xf32>, vector<16x64xf32> -> vector<16x64xf32>
    %472 = arith.addf %450, %471 : vector<16x64xf32>
    %c0_172 = arith.constant 0 : index
    %c0_173 = arith.constant 0 : index
    %473 = vector.load %arg11[%c0_172, %c0_173] : memref<1x64xf32, #tpu.memory_space<vmem>>, vector<1x64xf32>
    %474 = arith.mulf %472, %472 : vector<16x64xf32>
    %cst_174 = arith.constant dense<0.000000e+00> : vector<16xf32>
    %475 = vector.multi_reduction <add>, %474, %cst_174 [1] : vector<16x64xf32> to vector<16xf32>
    %476 = vector.shape_cast %475 : vector<16xf32> to vector<16x1xf32>
    %cst_175 = arith.constant 6.400000e+01 : f32
    %477 = vector.broadcast %cst_175 : f32 to vector<16x1xf32>
    %478 = arith.divf %476, %477 : vector<16x1xf32>
    %cst_176 = arith.constant 9.99999997E-7 : f32
    %479 = vector.broadcast %cst_176 : f32 to vector<16x1xf32>
    %480 = arith.addf %478, %479 : vector<16x1xf32>
    %481 = math.rsqrt %480 : vector<16x1xf32>
    %482 = vector.broadcast %481 : vector<16x1xf32> to vector<16x64xf32>
    %483 = arith.mulf %472, %482 : vector<16x64xf32>
    %484 = vector.broadcast %473 : vector<1x64xf32> to vector<16x64xf32>
    %485 = arith.mulf %483, %484 : vector<16x64xf32>
    %c0_177 = arith.constant 0 : index
    %c0_178 = arith.constant 0 : index
    %486 = vector.load %arg12[%c0_177, %c0_178] : memref<64x64xf32, #tpu.memory_space<vmem>>, vector<64x64xf32>
    %cst_179 = arith.constant dense<0.000000e+00> : vector<16x64xf32>
    %487 = tpu.matmul %485, %486, %cst_179 {dimension_numbers = #tpu.dot_dimension_numbers<[1], [0], [0], [1], [0, 0, 1, 1], [], []>} : vector<16x64xf32>, vector<64x64xf32>, vector<16x64xf32> -> vector<16x64xf32>
    %c0_180 = arith.constant 0 : index
    %c0_181 = arith.constant 0 : index
    %488 = vector.load %arg13[%c0_180, %c0_181] : memref<1x64xf32, #tpu.memory_space<vmem>>, vector<1x64xf32>
    %489 = vector.broadcast %488 : vector<1x64xf32> to vector<16x64xf32>
    %490 = arith.addf %487, %489 : vector<16x64xf32>
    %c0_182 = arith.constant 0 : index
    %c0_183 = arith.constant 0 : index
    %491 = vector.load %arg14[%c0_182, %c0_183] : memref<1x64xf32, #tpu.memory_space<vmem>>, vector<1x64xf32>
    %c0_184 = arith.constant 0 : index
    %c0_185 = arith.constant 0 : index
    %492 = vector.load %arg15[%c0_184, %c0_185] : memref<1x64xf32, #tpu.memory_space<vmem>>, vector<1x64xf32>
    %cst_186 = arith.constant dense<0.000000e+00> : vector<16xf32>
    %493 = vector.multi_reduction <add>, %490, %cst_186 [1] : vector<16x64xf32> to vector<16xf32>
    %494 = vector.shape_cast %493 : vector<16xf32> to vector<16x1xf32>
    %cst_187 = arith.constant 6.400000e+01 : f32
    %495 = vector.broadcast %cst_187 : f32 to vector<16x1xf32>
    %496 = arith.divf %494, %495 : vector<16x1xf32>
    %497 = vector.broadcast %496 : vector<16x1xf32> to vector<16x64xf32>
    %498 = arith.subf %490, %497 : vector<16x64xf32>
    %499 = arith.mulf %498, %498 : vector<16x64xf32>
    %cst_188 = arith.constant dense<0.000000e+00> : vector<16xf32>
    %500 = vector.multi_reduction <add>, %499, %cst_188 [1] : vector<16x64xf32> to vector<16xf32>
    %501 = vector.shape_cast %500 : vector<16xf32> to vector<16x1xf32>
    %cst_189 = arith.constant 6.400000e+01 : f32
    %502 = vector.broadcast %cst_189 : f32 to vector<16x1xf32>
    %503 = arith.divf %501, %502 : vector<16x1xf32>
    %cst_190 = arith.constant 9.99999974E-6 : f32
    %504 = vector.broadcast %cst_190 : f32 to vector<16x1xf32>
    %505 = arith.addf %503, %504 : vector<16x1xf32>
    %506 = math.rsqrt %505 : vector<16x1xf32>
    %507 = vector.broadcast %506 : vector<16x1xf32> to vector<16x64xf32>
    %508 = arith.mulf %498, %507 : vector<16x64xf32>
    %509 = vector.broadcast %491 : vector<1x64xf32> to vector<16x64xf32>
    %510 = arith.mulf %508, %509 : vector<16x64xf32>
    %511 = vector.broadcast %492 : vector<1x64xf32> to vector<16x64xf32>
    %512 = arith.addf %510, %511 : vector<16x64xf32>
    %c0_191 = arith.constant 0 : index
    %c0_192 = arith.constant 0 : index
    %513 = vector.load %arg16[%c0_191, %c0_192] : memref<64x192xf32, #tpu.memory_space<vmem>>, vector<64x192xf32>
    %cst_193 = arith.constant dense<0.000000e+00> : vector<16x192xf32>
    %514 = tpu.matmul %512, %513, %cst_193 {dimension_numbers = #tpu.dot_dimension_numbers<[1], [0], [0], [1], [0, 0, 1, 1], [], []>} : vector<16x64xf32>, vector<64x192xf32>, vector<16x192xf32> -> vector<16x192xf32>
    %c0_194 = arith.constant 0 : index
    %c0_195 = arith.constant 0 : index
    %515 = vector.load %arg17[%c0_194, %c0_195] : memref<1x192xf32, #tpu.memory_space<vmem>>, vector<1x192xf32>
    %516 = vector.broadcast %515 : vector<1x192xf32> to vector<16x192xf32>
    %517 = arith.addf %514, %516 : vector<16x192xf32>
    %c0_196 = arith.constant 0 : index
    %c0_197 = arith.constant 0 : index
    %518 = vector.load %arg18[%c0_196, %c0_197] : memref<64x64xf32, #tpu.memory_space<vmem>>, vector<64x64xf32>
    %519 = vector.extract_strided_slice %517 {offsets = [0, 0], sizes = [8, 16], strides = [1, 1]} : vector<16x192xf32> to vector<8x16xf32>
    %520 = vector.extract_strided_slice %517 {offsets = [0, 64], sizes = [8, 16], strides = [1, 1]} : vector<16x192xf32> to vector<8x16xf32>
    %521 = vector.extract_strided_slice %517 {offsets = [0, 128], sizes = [8, 16], strides = [1, 1]} : vector<16x192xf32> to vector<8x16xf32>
    %cst_198 = arith.constant dense<0.000000e+00> : vector<8x8xf32>
    %522 = tpu.matmul %519, %520, %cst_198 {dimension_numbers = #tpu.dot_dimension_numbers<[1], [1], [0], [0], [0, 0, 1, 0], [], []>} : vector<8x16xf32>, vector<8x16xf32>, vector<8x8xf32> -> vector<8x8xf32>
    %cst_199 = arith.constant 2.500000e-01 : f32
    %523 = vector.broadcast %cst_199 : f32 to vector<8x8xf32>
    %524 = arith.mulf %522, %523 : vector<8x8xf32>
    %525 = vector.broadcast %41 : vector<1x8xf32> to vector<8x8xf32>
    %526 = arith.addf %524, %525 : vector<8x8xf32>
    %cst_200 = arith.constant dense<0xFF800000> : vector<8xf32>
    %527 = vector.multi_reduction <maximumf>, %526, %cst_200 [1] : vector<8x8xf32> to vector<8xf32>
    %528 = vector.shape_cast %527 : vector<8xf32> to vector<8x1xf32>
    %529 = vector.broadcast %528 : vector<8x1xf32> to vector<8x8xf32>
    %530 = arith.subf %526, %529 : vector<8x8xf32>
    %531 = math.exp %530 : vector<8x8xf32>
    %cst_201 = arith.constant dense<0.000000e+00> : vector<8xf32>
    %532 = vector.multi_reduction <add>, %531, %cst_201 [1] : vector<8x8xf32> to vector<8xf32>
    %533 = vector.shape_cast %532 : vector<8xf32> to vector<8x1xf32>
    %534 = tpu.reciprocal %533 {approx = true} : vector<8x1xf32> -> vector<8x1xf32>
    %535 = vector.broadcast %534 : vector<8x1xf32> to vector<8x8xf32>
    %536 = arith.mulf %531, %535 : vector<8x8xf32>
    %cst_202 = arith.constant dense<0.000000e+00> : vector<8x16xf32>
    %537 = tpu.matmul %536, %521, %cst_202 {dimension_numbers = #tpu.dot_dimension_numbers<[1], [0], [0], [1], [0, 0, 1, 1], [], []>} : vector<8x8xf32>, vector<8x16xf32>, vector<8x16xf32> -> vector<8x16xf32>
    %538 = vector.extract_strided_slice %518 {offsets = [0, 0], sizes = [16, 64], strides = [1, 1]} : vector<64x64xf32> to vector<16x64xf32>
    %cst_203 = arith.constant dense<0.000000e+00> : vector<8x64xf32>
    %539 = tpu.matmul %537, %538, %cst_203 {dimension_numbers = #tpu.dot_dimension_numbers<[1], [0], [0], [1], [0, 0, 1, 1], [], []>} : vector<8x16xf32>, vector<16x64xf32>, vector<8x64xf32> -> vector<8x64xf32>
    %540 = vector.extract_strided_slice %517 {offsets = [0, 16], sizes = [8, 16], strides = [1, 1]} : vector<16x192xf32> to vector<8x16xf32>
    %541 = vector.extract_strided_slice %517 {offsets = [0, 80], sizes = [8, 16], strides = [1, 1]} : vector<16x192xf32> to vector<8x16xf32>
    %542 = vector.extract_strided_slice %517 {offsets = [0, 144], sizes = [8, 16], strides = [1, 1]} : vector<16x192xf32> to vector<8x16xf32>
    %cst_204 = arith.constant dense<0.000000e+00> : vector<8x8xf32>
    %543 = tpu.matmul %540, %541, %cst_204 {dimension_numbers = #tpu.dot_dimension_numbers<[1], [1], [0], [0], [0, 0, 1, 0], [], []>} : vector<8x16xf32>, vector<8x16xf32>, vector<8x8xf32> -> vector<8x8xf32>
    %cst_205 = arith.constant 2.500000e-01 : f32
    %544 = vector.broadcast %cst_205 : f32 to vector<8x8xf32>
    %545 = arith.mulf %543, %544 : vector<8x8xf32>
    %546 = vector.broadcast %42 : vector<1x8xf32> to vector<8x8xf32>
    %547 = arith.addf %545, %546 : vector<8x8xf32>
    %cst_206 = arith.constant dense<0xFF800000> : vector<8xf32>
    %548 = vector.multi_reduction <maximumf>, %547, %cst_206 [1] : vector<8x8xf32> to vector<8xf32>
    %549 = vector.shape_cast %548 : vector<8xf32> to vector<8x1xf32>
    %550 = vector.broadcast %549 : vector<8x1xf32> to vector<8x8xf32>
    %551 = arith.subf %547, %550 : vector<8x8xf32>
    %552 = math.exp %551 : vector<8x8xf32>
    %cst_207 = arith.constant dense<0.000000e+00> : vector<8xf32>
    %553 = vector.multi_reduction <add>, %552, %cst_207 [1] : vector<8x8xf32> to vector<8xf32>
    %554 = vector.shape_cast %553 : vector<8xf32> to vector<8x1xf32>
    %555 = tpu.reciprocal %554 {approx = true} : vector<8x1xf32> -> vector<8x1xf32>
    %556 = vector.broadcast %555 : vector<8x1xf32> to vector<8x8xf32>
    %557 = arith.mulf %552, %556 : vector<8x8xf32>
    %cst_208 = arith.constant dense<0.000000e+00> : vector<8x16xf32>
    %558 = tpu.matmul %557, %542, %cst_208 {dimension_numbers = #tpu.dot_dimension_numbers<[1], [0], [0], [1], [0, 0, 1, 1], [], []>} : vector<8x8xf32>, vector<8x16xf32>, vector<8x16xf32> -> vector<8x16xf32>
    %559 = vector.extract_strided_slice %518 {offsets = [16, 0], sizes = [16, 64], strides = [1, 1]} : vector<64x64xf32> to vector<16x64xf32>
    %cst_209 = arith.constant dense<0.000000e+00> : vector<8x64xf32>
    %560 = tpu.matmul %558, %559, %cst_209 {dimension_numbers = #tpu.dot_dimension_numbers<[1], [0], [0], [1], [0, 0, 1, 1], [], []>} : vector<8x16xf32>, vector<16x64xf32>, vector<8x64xf32> -> vector<8x64xf32>
    %561 = arith.addf %539, %560 : vector<8x64xf32>
    %562 = vector.extract_strided_slice %517 {offsets = [0, 32], sizes = [8, 16], strides = [1, 1]} : vector<16x192xf32> to vector<8x16xf32>
    %563 = vector.extract_strided_slice %517 {offsets = [0, 96], sizes = [8, 16], strides = [1, 1]} : vector<16x192xf32> to vector<8x16xf32>
    %564 = vector.extract_strided_slice %517 {offsets = [0, 160], sizes = [8, 16], strides = [1, 1]} : vector<16x192xf32> to vector<8x16xf32>
    %cst_210 = arith.constant dense<0.000000e+00> : vector<8x8xf32>
    %565 = tpu.matmul %562, %563, %cst_210 {dimension_numbers = #tpu.dot_dimension_numbers<[1], [1], [0], [0], [0, 0, 1, 0], [], []>} : vector<8x16xf32>, vector<8x16xf32>, vector<8x8xf32> -> vector<8x8xf32>
    %cst_211 = arith.constant 2.500000e-01 : f32
    %566 = vector.broadcast %cst_211 : f32 to vector<8x8xf32>
    %567 = arith.mulf %565, %566 : vector<8x8xf32>
    %568 = vector.broadcast %43 : vector<1x8xf32> to vector<8x8xf32>
    %569 = arith.addf %567, %568 : vector<8x8xf32>
    %cst_212 = arith.constant dense<0xFF800000> : vector<8xf32>
    %570 = vector.multi_reduction <maximumf>, %569, %cst_212 [1] : vector<8x8xf32> to vector<8xf32>
    %571 = vector.shape_cast %570 : vector<8xf32> to vector<8x1xf32>
    %572 = vector.broadcast %571 : vector<8x1xf32> to vector<8x8xf32>
    %573 = arith.subf %569, %572 : vector<8x8xf32>
    %574 = math.exp %573 : vector<8x8xf32>
    %cst_213 = arith.constant dense<0.000000e+00> : vector<8xf32>
    %575 = vector.multi_reduction <add>, %574, %cst_213 [1] : vector<8x8xf32> to vector<8xf32>
    %576 = vector.shape_cast %575 : vector<8xf32> to vector<8x1xf32>
    %577 = tpu.reciprocal %576 {approx = true} : vector<8x1xf32> -> vector<8x1xf32>
    %578 = vector.broadcast %577 : vector<8x1xf32> to vector<8x8xf32>
    %579 = arith.mulf %574, %578 : vector<8x8xf32>
    %cst_214 = arith.constant dense<0.000000e+00> : vector<8x16xf32>
    %580 = tpu.matmul %579, %564, %cst_214 {dimension_numbers = #tpu.dot_dimension_numbers<[1], [0], [0], [1], [0, 0, 1, 1], [], []>} : vector<8x8xf32>, vector<8x16xf32>, vector<8x16xf32> -> vector<8x16xf32>
    %581 = vector.extract_strided_slice %518 {offsets = [32, 0], sizes = [16, 64], strides = [1, 1]} : vector<64x64xf32> to vector<16x64xf32>
    %cst_215 = arith.constant dense<0.000000e+00> : vector<8x64xf32>
    %582 = tpu.matmul %580, %581, %cst_215 {dimension_numbers = #tpu.dot_dimension_numbers<[1], [0], [0], [1], [0, 0, 1, 1], [], []>} : vector<8x16xf32>, vector<16x64xf32>, vector<8x64xf32> -> vector<8x64xf32>
    %583 = arith.addf %561, %582 : vector<8x64xf32>
    %584 = vector.extract_strided_slice %517 {offsets = [0, 48], sizes = [8, 16], strides = [1, 1]} : vector<16x192xf32> to vector<8x16xf32>
    %585 = vector.extract_strided_slice %517 {offsets = [0, 112], sizes = [8, 16], strides = [1, 1]} : vector<16x192xf32> to vector<8x16xf32>
    %586 = vector.extract_strided_slice %517 {offsets = [0, 176], sizes = [8, 16], strides = [1, 1]} : vector<16x192xf32> to vector<8x16xf32>
    %cst_216 = arith.constant dense<0.000000e+00> : vector<8x8xf32>
    %587 = tpu.matmul %584, %585, %cst_216 {dimension_numbers = #tpu.dot_dimension_numbers<[1], [1], [0], [0], [0, 0, 1, 0], [], []>} : vector<8x16xf32>, vector<8x16xf32>, vector<8x8xf32> -> vector<8x8xf32>
    %cst_217 = arith.constant 2.500000e-01 : f32
    %588 = vector.broadcast %cst_217 : f32 to vector<8x8xf32>
    %589 = arith.mulf %587, %588 : vector<8x8xf32>
    %590 = vector.broadcast %44 : vector<1x8xf32> to vector<8x8xf32>
    %591 = arith.addf %589, %590 : vector<8x8xf32>
    %cst_218 = arith.constant dense<0xFF800000> : vector<8xf32>
    %592 = vector.multi_reduction <maximumf>, %591, %cst_218 [1] : vector<8x8xf32> to vector<8xf32>
    %593 = vector.shape_cast %592 : vector<8xf32> to vector<8x1xf32>
    %594 = vector.broadcast %593 : vector<8x1xf32> to vector<8x8xf32>
    %595 = arith.subf %591, %594 : vector<8x8xf32>
    %596 = math.exp %595 : vector<8x8xf32>
    %cst_219 = arith.constant dense<0.000000e+00> : vector<8xf32>
    %597 = vector.multi_reduction <add>, %596, %cst_219 [1] : vector<8x8xf32> to vector<8xf32>
    %598 = vector.shape_cast %597 : vector<8xf32> to vector<8x1xf32>
    %599 = tpu.reciprocal %598 {approx = true} : vector<8x1xf32> -> vector<8x1xf32>
    %600 = vector.broadcast %599 : vector<8x1xf32> to vector<8x8xf32>
    %601 = arith.mulf %596, %600 : vector<8x8xf32>
    %cst_220 = arith.constant dense<0.000000e+00> : vector<8x16xf32>
    %602 = tpu.matmul %601, %586, %cst_220 {dimension_numbers = #tpu.dot_dimension_numbers<[1], [0], [0], [1], [0, 0, 1, 1], [], []>} : vector<8x8xf32>, vector<8x16xf32>, vector<8x16xf32> -> vector<8x16xf32>
    %603 = vector.extract_strided_slice %518 {offsets = [48, 0], sizes = [16, 64], strides = [1, 1]} : vector<64x64xf32> to vector<16x64xf32>
    %cst_221 = arith.constant dense<0.000000e+00> : vector<8x64xf32>
    %604 = tpu.matmul %602, %603, %cst_221 {dimension_numbers = #tpu.dot_dimension_numbers<[1], [0], [0], [1], [0, 0, 1, 1], [], []>} : vector<8x16xf32>, vector<16x64xf32>, vector<8x64xf32> -> vector<8x64xf32>
    %605 = arith.addf %583, %604 : vector<8x64xf32>
    %606 = vector.extract_strided_slice %517 {offsets = [8, 0], sizes = [8, 16], strides = [1, 1]} : vector<16x192xf32> to vector<8x16xf32>
    %607 = vector.extract_strided_slice %517 {offsets = [8, 64], sizes = [8, 16], strides = [1, 1]} : vector<16x192xf32> to vector<8x16xf32>
    %608 = vector.extract_strided_slice %517 {offsets = [8, 128], sizes = [8, 16], strides = [1, 1]} : vector<16x192xf32> to vector<8x16xf32>
    %cst_222 = arith.constant dense<0.000000e+00> : vector<8x8xf32>
    %609 = tpu.matmul %606, %607, %cst_222 {dimension_numbers = #tpu.dot_dimension_numbers<[1], [1], [0], [0], [0, 0, 1, 0], [], []>} : vector<8x16xf32>, vector<8x16xf32>, vector<8x8xf32> -> vector<8x8xf32>
    %cst_223 = arith.constant 2.500000e-01 : f32
    %610 = vector.broadcast %cst_223 : f32 to vector<8x8xf32>
    %611 = arith.mulf %609, %610 : vector<8x8xf32>
    %612 = vector.broadcast %45 : vector<1x8xf32> to vector<8x8xf32>
    %613 = arith.addf %611, %612 : vector<8x8xf32>
    %cst_224 = arith.constant dense<0xFF800000> : vector<8xf32>
    %614 = vector.multi_reduction <maximumf>, %613, %cst_224 [1] : vector<8x8xf32> to vector<8xf32>
    %615 = vector.shape_cast %614 : vector<8xf32> to vector<8x1xf32>
    %616 = vector.broadcast %615 : vector<8x1xf32> to vector<8x8xf32>
    %617 = arith.subf %613, %616 : vector<8x8xf32>
    %618 = math.exp %617 : vector<8x8xf32>
    %cst_225 = arith.constant dense<0.000000e+00> : vector<8xf32>
    %619 = vector.multi_reduction <add>, %618, %cst_225 [1] : vector<8x8xf32> to vector<8xf32>
    %620 = vector.shape_cast %619 : vector<8xf32> to vector<8x1xf32>
    %621 = tpu.reciprocal %620 {approx = true} : vector<8x1xf32> -> vector<8x1xf32>
    %622 = vector.broadcast %621 : vector<8x1xf32> to vector<8x8xf32>
    %623 = arith.mulf %618, %622 : vector<8x8xf32>
    %cst_226 = arith.constant dense<0.000000e+00> : vector<8x16xf32>
    %624 = tpu.matmul %623, %608, %cst_226 {dimension_numbers = #tpu.dot_dimension_numbers<[1], [0], [0], [1], [0, 0, 1, 1], [], []>} : vector<8x8xf32>, vector<8x16xf32>, vector<8x16xf32> -> vector<8x16xf32>
    %625 = vector.extract_strided_slice %518 {offsets = [0, 0], sizes = [16, 64], strides = [1, 1]} : vector<64x64xf32> to vector<16x64xf32>
    %cst_227 = arith.constant dense<0.000000e+00> : vector<8x64xf32>
    %626 = tpu.matmul %624, %625, %cst_227 {dimension_numbers = #tpu.dot_dimension_numbers<[1], [0], [0], [1], [0, 0, 1, 1], [], []>} : vector<8x16xf32>, vector<16x64xf32>, vector<8x64xf32> -> vector<8x64xf32>
    %627 = vector.extract_strided_slice %517 {offsets = [8, 16], sizes = [8, 16], strides = [1, 1]} : vector<16x192xf32> to vector<8x16xf32>
    %628 = vector.extract_strided_slice %517 {offsets = [8, 80], sizes = [8, 16], strides = [1, 1]} : vector<16x192xf32> to vector<8x16xf32>
    %629 = vector.extract_strided_slice %517 {offsets = [8, 144], sizes = [8, 16], strides = [1, 1]} : vector<16x192xf32> to vector<8x16xf32>
    %cst_228 = arith.constant dense<0.000000e+00> : vector<8x8xf32>
    %630 = tpu.matmul %627, %628, %cst_228 {dimension_numbers = #tpu.dot_dimension_numbers<[1], [1], [0], [0], [0, 0, 1, 0], [], []>} : vector<8x16xf32>, vector<8x16xf32>, vector<8x8xf32> -> vector<8x8xf32>
    %cst_229 = arith.constant 2.500000e-01 : f32
    %631 = vector.broadcast %cst_229 : f32 to vector<8x8xf32>
    %632 = arith.mulf %630, %631 : vector<8x8xf32>
    %633 = vector.broadcast %46 : vector<1x8xf32> to vector<8x8xf32>
    %634 = arith.addf %632, %633 : vector<8x8xf32>
    %cst_230 = arith.constant dense<0xFF800000> : vector<8xf32>
    %635 = vector.multi_reduction <maximumf>, %634, %cst_230 [1] : vector<8x8xf32> to vector<8xf32>
    %636 = vector.shape_cast %635 : vector<8xf32> to vector<8x1xf32>
    %637 = vector.broadcast %636 : vector<8x1xf32> to vector<8x8xf32>
    %638 = arith.subf %634, %637 : vector<8x8xf32>
    %639 = math.exp %638 : vector<8x8xf32>
    %cst_231 = arith.constant dense<0.000000e+00> : vector<8xf32>
    %640 = vector.multi_reduction <add>, %639, %cst_231 [1] : vector<8x8xf32> to vector<8xf32>
    %641 = vector.shape_cast %640 : vector<8xf32> to vector<8x1xf32>
    %642 = tpu.reciprocal %641 {approx = true} : vector<8x1xf32> -> vector<8x1xf32>
    %643 = vector.broadcast %642 : vector<8x1xf32> to vector<8x8xf32>
    %644 = arith.mulf %639, %643 : vector<8x8xf32>
    %cst_232 = arith.constant dense<0.000000e+00> : vector<8x16xf32>
    %645 = tpu.matmul %644, %629, %cst_232 {dimension_numbers = #tpu.dot_dimension_numbers<[1], [0], [0], [1], [0, 0, 1, 1], [], []>} : vector<8x8xf32>, vector<8x16xf32>, vector<8x16xf32> -> vector<8x16xf32>
    %646 = vector.extract_strided_slice %518 {offsets = [16, 0], sizes = [16, 64], strides = [1, 1]} : vector<64x64xf32> to vector<16x64xf32>
    %cst_233 = arith.constant dense<0.000000e+00> : vector<8x64xf32>
    %647 = tpu.matmul %645, %646, %cst_233 {dimension_numbers = #tpu.dot_dimension_numbers<[1], [0], [0], [1], [0, 0, 1, 1], [], []>} : vector<8x16xf32>, vector<16x64xf32>, vector<8x64xf32> -> vector<8x64xf32>
    %648 = arith.addf %626, %647 : vector<8x64xf32>
    %649 = vector.extract_strided_slice %517 {offsets = [8, 32], sizes = [8, 16], strides = [1, 1]} : vector<16x192xf32> to vector<8x16xf32>
    %650 = vector.extract_strided_slice %517 {offsets = [8, 96], sizes = [8, 16], strides = [1, 1]} : vector<16x192xf32> to vector<8x16xf32>
    %651 = vector.extract_strided_slice %517 {offsets = [8, 160], sizes = [8, 16], strides = [1, 1]} : vector<16x192xf32> to vector<8x16xf32>
    %cst_234 = arith.constant dense<0.000000e+00> : vector<8x8xf32>
    %652 = tpu.matmul %649, %650, %cst_234 {dimension_numbers = #tpu.dot_dimension_numbers<[1], [1], [0], [0], [0, 0, 1, 0], [], []>} : vector<8x16xf32>, vector<8x16xf32>, vector<8x8xf32> -> vector<8x8xf32>
    %cst_235 = arith.constant 2.500000e-01 : f32
    %653 = vector.broadcast %cst_235 : f32 to vector<8x8xf32>
    %654 = arith.mulf %652, %653 : vector<8x8xf32>
    %655 = vector.broadcast %47 : vector<1x8xf32> to vector<8x8xf32>
    %656 = arith.addf %654, %655 : vector<8x8xf32>
    %cst_236 = arith.constant dense<0xFF800000> : vector<8xf32>
    %657 = vector.multi_reduction <maximumf>, %656, %cst_236 [1] : vector<8x8xf32> to vector<8xf32>
    %658 = vector.shape_cast %657 : vector<8xf32> to vector<8x1xf32>
    %659 = vector.broadcast %658 : vector<8x1xf32> to vector<8x8xf32>
    %660 = arith.subf %656, %659 : vector<8x8xf32>
    %661 = math.exp %660 : vector<8x8xf32>
    %cst_237 = arith.constant dense<0.000000e+00> : vector<8xf32>
    %662 = vector.multi_reduction <add>, %661, %cst_237 [1] : vector<8x8xf32> to vector<8xf32>
    %663 = vector.shape_cast %662 : vector<8xf32> to vector<8x1xf32>
    %664 = tpu.reciprocal %663 {approx = true} : vector<8x1xf32> -> vector<8x1xf32>
    %665 = vector.broadcast %664 : vector<8x1xf32> to vector<8x8xf32>
    %666 = arith.mulf %661, %665 : vector<8x8xf32>
    %cst_238 = arith.constant dense<0.000000e+00> : vector<8x16xf32>
    %667 = tpu.matmul %666, %651, %cst_238 {dimension_numbers = #tpu.dot_dimension_numbers<[1], [0], [0], [1], [0, 0, 1, 1], [], []>} : vector<8x8xf32>, vector<8x16xf32>, vector<8x16xf32> -> vector<8x16xf32>
    %668 = vector.extract_strided_slice %518 {offsets = [32, 0], sizes = [16, 64], strides = [1, 1]} : vector<64x64xf32> to vector<16x64xf32>
    %cst_239 = arith.constant dense<0.000000e+00> : vector<8x64xf32>
    %669 = tpu.matmul %667, %668, %cst_239 {dimension_numbers = #tpu.dot_dimension_numbers<[1], [0], [0], [1], [0, 0, 1, 1], [], []>} : vector<8x16xf32>, vector<16x64xf32>, vector<8x64xf32> -> vector<8x64xf32>
    %670 = arith.addf %648, %669 : vector<8x64xf32>
    %671 = vector.extract_strided_slice %517 {offsets = [8, 48], sizes = [8, 16], strides = [1, 1]} : vector<16x192xf32> to vector<8x16xf32>
    %672 = vector.extract_strided_slice %517 {offsets = [8, 112], sizes = [8, 16], strides = [1, 1]} : vector<16x192xf32> to vector<8x16xf32>
    %673 = vector.extract_strided_slice %517 {offsets = [8, 176], sizes = [8, 16], strides = [1, 1]} : vector<16x192xf32> to vector<8x16xf32>
    %cst_240 = arith.constant dense<0.000000e+00> : vector<8x8xf32>
    %674 = tpu.matmul %671, %672, %cst_240 {dimension_numbers = #tpu.dot_dimension_numbers<[1], [1], [0], [0], [0, 0, 1, 0], [], []>} : vector<8x16xf32>, vector<8x16xf32>, vector<8x8xf32> -> vector<8x8xf32>
    %cst_241 = arith.constant 2.500000e-01 : f32
    %675 = vector.broadcast %cst_241 : f32 to vector<8x8xf32>
    %676 = arith.mulf %674, %675 : vector<8x8xf32>
    %677 = vector.broadcast %48 : vector<1x8xf32> to vector<8x8xf32>
    %678 = arith.addf %676, %677 : vector<8x8xf32>
    %cst_242 = arith.constant dense<0xFF800000> : vector<8xf32>
    %679 = vector.multi_reduction <maximumf>, %678, %cst_242 [1] : vector<8x8xf32> to vector<8xf32>
    %680 = vector.shape_cast %679 : vector<8xf32> to vector<8x1xf32>
    %681 = vector.broadcast %680 : vector<8x1xf32> to vector<8x8xf32>
    %682 = arith.subf %678, %681 : vector<8x8xf32>
    %683 = math.exp %682 : vector<8x8xf32>
    %cst_243 = arith.constant dense<0.000000e+00> : vector<8xf32>
    %684 = vector.multi_reduction <add>, %683, %cst_243 [1] : vector<8x8xf32> to vector<8xf32>
    %685 = vector.shape_cast %684 : vector<8xf32> to vector<8x1xf32>
    %686 = tpu.reciprocal %685 {approx = true} : vector<8x1xf32> -> vector<8x1xf32>
    %687 = vector.broadcast %686 : vector<8x1xf32> to vector<8x8xf32>
    %688 = arith.mulf %683, %687 : vector<8x8xf32>
    %cst_244 = arith.constant dense<0.000000e+00> : vector<8x16xf32>
    %689 = tpu.matmul %688, %673, %cst_244 {dimension_numbers = #tpu.dot_dimension_numbers<[1], [0], [0], [1], [0, 0, 1, 1], [], []>} : vector<8x8xf32>, vector<8x16xf32>, vector<8x16xf32> -> vector<8x16xf32>
    %690 = vector.extract_strided_slice %518 {offsets = [48, 0], sizes = [16, 64], strides = [1, 1]} : vector<64x64xf32> to vector<16x64xf32>
    %cst_245 = arith.constant dense<0.000000e+00> : vector<8x64xf32>
    %691 = tpu.matmul %689, %690, %cst_245 {dimension_numbers = #tpu.dot_dimension_numbers<[1], [0], [0], [1], [0, 0, 1, 1], [], []>} : vector<8x16xf32>, vector<16x64xf32>, vector<8x64xf32> -> vector<8x64xf32>
    %692 = arith.addf %670, %691 : vector<8x64xf32>
    %693 = tpu.concatenate %605, %692 in 0 : vector<8x64xf32>, vector<8x64xf32> -> vector<16x64xf32>
    %c0_246 = arith.constant 0 : index
    %c0_247 = arith.constant 0 : index
    %694 = vector.load %arg19[%c0_246, %c0_247] : memref<1x64xf32, #tpu.memory_space<vmem>>, vector<1x64xf32>
    %695 = vector.broadcast %694 : vector<1x64xf32> to vector<16x64xf32>
    %696 = arith.addf %693, %695 : vector<16x64xf32>
    %697 = arith.addf %512, %696 : vector<16x64xf32>
    %c0_248 = arith.constant 0 : index
    %c0_249 = arith.constant 0 : index
    %698 = vector.load %arg20[%c0_248, %c0_249] : memref<1x64xf32, #tpu.memory_space<vmem>>, vector<1x64xf32>
    %c0_250 = arith.constant 0 : index
    %c0_251 = arith.constant 0 : index
    %699 = vector.load %arg21[%c0_250, %c0_251] : memref<1x64xf32, #tpu.memory_space<vmem>>, vector<1x64xf32>
    %cst_252 = arith.constant dense<0.000000e+00> : vector<16xf32>
    %700 = vector.multi_reduction <add>, %697, %cst_252 [1] : vector<16x64xf32> to vector<16xf32>
    %701 = vector.shape_cast %700 : vector<16xf32> to vector<16x1xf32>
    %cst_253 = arith.constant 6.400000e+01 : f32
    %702 = vector.broadcast %cst_253 : f32 to vector<16x1xf32>
    %703 = arith.divf %701, %702 : vector<16x1xf32>
    %704 = vector.broadcast %703 : vector<16x1xf32> to vector<16x64xf32>
    %705 = arith.subf %697, %704 : vector<16x64xf32>
    %706 = arith.mulf %705, %705 : vector<16x64xf32>
    %cst_254 = arith.constant dense<0.000000e+00> : vector<16xf32>
    %707 = vector.multi_reduction <add>, %706, %cst_254 [1] : vector<16x64xf32> to vector<16xf32>
    %708 = vector.shape_cast %707 : vector<16xf32> to vector<16x1xf32>
    %cst_255 = arith.constant 6.400000e+01 : f32
    %709 = vector.broadcast %cst_255 : f32 to vector<16x1xf32>
    %710 = arith.divf %708, %709 : vector<16x1xf32>
    %cst_256 = arith.constant 9.99999974E-6 : f32
    %711 = vector.broadcast %cst_256 : f32 to vector<16x1xf32>
    %712 = arith.addf %710, %711 : vector<16x1xf32>
    %713 = math.rsqrt %712 : vector<16x1xf32>
    %714 = vector.broadcast %713 : vector<16x1xf32> to vector<16x64xf32>
    %715 = arith.mulf %705, %714 : vector<16x64xf32>
    %716 = vector.broadcast %698 : vector<1x64xf32> to vector<16x64xf32>
    %717 = arith.mulf %715, %716 : vector<16x64xf32>
    %718 = vector.broadcast %699 : vector<1x64xf32> to vector<16x64xf32>
    %719 = arith.addf %717, %718 : vector<16x64xf32>
    %c0_257 = arith.constant 0 : index
    %c0_258 = arith.constant 0 : index
    %720 = vector.load %arg22[%c0_257, %c0_258] : memref<64x128xf32, #tpu.memory_space<vmem>>, vector<64x128xf32>
    %cst_259 = arith.constant dense<0.000000e+00> : vector<16x128xf32>
    %721 = tpu.matmul %719, %720, %cst_259 {dimension_numbers = #tpu.dot_dimension_numbers<[1], [0], [0], [1], [0, 0, 1, 1], [], []>} : vector<16x64xf32>, vector<64x128xf32>, vector<16x128xf32> -> vector<16x128xf32>
    %c0_260 = arith.constant 0 : index
    %c0_261 = arith.constant 0 : index
    %722 = vector.load %arg23[%c0_260, %c0_261] : memref<1x128xf32, #tpu.memory_space<vmem>>, vector<1x128xf32>
    %723 = vector.broadcast %722 : vector<1x128xf32> to vector<16x128xf32>
    %724 = arith.addf %721, %723 : vector<16x128xf32>
    %cst_262 = arith.constant 0.000000e+00 : f32
    %725 = vector.broadcast %cst_262 : f32 to vector<16x128xf32>
    %726 = arith.maximumf %724, %725 : vector<16x128xf32>
    %c0_263 = arith.constant 0 : index
    %c0_264 = arith.constant 0 : index
    %727 = vector.load %arg24[%c0_263, %c0_264] : memref<128x64xf32, #tpu.memory_space<vmem>>, vector<128x64xf32>
    %cst_265 = arith.constant dense<0.000000e+00> : vector<16x64xf32>
    %728 = tpu.matmul %726, %727, %cst_265 {dimension_numbers = #tpu.dot_dimension_numbers<[1], [0], [0], [1], [0, 0, 1, 1], [], []>} : vector<16x128xf32>, vector<128x64xf32>, vector<16x64xf32> -> vector<16x64xf32>
    %c0_266 = arith.constant 0 : index
    %c0_267 = arith.constant 0 : index
    %729 = vector.load %arg25[%c0_266, %c0_267] : memref<1x64xf32, #tpu.memory_space<vmem>>, vector<1x64xf32>
    %730 = vector.broadcast %729 : vector<1x64xf32> to vector<16x64xf32>
    %731 = arith.addf %728, %730 : vector<16x64xf32>
    %732 = arith.addf %719, %731 : vector<16x64xf32>
    %c0_268 = arith.constant 0 : index
    %c0_269 = arith.constant 0 : index
    %733 = vector.load %arg26[%c0_268, %c0_269] : memref<1x64xf32, #tpu.memory_space<vmem>>, vector<1x64xf32>
    %c0_270 = arith.constant 0 : index
    %c0_271 = arith.constant 0 : index
    %734 = vector.load %arg27[%c0_270, %c0_271] : memref<1x64xf32, #tpu.memory_space<vmem>>, vector<1x64xf32>
    %cst_272 = arith.constant dense<0.000000e+00> : vector<16xf32>
    %735 = vector.multi_reduction <add>, %732, %cst_272 [1] : vector<16x64xf32> to vector<16xf32>
    %736 = vector.shape_cast %735 : vector<16xf32> to vector<16x1xf32>
    %cst_273 = arith.constant 6.400000e+01 : f32
    %737 = vector.broadcast %cst_273 : f32 to vector<16x1xf32>
    %738 = arith.divf %736, %737 : vector<16x1xf32>
    %739 = vector.broadcast %738 : vector<16x1xf32> to vector<16x64xf32>
    %740 = arith.subf %732, %739 : vector<16x64xf32>
    %741 = arith.mulf %740, %740 : vector<16x64xf32>
    %cst_274 = arith.constant dense<0.000000e+00> : vector<16xf32>
    %742 = vector.multi_reduction <add>, %741, %cst_274 [1] : vector<16x64xf32> to vector<16xf32>
    %743 = vector.shape_cast %742 : vector<16xf32> to vector<16x1xf32>
    %cst_275 = arith.constant 6.400000e+01 : f32
    %744 = vector.broadcast %cst_275 : f32 to vector<16x1xf32>
    %745 = arith.divf %743, %744 : vector<16x1xf32>
    %cst_276 = arith.constant 9.99999974E-6 : f32
    %746 = vector.broadcast %cst_276 : f32 to vector<16x1xf32>
    %747 = arith.addf %745, %746 : vector<16x1xf32>
    %748 = math.rsqrt %747 : vector<16x1xf32>
    %749 = vector.broadcast %748 : vector<16x1xf32> to vector<16x64xf32>
    %750 = arith.mulf %740, %749 : vector<16x64xf32>
    %751 = vector.broadcast %733 : vector<1x64xf32> to vector<16x64xf32>
    %752 = arith.mulf %750, %751 : vector<16x64xf32>
    %753 = vector.broadcast %734 : vector<1x64xf32> to vector<16x64xf32>
    %754 = arith.addf %752, %753 : vector<16x64xf32>
    %c0_277 = arith.constant 0 : index
    %c0_278 = arith.constant 0 : index
    %755 = vector.load %arg28[%c0_277, %c0_278] : memref<64x128xf32, #tpu.memory_space<vmem>>, vector<64x128xf32>
    %cst_279 = arith.constant dense<0.000000e+00> : vector<16x128xf32>
    %756 = tpu.matmul %754, %755, %cst_279 {dimension_numbers = #tpu.dot_dimension_numbers<[1], [0], [0], [1], [0, 0, 1, 1], [], []>} : vector<16x64xf32>, vector<64x128xf32>, vector<16x128xf32> -> vector<16x128xf32>
    %c0_280 = arith.constant 0 : index
    %c0_281 = arith.constant 0 : index
    %757 = vector.load %arg29[%c0_280, %c0_281] : memref<1x128xf32, #tpu.memory_space<vmem>>, vector<1x128xf32>
    %758 = vector.broadcast %757 : vector<1x128xf32> to vector<16x128xf32>
    %759 = arith.addf %756, %758 : vector<16x128xf32>
    %c0_282 = arith.constant 0 : index
    %c0_283 = arith.constant 0 : index
    %760 = vector.load %arg30[%c0_282, %c0_283] : memref<16x128xf32, #tpu.memory_space<vmem>>, vector<16x128xf32>
    tpu.vector_store %arg30[%c0_282, %c0_283], %759 {strides = array<i32>} : memref<16x128xf32, #tpu.memory_space<vmem>>, vector<16x128xf32>,
    return
  }
}

</mosaic_0001>

<llo_original>
// kernel: forward.1
$region0: #{forward.1}
  #allocation0 [shape = 'u32[]', space=smem, size = 0x4, offset = 0x4, fixed_abs, tag = 'smem constant byte address 0x4 - core index']
  #allocation1 [shape = 'u32[144,128]{1,0:T(1,128)}', space=vmem, size = 0x12000, scoped, tag = 'internal scratch']
  %s0 = inlined_call_operand.smem [shape: u32[31], index: -1, kind: input, shape index: {}]
  %s1 = sld [smem:[%s0]]
  %s2 = scalar_lea.smem %s0, 1
  %s3 = sld [smem:[%s2]]
  %s4 = scalar_lea.smem %s0, 2
  %s5 = sld [smem:[%s4]]
  %s6 = scalar_lea.smem %s0, 3
  %s7 = sld [smem:[%s6]]
  %s8 = scalar_lea.smem %s0, 4
  %s9 = sld [smem:[%s8]]
  %s10 = scalar_lea.smem %s0, 5
  %s11 = sld [smem:[%s10]]
  %s12 = scalar_lea.smem %s0, 6
  %s13 = sld [smem:[%s12]]
  %s14 = scalar_lea.smem %s0, 7
  %s15 = sld [smem:[%s14]]
  %s16 = scalar_lea.smem %s0, 8
  %s17 = sld [smem:[%s16]]
  %s18 = scalar_lea.smem %s0, 9
  %s19 = sld [smem:[%s18]]
  %s20 = scalar_lea.smem %s0, 10
  %s21 = sld [smem:[%s20]]
  %s22 = scalar_lea.smem %s0, 11
  %s23 = sld [smem:[%s22]]
  %s24 = scalar_lea.smem %s0, 12
  %s25 = sld [smem:[%s24]]
  %s26 = scalar_lea.smem %s0, 13
  %s27 = sld [smem:[%s26]]
  %s28 = scalar_lea.smem %s0, 14
  %s29 = sld [smem:[%s28]]
  %s30 = scalar_lea.smem %s0, 15
  %s31 = sld [smem:[%s30]]
  %s32 = scalar_lea.smem %s0, 16
  %s33 = sld [smem:[%s32]]
  %s34 = scalar_lea.smem %s0, 17
  %s35 = sld [smem:[%s34]]
  %s36 = scalar_lea.smem %s0, 18
  %s37 = sld [smem:[%s36]]
  %s38 = scalar_lea.smem %s0, 19
  %s39 = sld [smem:[%s38]]
  %s40 = scalar_lea.smem %s0, 20
  %s41 = sld [smem:[%s40]]
  %s42 = scalar_lea.smem %s0, 21
  %s43 = sld [smem:[%s42]]
  %s44 = scalar_lea.smem %s0, 22
  %s45 = sld [smem:[%s44]]
  %s46 = scalar_lea.smem %s0, 23
  %s47 = sld [smem:[%s46]]
  %s48 = scalar_lea.smem %s0, 24
  %s49 = sld [smem:[%s48]]
  %s50 = scalar_lea.smem %s0, 25
  %s51 = sld [smem:[%s50]]
  %s52 = scalar_lea.smem %s0, 26
  %s53 = sld [smem:[%s52]]
  %s54 = scalar_lea.smem %s0, 27
  %s55 = sld [smem:[%s54]]
  %s56 = scalar_lea.smem %s0, 28
  %s57 = sld [smem:[%s56]]
  %s58 = scalar_lea.smem %s0, 29
  %s59 = sld [smem:[%s58]]
  %s60 = scalar_lea.smem %s0, 30
  %s61 = sld [smem:[%s60]]
  %s62 = sld [smem:[#allocation0]]
  $region130: #{forward.1} parent=0
    _
  %s64 = ssub.s32 1, %s62
  %s65 = scalar_select 0, %s64, %s62
  // Predicated region
  $region2: #{forward.1} parent=0 // pred_check
    _
  $region3: #{forward.1} parent=0 // pred_check_branch
    %67 = sbr.rel (0) target = $region5
  $region4: #{forward.1} parent=0 // pred_region
    _
  $region5: #{forward.1} parent=0 // pred_fallthru
    _
  // Predicated region
  $region6: #{forward.1} parent=0 // pred_check
    _
  $region7: #{forward.1} parent=0 // pred_check_branch
    %69 = sbr.rel (0) target = $region9
  $region8: #{forward.1} parent=0 // pred_region
    _
  $region9: #{forward.1} parent=0 // pred_fallthru
    _
  // Predicated region
  $region10: #{forward.1} parent=0 // pred_check
    _
  $region11: #{forward.1} parent=0 // pred_check_branch
    %71 = sbr.rel (0) target = $region13
  $region12: #{forward.1} parent=0 // pred_region
    _
  $region13: #{forward.1} parent=0 // pred_fallthru
    _
  // Predicated region
  $region14: #{forward.1} parent=0 // pred_check
    _
  $region15: #{forward.1} parent=0 // pred_check_branch
    %73 = sbr.rel (0) target = $region17
  $region16: #{forward.1} parent=0 // pred_region
    _
  $region17: #{forward.1} parent=0 // pred_fallthru
    _
  // Predicated region
  $region18: #{forward.1} parent=0 // pred_check
    _
  $region19: #{forward.1} parent=0 // pred_check_branch
    %75 = sbr.rel (0) target = $region21
  $region20: #{forward.1} parent=0 // pred_region
    _
  $region21: #{forward.1} parent=0 // pred_fallthru
    _
  // Predicated region
  $region22: #{forward.1} parent=0 // pred_check
    _
  $region23: #{forward.1} parent=0 // pred_check_branch
    %77 = sbr.rel (0) target = $region25
  $region24: #{forward.1} parent=0 // pred_region
    _
  $region25: #{forward.1} parent=0 // pred_fallthru
    _
  // Predicated region
  $region26: #{forward.1} parent=0 // pred_check
    _
  $region27: #{forward.1} parent=0 // pred_check_branch
    %79 = sbr.rel (0) target = $region29
  $region28: #{forward.1} parent=0 // pred_region
    _
  $region29: #{forward.1} parent=0 // pred_fallthru
    _
  // Predicated region
  $region30: #{forward.1} parent=0 // pred_check
    _
  $region31: #{forward.1} parent=0 // pred_check_branch
    %81 = sbr.rel (0) target = $region33
  $region32: #{forward.1} parent=0 // pred_region
    _
  $region33: #{forward.1} parent=0 // pred_fallthru
    _
  // Predicated region
  $region34: #{forward.1} parent=0 // pred_check
    _
  $region35: #{forward.1} parent=0 // pred_check_branch
    %83 = sbr.rel (0) target = $region37
  $region36: #{forward.1} parent=0 // pred_region
    _
  $region37: #{forward.1} parent=0 // pred_fallthru
    _
  // Predicated region
  $region38: #{forward.1} parent=0 // pred_check
    _
  $region39: #{forward.1} parent=0 // pred_check_branch
    %85 = sbr.rel (0) target = $region41
  $region40: #{forward.1} parent=0 // pred_region
    _
  $region41: #{forward.1} parent=0 // pred_fallthru
    _
  // Predicated region
  $region42: #{forward.1} parent=0 // pred_check
    _
  $region43: #{forward.1} parent=0 // pred_check_branch
    %87 = sbr.rel (0) target = $region45
  $region44: #{forward.1} parent=0 // pred_region
    _
  $region45: #{forward.1} parent=0 // pred_fallthru
    _
  // Predicated region
  $region46: #{forward.1} parent=0 // pred_check
    _
  $region47: #{forward.1} parent=0 // pred_check_branch
    %89 = sbr.rel (0) target = $region49
  $region48: #{forward.1} parent=0 // pred_region
    _
  $region49: #{forward.1} parent=0 // pred_fallthru
    _
  // Predicated region
  $region50: #{forward.1} parent=0 // pred_check
    _
  $region51: #{forward.1} parent=0 // pred_check_branch
    %91 = sbr.rel (0) target = $region53
  $region52: #{forward.1} parent=0 // pred_region
    _
  $region53: #{forward.1} parent=0 // pred_fallthru
    _
  // Predicated region
  $region54: #{forward.1} parent=0 // pred_check
    _
  $region55: #{forward.1} parent=0 // pred_check_branch
    %93 = sbr.rel (0) target = $region57
  $region56: #{forward.1} parent=0 // pred_region
    _
  $region57: #{forward.1} parent=0 // pred_fallthru
    _
  // Predicated region
  $region58: #{forward.1} parent=0 // pred_check
    _
  $region59: #{forward.1} parent=0 // pred_check_branch
    %95 = sbr.rel (0) target = $region61
  $region60: #{forward.1} parent=0 // pred_region
    _
  $region61: #{forward.1} parent=0 // pred_fallthru
    _
  // Predicated region
  $region62: #{forward.1} parent=0 // pred_check
    _
  $region63: #{forward.1} parent=0 // pred_check_branch
    %97 = sbr.rel (0) target = $region65
  $region64: #{forward.1} parent=0 // pred_region
    _
  $region65: #{forward.1} parent=0 // pred_fallthru
    _
  // Predicated region
  $region66: #{forward.1} parent=0 // pred_check
    _
  $region67: #{forward.1} parent=0 // pred_check_branch
    %99 = sbr.rel (0) target = $region69
  $region68: #{forward.1} parent=0 // pred_region
    _
  $region69: #{forward.1} parent=0 // pred_fallthru
    _
  // Predicated region
  $region70: #{forward.1} parent=0 // pred_check
    _
  $region71: #{forward.1} parent=0 // pred_check_branch
    %101 = sbr.rel (0) target = $region73
  $region72: #{forward.1} parent=0 // pred_region
    _
  $region73: #{forward.1} parent=0 // pred_fallthru
    _
  // Predicated region
  $region74: #{forward.1} parent=0 // pred_check
    _
  $region75: #{forward.1} parent=0 // pred_check_branch
    %103 = sbr.rel (0) target = $region77
  $region76: #{forward.1} parent=0 // pred_region
    _
  $region77: #{forward.1} parent=0 // pred_fallthru
    _
  // Predicated region
  $region78: #{forward.1} parent=0 // pred_check
    _
  $region79: #{forward.1} parent=0 // pred_check_branch
    %105 = sbr.rel (0) target = $region81
  $region80: #{forward.1} parent=0 // pred_region
    _
  $region81: #{forward.1} parent=0 // pred_fallthru
    _
  // Predicated region
  $region82: #{forward.1} parent=0 // pred_check
    _
  $region83: #{forward.1} parent=0 // pred_check_branch
    %107 = sbr.rel (0) target = $region85
  $region84: #{forward.1} parent=0 // pred_region
    _
  $region85: #{forward.1} parent=0 // pred_fallthru
    _
  // Predicated region
  $region86: #{forward.1} parent=0 // pred_check
    _
  $region87: #{forward.1} parent=0 // pred_check_branch
    %109 = sbr.rel (0) target = $region89
  $region88: #{forward.1} parent=0 // pred_region
    _
  $region89: #{forward.1} parent=0 // pred_fallthru
    _
  // Predicated region
  $region90: #{forward.1} parent=0 // pred_check
    _
  $region91: #{forward.1} parent=0 // pred_check_branch
    %111 = sbr.rel (0) target = $region93
  $region92: #{forward.1} parent=0 // pred_region
    _
  $region93: #{forward.1} parent=0 // pred_fallthru
    _
  // Predicated region
  $region94: #{forward.1} parent=0 // pred_check
    _
  $region95: #{forward.1} parent=0 // pred_check_branch
    %113 = sbr.rel (0) target = $region97
  $region96: #{forward.1} parent=0 // pred_region
    _
  $region97: #{forward.1} parent=0 // pred_fallthru
    _
  // Predicated region
  $region98: #{forward.1} parent=0 // pred_check
    _
  $region99: #{forward.1} parent=0 // pred_check_branch
    %115 = sbr.rel (0) target = $region101
  $region100: #{forward.1} parent=0 // pred_region
    _
  $region101: #{forward.1} parent=0 // pred_fallthru
    _
  // Predicated region
  $region102: #{forward.1} parent=0 // pred_check
    _
  $region103: #{forward.1} parent=0 // pred_check_branch
    %117 = sbr.rel (0) target = $region105
  $region104: #{forward.1} parent=0 // pred_region
    _
  $region105: #{forward.1} parent=0 // pred_fallthru
    _
  // Predicated region
  $region106: #{forward.1} parent=0 // pred_check
    _
  $region107: #{forward.1} parent=0 // pred_check_branch
    %119 = sbr.rel (0) target = $region109
  $region108: #{forward.1} parent=0 // pred_region
    _
  $region109: #{forward.1} parent=0 // pred_fallthru
    _
  // Predicated region
  $region110: #{forward.1} parent=0 // pred_check
    _
  $region111: #{forward.1} parent=0 // pred_check_branch
    %121 = sbr.rel (0) target = $region113
  $region112: #{forward.1} parent=0 // pred_region
    _
  $region113: #{forward.1} parent=0 // pred_fallthru
    _
  // Predicated region
  $region114: #{forward.1} parent=0 // pred_check
    _
  $region115: #{forward.1} parent=0 // pred_check_branch
    %123 = sbr.rel (0) target = $region117
  $region116: #{forward.1} parent=0 // pred_region
    _
  $region117: #{forward.1} parent=0 // pred_fallthru
    _
  // Predicated region
  $region118: #{forward.1} parent=0 // pred_check
    _
  $region119: #{forward.1} parent=0 // pred_check_branch
    %125 = sbr.rel (0) target = $region121
  $region120: #{forward.1} parent=0 // pred_region
    _
  $region121: #{forward.1} parent=0 // pred_fallthru
    _
  %v126 = vld [vmem:[%s3] sm:$0x3]
  %v127 = vld [vmem:[%s5] sm:$0xff]
  %v128 = vlaneseq
  %v129 = vshrl.u32 %v128, 7
  %v130 = vsub.s32 0, %v129
  %v131 = vrot.slane %v126, %v130
  %v132 = vadd.f32 %v127, %v131
  %s133 = scalar_lea.vmem %s5, 8
  %v134 = vld [vmem:[%s133] sm:$0xff]
  %v135 = vadd.f32 %v134, %v131
  %s136 = scalar_lea.vmem %s5, 16
  %v137 = vld [vmem:[%s136] sm:$0xff]
  %v138 = vadd.f32 %v137, %v131
  %s139 = scalar_lea.vmem %s5, 24
  %v140 = vld [vmem:[%s139] sm:$0xff]
  %v141 = vadd.f32 %v140, %v131
  %v142 = vlaneseq
  %v143 = vshrl.u32 %v142, 7
  %v144 = vsub.s32 1, %v143
  %v145 = vrot.slane %v126, %v144
  %v146 = vadd.f32 %v127, %v145
  %v147 = vadd.f32 %v134, %v145
  %v148 = vadd.f32 %v137, %v145
  %v149 = vadd.f32 %v140, %v145
  %v150 = vld [vmem:[%s1] sm:$0xff]
  %v151 = vld [vmem:[%s1 + $0x8] sm:$0xff]
  %v152 = vld [vmem:[%s7] sm:$0xff]
  %v153 = vld [vmem:[%s7 + $0x8] sm:$0xff]
  %v154 = vld [vmem:[%s7 + $0x10] sm:$0xff]
  %v155 = vld [vmem:[%s7 + $0x18] sm:$0xff]
  %v156 = vld [vmem:[%s9] sm:$0x1]
  %v158 = vlaneseq
  %v159 = vshrl.u32 %v158, 7
  %v160 = vsub.s32 0, %v159
  %v161 = vrot.slane %v156, %v160
  %vm163 = vcmask 261120
  %v165 = vsel %vm163, %v150, 0
  %v168 = vsel %vm163, %v151, 0
  %170 = vmatprep.subr.mxu0 0.0
  %171 = vmatpush1.msra.mxu0 0.0
  %172 = vmatprep.subr.mxu0 0.0
  %173 = vmatpush1.msra.mxu0 0.0
  %174 = vmatprep.subr.mxu0 0.0
  %175 = vmatpush1.msra.mxu0 0.0
  %176 = vmatprep.subr.mxu0 0.0
  %177 = vmatpush1.msra.mxu0 0.0
  %178 = vmatprep.subr.mxu0 0.0
  %179 = vmatpush1.msra.mxu0 0.0
  %180 = vmatprep.subr.mxu0 0.0
  %181 = vmatpush1.msra.mxu0 0.0
  %182 = vmatprep.subr.mxu0 0.0
  %183 = vmatpush1.msra.mxu0 0.0
  %184 = vmatprep.subr.mxu0 0.0
  %185 = vmatpush1.msra.mxu0 0.0
  %186 = vmatprep.subr.mxu0 0.0
  %187 = vmatpush1.msra.mxu0 0.0
  %188 = vmatprep.subr.mxu0 0.0
  %189 = vmatpush1.msra.mxu0 0.0
  %190 = vmatprep.subr.mxu0 0.0
  %191 = vmatpush1.msra.mxu0 0.0
  %192 = vmatprep.subr.mxu0 0.0
  %193 = vmatpush1.msra.mxu0 0.0
  %194 = vmatprep.subr.mxu0 0.0
  %195 = vmatpush1.msra.mxu0 %v155
  %196 = vmatprep.subr.mxu0 0.0
  %197 = vmatpush1.msra.mxu0 %v154
  %198 = vmatprep.subr.mxu0 0.0
  %199 = vmatpush1.msra.mxu0 %v153
  %200 = vmatprep.subr.mxu0 0.0
  %201 = vmatpush1.msra.mxu0 %v152
  %202 = vmatprep.subr.mxu0 0.0
  %203 = vmatpush2.msra.mxu0 0.0
  %204 = vmatprep.subr.mxu0 0.0
  %205 = vmatpush2.msra.mxu0 0.0
  %206 = vmatprep.subr.mxu0 0.0
  %207 = vmatpush2.msra.mxu0 0.0
  %208 = vmatprep.subr.mxu0 0.0
  %209 = vmatpush2.msra.mxu0 0.0
  %210 = vmatprep.subr.mxu0 0.0
  %211 = vmatpush2.msra.mxu0 0.0
  %212 = vmatprep.subr.mxu0 0.0
  %213 = vmatpush2.msra.mxu0 0.0
  %214 = vmatprep.subr.mxu0 0.0
  %215 = vmatpush2.msra.mxu0 0.0
  %216 = vmatprep.subr.mxu0 0.0
  %217 = vmatpush2.msra.mxu0 0.0
  %218 = vmatprep.subr.mxu0 0.0
  %219 = vmatpush2.msra.mxu0 0.0
  %220 = vmatprep.subr.mxu0 0.0
  %221 = vmatpush2.msra.mxu0 0.0
  %222 = vmatprep.subr.mxu0 0.0
  %223 = vmatpush2.msra.mxu0 0.0
  %224 = vmatprep.subr.mxu0 0.0
  %225 = vmatpush2.msra.mxu0 0.0
  %226 = vmatprep.subr.mxu0 0.0
  %227 = vmatpush2.msra.mxu0 0.0
  %228 = vmatprep.subr.mxu0 0.0
  %229 = vmatpush2.msra.mxu0 0.0
  %230 = vmatprep.subr.mxu0 0.0
  %231 = vmatpush2.msra.mxu0 0.0
  %232 = vmatprep.subr.mxu0 0.0
  %233 = vmatpush2.msra.mxu0 0.0
  %234 = vmatprep.mubr.f32.mxu0 0.0
  %235 = vmatmul.mubr.f32.gmra.mxu0 %v165
  %v236 = vpop.f32.mrf.mxu0
  %v237 = vadd.f32 %v161, %v236
  %v238 = vpop.f32.mrf.mxu0
  %239 = vmatprep.mubr.f32.mxu0 0.0
  %240 = vmatmul.mubr.f32.gmra.mxu0 %v168
  %v241 = vpop.f32.mrf.mxu0
  %v242 = vadd.f32 %v161, %v241
  %v243 = vpop.f32.mrf.mxu0
  %244 = vdwg.mxu0
  %v245 = vld [vmem:[%s11] sm:$0x3]
  %v246 = vld [vmem:[%s17] sm:$0x3]
  %v247 = vmul.f32 %v237, %v237
  %v248 = vmul.f32 %v242, %v242
  %vm249 = vcmask 523264
  %v250 = vsel %vm249, %v247, 0.0
  %251 = vadd.xlane.f32.xlu0 %v250
  %v252 = vpop.xlane.xlu0 %251
  %v253 = vsel %vm249, %v248, 0.0
  %254 = vadd.xlane.f32.xlu0 %v253
  %v255 = vpop.xlane.xlu0 %254
  %v256 = vrcp.pop 64.0
  %v257 = vmul.f32 %v252, %v256
  %v258 = vmul.f32 %v255, %v256
  %v259 = vadd.f32 %v257, 1e-06
  %v260 = vadd.f32 %v258, 1e-06
  %v261 = vrsqrt.pop %v259
  %v262 = vrsqrt.pop %v260
  %v263 = vmul.f32 %v237, %v261
  %v264 = vmul.f32 %v242, %v262
  %v265 = vlaneseq
  %v266 = vshrl.u32 %v265, 7
  %v267 = vsub.s32 0, %v266
  %v268 = vrot.slane %v245, %v267
  %v269 = vmul.f32 %v263, %v268
  %v270 = vmul.f32 %v264, %v268
  %v271 = vld [vmem:[%s13] sm:$0xff]
  %v272 = vld [vmem:[%s13 + $0x8] sm:$0xff]
  %v273 = vld [vmem:[%s13 + $0x10] sm:$0xff]
  %v274 = vld [vmem:[%s13 + $0x18] sm:$0xff]
  %v275 = vld [vmem:[%s13 + $0x20] sm:$0xff]
  %v276 = vld [vmem:[%s13 + $0x28] sm:$0xff]
  %v277 = vld [vmem:[%s13 + $0x30] sm:$0xff]
  %v278 = vld [vmem:[%s13 + $0x38] sm:$0xff]
  %v279 = vld [vmem:[%s13 + $0x40] sm:$0xff]
  %v280 = vld [vmem:[%s13 + $0x48] sm:$0xff]
  %v281 = vld [vmem:[%s13 + $0x50] sm:$0xff]
  %v282 = vld [vmem:[%s13 + $0x58] sm:$0xff]
  %v283 = vld [vmem:[%s13 + $0x60] sm:$0xff]
  %v284 = vld [vmem:[%s13 + $0x68] sm:$0xff]
  %v285 = vld [vmem:[%s13 + $0x70] sm:$0xff]
  %v286 = vld [vmem:[%s13 + $0x78] sm:$0xff]
  %v288 = vsel %vm249, %v269, 0
  %v291 = vsel %vm249, %v270, 0
  %293 = vmatprep.subr.mxu0 0.0
  %294 = vmatpush1.msra.mxu0 0.0
  %295 = vmatprep.subr.mxu0 0.0
  %296 = vmatpush1.msra.mxu0 0.0
  %297 = vmatprep.subr.mxu0 0.0
  %298 = vmatpush1.msra.mxu0 0.0
  %299 = vmatprep.subr.mxu0 0.0
  %300 = vmatpush1.msra.mxu0 0.0
  %301 = vmatprep.subr.mxu0 0.0
  %302 = vmatpush1.msra.mxu0 0.0
  %303 = vmatprep.subr.mxu0 0.0
  %304 = vmatpush1.msra.mxu0 0.0
  %305 = vmatprep.subr.mxu0 0.0
  %306 = vmatpush1.msra.mxu0 0.0
  %307 = vmatprep.subr.mxu0 0.0
  %308 = vmatpush1.msra.mxu0 0.0
  %309 = vmatprep.subr.mxu0 %v286
  %310 = vmatpush1.msra.mxu0 %v285
  %311 = vmatprep.subr.mxu0 %v284
  %312 = vmatpush1.msra.mxu0 %v283
  %313 = vmatprep.subr.mxu0 %v282
  %314 = vmatpush1.msra.mxu0 %v281
  %315 = vmatprep.subr.mxu0 %v280
  %316 = vmatpush1.msra.mxu0 %v279
  %317 = vmatprep.subr.mxu0 %v278
  %318 = vmatpush1.msra.mxu0 %v277
  %319 = vmatprep.subr.mxu0 %v276
  %320 = vmatpush1.msra.mxu0 %v275
  %321 = vmatprep.subr.mxu0 %v274
  %322 = vmatpush1.msra.mxu0 %v273
  %323 = vmatprep.subr.mxu0 %v272
  %324 = vmatpush1.msra.mxu0 %v271
  %325 = vmatprep.subr.mxu0 0.0
  %326 = vmatpush2.msra.mxu0 0.0
  %327 = vmatprep.subr.mxu0 0.0
  %328 = vmatpush2.msra.mxu0 0.0
  %329 = vmatprep.subr.mxu0 0.0
  %330 = vmatpush2.msra.mxu0 0.0
  %331 = vmatprep.subr.mxu0 0.0
  %332 = vmatpush2.msra.mxu0 0.0
  %333 = vmatprep.subr.mxu0 0.0
  %334 = vmatpush2.msra.mxu0 0.0
  %335 = vmatprep.subr.mxu0 0.0
  %336 = vmatpush2.msra.mxu0 0.0
  %337 = vmatprep.subr.mxu0 0.0
  %338 = vmatpush2.msra.mxu0 0.0
  %339 = vmatprep.subr.mxu0 0.0
  %340 = vmatpush2.msra.mxu0 0.0
  %341 = vmatprep.subr.mxu0 0.0
  %342 = vmatpush2.msra.mxu0 0.0
  %343 = vmatprep.subr.mxu0 0.0
  %344 = vmatpush2.msra.mxu0 0.0
  %345 = vmatprep.subr.mxu0 0.0
  %346 = vmatpush2.msra.mxu0 0.0
  %347 = vmatprep.subr.mxu0 0.0
  %348 = vmatpush2.msra.mxu0 0.0
  %349 = vmatprep.subr.mxu0 0.0
  %350 = vmatpush2.msra.mxu0 0.0
  %351 = vmatprep.subr.mxu0 0.0
  %352 = vmatpush2.msra.mxu0 0.0
  %353 = vmatprep.subr.mxu0 0.0
  %354 = vmatpush2.msra.mxu0 0.0
  %355 = vmatprep.subr.mxu0 0.0
  %356 = vmatpush2.msra.mxu0 0.0
  %357 = vmatprep.mubr.f32.mxu0 0.0
  %358 = vmatmul.mubr.f32.gmra.mxu0 %v288
  %v359 = vpop.f32.mrf.mxu0
  %v360 = vadd.f32 0.0, %v359
  %v361 = vpop.f32.mrf.mxu0
  %v362 = vadd.f32 0.0, %v361
  %363 = vmatprep.mubr.f32.mxu0 0.0
  %364 = vmatmul.mubr.f32.gmra.mxu0 %v291
  %v365 = vpop.f32.mrf.mxu0
  %v366 = vadd.f32 0.0, %v365
  %v367 = vpop.f32.mrf.mxu0
  %v368 = vadd.f32 0.0, %v367
  %369 = vdwg.mxu0
  %v370 = vld [vmem:[%s15] sm:$0xff]
  %v371 = vld [vmem:[%s15 + $0x8] sm:$0xff]
  %v372 = vld [vmem:[%s15 + $0x10] sm:$0xff]
  %v373 = vld [vmem:[%s15 + $0x18] sm:$0xff]
  %v374 = vld [vmem:[%s15 + $0x20] sm:$0xff]
  %v375 = vld [vmem:[%s15 + $0x28] sm:$0xff]
  %v376 = vld [vmem:[%s15 + $0x30] sm:$0xff]
  %v377 = vld [vmem:[%s15 + $0x38] sm:$0xff]
  %379 = vrot.lane.b32.xlu0 %v360, 64
  %v380 = vpop.permute.xlu0 %379
  %vm381 = vcmask 130048
  %v382 = vsel %vm381, %v360, 0
  %v384 = vsel %vm381, %v380, 0
  %386 = vmatprep.subr.mxu0 0.0
  %387 = vmatpush1.xpose.msra.mxu0 0.0
  %388 = vmatprep.subr.mxu0 0.0
  %389 = vmatpush1.xpose.msra.mxu0 0.0
  %390 = vmatprep.subr.mxu0 0.0
  %391 = vmatpush1.xpose.msra.mxu0 0.0
  %392 = vmatprep.subr.mxu0 0.0
  %393 = vmatpush1.xpose.msra.mxu0 0.0
  %394 = vmatprep.subr.mxu0 0.0
  %395 = vmatpush1.xpose.msra.mxu0 0.0
  %396 = vmatprep.subr.mxu0 0.0
  %397 = vmatpush1.xpose.msra.mxu0 0.0
  %398 = vmatprep.subr.mxu0 0.0
  %399 = vmatpush1.xpose.msra.mxu0 0.0
  %400 = vmatprep.subr.mxu0 0.0
  %401 = vmatpush1.xpose.msra.mxu0 0.0
  %402 = vmatprep.subr.mxu0 0.0
  %403 = vmatpush1.xpose.msra.mxu0 0.0
  %404 = vmatprep.subr.mxu0 0.0
  %405 = vmatpush1.xpose.msra.mxu0 0.0
  %406 = vmatprep.subr.mxu0 0.0
  %407 = vmatpush1.xpose.msra.mxu0 0.0
  %408 = vmatprep.subr.mxu0 0.0
  %409 = vmatpush1.xpose.msra.mxu0 0.0
  %410 = vmatprep.subr.mxu0 0.0
  %411 = vmatpush1.xpose.msra.mxu0 0.0
  %412 = vmatprep.subr.mxu0 0.0
  %413 = vmatpush1.xpose.msra.mxu0 0.0
  %414 = vmatprep.subr.mxu0 0.0
  %415 = vmatpush1.xpose.msra.mxu0 0.0
  %416 = vmatprep.subr.mxu0 0.0
  %417 = vmatpush1.xpose.msra.mxu0 %v384
  %418 = vmatprep.subr.mxu0 0.0
  %419 = vmatpush2.xpose.msra.mxu0 0.0
  %420 = vmatprep.subr.mxu0 0.0
  %421 = vmatpush2.xpose.msra.mxu0 0.0
  %422 = vmatprep.subr.mxu0 0.0
  %423 = vmatpush2.xpose.msra.mxu0 0.0
  %424 = vmatprep.subr.mxu0 0.0
  %425 = vmatpush2.xpose.msra.mxu0 0.0
  %426 = vmatprep.subr.mxu0 0.0
  %427 = vmatpush2.xpose.msra.mxu0 0.0
  %428 = vmatprep.subr.mxu0 0.0
  %429 = vmatpush2.xpose.msra.mxu0 0.0
  %430 = vmatprep.subr.mxu0 0.0
  %431 = vmatpush2.xpose.msra.mxu0 0.0
  %432 = vmatprep.subr.mxu0 0.0
  %433 = vmatpush2.xpose.msra.mxu0 0.0
  %434 = vmatprep.subr.mxu0 0.0
  %435 = vmatpush2.xpose.msra.mxu0 0.0
  %436 = vmatprep.subr.mxu0 0.0
  %437 = vmatpush2.xpose.msra.mxu0 0.0
  %438 = vmatprep.subr.mxu0 0.0
  %439 = vmatpush2.xpose.msra.mxu0 0.0
  %440 = vmatprep.subr.mxu0 0.0
  %441 = vmatpush2.xpose.msra.mxu0 0.0
  %442 = vmatprep.subr.mxu0 0.0
  %443 = vmatpush2.xpose.msra.mxu0 0.0
  %444 = vmatprep.subr.mxu0 0.0
  %445 = vmatpush2.xpose.msra.mxu0 0.0
  %446 = vmatprep.subr.mxu0 0.0
  %447 = vmatpush2.xpose.msra.mxu0 0.0
  %448 = vmatprep.subr.mxu0 0.0
  %449 = vmatpush2.xpose.msra.mxu0 0.0
  %450 = vmatprep.mubr.f32.mxu0 0.0
  %451 = vmatmul.mubr.f32.gmra.mxu0 %v382
  %v452 = vpop.f32.mrf.mxu0
  %v453 = vadd.f32 %v132, %v452
  %v454 = vpop.f32.mrf.mxu0
  %455 = vdwg.mxu0
  %vm456 = vcmask 64512
  %v457 = vsel %vm456, %v453, -inf
  %458 = vmax.xlane.f32.xlu0 %v457
  %v459 = vpop.xlane.xlu0 %458
  %v460 = vsub.f32 %v453, %v459
  %v461 = vmul.f32 %v460, 1.442695
  %v462 = vpow.pop %v461
  %v463 = vsel %vm456, %v462, 0.0
  %464 = vadd.xlane.f32.xlu0 %v463
  %v465 = vpop.xlane.xlu0 %464
  %v466 = vrcp.pop %v465
  %v467 = vmul.f32 %v462, %v466
  %v469 = vsel %vm456, %v467, 0
  %471 = vmatprep.subr.mxu0 0.0
  %472 = vmatpush1.msra.mxu0 0.0
  %473 = vmatprep.subr.mxu0 0.0
  %474 = vmatpush1.msra.mxu0 0.0
  %475 = vmatprep.subr.mxu0 0.0
  %476 = vmatpush1.msra.mxu0 0.0
  %477 = vmatprep.subr.mxu0 0.0
  %478 = vmatpush1.msra.mxu0 0.0
  %479 = vmatprep.subr.mxu0 0.0
  %480 = vmatpush1.msra.mxu0 0.0
  %481 = vmatprep.subr.mxu0 0.0
  %482 = vmatpush1.msra.mxu0 0.0
  %483 = vmatprep.subr.mxu0 0.0
  %484 = vmatpush1.msra.mxu0 0.0
  %485 = vmatprep.subr.mxu0 0.0
  %486 = vmatpush1.msra.mxu0 0.0
  %487 = vmatprep.subr.mxu0 0.0
  %488 = vmatpush1.msra.mxu0 0.0
  %489 = vmatprep.subr.mxu0 0.0
  %490 = vmatpush1.msra.mxu0 0.0
  %491 = vmatprep.subr.mxu0 0.0
  %492 = vmatpush1.msra.mxu0 0.0
  %493 = vmatprep.subr.mxu0 0.0
  %494 = vmatpush1.msra.mxu0 0.0
  %495 = vmatprep.subr.mxu0 0.0
  %496 = vmatpush1.msra.mxu0 0.0
  %497 = vmatprep.subr.mxu0 0.0
  %498 = vmatpush1.msra.mxu0 0.0
  %499 = vmatprep.subr.mxu0 0.0
  %500 = vmatpush1.msra.mxu0 0.0
  %501 = vmatprep.subr.mxu0 0.0
  %502 = vmatpush1.msra.mxu0 %v362
  %503 = vmatprep.subr.mxu0 0.0
  %504 = vmatpush2.msra.mxu0 0.0
  %505 = vmatprep.subr.mxu0 0.0
  %506 = vmatpush2.msra.mxu0 0.0
  %507 = vmatprep.subr.mxu0 0.0
  %508 = vmatpush2.msra.mxu0 0.0
  %509 = vmatprep.subr.mxu0 0.0
  %510 = vmatpush2.msra.mxu0 0.0
  %511 = vmatprep.subr.mxu0 0.0
  %512 = vmatpush2.msra.mxu0 0.0
  %513 = vmatprep.subr.mxu0 0.0
  %514 = vmatpush2.msra.mxu0 0.0
  %515 = vmatprep.subr.mxu0 0.0
  %516 = vmatpush2.msra.mxu0 0.0
  %517 = vmatprep.subr.mxu0 0.0
  %518 = vmatpush2.msra.mxu0 0.0
  %519 = vmatprep.subr.mxu0 0.0
  %520 = vmatpush2.msra.mxu0 0.0
  %521 = vmatprep.subr.mxu0 0.0
  %522 = vmatpush2.msra.mxu0 0.0
  %523 = vmatprep.subr.mxu0 0.0
  %524 = vmatpush2.msra.mxu0 0.0
  %525 = vmatprep.subr.mxu0 0.0
  %526 = vmatpush2.msra.mxu0 0.0
  %527 = vmatprep.subr.mxu0 0.0
  %528 = vmatpush2.msra.mxu0 0.0
  %529 = vmatprep.subr.mxu0 0.0
  %530 = vmatpush2.msra.mxu0 0.0
  %531 = vmatprep.subr.mxu0 0.0
  %532 = vmatpush2.msra.mxu0 0.0
  %533 = vmatprep.subr.mxu0 0.0
  %534 = vmatpush2.msra.mxu0 0.0
  %535 = vmatprep.mubr.f32.mxu0 0.0
  %536 = vmatmul.mubr.f32.gmra.mxu0 %v469
  %v537 = vpop.f32.mrf.mxu0
  %v538 = vadd.f32 0.0, %v537
  %v539 = vpop.f32.mrf.mxu0
  %540 = vdwg.mxu0
  %541 = vrot.lane.b32.xlu0 %v360, 112
  %v542 = vpop.permute.xlu0 %541
  %543 = vrot.lane.b32.xlu0 %v360, 48
  %v544 = vpop.permute.xlu0 %543
  %v545 = vsel %vm381, %v542, 0
  %v547 = vsel %vm381, %v544, 0
  %549 = vmatprep.subr.mxu0 0.0
  %550 = vmatpush1.xpose.msra.mxu0 0.0
  %551 = vmatprep.subr.mxu0 0.0
  %552 = vmatpush1.xpose.msra.mxu0 0.0
  %553 = vmatprep.subr.mxu0 0.0
  %554 = vmatpush1.xpose.msra.mxu0 0.0
  %555 = vmatprep.subr.mxu0 0.0
  %556 = vmatpush1.xpose.msra.mxu0 0.0
  %557 = vmatprep.subr.mxu0 0.0
  %558 = vmatpush1.xpose.msra.mxu0 0.0
  %559 = vmatprep.subr.mxu0 0.0
  %560 = vmatpush1.xpose.msra.mxu0 0.0
  %561 = vmatprep.subr.mxu0 0.0
  %562 = vmatpush1.xpose.msra.mxu0 0.0
  %563 = vmatprep.subr.mxu0 0.0
  %564 = vmatpush1.xpose.msra.mxu0 0.0
  %565 = vmatprep.subr.mxu0 0.0
  %566 = vmatpush1.xpose.msra.mxu0 0.0
  %567 = vmatprep.subr.mxu0 0.0
  %568 = vmatpush1.xpose.msra.mxu0 0.0
  %569 = vmatprep.subr.mxu0 0.0
  %570 = vmatpush1.xpose.msra.mxu0 0.0
  %571 = vmatprep.subr.mxu0 0.0
  %572 = vmatpush1.xpose.msra.mxu0 0.0
  %573 = vmatprep.subr.mxu0 0.0
  %574 = vmatpush1.xpose.msra.mxu0 0.0
  %575 = vmatprep.subr.mxu0 0.0
  %576 = vmatpush1.xpose.msra.mxu0 0.0
  %577 = vmatprep.subr.mxu0 0.0
  %578 = vmatpush1.xpose.msra.mxu0 0.0
  %579 = vmatprep.subr.mxu0 0.0
  %580 = vmatpush1.xpose.msra.mxu0 %v547
  %581 = vmatprep.subr.mxu0 0.0
  %582 = vmatpush2.xpose.msra.mxu0 0.0
  %583 = vmatprep.subr.mxu0 0.0
  %584 = vmatpush2.xpose.msra.mxu0 0.0
  %585 = vmatprep.subr.mxu0 0.0
  %586 = vmatpush2.xpose.msra.mxu0 0.0
  %587 = vmatprep.subr.mxu0 0.0
  %588 = vmatpush2.xpose.msra.mxu0 0.0
  %589 = vmatprep.subr.mxu0 0.0
  %590 = vmatpush2.xpose.msra.mxu0 0.0
  %591 = vmatprep.subr.mxu0 0.0
  %592 = vmatpush2.xpose.msra.mxu0 0.0
  %593 = vmatprep.subr.mxu0 0.0
  %594 = vmatpush2.xpose.msra.mxu0 0.0
  %595 = vmatprep.subr.mxu0 0.0
  %596 = vmatpush2.xpose.msra.mxu0 0.0
  %597 = vmatprep.subr.mxu0 0.0
  %598 = vmatpush2.xpose.msra.mxu0 0.0
  %599 = vmatprep.subr.mxu0 0.0
  %600 = vmatpush2.xpose.msra.mxu0 0.0
  %601 = vmatprep.subr.mxu0 0.0
  %602 = vmatpush2.xpose.msra.mxu0 0.0
  %603 = vmatprep.subr.mxu0 0.0
  %604 = vmatpush2.xpose.msra.mxu0 0.0
  %605 = vmatprep.subr.mxu0 0.0
  %606 = vmatpush2.xpose.msra.mxu0 0.0
  %607 = vmatprep.subr.mxu0 0.0
  %608 = vmatpush2.xpose.msra.mxu0 0.0
  %609 = vmatprep.subr.mxu0 0.0
  %610 = vmatpush2.xpose.msra.mxu0 0.0
  %611 = vmatprep.subr.mxu0 0.0
  %612 = vmatpush2.xpose.msra.mxu0 0.0
  %613 = vmatprep.mubr.f32.mxu0 0.0
  %614 = vmatmul.mubr.f32.gmra.mxu0 %v545
  %v615 = vpop.f32.mrf.mxu0
  %v616 = vadd.f32 %v135, %v615
  %v617 = vpop.f32.mrf.mxu0
  %618 = vdwg.mxu0
  %v619 = vsel %vm456, %v616, -inf
  %620 = vmax.xlane.f32.xlu0 %v619
  %v621 = vpop.xlane.xlu0 %620
  %v622 = vsub.f32 %v616, %v621
  %v623 = vmul.f32 %v622, 1.442695
  %v624 = vpow.pop %v623
  %v625 = vsel %vm456, %v624, 0.0
  %626 = vadd.xlane.f32.xlu0 %v625
  %v627 = vpop.xlane.xlu0 %626
  %v628 = vrcp.pop %v627
  %v629 = vmul.f32 %v624, %v628
  %631 = vrot.lane.b32.xlu0 %v362, 112
  %v632 = vpop.permute.xlu0 %631
  %v635 = vsel %vm456, %v629, 0
  %637 = vmatprep.subr.mxu0 0.0
  %638 = vmatpush1.msra.mxu0 0.0
  %639 = vmatprep.subr.mxu0 0.0
  %640 = vmatpush1.msra.mxu0 0.0
  %641 = vmatprep.subr.mxu0 0.0
  %642 = vmatpush1.msra.mxu0 0.0
  %643 = vmatprep.subr.mxu0 0.0
  %644 = vmatpush1.msra.mxu0 0.0
  %645 = vmatprep.subr.mxu0 0.0
  %646 = vmatpush1.msra.mxu0 0.0
  %647 = vmatprep.subr.mxu0 0.0
  %648 = vmatpush1.msra.mxu0 0.0
  %649 = vmatprep.subr.mxu0 0.0
  %650 = vmatpush1.msra.mxu0 0.0
  %651 = vmatprep.subr.mxu0 0.0
  %652 = vmatpush1.msra.mxu0 0.0
  %653 = vmatprep.subr.mxu0 0.0
  %654 = vmatpush1.msra.mxu0 0.0
  %655 = vmatprep.subr.mxu0 0.0
  %656 = vmatpush1.msra.mxu0 0.0
  %657 = vmatprep.subr.mxu0 0.0
  %658 = vmatpush1.msra.mxu0 0.0
  %659 = vmatprep.subr.mxu0 0.0
  %660 = vmatpush1.msra.mxu0 0.0
  %661 = vmatprep.subr.mxu0 0.0
  %662 = vmatpush1.msra.mxu0 0.0
  %663 = vmatprep.subr.mxu0 0.0
  %664 = vmatpush1.msra.mxu0 0.0
  %665 = vmatprep.subr.mxu0 0.0
  %666 = vmatpush1.msra.mxu0 0.0
  %667 = vmatprep.subr.mxu0 0.0
  %668 = vmatpush1.msra.mxu0 %v632
  %669 = vmatprep.subr.mxu0 0.0
  %670 = vmatpush2.msra.mxu0 0.0
  %671 = vmatprep.subr.mxu0 0.0
  %672 = vmatpush2.msra.mxu0 0.0
  %673 = vmatprep.subr.mxu0 0.0
  %674 = vmatpush2.msra.mxu0 0.0
  %675 = vmatprep.subr.mxu0 0.0
  %676 = vmatpush2.msra.mxu0 0.0
  %677 = vmatprep.subr.mxu0 0.0
  %678 = vmatpush2.msra.mxu0 0.0
  %679 = vmatprep.subr.mxu0 0.0
  %680 = vmatpush2.msra.mxu0 0.0
  %681 = vmatprep.subr.mxu0 0.0
  %682 = vmatpush2.msra.mxu0 0.0
  %683 = vmatprep.subr.mxu0 0.0
  %684 = vmatpush2.msra.mxu0 0.0
  %685 = vmatprep.subr.mxu0 0.0
  %686 = vmatpush2.msra.mxu0 0.0
  %687 = vmatprep.subr.mxu0 0.0
  %688 = vmatpush2.msra.mxu0 0.0
  %689 = vmatprep.subr.mxu0 0.0
  %690 = vmatpush2.msra.mxu0 0.0
  %691 = vmatprep.subr.mxu0 0.0
  %692 = vmatpush2.msra.mxu0 0.0
  %693 = vmatprep.subr.mxu0 0.0
  %694 = vmatpush2.msra.mxu0 0.0
  %695 = vmatprep.subr.mxu0 0.0
  %696 = vmatpush2.msra.mxu0 0.0
  %697 = vmatprep.subr.mxu0 0.0
  %698 = vmatpush2.msra.mxu0 0.0
  %699 = vmatprep.subr.mxu0 0.0
  %700 = vmatpush2.msra.mxu0 0.0
  %701 = vmatprep.mubr.f32.mxu0 0.0
  %702 = vmatmul.mubr.f32.gmra.mxu0 %v635
  %v703 = vpop.f32.mrf.mxu0
  %v704 = vadd.f32 0.0, %v703
  %v705 = vpop.f32.mrf.mxu0
  %706 = vdwg.mxu0
  %v708 = vsel %vm381, %v704, 0
  %710 = vmatprep.subr.mxu0 0.0
  %711 = vmatpush1.msra.mxu0 0.0
  %712 = vmatprep.subr.mxu0 0.0
  %713 = vmatpush1.msra.mxu0 0.0
  %714 = vmatprep.subr.mxu0 0.0
  %715 = vmatpush1.msra.mxu0 0.0
  %716 = vmatprep.subr.mxu0 0.0
  %717 = vmatpush1.msra.mxu0 0.0
  %718 = vmatprep.subr.mxu0 0.0
  %719 = vmatpush1.msra.mxu0 0.0
  %720 = vmatprep.subr.mxu0 0.0
  %721 = vmatpush1.msra.mxu0 0.0
  %722 = vmatprep.subr.mxu0 0.0
  %723 = vmatpush1.msra.mxu0 0.0
  %724 = vmatprep.subr.mxu0 0.0
  %725 = vmatpush1.msra.mxu0 0.0
  %726 = vmatprep.subr.mxu0 0.0
  %727 = vmatpush1.msra.mxu0 0.0
  %728 = vmatprep.subr.mxu0 0.0
  %729 = vmatpush1.msra.mxu0 0.0
  %730 = vmatprep.subr.mxu0 0.0
  %731 = vmatpush1.msra.mxu0 0.0
  %732 = vmatprep.subr.mxu0 0.0
  %733 = vmatpush1.msra.mxu0 0.0
  %734 = vmatprep.subr.mxu0 0.0
  %735 = vmatpush1.msra.mxu0 0.0
  %736 = vmatprep.subr.mxu0 0.0
  %737 = vmatpush1.msra.mxu0 0.0
  %738 = vmatprep.subr.mxu0 0.0
  %739 = vmatpush1.msra.mxu0 %v373
  %740 = vmatprep.subr.mxu0 0.0
  %741 = vmatpush1.msra.mxu0 %v372
  %742 = vmatprep.subr.mxu0 0.0
  %743 = vmatpush2.msra.mxu0 0.0
  %744 = vmatprep.subr.mxu0 0.0
  %745 = vmatpush2.msra.mxu0 0.0
  %746 = vmatprep.subr.mxu0 0.0
  %747 = vmatpush2.msra.mxu0 0.0
  %748 = vmatprep.subr.mxu0 0.0
  %749 = vmatpush2.msra.mxu0 0.0
  %750 = vmatprep.subr.mxu0 0.0
  %751 = vmatpush2.msra.mxu0 0.0
  %752 = vmatprep.subr.mxu0 0.0
  %753 = vmatpush2.msra.mxu0 0.0
  %754 = vmatprep.subr.mxu0 0.0
  %755 = vmatpush2.msra.mxu0 0.0
  %756 = vmatprep.subr.mxu0 0.0
  %757 = vmatpush2.msra.mxu0 0.0
  %758 = vmatprep.subr.mxu0 0.0
  %759 = vmatpush2.msra.mxu0 0.0
  %760 = vmatprep.subr.mxu0 0.0
  %761 = vmatpush2.msra.mxu0 0.0
  %762 = vmatprep.subr.mxu0 0.0
  %763 = vmatpush2.msra.mxu0 0.0
  %764 = vmatprep.subr.mxu0 0.0
  %765 = vmatpush2.msra.mxu0 0.0
  %766 = vmatprep.subr.mxu0 0.0
  %767 = vmatpush2.msra.mxu0 0.0
  %768 = vmatprep.subr.mxu0 0.0
  %769 = vmatpush2.msra.mxu0 0.0
  %770 = vmatprep.subr.mxu0 0.0
  %771 = vmatpush2.msra.mxu0 0.0
  %772 = vmatprep.subr.mxu0 0.0
  %773 = vmatpush2.msra.mxu0 0.0
  %774 = vmatprep.mubr.f32.mxu0 0.0
  %775 = vmatmul.mubr.f32.gmra.mxu0 %v708
  %v776 = vpop.f32.mrf.mxu0
  %v777 = vadd.f32 0.0, %v776
  %v778 = vpop.f32.mrf.mxu0
  %779 = vdwg.mxu0
  %v781 = vsel %vm381, %v538, 0
  %783 = vmatprep.subr.mxu0 0.0
  %784 = vmatpush1.msra.mxu0 0.0
  %785 = vmatprep.subr.mxu0 0.0
  %786 = vmatpush1.msra.mxu0 0.0
  %787 = vmatprep.subr.mxu0 0.0
  %788 = vmatpush1.msra.mxu0 0.0
  %789 = vmatprep.subr.mxu0 0.0
  %790 = vmatpush1.msra.mxu0 0.0
  %791 = vmatprep.subr.mxu0 0.0
  %792 = vmatpush1.msra.mxu0 0.0
  %793 = vmatprep.subr.mxu0 0.0
  %794 = vmatpush1.msra.mxu0 0.0
  %795 = vmatprep.subr.mxu0 0.0
  %796 = vmatpush1.msra.mxu0 0.0
  %797 = vmatprep.subr.mxu0 0.0
  %798 = vmatpush1.msra.mxu0 0.0
  %799 = vmatprep.subr.mxu0 0.0
  %800 = vmatpush1.msra.mxu0 0.0
  %801 = vmatprep.subr.mxu0 0.0
  %802 = vmatpush1.msra.mxu0 0.0
  %803 = vmatprep.subr.mxu0 0.0
  %804 = vmatpush1.msra.mxu0 0.0
  %805 = vmatprep.subr.mxu0 0.0
  %806 = vmatpush1.msra.mxu0 0.0
  %807 = vmatprep.subr.mxu0 0.0
  %808 = vmatpush1.msra.mxu0 0.0
  %809 = vmatprep.subr.mxu0 0.0
  %810 = vmatpush1.msra.mxu0 0.0
  %811 = vmatprep.subr.mxu0 0.0
  %812 = vmatpush1.msra.mxu0 %v371
  %813 = vmatprep.subr.mxu0 0.0
  %814 = vmatpush1.msra.mxu0 %v370
  %815 = vmatprep.subr.mxu0 0.0
  %816 = vmatpush2.msra.mxu0 0.0
  %817 = vmatprep.subr.mxu0 0.0
  %818 = vmatpush2.msra.mxu0 0.0
  %819 = vmatprep.subr.mxu0 0.0
  %820 = vmatpush2.msra.mxu0 0.0
  %821 = vmatprep.subr.mxu0 0.0
  %822 = vmatpush2.msra.mxu0 0.0
  %823 = vmatprep.subr.mxu0 0.0
  %824 = vmatpush2.msra.mxu0 0.0
  %825 = vmatprep.subr.mxu0 0.0
  %826 = vmatpush2.msra.mxu0 0.0
  %827 = vmatprep.subr.mxu0 0.0
  %828 = vmatpush2.msra.mxu0 0.0
  %829 = vmatprep.subr.mxu0 0.0
  %830 = vmatpush2.msra.mxu0 0.0
  %831 = vmatprep.subr.mxu0 0.0
  %832 = vmatpush2.msra.mxu0 0.0
  %833 = vmatprep.subr.mxu0 0.0
  %834 = vmatpush2.msra.mxu0 0.0
  %835 = vmatprep.subr.mxu0 0.0
  %836 = vmatpush2.msra.mxu0 0.0
  %837 = vmatprep.subr.mxu0 0.0
  %838 = vmatpush2.msra.mxu0 0.0
  %839 = vmatprep.subr.mxu0 0.0
  %840 = vmatpush2.msra.mxu0 0.0
  %841 = vmatprep.subr.mxu0 0.0
  %842 = vmatpush2.msra.mxu0 0.0
  %843 = vmatprep.subr.mxu0 0.0
  %844 = vmatpush2.msra.mxu0 0.0
  %845 = vmatprep.subr.mxu0 0.0
  %846 = vmatpush2.msra.mxu0 0.0
  %847 = vmatprep.mubr.f32.mxu0 0.0
  %848 = vmatmul.mubr.f32.gmra.mxu0 %v781
  %v849 = vpop.f32.mrf.mxu0
  %v850 = vadd.f32 %v777, %v849
  %v851 = vpop.f32.mrf.mxu0
  %852 = vdwg.mxu0
  %853 = vrot.lane.b32.xlu0 %v360, 96
  %v854 = vpop.permute.xlu0 %853
  %855 = vrot.lane.b32.xlu0 %v360, 32
  %v856 = vpop.permute.xlu0 %855
  %v857 = vsel %vm381, %v854, 0
  %v859 = vsel %vm381, %v856, 0
  %861 = vmatprep.subr.mxu0 0.0
  %862 = vmatpush1.xpose.msra.mxu0 0.0
  %863 = vmatprep.subr.mxu0 0.0
  %864 = vmatpush1.xpose.msra.mxu0 0.0
  %865 = vmatprep.subr.mxu0 0.0
  %866 = vmatpush1.xpose.msra.mxu0 0.0
  %867 = vmatprep.subr.mxu0 0.0
  %868 = vmatpush1.xpose.msra.mxu0 0.0
  %869 = vmatprep.subr.mxu0 0.0
  %870 = vmatpush1.xpose.msra.mxu0 0.0
  %871 = vmatprep.subr.mxu0 0.0
  %872 = vmatpush1.xpose.msra.mxu0 0.0
  %873 = vmatprep.subr.mxu0 0.0
  %874 = vmatpush1.xpose.msra.mxu0 0.0
  %875 = vmatprep.subr.mxu0 0.0
  %876 = vmatpush1.xpose.msra.mxu0 0.0
  %877 = vmatprep.subr.mxu0 0.0
  %878 = vmatpush1.xpose.msra.mxu0 0.0
  %879 = vmatprep.subr.mxu0 0.0
  %880 = vmatpush1.xpose.msra.mxu0 0.0
  %881 = vmatprep.subr.mxu0 0.0
  %882 = vmatpush1.xpose.msra.mxu0 0.0
  %883 = vmatprep.subr.mxu0 0.0
  %884 = vmatpush1.xpose.msra.mxu0 0.0
  %885 = vmatprep.subr.mxu0 0.0
  %886 = vmatpush1.xpose.msra.mxu0 0.0
  %887 = vmatprep.subr.mxu0 0.0
  %888 = vmatpush1.xpose.msra.mxu0 0.0
  %889 = vmatprep.subr.mxu0 0.0
  %890 = vmatpush1.xpose.msra.mxu0 0.0
  %891 = vmatprep.subr.mxu0 0.0
  %892 = vmatpush1.xpose.msra.mxu0 %v859
  %893 = vmatprep.subr.mxu0 0.0
  %894 = vmatpush2.xpose.msra.mxu0 0.0
  %895 = vmatprep.subr.mxu0 0.0
  %896 = vmatpush2.xpose.msra.mxu0 0.0
  %897 = vmatprep.subr.mxu0 0.0
  %898 = vmatpush2.xpose.msra.mxu0 0.0
  %899 = vmatprep.subr.mxu0 0.0
  %900 = vmatpush2.xpose.msra.mxu0 0.0
  %901 = vmatprep.subr.mxu0 0.0
  %902 = vmatpush2.xpose.msra.mxu0 0.0
  %903 = vmatprep.subr.mxu0 0.0
  %904 = vmatpush2.xpose.msra.mxu0 0.0
  %905 = vmatprep.subr.mxu0 0.0
  %906 = vmatpush2.xpose.msra.mxu0 0.0
  %907 = vmatprep.subr.mxu0 0.0
  %908 = vmatpush2.xpose.msra.mxu0 0.0
  %909 = vmatprep.subr.mxu0 0.0
  %910 = vmatpush2.xpose.msra.mxu0 0.0
  %911 = vmatprep.subr.mxu0 0.0
  %912 = vmatpush2.xpose.msra.mxu0 0.0
  %913 = vmatprep.subr.mxu0 0.0
  %914 = vmatpush2.xpose.msra.mxu0 0.0
  %915 = vmatprep.subr.mxu0 0.0
  %916 = vmatpush2.xpose.msra.mxu0 0.0
  %917 = vmatprep.subr.mxu0 0.0
  %918 = vmatpush2.xpose.msra.mxu0 0.0
  %919 = vmatprep.subr.mxu0 0.0
  %920 = vmatpush2.xpose.msra.mxu0 0.0
  %921 = vmatprep.subr.mxu0 0.0
  %922 = vmatpush2.xpose.msra.mxu0 0.0
  %923 = vmatprep.subr.mxu0 0.0
  %924 = vmatpush2.xpose.msra.mxu0 0.0
  %925 = vmatprep.mubr.f32.mxu0 0.0
  %926 = vmatmul.mubr.f32.gmra.mxu0 %v857
  %v927 = vpop.f32.mrf.mxu0
  %v928 = vadd.f32 %v138, %v927
  %v929 = vpop.f32.mrf.mxu0
  %930 = vdwg.mxu0
  %v931 = vsel %vm456, %v928, -inf
  %932 = vmax.xlane.f32.xlu0 %v931
  %v933 = vpop.xlane.xlu0 %932
  %v934 = vsub.f32 %v928, %v933
  %v935 = vmul.f32 %v934, 1.442695
  %v936 = vpow.pop %v935
  %v937 = vsel %vm456, %v936, 0.0
  %938 = vadd.xlane.f32.xlu0 %v937
  %v939 = vpop.xlane.xlu0 %938
  %v940 = vrcp.pop %v939
  %v941 = vmul.f32 %v936, %v940
  %942 = vrot.lane.b32.xlu0 %v362, 96
  %v943 = vpop.permute.xlu0 %942
  %v946 = vsel %vm456, %v941, 0
  %948 = vmatprep.subr.mxu0 0.0
  %949 = vmatpush1.msra.mxu0 0.0
  %950 = vmatprep.subr.mxu0 0.0
  %951 = vmatpush1.msra.mxu0 0.0
  %952 = vmatprep.subr.mxu0 0.0
  %953 = vmatpush1.msra.mxu0 0.0
  %954 = vmatprep.subr.mxu0 0.0
  %955 = vmatpush1.msra.mxu0 0.0
  %956 = vmatprep.subr.mxu0 0.0
  %957 = vmatpush1.msra.mxu0 0.0
  %958 = vmatprep.subr.mxu0 0.0
  %959 = vmatpush1.msra.mxu0 0.0
  %960 = vmatprep.subr.mxu0 0.0
  %961 = vmatpush1.msra.mxu0 0.0
  %962 = vmatprep.subr.mxu0 0.0
  %963 = vmatpush1.msra.mxu0 0.0
  %964 = vmatprep.subr.mxu0 0.0
  %965 = vmatpush1.msra.mxu0 0.0
  %966 = vmatprep.subr.mxu0 0.0
  %967 = vmatpush1.msra.mxu0 0.0
  %968 = vmatprep.subr.mxu0 0.0
  %969 = vmatpush1.msra.mxu0 0.0
  %970 = vmatprep.subr.mxu0 0.0
  %971 = vmatpush1.msra.mxu0 0.0
  %972 = vmatprep.subr.mxu0 0.0
  %973 = vmatpush1.msra.mxu0 0.0
  %974 = vmatprep.subr.mxu0 0.0
  %975 = vmatpush1.msra.mxu0 0.0
  %976 = vmatprep.subr.mxu0 0.0
  %977 = vmatpush1.msra.mxu0 0.0
  %978 = vmatprep.subr.mxu0 0.0
  %979 = vmatpush1.msra.mxu0 %v943
  %980 = vmatprep.subr.mxu0 0.0
  %981 = vmatpush2.msra.mxu0 0.0
  %982 = vmatprep.subr.mxu0 0.0
  %983 = vmatpush2.msra.mxu0 0.0
  %984 = vmatprep.subr.mxu0 0.0
  %985 = vmatpush2.msra.mxu0 0.0
  %986 = vmatprep.subr.mxu0 0.0
  %987 = vmatpush2.msra.mxu0 0.0
  %988 = vmatprep.subr.mxu0 0.0
  %989 = vmatpush2.msra.mxu0 0.0
  %990 = vmatprep.subr.mxu0 0.0
  %991 = vmatpush2.msra.mxu0 0.0
  %992 = vmatprep.subr.mxu0 0.0
  %993 = vmatpush2.msra.mxu0 0.0
  %994 = vmatprep.subr.mxu0 0.0
  %995 = vmatpush2.msra.mxu0 0.0
  %996 = vmatprep.subr.mxu0 0.0
  %997 = vmatpush2.msra.mxu0 0.0
  %998 = vmatprep.subr.mxu0 0.0
  %999 = vmatpush2.msra.mxu0 0.0
  %1000 = vmatprep.subr.mxu0 0.0
  %1001 = vmatpush2.msra.mxu0 0.0
  %1002 = vmatprep.subr.mxu0 0.0
  %1003 = vmatpush2.msra.mxu0 0.0
  %1004 = vmatprep.subr.mxu0 0.0
  %1005 = vmatpush2.msra.mxu0 0.0
  %1006 = vmatprep.subr.mxu0 0.0
  %1007 = vmatpush2.msra.mxu0 0.0
  %1008 = vmatprep.subr.mxu0 0.0
  %1009 = vmatpush2.msra.mxu0 0.0
  %1010 = vmatprep.subr.mxu0 0.0
  %1011 = vmatpush2.msra.mxu0 0.0
  %1012 = vmatprep.mubr.f32.mxu0 0.0
  %1013 = vmatmul.mubr.f32.gmra.mxu0 %v946
  %v1014 = vpop.f32.mrf.mxu0
  %v1015 = vadd.f32 0.0, %v1014
  %v1016 = vpop.f32.mrf.mxu0
  %1017 = vdwg.mxu0
  %v1019 = vsel %vm381, %v1015, 0
  %1021 = vmatprep.subr.mxu0 0.0
  %1022 = vmatpush1.msra.mxu0 0.0
  %1023 = vmatprep.subr.mxu0 0.0
  %1024 = vmatpush1.msra.mxu0 0.0
  %1025 = vmatprep.subr.mxu0 0.0
  %1026 = vmatpush1.msra.mxu0 0.0
  %1027 = vmatprep.subr.mxu0 0.0
  %1028 = vmatpush1.msra.mxu0 0.0
  %1029 = vmatprep.subr.mxu0 0.0
  %1030 = vmatpush1.msra.mxu0 0.0
  %1031 = vmatprep.subr.mxu0 0.0
  %1032 = vmatpush1.msra.mxu0 0.0
  %1033 = vmatprep.subr.mxu0 0.0
  %1034 = vmatpush1.msra.mxu0 0.0
  %1035 = vmatprep.subr.mxu0 0.0
  %1036 = vmatpush1.msra.mxu0 0.0
  %1037 = vmatprep.subr.mxu0 0.0
  %1038 = vmatpush1.msra.mxu0 0.0
  %1039 = vmatprep.subr.mxu0 0.0
  %1040 = vmatpush1.msra.mxu0 0.0
  %1041 = vmatprep.subr.mxu0 0.0
  %1042 = vmatpush1.msra.mxu0 0.0
  %1043 = vmatprep.subr.mxu0 0.0
  %1044 = vmatpush1.msra.mxu0 0.0
  %1045 = vmatprep.subr.mxu0 0.0
  %1046 = vmatpush1.msra.mxu0 0.0
  %1047 = vmatprep.subr.mxu0 0.0
  %1048 = vmatpush1.msra.mxu0 0.0
  %1049 = vmatprep.subr.mxu0 0.0
  %1050 = vmatpush1.msra.mxu0 %v375
  %1051 = vmatprep.subr.mxu0 0.0
  %1052 = vmatpush1.msra.mxu0 %v374
  %1053 = vmatprep.subr.mxu0 0.0
  %1054 = vmatpush2.msra.mxu0 0.0
  %1055 = vmatprep.subr.mxu0 0.0
  %1056 = vmatpush2.msra.mxu0 0.0
  %1057 = vmatprep.subr.mxu0 0.0
  %1058 = vmatpush2.msra.mxu0 0.0
  %1059 = vmatprep.subr.mxu0 0.0
  %1060 = vmatpush2.msra.mxu0 0.0
  %1061 = vmatprep.subr.mxu0 0.0
  %1062 = vmatpush2.msra.mxu0 0.0
  %1063 = vmatprep.subr.mxu0 0.0
  %1064 = vmatpush2.msra.mxu0 0.0
  %1065 = vmatprep.subr.mxu0 0.0
  %1066 = vmatpush2.msra.mxu0 0.0
  %1067 = vmatprep.subr.mxu0 0.0
  %1068 = vmatpush2.msra.mxu0 0.0
  %1069 = vmatprep.subr.mxu0 0.0
  %1070 = vmatpush2.msra.mxu0 0.0
  %1071 = vmatprep.subr.mxu0 0.0
  %1072 = vmatpush2.msra.mxu0 0.0
  %1073 = vmatprep.subr.mxu0 0.0
  %1074 = vmatpush2.msra.mxu0 0.0
  %1075 = vmatprep.subr.mxu0 0.0
  %1076 = vmatpush2.msra.mxu0 0.0
  %1077 = vmatprep.subr.mxu0 0.0
  %1078 = vmatpush2.msra.mxu0 0.0
  %1079 = vmatprep.subr.mxu0 0.0
  %1080 = vmatpush2.msra.mxu0 0.0
  %1081 = vmatprep.subr.mxu0 0.0
  %1082 = vmatpush2.msra.mxu0 0.0
  %1083 = vmatprep.subr.mxu0 0.0
  %1084 = vmatpush2.msra.mxu0 0.0
  %1085 = vmatprep.mubr.f32.mxu0 0.0
  %1086 = vmatmul.mubr.f32.gmra.mxu0 %v1019
  %v1087 = vpop.f32.mrf.mxu0
  %v1088 = vadd.f32 0.0, %v1087
  %v1089 = vpop.f32.mrf.mxu0
  %1090 = vdwg.mxu0
  %v1091 = vadd.f32 %v850, %v1088
  %1092 = vrot.lane.b32.xlu0 %v360, 80
  %v1093 = vpop.permute.xlu0 %1092
  %1094 = vrot.lane.b32.xlu0 %v360, 16
  %v1095 = vpop.permute.xlu0 %1094
  %v1096 = vsel %vm381, %v1093, 0
  %v1098 = vsel %vm381, %v1095, 0
  %1100 = vmatprep.subr.mxu0 0.0
  %1101 = vmatpush1.xpose.msra.mxu0 0.0
  %1102 = vmatprep.subr.mxu0 0.0
  %1103 = vmatpush1.xpose.msra.mxu0 0.0
  %1104 = vmatprep.subr.mxu0 0.0
  %1105 = vmatpush1.xpose.msra.mxu0 0.0
  %1106 = vmatprep.subr.mxu0 0.0
  %1107 = vmatpush1.xpose.msra.mxu0 0.0
  %1108 = vmatprep.subr.mxu0 0.0
  %1109 = vmatpush1.xpose.msra.mxu0 0.0
  %1110 = vmatprep.subr.mxu0 0.0
  %1111 = vmatpush1.xpose.msra.mxu0 0.0
  %1112 = vmatprep.subr.mxu0 0.0
  %1113 = vmatpush1.xpose.msra.mxu0 0.0
  %1114 = vmatprep.subr.mxu0 0.0
  %1115 = vmatpush1.xpose.msra.mxu0 0.0
  %1116 = vmatprep.subr.mxu0 0.0
  %1117 = vmatpush1.xpose.msra.mxu0 0.0
  %1118 = vmatprep.subr.mxu0 0.0
  %1119 = vmatpush1.xpose.msra.mxu0 0.0
  %1120 = vmatprep.subr.mxu0 0.0
  %1121 = vmatpush1.xpose.msra.mxu0 0.0
  %1122 = vmatprep.subr.mxu0 0.0
  %1123 = vmatpush1.xpose.msra.mxu0 0.0
  %1124 = vmatprep.subr.mxu0 0.0
  %1125 = vmatpush1.xpose.msra.mxu0 0.0
  %1126 = vmatprep.subr.mxu0 0.0
  %1127 = vmatpush1.xpose.msra.mxu0 0.0
  %1128 = vmatprep.subr.mxu0 0.0
  %1129 = vmatpush1.xpose.msra.mxu0 0.0
  %1130 = vmatprep.subr.mxu0 0.0
  %1131 = vmatpush1.xpose.msra.mxu0 %v1098
  %1132 = vmatprep.subr.mxu0 0.0
  %1133 = vmatpush2.xpose.msra.mxu0 0.0
  %1134 = vmatprep.subr.mxu0 0.0
  %1135 = vmatpush2.xpose.msra.mxu0 0.0
  %1136 = vmatprep.subr.mxu0 0.0
  %1137 = vmatpush2.xpose.msra.mxu0 0.0
  %1138 = vmatprep.subr.mxu0 0.0
  %1139 = vmatpush2.xpose.msra.mxu0 0.0
  %1140 = vmatprep.subr.mxu0 0.0
  %1141 = vmatpush2.xpose.msra.mxu0 0.0
  %1142 = vmatprep.subr.mxu0 0.0
  %1143 = vmatpush2.xpose.msra.mxu0 0.0
  %1144 = vmatprep.subr.mxu0 0.0
  %1145 = vmatpush2.xpose.msra.mxu0 0.0
  %1146 = vmatprep.subr.mxu0 0.0
  %1147 = vmatpush2.xpose.msra.mxu0 0.0
  %1148 = vmatprep.subr.mxu0 0.0
  %1149 = vmatpush2.xpose.msra.mxu0 0.0
  %1150 = vmatprep.subr.mxu0 0.0
  %1151 = vmatpush2.xpose.msra.mxu0 0.0
  %1152 = vmatprep.subr.mxu0 0.0
  %1153 = vmatpush2.xpose.msra.mxu0 0.0
  %1154 = vmatprep.subr.mxu0 0.0
  %1155 = vmatpush2.xpose.msra.mxu0 0.0
  %1156 = vmatprep.subr.mxu0 0.0
  %1157 = vmatpush2.xpose.msra.mxu0 0.0
  %1158 = vmatprep.subr.mxu0 0.0
  %1159 = vmatpush2.xpose.msra.mxu0 0.0
  %1160 = vmatprep.subr.mxu0 0.0
  %1161 = vmatpush2.xpose.msra.mxu0 0.0
  %1162 = vmatprep.subr.mxu0 0.0
  %1163 = vmatpush2.xpose.msra.mxu0 0.0
  %1164 = vmatprep.mubr.f32.mxu0 0.0
  %1165 = vmatmul.mubr.f32.gmra.mxu0 %v1096
  %v1166 = vpop.f32.mrf.mxu0
  %v1167 = vadd.f32 %v141, %v1166
  %v1168 = vpop.f32.mrf.mxu0
  %1169 = vdwg.mxu0
  %v1170 = vsel %vm456, %v1167, -inf
  %1171 = vmax.xlane.f32.xlu0 %v1170
  %v1172 = vpop.xlane.xlu0 %1171
  %v1173 = vsub.f32 %v1167, %v1172
  %v1174 = vmul.f32 %v1173, 1.442695
  %v1175 = vpow.pop %v1174
  %v1176 = vsel %vm456, %v1175, 0.0
  %1177 = vadd.xlane.f32.xlu0 %v1176
  %v1178 = vpop.xlane.xlu0 %1177
  %v1179 = vrcp.pop %v1178
  %v1180 = vmul.f32 %v1175, %v1179
  %1181 = vrot.lane.b32.xlu0 %v362, 80
  %v1182 = vpop.permute.xlu0 %1181
  %v1185 = vsel %vm456, %v1180, 0
  %1187 = vmatprep.subr.mxu0 0.0
  %1188 = vmatpush1.msra.mxu0 0.0
  %1189 = vmatprep.subr.mxu0 0.0
  %1190 = vmatpush1.msra.mxu0 0.0
  %1191 = vmatprep.subr.mxu0 0.0
  %1192 = vmatpush1.msra.mxu0 0.0
  %1193 = vmatprep.subr.mxu0 0.0
  %1194 = vmatpush1.msra.mxu0 0.0
  %1195 = vmatprep.subr.mxu0 0.0
  %1196 = vmatpush1.msra.mxu0 0.0
  %1197 = vmatprep.subr.mxu0 0.0
  %1198 = vmatpush1.msra.mxu0 0.0
  %1199 = vmatprep.subr.mxu0 0.0
  %1200 = vmatpush1.msra.mxu0 0.0
  %1201 = vmatprep.subr.mxu0 0.0
  %1202 = vmatpush1.msra.mxu0 0.0
  %1203 = vmatprep.subr.mxu0 0.0
  %1204 = vmatpush1.msra.mxu0 0.0
  %1205 = vmatprep.subr.mxu0 0.0
  %1206 = vmatpush1.msra.mxu0 0.0
  %1207 = vmatprep.subr.mxu0 0.0
  %1208 = vmatpush1.msra.mxu0 0.0
  %1209 = vmatprep.subr.mxu0 0.0
  %1210 = vmatpush1.msra.mxu0 0.0
  %1211 = vmatprep.subr.mxu0 0.0
  %1212 = vmatpush1.msra.mxu0 0.0
  %1213 = vmatprep.subr.mxu0 0.0
  %1214 = vmatpush1.msra.mxu0 0.0
  %1215 = vmatprep.subr.mxu0 0.0
  %1216 = vmatpush1.msra.mxu0 0.0
  %1217 = vmatprep.subr.mxu0 0.0
  %1218 = vmatpush1.msra.mxu0 %v1182
  %1219 = vmatprep.subr.mxu0 0.0
  %1220 = vmatpush2.msra.mxu0 0.0
  %1221 = vmatprep.subr.mxu0 0.0
  %1222 = vmatpush2.msra.mxu0 0.0
  %1223 = vmatprep.subr.mxu0 0.0
  %1224 = vmatpush2.msra.mxu0 0.0
  %1225 = vmatprep.subr.mxu0 0.0
  %1226 = vmatpush2.msra.mxu0 0.0
  %1227 = vmatprep.subr.mxu0 0.0
  %1228 = vmatpush2.msra.mxu0 0.0
  %1229 = vmatprep.subr.mxu0 0.0
  %1230 = vmatpush2.msra.mxu0 0.0
  %1231 = vmatprep.subr.mxu0 0.0
  %1232 = vmatpush2.msra.mxu0 0.0
  %1233 = vmatprep.subr.mxu0 0.0
  %1234 = vmatpush2.msra.mxu0 0.0
  %1235 = vmatprep.subr.mxu0 0.0
  %1236 = vmatpush2.msra.mxu0 0.0
  %1237 = vmatprep.subr.mxu0 0.0
  %1238 = vmatpush2.msra.mxu0 0.0
  %1239 = vmatprep.subr.mxu0 0.0
  %1240 = vmatpush2.msra.mxu0 0.0
  %1241 = vmatprep.subr.mxu0 0.0
  %1242 = vmatpush2.msra.mxu0 0.0
  %1243 = vmatprep.subr.mxu0 0.0
  %1244 = vmatpush2.msra.mxu0 0.0
  %1245 = vmatprep.subr.mxu0 0.0
  %1246 = vmatpush2.msra.mxu0 0.0
  %1247 = vmatprep.subr.mxu0 0.0
  %1248 = vmatpush2.msra.mxu0 0.0
  %1249 = vmatprep.subr.mxu0 0.0
  %1250 = vmatpush2.msra.mxu0 0.0
  %1251 = vmatprep.mubr.f32.mxu0 0.0
  %1252 = vmatmul.mubr.f32.gmra.mxu0 %v1185
  %v1253 = vpop.f32.mrf.mxu0
  %v1254 = vadd.f32 0.0, %v1253
  %v1255 = vpop.f32.mrf.mxu0
  %1256 = vdwg.mxu0
  %v1258 = vsel %vm381, %v1254, 0
  %1260 = vmatprep.subr.mxu0 0.0
  %1261 = vmatpush1.msra.mxu0 0.0
  %1262 = vmatprep.subr.mxu0 0.0
  %1263 = vmatpush1.msra.mxu0 0.0
  %1264 = vmatprep.subr.mxu0 0.0
  %1265 = vmatpush1.msra.mxu0 0.0
  %1266 = vmatprep.subr.mxu0 0.0
  %1267 = vmatpush1.msra.mxu0 0.0
  %1268 = vmatprep.subr.mxu0 0.0
  %1269 = vmatpush1.msra.mxu0 0.0
  %1270 = vmatprep.subr.mxu0 0.0
  %1271 = vmatpush1.msra.mxu0 0.0
  %1272 = vmatprep.subr.mxu0 0.0
  %1273 = vmatpush1.msra.mxu0 0.0
  %1274 = vmatprep.subr.mxu0 0.0
  %1275 = vmatpush1.msra.mxu0 0.0
  %1276 = vmatprep.subr.mxu0 0.0
  %1277 = vmatpush1.msra.mxu0 0.0
  %1278 = vmatprep.subr.mxu0 0.0
  %1279 = vmatpush1.msra.mxu0 0.0
  %1280 = vmatprep.subr.mxu0 0.0
  %1281 = vmatpush1.msra.mxu0 0.0
  %1282 = vmatprep.subr.mxu0 0.0
  %1283 = vmatpush1.msra.mxu0 0.0
  %1284 = vmatprep.subr.mxu0 0.0
  %1285 = vmatpush1.msra.mxu0 0.0
  %1286 = vmatprep.subr.mxu0 0.0
  %1287 = vmatpush1.msra.mxu0 0.0
  %1288 = vmatprep.subr.mxu0 0.0
  %1289 = vmatpush1.msra.mxu0 %v377
  %1290 = vmatprep.subr.mxu0 0.0
  %1291 = vmatpush1.msra.mxu0 %v376
  %1292 = vmatprep.subr.mxu0 0.0
  %1293 = vmatpush2.msra.mxu0 0.0
  %1294 = vmatprep.subr.mxu0 0.0
  %1295 = vmatpush2.msra.mxu0 0.0
  %1296 = vmatprep.subr.mxu0 0.0
  %1297 = vmatpush2.msra.mxu0 0.0
  %1298 = vmatprep.subr.mxu0 0.0
  %1299 = vmatpush2.msra.mxu0 0.0
  %1300 = vmatprep.subr.mxu0 0.0
  %1301 = vmatpush2.msra.mxu0 0.0
  %1302 = vmatprep.subr.mxu0 0.0
  %1303 = vmatpush2.msra.mxu0 0.0
  %1304 = vmatprep.subr.mxu0 0.0
  %1305 = vmatpush2.msra.mxu0 0.0
  %1306 = vmatprep.subr.mxu0 0.0
  %1307 = vmatpush2.msra.mxu0 0.0
  %1308 = vmatprep.subr.mxu0 0.0
  %1309 = vmatpush2.msra.mxu0 0.0
  %1310 = vmatprep.subr.mxu0 0.0
  %1311 = vmatpush2.msra.mxu0 0.0
  %1312 = vmatprep.subr.mxu0 0.0
  %1313 = vmatpush2.msra.mxu0 0.0
  %1314 = vmatprep.subr.mxu0 0.0
  %1315 = vmatpush2.msra.mxu0 0.0
  %1316 = vmatprep.subr.mxu0 0.0
  %1317 = vmatpush2.msra.mxu0 0.0
  %1318 = vmatprep.subr.mxu0 0.0
  %1319 = vmatpush2.msra.mxu0 0.0
  %1320 = vmatprep.subr.mxu0 0.0
  %1321 = vmatpush2.msra.mxu0 0.0
  %1322 = vmatprep.subr.mxu0 0.0
  %1323 = vmatpush2.msra.mxu0 0.0
  %1324 = vmatprep.mubr.f32.mxu0 0.0
  %1325 = vmatmul.mubr.f32.gmra.mxu0 %v1258
  %v1326 = vpop.f32.mrf.mxu0
  %v1327 = vadd.f32 0.0, %v1326
  %v1328 = vpop.f32.mrf.mxu0
  %1329 = vdwg.mxu0
  %v1330 = vadd.f32 %v1091, %v1327
  %1332 = vrot.lane.b32.xlu0 %v366, 64
  %v1333 = vpop.permute.xlu0 %1332
  %v1334 = vsel %vm381, %v366, 0
  %v1336 = vsel %vm381, %v1333, 0
  %1338 = vmatprep.subr.mxu0 0.0
  %1339 = vmatpush1.xpose.msra.mxu0 0.0
  %1340 = vmatprep.subr.mxu0 0.0
  %1341 = vmatpush1.xpose.msra.mxu0 0.0
  %1342 = vmatprep.subr.mxu0 0.0
  %1343 = vmatpush1.xpose.msra.mxu0 0.0
  %1344 = vmatprep.subr.mxu0 0.0
  %1345 = vmatpush1.xpose.msra.mxu0 0.0
  %1346 = vmatprep.subr.mxu0 0.0
  %1347 = vmatpush1.xpose.msra.mxu0 0.0
  %1348 = vmatprep.subr.mxu0 0.0
  %1349 = vmatpush1.xpose.msra.mxu0 0.0
  %1350 = vmatprep.subr.mxu0 0.0
  %1351 = vmatpush1.xpose.msra.mxu0 0.0
  %1352 = vmatprep.subr.mxu0 0.0
  %1353 = vmatpush1.xpose.msra.mxu0 0.0
  %1354 = vmatprep.subr.mxu0 0.0
  %1355 = vmatpush1.xpose.msra.mxu0 0.0
  %1356 = vmatprep.subr.mxu0 0.0
  %1357 = vmatpush1.xpose.msra.mxu0 0.0
  %1358 = vmatprep.subr.mxu0 0.0
  %1359 = vmatpush1.xpose.msra.mxu0 0.0
  %1360 = vmatprep.subr.mxu0 0.0
  %1361 = vmatpush1.xpose.msra.mxu0 0.0
  %1362 = vmatprep.subr.mxu0 0.0
  %1363 = vmatpush1.xpose.msra.mxu0 0.0
  %1364 = vmatprep.subr.mxu0 0.0
  %1365 = vmatpush1.xpose.msra.mxu0 0.0
  %1366 = vmatprep.subr.mxu0 0.0
  %1367 = vmatpush1.xpose.msra.mxu0 0.0
  %1368 = vmatprep.subr.mxu0 0.0
  %1369 = vmatpush1.xpose.msra.mxu0 %v1336
  %1370 = vmatprep.subr.mxu0 0.0
  %1371 = vmatpush2.xpose.msra.mxu0 0.0
  %1372 = vmatprep.subr.mxu0 0.0
  %1373 = vmatpush2.xpose.msra.mxu0 0.0
  %1374 = vmatprep.subr.mxu0 0.0
  %1375 = vmatpush2.xpose.msra.mxu0 0.0
  %1376 = vmatprep.subr.mxu0 0.0
  %1377 = vmatpush2.xpose.msra.mxu0 0.0
  %1378 = vmatprep.subr.mxu0 0.0
  %1379 = vmatpush2.xpose.msra.mxu0 0.0
  %1380 = vmatprep.subr.mxu0 0.0
  %1381 = vmatpush2.xpose.msra.mxu0 0.0
  %1382 = vmatprep.subr.mxu0 0.0
  %1383 = vmatpush2.xpose.msra.mxu0 0.0
  %1384 = vmatprep.subr.mxu0 0.0
  %1385 = vmatpush2.xpose.msra.mxu0 0.0
  %1386 = vmatprep.subr.mxu0 0.0
  %1387 = vmatpush2.xpose.msra.mxu0 0.0
  %1388 = vmatprep.subr.mxu0 0.0
  %1389 = vmatpush2.xpose.msra.mxu0 0.0
  %1390 = vmatprep.subr.mxu0 0.0
  %1391 = vmatpush2.xpose.msra.mxu0 0.0
  %1392 = vmatprep.subr.mxu0 0.0
  %1393 = vmatpush2.xpose.msra.mxu0 0.0
  %1394 = vmatprep.subr.mxu0 0.0
  %1395 = vmatpush2.xpose.msra.mxu0 0.0
  %1396 = vmatprep.subr.mxu0 0.0
  %1397 = vmatpush2.xpose.msra.mxu0 0.0
  %1398 = vmatprep.subr.mxu0 0.0
  %1399 = vmatpush2.xpose.msra.mxu0 0.0
  %1400 = vmatprep.subr.mxu0 0.0
  %1401 = vmatpush2.xpose.msra.mxu0 0.0
  %1402 = vmatprep.mubr.f32.mxu0 0.0
  %1403 = vmatmul.mubr.f32.gmra.mxu0 %v1334
  %v1404 = vpop.f32.mrf.mxu0
  %v1405 = vadd.f32 %v146, %v1404
  %v1406 = vpop.f32.mrf.mxu0
  %1407 = vdwg.mxu0
  %v1408 = vsel %vm456, %v1405, -inf
  %1409 = vmax.xlane.f32.xlu0 %v1408
  %v1410 = vpop.xlane.xlu0 %1409
  %v1411 = vsub.f32 %v1405, %v1410
  %v1412 = vmul.f32 %v1411, 1.442695
  %v1413 = vpow.pop %v1412
  %v1414 = vsel %vm456, %v1413, 0.0
  %1415 = vadd.xlane.f32.xlu0 %v1414
  %v1416 = vpop.xlane.xlu0 %1415
  %v1417 = vrcp.pop %v1416
  %v1418 = vmul.f32 %v1413, %v1417
  %v1420 = vsel %vm456, %v1418, 0
  %1422 = vmatprep.subr.mxu0 0.0
  %1423 = vmatpush1.msra.mxu0 0.0
  %1424 = vmatprep.subr.mxu0 0.0
  %1425 = vmatpush1.msra.mxu0 0.0
  %1426 = vmatprep.subr.mxu0 0.0
  %1427 = vmatpush1.msra.mxu0 0.0
  %1428 = vmatprep.subr.mxu0 0.0
  %1429 = vmatpush1.msra.mxu0 0.0
  %1430 = vmatprep.subr.mxu0 0.0
  %1431 = vmatpush1.msra.mxu0 0.0
  %1432 = vmatprep.subr.mxu0 0.0
  %1433 = vmatpush1.msra.mxu0 0.0
  %1434 = vmatprep.subr.mxu0 0.0
  %1435 = vmatpush1.msra.mxu0 0.0
  %1436 = vmatprep.subr.mxu0 0.0
  %1437 = vmatpush1.msra.mxu0 0.0
  %1438 = vmatprep.subr.mxu0 0.0
  %1439 = vmatpush1.msra.mxu0 0.0
  %1440 = vmatprep.subr.mxu0 0.0
  %1441 = vmatpush1.msra.mxu0 0.0
  %1442 = vmatprep.subr.mxu0 0.0
  %1443 = vmatpush1.msra.mxu0 0.0
  %1444 = vmatprep.subr.mxu0 0.0
  %1445 = vmatpush1.msra.mxu0 0.0
  %1446 = vmatprep.subr.mxu0 0.0
  %1447 = vmatpush1.msra.mxu0 0.0
  %1448 = vmatprep.subr.mxu0 0.0
  %1449 = vmatpush1.msra.mxu0 0.0
  %1450 = vmatprep.subr.mxu0 0.0
  %1451 = vmatpush1.msra.mxu0 0.0
  %1452 = vmatprep.subr.mxu0 0.0
  %1453 = vmatpush1.msra.mxu0 %v368
  %1454 = vmatprep.subr.mxu0 0.0
  %1455 = vmatpush2.msra.mxu0 0.0
  %1456 = vmatprep.subr.mxu0 0.0
  %1457 = vmatpush2.msra.mxu0 0.0
  %1458 = vmatprep.subr.mxu0 0.0
  %1459 = vmatpush2.msra.mxu0 0.0
  %1460 = vmatprep.subr.mxu0 0.0
  %1461 = vmatpush2.msra.mxu0 0.0
  %1462 = vmatprep.subr.mxu0 0.0
  %1463 = vmatpush2.msra.mxu0 0.0
  %1464 = vmatprep.subr.mxu0 0.0
  %1465 = vmatpush2.msra.mxu0 0.0
  %1466 = vmatprep.subr.mxu0 0.0
  %1467 = vmatpush2.msra.mxu0 0.0
  %1468 = vmatprep.subr.mxu0 0.0
  %1469 = vmatpush2.msra.mxu0 0.0
  %1470 = vmatprep.subr.mxu0 0.0
  %1471 = vmatpush2.msra.mxu0 0.0
  %1472 = vmatprep.subr.mxu0 0.0
  %1473 = vmatpush2.msra.mxu0 0.0
  %1474 = vmatprep.subr.mxu0 0.0
  %1475 = vmatpush2.msra.mxu0 0.0
  %1476 = vmatprep.subr.mxu0 0.0
  %1477 = vmatpush2.msra.mxu0 0.0
  %1478 = vmatprep.subr.mxu0 0.0
  %1479 = vmatpush2.msra.mxu0 0.0
  %1480 = vmatprep.subr.mxu0 0.0
  %1481 = vmatpush2.msra.mxu0 0.0
  %1482 = vmatprep.subr.mxu0 0.0
  %1483 = vmatpush2.msra.mxu0 0.0
  %1484 = vmatprep.subr.mxu0 0.0
  %1485 = vmatpush2.msra.mxu0 0.0
  %1486 = vmatprep.mubr.f32.mxu0 0.0
  %1487 = vmatmul.mubr.f32.gmra.mxu0 %v1420
  %v1488 = vpop.f32.mrf.mxu0
  %v1489 = vadd.f32 0.0, %v1488
  %v1490 = vpop.f32.mrf.mxu0
  %1491 = vdwg.mxu0
  %1492 = vrot.lane.b32.xlu0 %v366, 112
  %v1493 = vpop.permute.xlu0 %1492
  %1494 = vrot.lane.b32.xlu0 %v366, 48
  %v1495 = vpop.permute.xlu0 %1494
  %v1496 = vsel %vm381, %v1493, 0
  %v1498 = vsel %vm381, %v1495, 0
  %1500 = vmatprep.subr.mxu0 0.0
  %1501 = vmatpush1.xpose.msra.mxu0 0.0
  %1502 = vmatprep.subr.mxu0 0.0
  %1503 = vmatpush1.xpose.msra.mxu0 0.0
  %1504 = vmatprep.subr.mxu0 0.0
  %1505 = vmatpush1.xpose.msra.mxu0 0.0
  %1506 = vmatprep.subr.mxu0 0.0
  %1507 = vmatpush1.xpose.msra.mxu0 0.0
  %1508 = vmatprep.subr.mxu0 0.0
  %1509 = vmatpush1.xpose.msra.mxu0 0.0
  %1510 = vmatprep.subr.mxu0 0.0
  %1511 = vmatpush1.xpose.msra.mxu0 0.0
  %1512 = vmatprep.subr.mxu0 0.0
  %1513 = vmatpush1.xpose.msra.mxu0 0.0
  %1514 = vmatprep.subr.mxu0 0.0
  %1515 = vmatpush1.xpose.msra.mxu0 0.0
  %1516 = vmatprep.subr.mxu0 0.0
  %1517 = vmatpush1.xpose.msra.mxu0 0.0
  %1518 = vmatprep.subr.mxu0 0.0
  %1519 = vmatpush1.xpose.msra.mxu0 0.0
  %1520 = vmatprep.subr.mxu0 0.0
  %1521 = vmatpush1.xpose.msra.mxu0 0.0
  %1522 = vmatprep.subr.mxu0 0.0
  %1523 = vmatpush1.xpose.msra.mxu0 0.0
  %1524 = vmatprep.subr.mxu0 0.0
  %1525 = vmatpush1.xpose.msra.mxu0 0.0
  %1526 = vmatprep.subr.mxu0 0.0
  %1527 = vmatpush1.xpose.msra.mxu0 0.0
  %1528 = vmatprep.subr.mxu0 0.0
  %1529 = vmatpush1.xpose.msra.mxu0 0.0
  %1530 = vmatprep.subr.mxu0 0.0
  %1531 = vmatpush1.xpose.msra.mxu0 %v1498
  %1532 = vmatprep.subr.mxu0 0.0
  %1533 = vmatpush2.xpose.msra.mxu0 0.0
  %1534 = vmatprep.subr.mxu0 0.0
  %1535 = vmatpush2.xpose.msra.mxu0 0.0
  %1536 = vmatprep.subr.mxu0 0.0
  %1537 = vmatpush2.xpose.msra.mxu0 0.0
  %1538 = vmatprep.subr.mxu0 0.0
  %1539 = vmatpush2.xpose.msra.mxu0 0.0
  %1540 = vmatprep.subr.mxu0 0.0
  %1541 = vmatpush2.xpose.msra.mxu0 0.0
  %1542 = vmatprep.subr.mxu0 0.0
  %1543 = vmatpush2.xpose.msra.mxu0 0.0
  %1544 = vmatprep.subr.mxu0 0.0
  %1545 = vmatpush2.xpose.msra.mxu0 0.0
  %1546 = vmatprep.subr.mxu0 0.0
  %1547 = vmatpush2.xpose.msra.mxu0 0.0
  %1548 = vmatprep.subr.mxu0 0.0
  %1549 = vmatpush2.xpose.msra.mxu0 0.0
  %1550 = vmatprep.subr.mxu0 0.0
  %1551 = vmatpush2.xpose.msra.mxu0 0.0
  %1552 = vmatprep.subr.mxu0 0.0
  %1553 = vmatpush2.xpose.msra.mxu0 0.0
  %1554 = vmatprep.subr.mxu0 0.0
  %1555 = vmatpush2.xpose.msra.mxu0 0.0
  %1556 = vmatprep.subr.mxu0 0.0
  %1557 = vmatpush2.xpose.msra.mxu0 0.0
  %1558 = vmatprep.subr.mxu0 0.0
  %1559 = vmatpush2.xpose.msra.mxu0 0.0
  %1560 = vmatprep.subr.mxu0 0.0
  %1561 = vmatpush2.xpose.msra.mxu0 0.0
  %1562 = vmatprep.subr.mxu0 0.0
  %1563 = vmatpush2.xpose.msra.mxu0 0.0
  %1564 = vmatprep.mubr.f32.mxu0 0.0
  %1565 = vmatmul.mubr.f32.gmra.mxu0 %v1496
  %v1566 = vpop.f32.mrf.mxu0
  %v1567 = vadd.f32 %v147, %v1566
  %v1568 = vpop.f32.mrf.mxu0
  %1569 = vdwg.mxu0
  %v1570 = vsel %vm456, %v1567, -inf
  %1571 = vmax.xlane.f32.xlu0 %v1570
  %v1572 = vpop.xlane.xlu0 %1571
  %v1573 = vsub.f32 %v1567, %v1572
  %v1574 = vmul.f32 %v1573, 1.442695
  %v1575 = vpow.pop %v1574
  %v1576 = vsel %vm456, %v1575, 0.0
  %1577 = vadd.xlane.f32.xlu0 %v1576
  %v1578 = vpop.xlane.xlu0 %1577
  %v1579 = vrcp.pop %v1578
  %v1580 = vmul.f32 %v1575, %v1579
  %1582 = vrot.lane.b32.xlu0 %v368, 112
  %v1583 = vpop.permute.xlu0 %1582
  %v1586 = vsel %vm456, %v1580, 0
  %1588 = vmatprep.subr.mxu0 0.0
  %1589 = vmatpush1.msra.mxu0 0.0
  %1590 = vmatprep.subr.mxu0 0.0
  %1591 = vmatpush1.msra.mxu0 0.0
  %1592 = vmatprep.subr.mxu0 0.0
  %1593 = vmatpush1.msra.mxu0 0.0
  %1594 = vmatprep.subr.mxu0 0.0
  %1595 = vmatpush1.msra.mxu0 0.0
  %1596 = vmatprep.subr.mxu0 0.0
  %1597 = vmatpush1.msra.mxu0 0.0
  %1598 = vmatprep.subr.mxu0 0.0
  %1599 = vmatpush1.msra.mxu0 0.0
  %1600 = vmatprep.subr.mxu0 0.0
  %1601 = vmatpush1.msra.mxu0 0.0
  %1602 = vmatprep.subr.mxu0 0.0
  %1603 = vmatpush1.msra.mxu0 0.0
  %1604 = vmatprep.subr.mxu0 0.0
  %1605 = vmatpush1.msra.mxu0 0.0
  %1606 = vmatprep.subr.mxu0 0.0
  %1607 = vmatpush1.msra.mxu0 0.0
  %1608 = vmatprep.subr.mxu0 0.0
  %1609 = vmatpush1.msra.mxu0 0.0
  %1610 = vmatprep.subr.mxu0 0.0
  %1611 = vmatpush1.msra.mxu0 0.0
  %1612 = vmatprep.subr.mxu0 0.0
  %1613 = vmatpush1.msra.mxu0 0.0
  %1614 = vmatprep.subr.mxu0 0.0
  %1615 = vmatpush1.msra.mxu0 0.0
  %1616 = vmatprep.subr.mxu0 0.0
  %1617 = vmatpush1.msra.mxu0 0.0
  %1618 = vmatprep.subr.mxu0 0.0
  %1619 = vmatpush1.msra.mxu0 %v1583
  %1620 = vmatprep.subr.mxu0 0.0
  %1621 = vmatpush2.msra.mxu0 0.0
  %1622 = vmatprep.subr.mxu0 0.0
  %1623 = vmatpush2.msra.mxu0 0.0
  %1624 = vmatprep.subr.mxu0 0.0
  %1625 = vmatpush2.msra.mxu0 0.0
  %1626 = vmatprep.subr.mxu0 0.0
  %1627 = vmatpush2.msra.mxu0 0.0
  %1628 = vmatprep.subr.mxu0 0.0
  %1629 = vmatpush2.msra.mxu0 0.0
  %1630 = vmatprep.subr.mxu0 0.0
  %1631 = vmatpush2.msra.mxu0 0.0
  %1632 = vmatprep.subr.mxu0 0.0
  %1633 = vmatpush2.msra.mxu0 0.0
  %1634 = vmatprep.subr.mxu0 0.0
  %1635 = vmatpush2.msra.mxu0 0.0
  %1636 = vmatprep.subr.mxu0 0.0
  %1637 = vmatpush2.msra.mxu0 0.0
  %1638 = vmatprep.subr.mxu0 0.0
  %1639 = vmatpush2.msra.mxu0 0.0
  %1640 = vmatprep.subr.mxu0 0.0
  %1641 = vmatpush2.msra.mxu0 0.0
  %1642 = vmatprep.subr.mxu0 0.0
  %1643 = vmatpush2.msra.mxu0 0.0
  %1644 = vmatprep.subr.mxu0 0.0
  %1645 = vmatpush2.msra.mxu0 0.0
  %1646 = vmatprep.subr.mxu0 0.0
  %1647 = vmatpush2.msra.mxu0 0.0
  %1648 = vmatprep.subr.mxu0 0.0
  %1649 = vmatpush2.msra.mxu0 0.0
  %1650 = vmatprep.subr.mxu0 0.0
  %1651 = vmatpush2.msra.mxu0 0.0
  %1652 = vmatprep.mubr.f32.mxu0 0.0
  %1653 = vmatmul.mubr.f32.gmra.mxu0 %v1586
  %v1654 = vpop.f32.mrf.mxu0
  %v1655 = vadd.f32 0.0, %v1654
  %v1656 = vpop.f32.mrf.mxu0
  %1657 = vdwg.mxu0
  %v1659 = vsel %vm381, %v1655, 0
  %1661 = vmatprep.subr.mxu0 0.0
  %1662 = vmatpush1.msra.mxu0 0.0
  %1663 = vmatprep.subr.mxu0 0.0
  %1664 = vmatpush1.msra.mxu0 0.0
  %1665 = vmatprep.subr.mxu0 0.0
  %1666 = vmatpush1.msra.mxu0 0.0
  %1667 = vmatprep.subr.mxu0 0.0
  %1668 = vmatpush1.msra.mxu0 0.0
  %1669 = vmatprep.subr.mxu0 0.0
  %1670 = vmatpush1.msra.mxu0 0.0
  %1671 = vmatprep.subr.mxu0 0.0
  %1672 = vmatpush1.msra.mxu0 0.0
  %1673 = vmatprep.subr.mxu0 0.0
  %1674 = vmatpush1.msra.mxu0 0.0
  %1675 = vmatprep.subr.mxu0 0.0
  %1676 = vmatpush1.msra.mxu0 0.0
  %1677 = vmatprep.subr.mxu0 0.0
  %1678 = vmatpush1.msra.mxu0 0.0
  %1679 = vmatprep.subr.mxu0 0.0
  %1680 = vmatpush1.msra.mxu0 0.0
  %1681 = vmatprep.subr.mxu0 0.0
  %1682 = vmatpush1.msra.mxu0 0.0
  %1683 = vmatprep.subr.mxu0 0.0
  %1684 = vmatpush1.msra.mxu0 0.0
  %1685 = vmatprep.subr.mxu0 0.0
  %1686 = vmatpush1.msra.mxu0 0.0
  %1687 = vmatprep.subr.mxu0 0.0
  %1688 = vmatpush1.msra.mxu0 0.0
  %1689 = vmatprep.subr.mxu0 0.0
  %1690 = vmatpush1.msra.mxu0 %v373
  %1691 = vmatprep.subr.mxu0 0.0
  %1692 = vmatpush1.msra.mxu0 %v372
  %1693 = vmatprep.subr.mxu0 0.0
  %1694 = vmatpush2.msra.mxu0 0.0
  %1695 = vmatprep.subr.mxu0 0.0
  %1696 = vmatpush2.msra.mxu0 0.0
  %1697 = vmatprep.subr.mxu0 0.0
  %1698 = vmatpush2.msra.mxu0 0.0
  %1699 = vmatprep.subr.mxu0 0.0
  %1700 = vmatpush2.msra.mxu0 0.0
  %1701 = vmatprep.subr.mxu0 0.0
  %1702 = vmatpush2.msra.mxu0 0.0
  %1703 = vmatprep.subr.mxu0 0.0
  %1704 = vmatpush2.msra.mxu0 0.0
  %1705 = vmatprep.subr.mxu0 0.0
  %1706 = vmatpush2.msra.mxu0 0.0
  %1707 = vmatprep.subr.mxu0 0.0
  %1708 = vmatpush2.msra.mxu0 0.0
  %1709 = vmatprep.subr.mxu0 0.0
  %1710 = vmatpush2.msra.mxu0 0.0
  %1711 = vmatprep.subr.mxu0 0.0
  %1712 = vmatpush2.msra.mxu0 0.0
  %1713 = vmatprep.subr.mxu0 0.0
  %1714 = vmatpush2.msra.mxu0 0.0
  %1715 = vmatprep.subr.mxu0 0.0
  %1716 = vmatpush2.msra.mxu0 0.0
  %1717 = vmatprep.subr.mxu0 0.0
  %1718 = vmatpush2.msra.mxu0 0.0
  %1719 = vmatprep.subr.mxu0 0.0
  %1720 = vmatpush2.msra.mxu0 0.0
  %1721 = vmatprep.subr.mxu0 0.0
  %1722 = vmatpush2.msra.mxu0 0.0
  %1723 = vmatprep.subr.mxu0 0.0
  %1724 = vmatpush2.msra.mxu0 0.0
  %1725 = vmatprep.mubr.f32.mxu0 0.0
  %1726 = vmatmul.mubr.f32.gmra.mxu0 %v1659
  %v1727 = vpop.f32.mrf.mxu0
  %v1728 = vadd.f32 0.0, %v1727
  %v1729 = vpop.f32.mrf.mxu0
  %1730 = vdwg.mxu0
  %v1732 = vsel %vm381, %v1489, 0
  %1734 = vmatprep.subr.mxu0 0.0
  %1735 = vmatpush1.msra.mxu0 0.0
  %1736 = vmatprep.subr.mxu0 0.0
  %1737 = vmatpush1.msra.mxu0 0.0
  %1738 = vmatprep.subr.mxu0 0.0
  %1739 = vmatpush1.msra.mxu0 0.0
  %1740 = vmatprep.subr.mxu0 0.0
  %1741 = vmatpush1.msra.mxu0 0.0
  %1742 = vmatprep.subr.mxu0 0.0
  %1743 = vmatpush1.msra.mxu0 0.0
  %1744 = vmatprep.subr.mxu0 0.0
  %1745 = vmatpush1.msra.mxu0 0.0
  %1746 = vmatprep.subr.mxu0 0.0
  %1747 = vmatpush1.msra.mxu0 0.0
  %1748 = vmatprep.subr.mxu0 0.0
  %1749 = vmatpush1.msra.mxu0 0.0
  %1750 = vmatprep.subr.mxu0 0.0
  %1751 = vmatpush1.msra.mxu0 0.0
  %1752 = vmatprep.subr.mxu0 0.0
  %1753 = vmatpush1.msra.mxu0 0.0
  %1754 = vmatprep.subr.mxu0 0.0
  %1755 = vmatpush1.msra.mxu0 0.0
  %1756 = vmatprep.subr.mxu0 0.0
  %1757 = vmatpush1.msra.mxu0 0.0
  %1758 = vmatprep.subr.mxu0 0.0
  %1759 = vmatpush1.msra.mxu0 0.0
  %1760 = vmatprep.subr.mxu0 0.0
  %1761 = vmatpush1.msra.mxu0 0.0
  %1762 = vmatprep.subr.mxu0 0.0
  %1763 = vmatpush1.msra.mxu0 %v371
  %1764 = vmatprep.subr.mxu0 0.0
  %1765 = vmatpush1.msra.mxu0 %v370
  %1766 = vmatprep.subr.mxu0 0.0
  %1767 = vmatpush2.msra.mxu0 0.0
  %1768 = vmatprep.subr.mxu0 0.0
  %1769 = vmatpush2.msra.mxu0 0.0
  %1770 = vmatprep.subr.mxu0 0.0
  %1771 = vmatpush2.msra.mxu0 0.0
  %1772 = vmatprep.subr.mxu0 0.0
  %1773 = vmatpush2.msra.mxu0 0.0
  %1774 = vmatprep.subr.mxu0 0.0
  %1775 = vmatpush2.msra.mxu0 0.0
  %1776 = vmatprep.subr.mxu0 0.0
  %1777 = vmatpush2.msra.mxu0 0.0
  %1778 = vmatprep.subr.mxu0 0.0
  %1779 = vmatpush2.msra.mxu0 0.0
  %1780 = vmatprep.subr.mxu0 0.0
  %1781 = vmatpush2.msra.mxu0 0.0
  %1782 = vmatprep.subr.mxu0 0.0
  %1783 = vmatpush2.msra.mxu0 0.0
  %1784 = vmatprep.subr.mxu0 0.0
  %1785 = vmatpush2.msra.mxu0 0.0
  %1786 = vmatprep.subr.mxu0 0.0
  %1787 = vmatpush2.msra.mxu0 0.0
  %1788 = vmatprep.subr.mxu0 0.0
  %1789 = vmatpush2.msra.mxu0 0.0
  %1790 = vmatprep.subr.mxu0 0.0
  %1791 = vmatpush2.msra.mxu0 0.0
  %1792 = vmatprep.subr.mxu0 0.0
  %1793 = vmatpush2.msra.mxu0 0.0
  %1794 = vmatprep.subr.mxu0 0.0
  %1795 = vmatpush2.msra.mxu0 0.0
  %1796 = vmatprep.subr.mxu0 0.0
  %1797 = vmatpush2.msra.mxu0 0.0
  %1798 = vmatprep.mubr.f32.mxu0 0.0
  %1799 = vmatmul.mubr.f32.gmra.mxu0 %v1732
  %v1800 = vpop.f32.mrf.mxu0
  %v1801 = vadd.f32 %v1728, %v1800
  %v1802 = vpop.f32.mrf.mxu0
  %1803 = vdwg.mxu0
  %1804 = vrot.lane.b32.xlu0 %v366, 96
  %v1805 = vpop.permute.xlu0 %1804
  %1806 = vrot.lane.b32.xlu0 %v366, 32
  %v1807 = vpop.permute.xlu0 %1806
  %v1808 = vsel %vm381, %v1805, 0
  %v1810 = vsel %vm381, %v1807, 0
  %1812 = vmatprep.subr.mxu0 0.0
  %1813 = vmatpush1.xpose.msra.mxu0 0.0
  %1814 = vmatprep.subr.mxu0 0.0
  %1815 = vmatpush1.xpose.msra.mxu0 0.0
  %1816 = vmatprep.subr.mxu0 0.0
  %1817 = vmatpush1.xpose.msra.mxu0 0.0
  %1818 = vmatprep.subr.mxu0 0.0
  %1819 = vmatpush1.xpose.msra.mxu0 0.0
  %1820 = vmatprep.subr.mxu0 0.0
  %1821 = vmatpush1.xpose.msra.mxu0 0.0
  %1822 = vmatprep.subr.mxu0 0.0
  %1823 = vmatpush1.xpose.msra.mxu0 0.0
  %1824 = vmatprep.subr.mxu0 0.0
  %1825 = vmatpush1.xpose.msra.mxu0 0.0
  %1826 = vmatprep.subr.mxu0 0.0
  %1827 = vmatpush1.xpose.msra.mxu0 0.0
  %1828 = vmatprep.subr.mxu0 0.0
  %1829 = vmatpush1.xpose.msra.mxu0 0.0
  %1830 = vmatprep.subr.mxu0 0.0
  %1831 = vmatpush1.xpose.msra.mxu0 0.0
  %1832 = vmatprep.subr.mxu0 0.0
  %1833 = vmatpush1.xpose.msra.mxu0 0.0
  %1834 = vmatprep.subr.mxu0 0.0
  %1835 = vmatpush1.xpose.msra.mxu0 0.0
  %1836 = vmatprep.subr.mxu0 0.0
  %1837 = vmatpush1.xpose.msra.mxu0 0.0
  %1838 = vmatprep.subr.mxu0 0.0
  %1839 = vmatpush1.xpose.msra.mxu0 0.0
  %1840 = vmatprep.subr.mxu0 0.0
  %1841 = vmatpush1.xpose.msra.mxu0 0.0
  %1842 = vmatprep.subr.mxu0 0.0
  %1843 = vmatpush1.xpose.msra.mxu0 %v1810
  %1844 = vmatprep.subr.mxu0 0.0
  %1845 = vmatpush2.xpose.msra.mxu0 0.0
  %1846 = vmatprep.subr.mxu0 0.0
  %1847 = vmatpush2.xpose.msra.mxu0 0.0
  %1848 = vmatprep.subr.mxu0 0.0
  %1849 = vmatpush2.xpose.msra.mxu0 0.0
  %1850 = vmatprep.subr.mxu0 0.0
  %1851 = vmatpush2.xpose.msra.mxu0 0.0
  %1852 = vmatprep.subr.mxu0 0.0
  %1853 = vmatpush2.xpose.msra.mxu0 0.0
  %1854 = vmatprep.subr.mxu0 0.0
  %1855 = vmatpush2.xpose.msra.mxu0 0.0
  %1856 = vmatprep.subr.mxu0 0.0
  %1857 = vmatpush2.xpose.msra.mxu0 0.0
  %1858 = vmatprep.subr.mxu0 0.0
  %1859 = vmatpush2.xpose.msra.mxu0 0.0
  %1860 = vmatprep.subr.mxu0 0.0
  %1861 = vmatpush2.xpose.msra.mxu0 0.0
  %1862 = vmatprep.subr.mxu0 0.0
  %1863 = vmatpush2.xpose.msra.mxu0 0.0
  %1864 = vmatprep.subr.mxu0 0.0
  %1865 = vmatpush2.xpose.msra.mxu0 0.0
  %1866 = vmatprep.subr.mxu0 0.0
  %1867 = vmatpush2.xpose.msra.mxu0 0.0
  %1868 = vmatprep.subr.mxu0 0.0
  %1869 = vmatpush2.xpose.msra.mxu0 0.0
  %1870 = vmatprep.subr.mxu0 0.0
  %1871 = vmatpush2.xpose.msra.mxu0 0.0
  %1872 = vmatprep.subr.mxu0 0.0
  %1873 = vmatpush2.xpose.msra.mxu0 0.0
  %1874 = vmatprep.subr.mxu0 0.0
  %1875 = vmatpush2.xpose.msra.mxu0 0.0
  %1876 = vmatprep.mubr.f32.mxu0 0.0
  %1877 = vmatmul.mubr.f32.gmra.mxu0 %v1808
  %v1878 = vpop.f32.mrf.mxu0
  %v1879 = vadd.f32 %v148, %v1878
  %v1880 = vpop.f32.mrf.mxu0
  %1881 = vdwg.mxu0
  %v1882 = vsel %vm456, %v1879, -inf
  %1883 = vmax.xlane.f32.xlu0 %v1882
  %v1884 = vpop.xlane.xlu0 %1883
  %v1885 = vsub.f32 %v1879, %v1884
  %v1886 = vmul.f32 %v1885, 1.442695
  %v1887 = vpow.pop %v1886
  %v1888 = vsel %vm456, %v1887, 0.0
  %1889 = vadd.xlane.f32.xlu0 %v1888
  %v1890 = vpop.xlane.xlu0 %1889
  %v1891 = vrcp.pop %v1890
  %v1892 = vmul.f32 %v1887, %v1891
  %1893 = vrot.lane.b32.xlu0 %v368, 96
  %v1894 = vpop.permute.xlu0 %1893
  %v1897 = vsel %vm456, %v1892, 0
  %1899 = vmatprep.subr.mxu0 0.0
  %1900 = vmatpush1.msra.mxu0 0.0
  %1901 = vmatprep.subr.mxu0 0.0
  %1902 = vmatpush1.msra.mxu0 0.0
  %1903 = vmatprep.subr.mxu0 0.0
  %1904 = vmatpush1.msra.mxu0 0.0
  %1905 = vmatprep.subr.mxu0 0.0
  %1906 = vmatpush1.msra.mxu0 0.0
  %1907 = vmatprep.subr.mxu0 0.0
  %1908 = vmatpush1.msra.mxu0 0.0
  %1909 = vmatprep.subr.mxu0 0.0
  %1910 = vmatpush1.msra.mxu0 0.0
  %1911 = vmatprep.subr.mxu0 0.0
  %1912 = vmatpush1.msra.mxu0 0.0
  %1913 = vmatprep.subr.mxu0 0.0
  %1914 = vmatpush1.msra.mxu0 0.0
  %1915 = vmatprep.subr.mxu0 0.0
  %1916 = vmatpush1.msra.mxu0 0.0
  %1917 = vmatprep.subr.mxu0 0.0
  %1918 = vmatpush1.msra.mxu0 0.0
  %1919 = vmatprep.subr.mxu0 0.0
  %1920 = vmatpush1.msra.mxu0 0.0
  %1921 = vmatprep.subr.mxu0 0.0
  %1922 = vmatpush1.msra.mxu0 0.0
  %1923 = vmatprep.subr.mxu0 0.0
  %1924 = vmatpush1.msra.mxu0 0.0
  %1925 = vmatprep.subr.mxu0 0.0
  %1926 = vmatpush1.msra.mxu0 0.0
  %1927 = vmatprep.subr.mxu0 0.0
  %1928 = vmatpush1.msra.mxu0 0.0
  %1929 = vmatprep.subr.mxu0 0.0
  %1930 = vmatpush1.msra.mxu0 %v1894
  %1931 = vmatprep.subr.mxu0 0.0
  %1932 = vmatpush2.msra.mxu0 0.0
  %1933 = vmatprep.subr.mxu0 0.0
  %1934 = vmatpush2.msra.mxu0 0.0
  %1935 = vmatprep.subr.mxu0 0.0
  %1936 = vmatpush2.msra.mxu0 0.0
  %1937 = vmatprep.subr.mxu0 0.0
  %1938 = vmatpush2.msra.mxu0 0.0
  %1939 = vmatprep.subr.mxu0 0.0
  %1940 = vmatpush2.msra.mxu0 0.0
  %1941 = vmatprep.subr.mxu0 0.0
  %1942 = vmatpush2.msra.mxu0 0.0
  %1943 = vmatprep.subr.mxu0 0.0
  %1944 = vmatpush2.msra.mxu0 0.0
  %1945 = vmatprep.subr.mxu0 0.0
  %1946 = vmatpush2.msra.mxu0 0.0
  %1947 = vmatprep.subr.mxu0 0.0
  %1948 = vmatpush2.msra.mxu0 0.0
  %1949 = vmatprep.subr.mxu0 0.0
  %1950 = vmatpush2.msra.mxu0 0.0
  %1951 = vmatprep.subr.mxu0 0.0
  %1952 = vmatpush2.msra.mxu0 0.0
  %1953 = vmatprep.subr.mxu0 0.0
  %1954 = vmatpush2.msra.mxu0 0.0
  %1955 = vmatprep.subr.mxu0 0.0
  %1956 = vmatpush2.msra.mxu0 0.0
  %1957 = vmatprep.subr.mxu0 0.0
  %1958 = vmatpush2.msra.mxu0 0.0
  %1959 = vmatprep.subr.mxu0 0.0
  %1960 = vmatpush2.msra.mxu0 0.0
  %1961 = vmatprep.subr.mxu0 0.0
  %1962 = vmatpush2.msra.mxu0 0.0
  %1963 = vmatprep.mubr.f32.mxu0 0.0
  %1964 = vmatmul.mubr.f32.gmra.mxu0 %v1897
  %v1965 = vpop.f32.mrf.mxu0
  %v1966 = vadd.f32 0.0, %v1965
  %v1967 = vpop.f32.mrf.mxu0
  %1968 = vdwg.mxu0
  %v1970 = vsel %vm381, %v1966, 0
  %1972 = vmatprep.subr.mxu0 0.0
  %1973 = vmatpush1.msra.mxu0 0.0
  %1974 = vmatprep.subr.mxu0 0.0
  %1975 = vmatpush1.msra.mxu0 0.0
  %1976 = vmatprep.subr.mxu0 0.0
  %1977 = vmatpush1.msra.mxu0 0.0
  %1978 = vmatprep.subr.mxu0 0.0
  %1979 = vmatpush1.msra.mxu0 0.0
  %1980 = vmatprep.subr.mxu0 0.0
  %1981 = vmatpush1.msra.mxu0 0.0
  %1982 = vmatprep.subr.mxu0 0.0
  %1983 = vmatpush1.msra.mxu0 0.0
  %1984 = vmatprep.subr.mxu0 0.0
  %1985 = vmatpush1.msra.mxu0 0.0
  %1986 = vmatprep.subr.mxu0 0.0
  %1987 = vmatpush1.msra.mxu0 0.0
  %1988 = vmatprep.subr.mxu0 0.0
  %1989 = vmatpush1.msra.mxu0 0.0
  %1990 = vmatprep.subr.mxu0 0.0
  %1991 = vmatpush1.msra.mxu0 0.0
  %1992 = vmatprep.subr.mxu0 0.0
  %1993 = vmatpush1.msra.mxu0 0.0
  %1994 = vmatprep.subr.mxu0 0.0
  %1995 = vmatpush1.msra.mxu0 0.0
  %1996 = vmatprep.subr.mxu0 0.0
  %1997 = vmatpush1.msra.mxu0 0.0
  %1998 = vmatprep.subr.mxu0 0.0
  %1999 = vmatpush1.msra.mxu0 0.0
  %2000 = vmatprep.subr.mxu0 0.0
  %2001 = vmatpush1.msra.mxu0 %v375
  %2002 = vmatprep.subr.mxu0 0.0
  %2003 = vmatpush1.msra.mxu0 %v374
  %2004 = vmatprep.subr.mxu0 0.0
  %2005 = vmatpush2.msra.mxu0 0.0
  %2006 = vmatprep.subr.mxu0 0.0
  %2007 = vmatpush2.msra.mxu0 0.0
  %2008 = vmatprep.subr.mxu0 0.0
  %2009 = vmatpush2.msra.mxu0 0.0
  %2010 = vmatprep.subr.mxu0 0.0
  %2011 = vmatpush2.msra.mxu0 0.0
  %2012 = vmatprep.subr.mxu0 0.0
  %2013 = vmatpush2.msra.mxu0 0.0
  %2014 = vmatprep.subr.mxu0 0.0
  %2015 = vmatpush2.msra.mxu0 0.0
  %2016 = vmatprep.subr.mxu0 0.0
  %2017 = vmatpush2.msra.mxu0 0.0
  %2018 = vmatprep.subr.mxu0 0.0
  %2019 = vmatpush2.msra.mxu0 0.0
  %2020 = vmatprep.subr.mxu0 0.0
  %2021 = vmatpush2.msra.mxu0 0.0
  %2022 = vmatprep.subr.mxu0 0.0
  %2023 = vmatpush2.msra.mxu0 0.0
  %2024 = vmatprep.subr.mxu0 0.0
  %2025 = vmatpush2.msra.mxu0 0.0
  %2026 = vmatprep.subr.mxu0 0.0
  %2027 = vmatpush2.msra.mxu0 0.0
  %2028 = vmatprep.subr.mxu0 0.0
  %2029 = vmatpush2.msra.mxu0 0.0
  %2030 = vmatprep.subr.mxu0 0.0
  %2031 = vmatpush2.msra.mxu0 0.0
  %2032 = vmatprep.subr.mxu0 0.0
  %2033 = vmatpush2.msra.mxu0 0.0
  %2034 = vmatprep.subr.mxu0 0.0
  %2035 = vmatpush2.msra.mxu0 0.0
  %2036 = vmatprep.mubr.f32.mxu0 0.0
  %2037 = vmatmul.mubr.f32.gmra.mxu0 %v1970
  %v2038 = vpop.f32.mrf.mxu0
  %v2039 = vadd.f32 0.0, %v2038
  %v2040 = vpop.f32.mrf.mxu0
  %2041 = vdwg.mxu0
  %v2042 = vadd.f32 %v1801, %v2039
  %2043 = vrot.lane.b32.xlu0 %v366, 80
  %v2044 = vpop.permute.xlu0 %2043
  %2045 = vrot.lane.b32.xlu0 %v366, 16
  %v2046 = vpop.permute.xlu0 %2045
  %v2047 = vsel %vm381, %v2044, 0
  %v2049 = vsel %vm381, %v2046, 0
  %2051 = vmatprep.subr.mxu0 0.0
  %2052 = vmatpush1.xpose.msra.mxu0 0.0
  %2053 = vmatprep.subr.mxu0 0.0
  %2054 = vmatpush1.xpose.msra.mxu0 0.0
  %2055 = vmatprep.subr.mxu0 0.0
  %2056 = vmatpush1.xpose.msra.mxu0 0.0
  %2057 = vmatprep.subr.mxu0 0.0
  %2058 = vmatpush1.xpose.msra.mxu0 0.0
  %2059 = vmatprep.subr.mxu0 0.0
  %2060 = vmatpush1.xpose.msra.mxu0 0.0
  %2061 = vmatprep.subr.mxu0 0.0
  %2062 = vmatpush1.xpose.msra.mxu0 0.0
  %2063 = vmatprep.subr.mxu0 0.0
  %2064 = vmatpush1.xpose.msra.mxu0 0.0
  %2065 = vmatprep.subr.mxu0 0.0
  %2066 = vmatpush1.xpose.msra.mxu0 0.0
  %2067 = vmatprep.subr.mxu0 0.0
  %2068 = vmatpush1.xpose.msra.mxu0 0.0
  %2069 = vmatprep.subr.mxu0 0.0
  %2070 = vmatpush1.xpose.msra.mxu0 0.0
  %2071 = vmatprep.subr.mxu0 0.0
  %2072 = vmatpush1.xpose.msra.mxu0 0.0
  %2073 = vmatprep.subr.mxu0 0.0
  %2074 = vmatpush1.xpose.msra.mxu0 0.0
  %2075 = vmatprep.subr.mxu0 0.0
  %2076 = vmatpush1.xpose.msra.mxu0 0.0
  %2077 = vmatprep.subr.mxu0 0.0
  %2078 = vmatpush1.xpose.msra.mxu0 0.0
  %2079 = vmatprep.subr.mxu0 0.0
  %2080 = vmatpush1.xpose.msra.mxu0 0.0
  %2081 = vmatprep.subr.mxu0 0.0
  %2082 = vmatpush1.xpose.msra.mxu0 %v2049
  %2083 = vmatprep.subr.mxu0 0.0
  %2084 = vmatpush2.xpose.msra.mxu0 0.0
  %2085 = vmatprep.subr.mxu0 0.0
  %2086 = vmatpush2.xpose.msra.mxu0 0.0
  %2087 = vmatprep.subr.mxu0 0.0
  %2088 = vmatpush2.xpose.msra.mxu0 0.0
  %2089 = vmatprep.subr.mxu0 0.0
  %2090 = vmatpush2.xpose.msra.mxu0 0.0
  %2091 = vmatprep.subr.mxu0 0.0
  %2092 = vmatpush2.xpose.msra.mxu0 0.0
  %2093 = vmatprep.subr.mxu0 0.0
  %2094 = vmatpush2.xpose.msra.mxu0 0.0
  %2095 = vmatprep.subr.mxu0 0.0
  %2096 = vmatpush2.xpose.msra.mxu0 0.0
  %2097 = vmatprep.subr.mxu0 0.0
  %2098 = vmatpush2.xpose.msra.mxu0 0.0
  %2099 = vmatprep.subr.mxu0 0.0
  %2100 = vmatpush2.xpose.msra.mxu0 0.0
  %2101 = vmatprep.subr.mxu0 0.0
  %2102 = vmatpush2.xpose.msra.mxu0 0.0
  %2103 = vmatprep.subr.mxu0 0.0
  %2104 = vmatpush2.xpose.msra.mxu0 0.0
  %2105 = vmatprep.subr.mxu0 0.0
  %2106 = vmatpush2.xpose.msra.mxu0 0.0
  %2107 = vmatprep.subr.mxu0 0.0
  %2108 = vmatpush2.xpose.msra.mxu0 0.0
  %2109 = vmatprep.subr.mxu0 0.0
  %2110 = vmatpush2.xpose.msra.mxu0 0.0
  %2111 = vmatprep.subr.mxu0 0.0
  %2112 = vmatpush2.xpose.msra.mxu0 0.0
  %2113 = vmatprep.subr.mxu0 0.0
  %2114 = vmatpush2.xpose.msra.mxu0 0.0
  %2115 = vmatprep.mubr.f32.mxu0 0.0
  %2116 = vmatmul.mubr.f32.gmra.mxu0 %v2047
  %v2117 = vpop.f32.mrf.mxu0
  %v2118 = vadd.f32 %v149, %v2117
  %v2119 = vpop.f32.mrf.mxu0
  %2120 = vdwg.mxu0
  %v2121 = vsel %vm456, %v2118, -inf
  %2122 = vmax.xlane.f32.xlu0 %v2121
  %v2123 = vpop.xlane.xlu0 %2122
  %v2124 = vsub.f32 %v2118, %v2123
  %v2125 = vmul.f32 %v2124, 1.442695
  %v2126 = vpow.pop %v2125
  %v2127 = vsel %vm456, %v2126, 0.0
  %2128 = vadd.xlane.f32.xlu0 %v2127
  %v2129 = vpop.xlane.xlu0 %2128
  %v2130 = vrcp.pop %v2129
  %v2131 = vmul.f32 %v2126, %v2130
  %2132 = vrot.lane.b32.xlu0 %v368, 80
  %v2133 = vpop.permute.xlu0 %2132
  %v2136 = vsel %vm456, %v2131, 0
  %2138 = vmatprep.subr.mxu0 0.0
  %2139 = vmatpush1.msra.mxu0 0.0
  %2140 = vmatprep.subr.mxu0 0.0
  %2141 = vmatpush1.msra.mxu0 0.0
  %2142 = vmatprep.subr.mxu0 0.0
  %2143 = vmatpush1.msra.mxu0 0.0
  %2144 = vmatprep.subr.mxu0 0.0
  %2145 = vmatpush1.msra.mxu0 0.0
  %2146 = vmatprep.subr.mxu0 0.0
  %2147 = vmatpush1.msra.mxu0 0.0
  %2148 = vmatprep.subr.mxu0 0.0
  %2149 = vmatpush1.msra.mxu0 0.0
  %2150 = vmatprep.subr.mxu0 0.0
  %2151 = vmatpush1.msra.mxu0 0.0
  %2152 = vmatprep.subr.mxu0 0.0
  %2153 = vmatpush1.msra.mxu0 0.0
  %2154 = vmatprep.subr.mxu0 0.0
  %2155 = vmatpush1.msra.mxu0 0.0
  %2156 = vmatprep.subr.mxu0 0.0
  %2157 = vmatpush1.msra.mxu0 0.0
  %2158 = vmatprep.subr.mxu0 0.0
  %2159 = vmatpush1.msra.mxu0 0.0
  %2160 = vmatprep.subr.mxu0 0.0
  %2161 = vmatpush1.msra.mxu0 0.0
  %2162 = vmatprep.subr.mxu0 0.0
  %2163 = vmatpush1.msra.mxu0 0.0
  %2164 = vmatprep.subr.mxu0 0.0
  %2165 = vmatpush1.msra.mxu0 0.0
  %2166 = vmatprep.subr.mxu0 0.0
  %2167 = vmatpush1.msra.mxu0 0.0
  %2168 = vmatprep.subr.mxu0 0.0
  %2169 = vmatpush1.msra.mxu0 %v2133
  %2170 = vmatprep.subr.mxu0 0.0
  %2171 = vmatpush2.msra.mxu0 0.0
  %2172 = vmatprep.subr.mxu0 0.0
  %2173 = vmatpush2.msra.mxu0 0.0
  %2174 = vmatprep.subr.mxu0 0.0
  %2175 = vmatpush2.msra.mxu0 0.0
  %2176 = vmatprep.subr.mxu0 0.0
  %2177 = vmatpush2.msra.mxu0 0.0
  %2178 = vmatprep.subr.mxu0 0.0
  %2179 = vmatpush2.msra.mxu0 0.0
  %2180 = vmatprep.subr.mxu0 0.0
  %2181 = vmatpush2.msra.mxu0 0.0
  %2182 = vmatprep.subr.mxu0 0.0
  %2183 = vmatpush2.msra.mxu0 0.0
  %2184 = vmatprep.subr.mxu0 0.0
  %2185 = vmatpush2.msra.mxu0 0.0
  %2186 = vmatprep.subr.mxu0 0.0
  %2187 = vmatpush2.msra.mxu0 0.0
  %2188 = vmatprep.subr.mxu0 0.0
  %2189 = vmatpush2.msra.mxu0 0.0
  %2190 = vmatprep.subr.mxu0 0.0
  %2191 = vmatpush2.msra.mxu0 0.0
  %2192 = vmatprep.subr.mxu0 0.0
  %2193 = vmatpush2.msra.mxu0 0.0
  %2194 = vmatprep.subr.mxu0 0.0
  %2195 = vmatpush2.msra.mxu0 0.0
  %2196 = vmatprep.subr.mxu0 0.0
  %2197 = vmatpush2.msra.mxu0 0.0
  %2198 = vmatprep.subr.mxu0 0.0
  %2199 = vmatpush2.msra.mxu0 0.0
  %2200 = vmatprep.subr.mxu0 0.0
  %2201 = vmatpush2.msra.mxu0 0.0
  %2202 = vmatprep.mubr.f32.mxu0 0.0
  %2203 = vmatmul.mubr.f32.gmra.mxu0 %v2136
  %v2204 = vpop.f32.mrf.mxu0
  %v2205 = vadd.f32 0.0, %v2204
  %v2206 = vpop.f32.mrf.mxu0
  %2207 = vdwg.mxu0
  %v2209 = vsel %vm381, %v2205, 0
  %2211 = vmatprep.subr.mxu0 0.0
  %2212 = vmatpush1.msra.mxu0 0.0
  %2213 = vmatprep.subr.mxu0 0.0
  %2214 = vmatpush1.msra.mxu0 0.0
  %2215 = vmatprep.subr.mxu0 0.0
  %2216 = vmatpush1.msra.mxu0 0.0
  %2217 = vmatprep.subr.mxu0 0.0
  %2218 = vmatpush1.msra.mxu0 0.0
  %2219 = vmatprep.subr.mxu0 0.0
  %2220 = vmatpush1.msra.mxu0 0.0
  %2221 = vmatprep.subr.mxu0 0.0
  %2222 = vmatpush1.msra.mxu0 0.0
  %2223 = vmatprep.subr.mxu0 0.0
  %2224 = vmatpush1.msra.mxu0 0.0
  %2225 = vmatprep.subr.mxu0 0.0
  %2226 = vmatpush1.msra.mxu0 0.0
  %2227 = vmatprep.subr.mxu0 0.0
  %2228 = vmatpush1.msra.mxu0 0.0
  %2229 = vmatprep.subr.mxu0 0.0
  %2230 = vmatpush1.msra.mxu0 0.0
  %2231 = vmatprep.subr.mxu0 0.0
  %2232 = vmatpush1.msra.mxu0 0.0
  %2233 = vmatprep.subr.mxu0 0.0
  %2234 = vmatpush1.msra.mxu0 0.0
  %2235 = vmatprep.subr.mxu0 0.0
  %2236 = vmatpush1.msra.mxu0 0.0
  %2237 = vmatprep.subr.mxu0 0.0
  %2238 = vmatpush1.msra.mxu0 0.0
  %2239 = vmatprep.subr.mxu0 0.0
  %2240 = vmatpush1.msra.mxu0 %v377
  %2241 = vmatprep.subr.mxu0 0.0
  %2242 = vmatpush1.msra.mxu0 %v376
  %2243 = vmatprep.subr.mxu0 0.0
  %2244 = vmatpush2.msra.mxu0 0.0
  %2245 = vmatprep.subr.mxu0 0.0
  %2246 = vmatpush2.msra.mxu0 0.0
  %2247 = vmatprep.subr.mxu0 0.0
  %2248 = vmatpush2.msra.mxu0 0.0
  %2249 = vmatprep.subr.mxu0 0.0
  %2250 = vmatpush2.msra.mxu0 0.0
  %2251 = vmatprep.subr.mxu0 0.0
  %2252 = vmatpush2.msra.mxu0 0.0
  %2253 = vmatprep.subr.mxu0 0.0
  %2254 = vmatpush2.msra.mxu0 0.0
  %2255 = vmatprep.subr.mxu0 0.0
  %2256 = vmatpush2.msra.mxu0 0.0
  %2257 = vmatprep.subr.mxu0 0.0
  %2258 = vmatpush2.msra.mxu0 0.0
  %2259 = vmatprep.subr.mxu0 0.0
  %2260 = vmatpush2.msra.mxu0 0.0
  %2261 = vmatprep.subr.mxu0 0.0
  %2262 = vmatpush2.msra.mxu0 0.0
  %2263 = vmatprep.subr.mxu0 0.0
  %2264 = vmatpush2.msra.mxu0 0.0
  %2265 = vmatprep.subr.mxu0 0.0
  %2266 = vmatpush2.msra.mxu0 0.0
  %2267 = vmatprep.subr.mxu0 0.0
  %2268 = vmatpush2.msra.mxu0 0.0
  %2269 = vmatprep.subr.mxu0 0.0
  %2270 = vmatpush2.msra.mxu0 0.0
  %2271 = vmatprep.subr.mxu0 0.0
  %2272 = vmatpush2.msra.mxu0 0.0
  %2273 = vmatprep.subr.mxu0 0.0
  %2274 = vmatpush2.msra.mxu0 0.0
  %2275 = vmatprep.mubr.f32.mxu0 0.0
  %2276 = vmatmul.mubr.f32.gmra.mxu0 %v2209
  %v2277 = vpop.f32.mrf.mxu0
  %v2278 = vadd.f32 0.0, %v2277
  %v2279 = vpop.f32.mrf.mxu0
  %2280 = vdwg.mxu0
  %v2281 = vadd.f32 %v2042, %v2278
  %v2282 = vadd.f32 %v237, %v1330
  %v2283 = vadd.f32 %v242, %v2281
  %v2284 = vmul.f32 %v2282, %v2282
  %v2285 = vmul.f32 %v2283, %v2283
  %v2286 = vsel %vm249, %v2284, 0.0
  %2287 = vadd.xlane.f32.xlu0 %v2286
  %v2288 = vpop.xlane.xlu0 %2287
  %v2289 = vsel %vm249, %v2285, 0.0
  %2290 = vadd.xlane.f32.xlu0 %v2289
  %v2291 = vpop.xlane.xlu0 %2290
  %v2292 = vmul.f32 %v2288, %v256
  %v2293 = vmul.f32 %v2291, %v256
  %v2294 = vadd.f32 %v2292, 1e-06
  %v2295 = vadd.f32 %v2293, 1e-06
  %v2296 = vrsqrt.pop %v2294
  %v2297 = vrsqrt.pop %v2295
  %v2298 = vmul.f32 %v2282, %v2296
  %v2299 = vmul.f32 %v2283, %v2297
  %v2300 = vlaneseq
  %v2301 = vshrl.u32 %v2300, 7
  %v2302 = vsub.s32 0, %v2301
  %v2303 = vrot.slane %v246, %v2302
  %v2304 = vmul.f32 %v2298, %v2303
  %v2305 = vmul.f32 %v2299, %v2303
  %v2306 = vld [vmem:[%s19] sm:$0xff]
  %v2307 = vld [vmem:[%s19 + $0x8] sm:$0xff]
  %v2308 = vld [vmem:[%s19 + $0x10] sm:$0xff]
  %v2309 = vld [vmem:[%s19 + $0x18] sm:$0xff]
  %v2310 = vld [vmem:[%s19 + $0x20] sm:$0xff]
  %v2311 = vld [vmem:[%s19 + $0x28] sm:$0xff]
  %v2312 = vld [vmem:[%s19 + $0x30] sm:$0xff]
  %v2313 = vld [vmem:[%s19 + $0x38] sm:$0xff]
  %v2315 = vsel %vm249, %v2304, 0
  %v2318 = vsel %vm249, %v2305, 0
  %2320 = vmatprep.subr.mxu0 0.0
  %2321 = vmatpush1.msra.mxu0 0.0
  %2322 = vmatprep.subr.mxu0 0.0
  %2323 = vmatpush1.msra.mxu0 0.0
  %2324 = vmatprep.subr.mxu0 0.0
  %2325 = vmatpush1.msra.mxu0 0.0
  %2326 = vmatprep.subr.mxu0 0.0
  %2327 = vmatpush1.msra.mxu0 0.0
  %2328 = vmatprep.subr.mxu0 0.0
  %2329 = vmatpush1.msra.mxu0 0.0
  %2330 = vmatprep.subr.mxu0 0.0
  %2331 = vmatpush1.msra.mxu0 0.0
  %2332 = vmatprep.subr.mxu0 0.0
  %2333 = vmatpush1.msra.mxu0 0.0
  %2334 = vmatprep.subr.mxu0 0.0
  %2335 = vmatpush1.msra.mxu0 0.0
  %2336 = vmatprep.subr.mxu0 0.0
  %2337 = vmatpush1.msra.mxu0 %v2313
  %2338 = vmatprep.subr.mxu0 0.0
  %2339 = vmatpush1.msra.mxu0 %v2312
  %2340 = vmatprep.subr.mxu0 0.0
  %2341 = vmatpush1.msra.mxu0 %v2311
  %2342 = vmatprep.subr.mxu0 0.0
  %2343 = vmatpush1.msra.mxu0 %v2310
  %2344 = vmatprep.subr.mxu0 0.0
  %2345 = vmatpush1.msra.mxu0 %v2309
  %2346 = vmatprep.subr.mxu0 0.0
  %2347 = vmatpush1.msra.mxu0 %v2308
  %2348 = vmatprep.subr.mxu0 0.0
  %2349 = vmatpush1.msra.mxu0 %v2307
  %2350 = vmatprep.subr.mxu0 0.0
  %2351 = vmatpush1.msra.mxu0 %v2306
  %2352 = vmatprep.subr.mxu0 0.0
  %2353 = vmatpush2.msra.mxu0 0.0
  %2354 = vmatprep.subr.mxu0 0.0
  %2355 = vmatpush2.msra.mxu0 0.0
  %2356 = vmatprep.subr.mxu0 0.0
  %2357 = vmatpush2.msra.mxu0 0.0
  %2358 = vmatprep.subr.mxu0 0.0
  %2359 = vmatpush2.msra.mxu0 0.0
  %2360 = vmatprep.subr.mxu0 0.0
  %2361 = vmatpush2.msra.mxu0 0.0
  %2362 = vmatprep.subr.mxu0 0.0
  %2363 = vmatpush2.msra.mxu0 0.0
  %2364 = vmatprep.subr.mxu0 0.0
  %2365 = vmatpush2.msra.mxu0 0.0
  %2366 = vmatprep.subr.mxu0 0.0
  %2367 = vmatpush2.msra.mxu0 0.0
  %2368 = vmatprep.subr.mxu0 0.0
  %2369 = vmatpush2.msra.mxu0 0.0
  %2370 = vmatprep.subr.mxu0 0.0
  %2371 = vmatpush2.msra.mxu0 0.0
  %2372 = vmatprep.subr.mxu0 0.0
  %2373 = vmatpush2.msra.mxu0 0.0
  %2374 = vmatprep.subr.mxu0 0.0
  %2375 = vmatpush2.msra.mxu0 0.0
  %2376 = vmatprep.subr.mxu0 0.0
  %2377 = vmatpush2.msra.mxu0 0.0
  %2378 = vmatprep.subr.mxu0 0.0
  %2379 = vmatpush2.msra.mxu0 0.0
  %2380 = vmatprep.subr.mxu0 0.0
  %2381 = vmatpush2.msra.mxu0 0.0
  %2382 = vmatprep.subr.mxu0 0.0
  %2383 = vmatpush2.msra.mxu0 0.0
  %2384 = vmatprep.mubr.f32.mxu0 0.0
  %2385 = vmatmul.mubr.f32.gmra.mxu0 %v2315
  %v2386 = vpop.f32.mrf.mxu0
  %v2387 = vadd.f32 0.0, %v2386
  %v2388 = vpop.f32.mrf.mxu0
  %2389 = vmatprep.mubr.f32.mxu0 0.0
  %2390 = vmatmul.mubr.f32.gmra.mxu0 %v2318
  %v2391 = vpop.f32.mrf.mxu0
  %v2392 = vadd.f32 0.0, %v2391
  %v2393 = vpop.f32.mrf.mxu0
  %2394 = vdwg.mxu0
  %v2395 = vmax.f32 %v2387, 0.0
  %v2396 = vmax.f32 %v2392, 0.0
  %v2397 = vld [vmem:[%s21] sm:$0xff]
  %v2398 = vld [vmem:[%s21 + $0x8] sm:$0xff]
  %v2399 = vld [vmem:[%s21 + $0x10] sm:$0xff]
  %v2400 = vld [vmem:[%s21 + $0x18] sm:$0xff]
  %v2401 = vld [vmem:[%s21 + $0x20] sm:$0xff]
  %v2402 = vld [vmem:[%s21 + $0x28] sm:$0xff]
  %v2403 = vld [vmem:[%s21 + $0x30] sm:$0xff]
  %v2404 = vld [vmem:[%s21 + $0x38] sm:$0xff]
  %v2405 = vld [vmem:[%s21 + $0x40] sm:$0xff]
  %v2406 = vld [vmem:[%s21 + $0x48] sm:$0xff]
  %v2407 = vld [vmem:[%s21 + $0x50] sm:$0xff]
  %v2408 = vld [vmem:[%s21 + $0x58] sm:$0xff]
  %v2409 = vld [vmem:[%s21 + $0x60] sm:$0xff]
  %v2410 = vld [vmem:[%s21 + $0x68] sm:$0xff]
  %v2411 = vld [vmem:[%s21 + $0x70] sm:$0xff]
  %v2412 = vld [vmem:[%s21 + $0x78] sm:$0xff]
  %2413 = vmatprep.subr.mxu0 0.0
  %2414 = vmatpush1.msra.mxu0 %v2412
  %2415 = vmatprep.subr.mxu0 0.0
  %2416 = vmatpush1.msra.mxu0 %v2411
  %2417 = vmatprep.subr.mxu0 0.0
  %2418 = vmatpush1.msra.mxu0 %v2410
  %2419 = vmatprep.subr.mxu0 0.0
  %2420 = vmatpush1.msra.mxu0 %v2409
  %2421 = vmatprep.subr.mxu0 0.0
  %2422 = vmatpush1.msra.mxu0 %v2408
  %2423 = vmatprep.subr.mxu0 0.0
  %2424 = vmatpush1.msra.mxu0 %v2407
  %2425 = vmatprep.subr.mxu0 0.0
  %2426 = vmatpush1.msra.mxu0 %v2406
  %2427 = vmatprep.subr.mxu0 0.0
  %2428 = vmatpush1.msra.mxu0 %v2405
  %2429 = vmatprep.subr.mxu0 0.0
  %2430 = vmatpush1.msra.mxu0 %v2404
  %2431 = vmatprep.subr.mxu0 0.0
  %2432 = vmatpush1.msra.mxu0 %v2403
  %2433 = vmatprep.subr.mxu0 0.0
  %2434 = vmatpush1.msra.mxu0 %v2402
  %2435 = vmatprep.subr.mxu0 0.0
  %2436 = vmatpush1.msra.mxu0 %v2401
  %2437 = vmatprep.subr.mxu0 0.0
  %2438 = vmatpush1.msra.mxu0 %v2400
  %2439 = vmatprep.subr.mxu0 0.0
  %2440 = vmatpush1.msra.mxu0 %v2399
  %2441 = vmatprep.subr.mxu0 0.0
  %2442 = vmatpush1.msra.mxu0 %v2398
  %2443 = vmatprep.subr.mxu0 0.0
  %2444 = vmatpush1.msra.mxu0 %v2397
  %2445 = vmatprep.subr.mxu0 0.0
  %2446 = vmatpush2.msra.mxu0 0.0
  %2447 = vmatprep.subr.mxu0 0.0
  %2448 = vmatpush2.msra.mxu0 0.0
  %2449 = vmatprep.subr.mxu0 0.0
  %2450 = vmatpush2.msra.mxu0 0.0
  %2451 = vmatprep.subr.mxu0 0.0
  %2452 = vmatpush2.msra.mxu0 0.0
  %2453 = vmatprep.subr.mxu0 0.0
  %2454 = vmatpush2.msra.mxu0 0.0
  %2455 = vmatprep.subr.mxu0 0.0
  %2456 = vmatpush2.msra.mxu0 0.0
  %2457 = vmatprep.subr.mxu0 0.0
  %2458 = vmatpush2.msra.mxu0 0.0
  %2459 = vmatprep.subr.mxu0 0.0
  %2460 = vmatpush2.msra.mxu0 0.0
  %2461 = vmatprep.subr.mxu0 0.0
  %2462 = vmatpush2.msra.mxu0 0.0
  %2463 = vmatprep.subr.mxu0 0.0
  %2464 = vmatpush2.msra.mxu0 0.0
  %2465 = vmatprep.subr.mxu0 0.0
  %2466 = vmatpush2.msra.mxu0 0.0
  %2467 = vmatprep.subr.mxu0 0.0
  %2468 = vmatpush2.msra.mxu0 0.0
  %2469 = vmatprep.subr.mxu0 0.0
  %2470 = vmatpush2.msra.mxu0 0.0
  %2471 = vmatprep.subr.mxu0 0.0
  %2472 = vmatpush2.msra.mxu0 0.0
  %2473 = vmatprep.subr.mxu0 0.0
  %2474 = vmatpush2.msra.mxu0 0.0
  %2475 = vmatprep.subr.mxu0 0.0
  %2476 = vmatpush2.msra.mxu0 0.0
  %2477 = vmatprep.mubr.f32.mxu0 0.0
  %2478 = vmatmul.mubr.f32.gmra.mxu0 %v2395
  %v2479 = vpop.f32.mrf.mxu0
  %v2480 = vadd.f32 0.0, %v2479
  %v2481 = vpop.f32.mrf.mxu0
  %2482 = vmatprep.mubr.f32.mxu0 0.0
  %2483 = vmatmul.mubr.f32.gmra.mxu0 %v2396
  %v2484 = vpop.f32.mrf.mxu0
  %v2485 = vadd.f32 0.0, %v2484
  %v2486 = vpop.f32.mrf.mxu0
  %2487 = vdwg.mxu0
  %v2488 = vadd.f32 %v2282, %v2480
  %v2489 = vadd.f32 %v2283, %v2485
  %v2490 = vmul.f32 %v2488, %v2488
  %v2491 = vmul.f32 %v2489, %v2489
  %v2492 = vsel %vm249, %v2490, 0.0
  %2493 = vadd.xlane.f32.xlu0 %v2492
  %v2494 = vpop.xlane.xlu0 %2493
  %v2495 = vsel %vm249, %v2491, 0.0
  %2496 = vadd.xlane.f32.xlu0 %v2495
  %v2497 = vpop.xlane.xlu0 %2496
  %v2498 = vmul.f32 %v2494, %v256
  %v2499 = vmul.f32 %v2497, %v256
  %v2500 = vadd.f32 %v2498, 1e-06
  %v2501 = vadd.f32 %v2499, 1e-06
  %v2502 = vrsqrt.pop %v2500
  %v2503 = vrsqrt.pop %v2501
  %v2504 = vmul.f32 %v2488, %v2502
  %v2505 = vmul.f32 %v2489, %v2503
  %v2506 = vlaneseq
  %v2507 = vshrl.u32 %v2506, 7
  %v2508 = vsub.s32 1, %v2507
  %v2509 = vrot.slane %v245, %v2508
  %v2510 = vmul.f32 %v2504, %v2509
  %v2511 = vmul.f32 %v2505, %v2509
  %s2512 = scalar_lea.vmem %s13, 128
  %v2513 = vld [vmem:[%s2512] sm:$0xff]
  %v2514 = vld [vmem:[%s2512 + $0x8] sm:$0xff]
  %v2515 = vld [vmem:[%s2512 + $0x10] sm:$0xff]
  %v2516 = vld [vmem:[%s2512 + $0x18] sm:$0xff]
  %v2517 = vld [vmem:[%s2512 + $0x20] sm:$0xff]
  %v2518 = vld [vmem:[%s2512 + $0x28] sm:$0xff]
  %v2519 = vld [vmem:[%s2512 + $0x30] sm:$0xff]
  %v2520 = vld [vmem:[%s2512 + $0x38] sm:$0xff]
  %v2521 = vld [vmem:[%s2512 + $0x40] sm:$0xff]
  %v2522 = vld [vmem:[%s2512 + $0x48] sm:$0xff]
  %v2523 = vld [vmem:[%s2512 + $0x50] sm:$0xff]
  %v2524 = vld [vmem:[%s2512 + $0x58] sm:$0xff]
  %v2525 = vld [vmem:[%s2512 + $0x60] sm:$0xff]
  %v2526 = vld [vmem:[%s2512 + $0x68] sm:$0xff]
  %v2527 = vld [vmem:[%s2512 + $0x70] sm:$0xff]
  %v2528 = vld [vmem:[%s2512 + $0x78] sm:$0xff]
  %v2530 = vsel %vm249, %v2510, 0
  %v2533 = vsel %vm249, %v2511, 0
  %2535 = vmatprep.subr.mxu0 0.0
  %2536 = vmatpush1.msra.mxu0 0.0
  %2537 = vmatprep.subr.mxu0 0.0
  %2538 = vmatpush1.msra.mxu0 0.0
  %2539 = vmatprep.subr.mxu0 0.0
  %2540 = vmatpush1.msra.mxu0 0.0
  %2541 = vmatprep.subr.mxu0 0.0
  %2542 = vmatpush1.msra.mxu0 0.0
  %2543 = vmatprep.subr.mxu0 0.0
  %2544 = vmatpush1.msra.mxu0 0.0
  %2545 = vmatprep.subr.mxu0 0.0
  %2546 = vmatpush1.msra.mxu0 0.0
  %2547 = vmatprep.subr.mxu0 0.0
  %2548 = vmatpush1.msra.mxu0 0.0
  %2549 = vmatprep.subr.mxu0 0.0
  %2550 = vmatpush1.msra.mxu0 0.0
  %2551 = vmatprep.subr.mxu0 %v2528
  %2552 = vmatpush1.msra.mxu0 %v2527
  %2553 = vmatprep.subr.mxu0 %v2526
  %2554 = vmatpush1.msra.mxu0 %v2525
  %2555 = vmatprep.subr.mxu0 %v2524
  %2556 = vmatpush1.msra.mxu0 %v2523
  %2557 = vmatprep.subr.mxu0 %v2522
  %2558 = vmatpush1.msra.mxu0 %v2521
  %2559 = vmatprep.subr.mxu0 %v2520
  %2560 = vmatpush1.msra.mxu0 %v2519
  %2561 = vmatprep.subr.mxu0 %v2518
  %2562 = vmatpush1.msra.mxu0 %v2517
  %2563 = vmatprep.subr.mxu0 %v2516
  %2564 = vmatpush1.msra.mxu0 %v2515
  %2565 = vmatprep.subr.mxu0 %v2514
  %2566 = vmatpush1.msra.mxu0 %v2513
  %2567 = vmatprep.subr.mxu0 0.0
  %2568 = vmatpush2.msra.mxu0 0.0
  %2569 = vmatprep.subr.mxu0 0.0
  %2570 = vmatpush2.msra.mxu0 0.0
  %2571 = vmatprep.subr.mxu0 0.0
  %2572 = vmatpush2.msra.mxu0 0.0
  %2573 = vmatprep.subr.mxu0 0.0
  %2574 = vmatpush2.msra.mxu0 0.0
  %2575 = vmatprep.subr.mxu0 0.0
  %2576 = vmatpush2.msra.mxu0 0.0
  %2577 = vmatprep.subr.mxu0 0.0
  %2578 = vmatpush2.msra.mxu0 0.0
  %2579 = vmatprep.subr.mxu0 0.0
  %2580 = vmatpush2.msra.mxu0 0.0
  %2581 = vmatprep.subr.mxu0 0.0
  %2582 = vmatpush2.msra.mxu0 0.0
  %2583 = vmatprep.subr.mxu0 0.0
  %2584 = vmatpush2.msra.mxu0 0.0
  %2585 = vmatprep.subr.mxu0 0.0
  %2586 = vmatpush2.msra.mxu0 0.0
  %2587 = vmatprep.subr.mxu0 0.0
  %2588 = vmatpush2.msra.mxu0 0.0
  %2589 = vmatprep.subr.mxu0 0.0
  %2590 = vmatpush2.msra.mxu0 0.0
  %2591 = vmatprep.subr.mxu0 0.0
  %2592 = vmatpush2.msra.mxu0 0.0
  %2593 = vmatprep.subr.mxu0 0.0
  %2594 = vmatpush2.msra.mxu0 0.0
  %2595 = vmatprep.subr.mxu0 0.0
  %2596 = vmatpush2.msra.mxu0 0.0
  %2597 = vmatprep.subr.mxu0 0.0
  %2598 = vmatpush2.msra.mxu0 0.0
  %2599 = vmatprep.mubr.f32.mxu0 0.0
  %2600 = vmatmul.mubr.f32.gmra.mxu0 %v2530
  %v2601 = vpop.f32.mrf.mxu0
  %v2602 = vadd.f32 0.0, %v2601
  %v2603 = vpop.f32.mrf.mxu0
  %v2604 = vadd.f32 0.0, %v2603
  %2605 = vmatprep.mubr.f32.mxu0 0.0
  %2606 = vmatmul.mubr.f32.gmra.mxu0 %v2533
  %v2607 = vpop.f32.mrf.mxu0
  %v2608 = vadd.f32 0.0, %v2607
  %v2609 = vpop.f32.mrf.mxu0
  %v2610 = vadd.f32 0.0, %v2609
  %2611 = vdwg.mxu0
  %s2612 = scalar_lea.vmem %s15, 64
  %v2613 = vld [vmem:[%s2612] sm:$0xff]
  %v2614 = vld [vmem:[%s2612 + $0x8] sm:$0xff]
  %v2615 = vld [vmem:[%s2612 + $0x10] sm:$0xff]
  %v2616 = vld [vmem:[%s2612 + $0x18] sm:$0xff]
  %v2617 = vld [vmem:[%s2612 + $0x20] sm:$0xff]
  %v2618 = vld [vmem:[%s2612 + $0x28] sm:$0xff]
  %v2619 = vld [vmem:[%s2612 + $0x30] sm:$0xff]
  %v2620 = vld [vmem:[%s2612 + $0x38] sm:$0xff]
  %2622 = vrot.lane.b32.xlu0 %v2602, 64
  %v2623 = vpop.permute.xlu0 %2622
  %v2624 = vsel %vm381, %v2602, 0
  %v2626 = vsel %vm381, %v2623, 0
  %2628 = vmatprep.subr.mxu0 0.0
  %2629 = vmatpush1.xpose.msra.mxu0 0.0
  %2630 = vmatprep.subr.mxu0 0.0
  %2631 = vmatpush1.xpose.msra.mxu0 0.0
  %2632 = vmatprep.subr.mxu0 0.0
  %2633 = vmatpush1.xpose.msra.mxu0 0.0
  %2634 = vmatprep.subr.mxu0 0.0
  %2635 = vmatpush1.xpose.msra.mxu0 0.0
  %2636 = vmatprep.subr.mxu0 0.0
  %2637 = vmatpush1.xpose.msra.mxu0 0.0
  %2638 = vmatprep.subr.mxu0 0.0
  %2639 = vmatpush1.xpose.msra.mxu0 0.0
  %2640 = vmatprep.subr.mxu0 0.0
  %2641 = vmatpush1.xpose.msra.mxu0 0.0
  %2642 = vmatprep.subr.mxu0 0.0
  %2643 = vmatpush1.xpose.msra.mxu0 0.0
  %2644 = vmatprep.subr.mxu0 0.0
  %2645 = vmatpush1.xpose.msra.mxu0 0.0
  %2646 = vmatprep.subr.mxu0 0.0
  %2647 = vmatpush1.xpose.msra.mxu0 0.0
  %2648 = vmatprep.subr.mxu0 0.0
  %2649 = vmatpush1.xpose.msra.mxu0 0.0
  %2650 = vmatprep.subr.mxu0 0.0
  %2651 = vmatpush1.xpose.msra.mxu0 0.0
  %2652 = vmatprep.subr.mxu0 0.0
  %2653 = vmatpush1.xpose.msra.mxu0 0.0
  %2654 = vmatprep.subr.mxu0 0.0
  %2655 = vmatpush1.xpose.msra.mxu0 0.0
  %2656 = vmatprep.subr.mxu0 0.0
  %2657 = vmatpush1.xpose.msra.mxu0 0.0
  %2658 = vmatprep.subr.mxu0 0.0
  %2659 = vmatpush1.xpose.msra.mxu0 %v2626
  %2660 = vmatprep.subr.mxu0 0.0
  %2661 = vmatpush2.xpose.msra.mxu0 0.0
  %2662 = vmatprep.subr.mxu0 0.0
  %2663 = vmatpush2.xpose.msra.mxu0 0.0
  %2664 = vmatprep.subr.mxu0 0.0
  %2665 = vmatpush2.xpose.msra.mxu0 0.0
  %2666 = vmatprep.subr.mxu0 0.0
  %2667 = vmatpush2.xpose.msra.mxu0 0.0
  %2668 = vmatprep.subr.mxu0 0.0
  %2669 = vmatpush2.xpose.msra.mxu0 0.0
  %2670 = vmatprep.subr.mxu0 0.0
  %2671 = vmatpush2.xpose.msra.mxu0 0.0
  %2672 = vmatprep.subr.mxu0 0.0
  %2673 = vmatpush2.xpose.msra.mxu0 0.0
  %2674 = vmatprep.subr.mxu0 0.0
  %2675 = vmatpush2.xpose.msra.mxu0 0.0
  %2676 = vmatprep.subr.mxu0 0.0
  %2677 = vmatpush2.xpose.msra.mxu0 0.0
  %2678 = vmatprep.subr.mxu0 0.0
  %2679 = vmatpush2.xpose.msra.mxu0 0.0
  %2680 = vmatprep.subr.mxu0 0.0
  %2681 = vmatpush2.xpose.msra.mxu0 0.0
  %2682 = vmatprep.subr.mxu0 0.0
  %2683 = vmatpush2.xpose.msra.mxu0 0.0
  %2684 = vmatprep.subr.mxu0 0.0
  %2685 = vmatpush2.xpose.msra.mxu0 0.0
  %2686 = vmatprep.subr.mxu0 0.0
  %2687 = vmatpush2.xpose.msra.mxu0 0.0
  %2688 = vmatprep.subr.mxu0 0.0
  %2689 = vmatpush2.xpose.msra.mxu0 0.0
  %2690 = vmatprep.subr.mxu0 0.0
  %2691 = vmatpush2.xpose.msra.mxu0 0.0
  %2692 = vmatprep.mubr.f32.mxu0 0.0
  %2693 = vmatmul.mubr.f32.gmra.mxu0 %v2624
  %v2694 = vpop.f32.mrf.mxu0
  %v2695 = vadd.f32 %v132, %v2694
  %v2696 = vpop.f32.mrf.mxu0
  %2697 = vdwg.mxu0
  %v2698 = vsel %vm456, %v2695, -inf
  %2699 = vmax.xlane.f32.xlu0 %v2698
  %v2700 = vpop.xlane.xlu0 %2699
  %v2701 = vsub.f32 %v2695, %v2700
  %v2702 = vmul.f32 %v2701, 1.442695
  %v2703 = vpow.pop %v2702
  %v2704 = vsel %vm456, %v2703, 0.0
  %2705 = vadd.xlane.f32.xlu0 %v2704
  %v2706 = vpop.xlane.xlu0 %2705
  %v2707 = vrcp.pop %v2706
  %v2708 = vmul.f32 %v2703, %v2707
  %v2710 = vsel %vm456, %v2708, 0
  %2712 = vmatprep.subr.mxu0 0.0
  %2713 = vmatpush1.msra.mxu0 0.0
  %2714 = vmatprep.subr.mxu0 0.0
  %2715 = vmatpush1.msra.mxu0 0.0
  %2716 = vmatprep.subr.mxu0 0.0
  %2717 = vmatpush1.msra.mxu0 0.0
  %2718 = vmatprep.subr.mxu0 0.0
  %2719 = vmatpush1.msra.mxu0 0.0
  %2720 = vmatprep.subr.mxu0 0.0
  %2721 = vmatpush1.msra.mxu0 0.0
  %2722 = vmatprep.subr.mxu0 0.0
  %2723 = vmatpush1.msra.mxu0 0.0
  %2724 = vmatprep.subr.mxu0 0.0
  %2725 = vmatpush1.msra.mxu0 0.0
  %2726 = vmatprep.subr.mxu0 0.0
  %2727 = vmatpush1.msra.mxu0 0.0
  %2728 = vmatprep.subr.mxu0 0.0
  %2729 = vmatpush1.msra.mxu0 0.0
  %2730 = vmatprep.subr.mxu0 0.0
  %2731 = vmatpush1.msra.mxu0 0.0
  %2732 = vmatprep.subr.mxu0 0.0
  %2733 = vmatpush1.msra.mxu0 0.0
  %2734 = vmatprep.subr.mxu0 0.0
  %2735 = vmatpush1.msra.mxu0 0.0
  %2736 = vmatprep.subr.mxu0 0.0
  %2737 = vmatpush1.msra.mxu0 0.0
  %2738 = vmatprep.subr.mxu0 0.0
  %2739 = vmatpush1.msra.mxu0 0.0
  %2740 = vmatprep.subr.mxu0 0.0
  %2741 = vmatpush1.msra.mxu0 0.0
  %2742 = vmatprep.subr.mxu0 0.0
  %2743 = vmatpush1.msra.mxu0 %v2604
  %2744 = vmatprep.subr.mxu0 0.0
  %2745 = vmatpush2.msra.mxu0 0.0
  %2746 = vmatprep.subr.mxu0 0.0
  %2747 = vmatpush2.msra.mxu0 0.0
  %2748 = vmatprep.subr.mxu0 0.0
  %2749 = vmatpush2.msra.mxu0 0.0
  %2750 = vmatprep.subr.mxu0 0.0
  %2751 = vmatpush2.msra.mxu0 0.0
  %2752 = vmatprep.subr.mxu0 0.0
  %2753 = vmatpush2.msra.mxu0 0.0
  %2754 = vmatprep.subr.mxu0 0.0
  %2755 = vmatpush2.msra.mxu0 0.0
  %2756 = vmatprep.subr.mxu0 0.0
  %2757 = vmatpush2.msra.mxu0 0.0
  %2758 = vmatprep.subr.mxu0 0.0
  %2759 = vmatpush2.msra.mxu0 0.0
  %2760 = vmatprep.subr.mxu0 0.0
  %2761 = vmatpush2.msra.mxu0 0.0
  %2762 = vmatprep.subr.mxu0 0.0
  %2763 = vmatpush2.msra.mxu0 0.0
  %2764 = vmatprep.subr.mxu0 0.0
  %2765 = vmatpush2.msra.mxu0 0.0
  %2766 = vmatprep.subr.mxu0 0.0
  %2767 = vmatpush2.msra.mxu0 0.0
  %2768 = vmatprep.subr.mxu0 0.0
  %2769 = vmatpush2.msra.mxu0 0.0
  %2770 = vmatprep.subr.mxu0 0.0
  %2771 = vmatpush2.msra.mxu0 0.0
  %2772 = vmatprep.subr.mxu0 0.0
  %2773 = vmatpush2.msra.mxu0 0.0
  %2774 = vmatprep.subr.mxu0 0.0
  %2775 = vmatpush2.msra.mxu0 0.0
  %2776 = vmatprep.mubr.f32.mxu0 0.0
  %2777 = vmatmul.mubr.f32.gmra.mxu0 %v2710
  %v2778 = vpop.f32.mrf.mxu0
  %v2779 = vadd.f32 0.0, %v2778
  %v2780 = vpop.f32.mrf.mxu0
  %2781 = vdwg.mxu0
  %2782 = vrot.lane.b32.xlu0 %v2602, 112
  %v2783 = vpop.permute.xlu0 %2782
  %2784 = vrot.lane.b32.xlu0 %v2602, 48
  %v2785 = vpop.permute.xlu0 %2784
  %v2786 = vsel %vm381, %v2783, 0
  %v2788 = vsel %vm381, %v2785, 0
  %2790 = vmatprep.subr.mxu0 0.0
  %2791 = vmatpush1.xpose.msra.mxu0 0.0
  %2792 = vmatprep.subr.mxu0 0.0
  %2793 = vmatpush1.xpose.msra.mxu0 0.0
  %2794 = vmatprep.subr.mxu0 0.0
  %2795 = vmatpush1.xpose.msra.mxu0 0.0
  %2796 = vmatprep.subr.mxu0 0.0
  %2797 = vmatpush1.xpose.msra.mxu0 0.0
  %2798 = vmatprep.subr.mxu0 0.0
  %2799 = vmatpush1.xpose.msra.mxu0 0.0
  %2800 = vmatprep.subr.mxu0 0.0
  %2801 = vmatpush1.xpose.msra.mxu0 0.0
  %2802 = vmatprep.subr.mxu0 0.0
  %2803 = vmatpush1.xpose.msra.mxu0 0.0
  %2804 = vmatprep.subr.mxu0 0.0
  %2805 = vmatpush1.xpose.msra.mxu0 0.0
  %2806 = vmatprep.subr.mxu0 0.0
  %2807 = vmatpush1.xpose.msra.mxu0 0.0
  %2808 = vmatprep.subr.mxu0 0.0
  %2809 = vmatpush1.xpose.msra.mxu0 0.0
  %2810 = vmatprep.subr.mxu0 0.0
  %2811 = vmatpush1.xpose.msra.mxu0 0.0
  %2812 = vmatprep.subr.mxu0 0.0
  %2813 = vmatpush1.xpose.msra.mxu0 0.0
  %2814 = vmatprep.subr.mxu0 0.0
  %2815 = vmatpush1.xpose.msra.mxu0 0.0
  %2816 = vmatprep.subr.mxu0 0.0
  %2817 = vmatpush1.xpose.msra.mxu0 0.0
  %2818 = vmatprep.subr.mxu0 0.0
  %2819 = vmatpush1.xpose.msra.mxu0 0.0
  %2820 = vmatprep.subr.mxu0 0.0
  %2821 = vmatpush1.xpose.msra.mxu0 %v2788
  %2822 = vmatprep.subr.mxu0 0.0
  %2823 = vmatpush2.xpose.msra.mxu0 0.0
  %2824 = vmatprep.subr.mxu0 0.0
  %2825 = vmatpush2.xpose.msra.mxu0 0.0
  %2826 = vmatprep.subr.mxu0 0.0
  %2827 = vmatpush2.xpose.msra.mxu0 0.0
  %2828 = vmatprep.subr.mxu0 0.0
  %2829 = vmatpush2.xpose.msra.mxu0 0.0
  %2830 = vmatprep.subr.mxu0 0.0
  %2831 = vmatpush2.xpose.msra.mxu0 0.0
  %2832 = vmatprep.subr.mxu0 0.0
  %2833 = vmatpush2.xpose.msra.mxu0 0.0
  %2834 = vmatprep.subr.mxu0 0.0
  %2835 = vmatpush2.xpose.msra.mxu0 0.0
  %2836 = vmatprep.subr.mxu0 0.0
  %2837 = vmatpush2.xpose.msra.mxu0 0.0
  %2838 = vmatprep.subr.mxu0 0.0
  %2839 = vmatpush2.xpose.msra.mxu0 0.0
  %2840 = vmatprep.subr.mxu0 0.0
  %2841 = vmatpush2.xpose.msra.mxu0 0.0
  %2842 = vmatprep.subr.mxu0 0.0
  %2843 = vmatpush2.xpose.msra.mxu0 0.0
  %2844 = vmatprep.subr.mxu0 0.0
  %2845 = vmatpush2.xpose.msra.mxu0 0.0
  %2846 = vmatprep.subr.mxu0 0.0
  %2847 = vmatpush2.xpose.msra.mxu0 0.0
  %2848 = vmatprep.subr.mxu0 0.0
  %2849 = vmatpush2.xpose.msra.mxu0 0.0
  %2850 = vmatprep.subr.mxu0 0.0
  %2851 = vmatpush2.xpose.msra.mxu0 0.0
  %2852 = vmatprep.subr.mxu0 0.0
  %2853 = vmatpush2.xpose.msra.mxu0 0.0
  %2854 = vmatprep.mubr.f32.mxu0 0.0
  %2855 = vmatmul.mubr.f32.gmra.mxu0 %v2786
  %v2856 = vpop.f32.mrf.mxu0
  %v2857 = vadd.f32 %v135, %v2856
  %v2858 = vpop.f32.mrf.mxu0
  %2859 = vdwg.mxu0
  %v2860 = vsel %vm456, %v2857, -inf
  %2861 = vmax.xlane.f32.xlu0 %v2860
  %v2862 = vpop.xlane.xlu0 %2861
  %v2863 = vsub.f32 %v2857, %v2862
  %v2864 = vmul.f32 %v2863, 1.442695
  %v2865 = vpow.pop %v2864
  %v2866 = vsel %vm456, %v2865, 0.0
  %2867 = vadd.xlane.f32.xlu0 %v2866
  %v2868 = vpop.xlane.xlu0 %2867
  %v2869 = vrcp.pop %v2868
  %v2870 = vmul.f32 %v2865, %v2869
  %2872 = vrot.lane.b32.xlu0 %v2604, 112
  %v2873 = vpop.permute.xlu0 %2872
  %v2876 = vsel %vm456, %v2870, 0
  %2878 = vmatprep.subr.mxu0 0.0
  %2879 = vmatpush1.msra.mxu0 0.0
  %2880 = vmatprep.subr.mxu0 0.0
  %2881 = vmatpush1.msra.mxu0 0.0
  %2882 = vmatprep.subr.mxu0 0.0
  %2883 = vmatpush1.msra.mxu0 0.0
  %2884 = vmatprep.subr.mxu0 0.0
  %2885 = vmatpush1.msra.mxu0 0.0
  %2886 = vmatprep.subr.mxu0 0.0
  %2887 = vmatpush1.msra.mxu0 0.0
  %2888 = vmatprep.subr.mxu0 0.0
  %2889 = vmatpush1.msra.mxu0 0.0
  %2890 = vmatprep.subr.mxu0 0.0
  %2891 = vmatpush1.msra.mxu0 0.0
  %2892 = vmatprep.subr.mxu0 0.0
  %2893 = vmatpush1.msra.mxu0 0.0
  %2894 = vmatprep.subr.mxu0 0.0
  %2895 = vmatpush1.msra.mxu0 0.0
  %2896 = vmatprep.subr.mxu0 0.0
  %2897 = vmatpush1.msra.mxu0 0.0
  %2898 = vmatprep.subr.mxu0 0.0
  %2899 = vmatpush1.msra.mxu0 0.0
  %2900 = vmatprep.subr.mxu0 0.0
  %2901 = vmatpush1.msra.mxu0 0.0
  %2902 = vmatprep.subr.mxu0 0.0
  %2903 = vmatpush1.msra.mxu0 0.0
  %2904 = vmatprep.subr.mxu0 0.0
  %2905 = vmatpush1.msra.mxu0 0.0
  %2906 = vmatprep.subr.mxu0 0.0
  %2907 = vmatpush1.msra.mxu0 0.0
  %2908 = vmatprep.subr.mxu0 0.0
  %2909 = vmatpush1.msra.mxu0 %v2873
  %2910 = vmatprep.subr.mxu0 0.0
  %2911 = vmatpush2.msra.mxu0 0.0
  %2912 = vmatprep.subr.mxu0 0.0
  %2913 = vmatpush2.msra.mxu0 0.0
  %2914 = vmatprep.subr.mxu0 0.0
  %2915 = vmatpush2.msra.mxu0 0.0
  %2916 = vmatprep.subr.mxu0 0.0
  %2917 = vmatpush2.msra.mxu0 0.0
  %2918 = vmatprep.subr.mxu0 0.0
  %2919 = vmatpush2.msra.mxu0 0.0
  %2920 = vmatprep.subr.mxu0 0.0
  %2921 = vmatpush2.msra.mxu0 0.0
  %2922 = vmatprep.subr.mxu0 0.0
  %2923 = vmatpush2.msra.mxu0 0.0
  %2924 = vmatprep.subr.mxu0 0.0
  %2925 = vmatpush2.msra.mxu0 0.0
  %2926 = vmatprep.subr.mxu0 0.0
  %2927 = vmatpush2.msra.mxu0 0.0
  %2928 = vmatprep.subr.mxu0 0.0
  %2929 = vmatpush2.msra.mxu0 0.0
  %2930 = vmatprep.subr.mxu0 0.0
  %2931 = vmatpush2.msra.mxu0 0.0
  %2932 = vmatprep.subr.mxu0 0.0
  %2933 = vmatpush2.msra.mxu0 0.0
  %2934 = vmatprep.subr.mxu0 0.0
  %2935 = vmatpush2.msra.mxu0 0.0
  %2936 = vmatprep.subr.mxu0 0.0
  %2937 = vmatpush2.msra.mxu0 0.0
  %2938 = vmatprep.subr.mxu0 0.0
  %2939 = vmatpush2.msra.mxu0 0.0
  %2940 = vmatprep.subr.mxu0 0.0
  %2941 = vmatpush2.msra.mxu0 0.0
  %2942 = vmatprep.mubr.f32.mxu0 0.0
  %2943 = vmatmul.mubr.f32.gmra.mxu0 %v2876
  %v2944 = vpop.f32.mrf.mxu0
  %v2945 = vadd.f32 0.0, %v2944
  %v2946 = vpop.f32.mrf.mxu0
  %2947 = vdwg.mxu0
  %v2949 = vsel %vm381, %v2945, 0
  %2951 = vmatprep.subr.mxu0 0.0
  %2952 = vmatpush1.msra.mxu0 0.0
  %2953 = vmatprep.subr.mxu0 0.0
  %2954 = vmatpush1.msra.mxu0 0.0
  %2955 = vmatprep.subr.mxu0 0.0
  %2956 = vmatpush1.msra.mxu0 0.0
  %2957 = vmatprep.subr.mxu0 0.0
  %2958 = vmatpush1.msra.mxu0 0.0
  %2959 = vmatprep.subr.mxu0 0.0
  %2960 = vmatpush1.msra.mxu0 0.0
  %2961 = vmatprep.subr.mxu0 0.0
  %2962 = vmatpush1.msra.mxu0 0.0
  %2963 = vmatprep.subr.mxu0 0.0
  %2964 = vmatpush1.msra.mxu0 0.0
  %2965 = vmatprep.subr.mxu0 0.0
  %2966 = vmatpush1.msra.mxu0 0.0
  %2967 = vmatprep.subr.mxu0 0.0
  %2968 = vmatpush1.msra.mxu0 0.0
  %2969 = vmatprep.subr.mxu0 0.0
  %2970 = vmatpush1.msra.mxu0 0.0
  %2971 = vmatprep.subr.mxu0 0.0
  %2972 = vmatpush1.msra.mxu0 0.0
  %2973 = vmatprep.subr.mxu0 0.0
  %2974 = vmatpush1.msra.mxu0 0.0
  %2975 = vmatprep.subr.mxu0 0.0
  %2976 = vmatpush1.msra.mxu0 0.0
  %2977 = vmatprep.subr.mxu0 0.0
  %2978 = vmatpush1.msra.mxu0 0.0
  %2979 = vmatprep.subr.mxu0 0.0
  %2980 = vmatpush1.msra.mxu0 %v2616
  %2981 = vmatprep.subr.mxu0 0.0
  %2982 = vmatpush1.msra.mxu0 %v2615
  %2983 = vmatprep.subr.mxu0 0.0
  %2984 = vmatpush2.msra.mxu0 0.0
  %2985 = vmatprep.subr.mxu0 0.0
  %2986 = vmatpush2.msra.mxu0 0.0
  %2987 = vmatprep.subr.mxu0 0.0
  %2988 = vmatpush2.msra.mxu0 0.0
  %2989 = vmatprep.subr.mxu0 0.0
  %2990 = vmatpush2.msra.mxu0 0.0
  %2991 = vmatprep.subr.mxu0 0.0
  %2992 = vmatpush2.msra.mxu0 0.0
  %2993 = vmatprep.subr.mxu0 0.0
  %2994 = vmatpush2.msra.mxu0 0.0
  %2995 = vmatprep.subr.mxu0 0.0
  %2996 = vmatpush2.msra.mxu0 0.0
  %2997 = vmatprep.subr.mxu0 0.0
  %2998 = vmatpush2.msra.mxu0 0.0
  %2999 = vmatprep.subr.mxu0 0.0
  %3000 = vmatpush2.msra.mxu0 0.0
  %3001 = vmatprep.subr.mxu0 0.0
  %3002 = vmatpush2.msra.mxu0 0.0
  %3003 = vmatprep.subr.mxu0 0.0
  %3004 = vmatpush2.msra.mxu0 0.0
  %3005 = vmatprep.subr.mxu0 0.0
  %3006 = vmatpush2.msra.mxu0 0.0
  %3007 = vmatprep.subr.mxu0 0.0
  %3008 = vmatpush2.msra.mxu0 0.0
  %3009 = vmatprep.subr.mxu0 0.0
  %3010 = vmatpush2.msra.mxu0 0.0
  %3011 = vmatprep.subr.mxu0 0.0
  %3012 = vmatpush2.msra.mxu0 0.0
  %3013 = vmatprep.subr.mxu0 0.0
  %3014 = vmatpush2.msra.mxu0 0.0
  %3015 = vmatprep.mubr.f32.mxu0 0.0
  %3016 = vmatmul.mubr.f32.gmra.mxu0 %v2949
  %v3017 = vpop.f32.mrf.mxu0
  %v3018 = vadd.f32 0.0, %v3017
  %v3019 = vpop.f32.mrf.mxu0
  %3020 = vdwg.mxu0
  %v3022 = vsel %vm381, %v2779, 0
  %3024 = vmatprep.subr.mxu0 0.0
  %3025 = vmatpush1.msra.mxu0 0.0
  %3026 = vmatprep.subr.mxu0 0.0
  %3027 = vmatpush1.msra.mxu0 0.0
  %3028 = vmatprep.subr.mxu0 0.0
  %3029 = vmatpush1.msra.mxu0 0.0
  %3030 = vmatprep.subr.mxu0 0.0
  %3031 = vmatpush1.msra.mxu0 0.0
  %3032 = vmatprep.subr.mxu0 0.0
  %3033 = vmatpush1.msra.mxu0 0.0
  %3034 = vmatprep.subr.mxu0 0.0
  %3035 = vmatpush1.msra.mxu0 0.0
  %3036 = vmatprep.subr.mxu0 0.0
  %3037 = vmatpush1.msra.mxu0 0.0
  %3038 = vmatprep.subr.mxu0 0.0
  %3039 = vmatpush1.msra.mxu0 0.0
  %3040 = vmatprep.subr.mxu0 0.0
  %3041 = vmatpush1.msra.mxu0 0.0
  %3042 = vmatprep.subr.mxu0 0.0
  %3043 = vmatpush1.msra.mxu0 0.0
  %3044 = vmatprep.subr.mxu0 0.0
  %3045 = vmatpush1.msra.mxu0 0.0
  %3046 = vmatprep.subr.mxu0 0.0
  %3047 = vmatpush1.msra.mxu0 0.0
  %3048 = vmatprep.subr.mxu0 0.0
  %3049 = vmatpush1.msra.mxu0 0.0
  %3050 = vmatprep.subr.mxu0 0.0
  %3051 = vmatpush1.msra.mxu0 0.0
  %3052 = vmatprep.subr.mxu0 0.0
  %3053 = vmatpush1.msra.mxu0 %v2614
  %3054 = vmatprep.subr.mxu0 0.0
  %3055 = vmatpush1.msra.mxu0 %v2613
  %3056 = vmatprep.subr.mxu0 0.0
  %3057 = vmatpush2.msra.mxu0 0.0
  %3058 = vmatprep.subr.mxu0 0.0
  %3059 = vmatpush2.msra.mxu0 0.0
  %3060 = vmatprep.subr.mxu0 0.0
  %3061 = vmatpush2.msra.mxu0 0.0
  %3062 = vmatprep.subr.mxu0 0.0
  %3063 = vmatpush2.msra.mxu0 0.0
  %3064 = vmatprep.subr.mxu0 0.0
  %3065 = vmatpush2.msra.mxu0 0.0
  %3066 = vmatprep.subr.mxu0 0.0
  %3067 = vmatpush2.msra.mxu0 0.0
  %3068 = vmatprep.subr.mxu0 0.0
  %3069 = vmatpush2.msra.mxu0 0.0
  %3070 = vmatprep.subr.mxu0 0.0
  %3071 = vmatpush2.msra.mxu0 0.0
  %3072 = vmatprep.subr.mxu0 0.0
  %3073 = vmatpush2.msra.mxu0 0.0
  %3074 = vmatprep.subr.mxu0 0.0
  %3075 = vmatpush2.msra.mxu0 0.0
  %3076 = vmatprep.subr.mxu0 0.0
  %3077 = vmatpush2.msra.mxu0 0.0
  %3078 = vmatprep.subr.mxu0 0.0
  %3079 = vmatpush2.msra.mxu0 0.0
  %3080 = vmatprep.subr.mxu0 0.0
  %3081 = vmatpush2.msra.mxu0 0.0
  %3082 = vmatprep.subr.mxu0 0.0
  %3083 = vmatpush2.msra.mxu0 0.0
  %3084 = vmatprep.subr.mxu0 0.0
  %3085 = vmatpush2.msra.mxu0 0.0
  %3086 = vmatprep.subr.mxu0 0.0
  %3087 = vmatpush2.msra.mxu0 0.0
  %3088 = vmatprep.mubr.f32.mxu0 0.0
  %3089 = vmatmul.mubr.f32.gmra.mxu0 %v3022
  %v3090 = vpop.f32.mrf.mxu0
  %v3091 = vadd.f32 %v3018, %v3090
  %v3092 = vpop.f32.mrf.mxu0
  %3093 = vdwg.mxu0
  %3094 = vrot.lane.b32.xlu0 %v2602, 96
  %v3095 = vpop.permute.xlu0 %3094
  %3096 = vrot.lane.b32.xlu0 %v2602, 32
  %v3097 = vpop.permute.xlu0 %3096
  %v3098 = vsel %vm381, %v3095, 0
  %v3100 = vsel %vm381, %v3097, 0
  %3102 = vmatprep.subr.mxu0 0.0
  %3103 = vmatpush1.xpose.msra.mxu0 0.0
  %3104 = vmatprep.subr.mxu0 0.0
  %3105 = vmatpush1.xpose.msra.mxu0 0.0
  %3106 = vmatprep.subr.mxu0 0.0
  %3107 = vmatpush1.xpose.msra.mxu0 0.0
  %3108 = vmatprep.subr.mxu0 0.0
  %3109 = vmatpush1.xpose.msra.mxu0 0.0
  %3110 = vmatprep.subr.mxu0 0.0
  %3111 = vmatpush1.xpose.msra.mxu0 0.0
  %3112 = vmatprep.subr.mxu0 0.0
  %3113 = vmatpush1.xpose.msra.mxu0 0.0
  %3114 = vmatprep.subr.mxu0 0.0
  %3115 = vmatpush1.xpose.msra.mxu0 0.0
  %3116 = vmatprep.subr.mxu0 0.0
  %3117 = vmatpush1.xpose.msra.mxu0 0.0
  %3118 = vmatprep.subr.mxu0 0.0
  %3119 = vmatpush1.xpose.msra.mxu0 0.0
  %3120 = vmatprep.subr.mxu0 0.0
  %3121 = vmatpush1.xpose.msra.mxu0 0.0
  %3122 = vmatprep.subr.mxu0 0.0
  %3123 = vmatpush1.xpose.msra.mxu0 0.0
  %3124 = vmatprep.subr.mxu0 0.0
  %3125 = vmatpush1.xpose.msra.mxu0 0.0
  %3126 = vmatprep.subr.mxu0 0.0
  %3127 = vmatpush1.xpose.msra.mxu0 0.0
  %3128 = vmatprep.subr.mxu0 0.0
  %3129 = vmatpush1.xpose.msra.mxu0 0.0
  %3130 = vmatprep.subr.mxu0 0.0
  %3131 = vmatpush1.xpose.msra.mxu0 0.0
  %3132 = vmatprep.subr.mxu0 0.0
  %3133 = vmatpush1.xpose.msra.mxu0 %v3100
  %3134 = vmatprep.subr.mxu0 0.0
  %3135 = vmatpush2.xpose.msra.mxu0 0.0
  %3136 = vmatprep.subr.mxu0 0.0
  %3137 = vmatpush2.xpose.msra.mxu0 0.0
  %3138 = vmatprep.subr.mxu0 0.0
  %3139 = vmatpush2.xpose.msra.mxu0 0.0
  %3140 = vmatprep.subr.mxu0 0.0
  %3141 = vmatpush2.xpose.msra.mxu0 0.0
  %3142 = vmatprep.subr.mxu0 0.0
  %3143 = vmatpush2.xpose.msra.mxu0 0.0
  %3144 = vmatprep.subr.mxu0 0.0
  %3145 = vmatpush2.xpose.msra.mxu0 0.0
  %3146 = vmatprep.subr.mxu0 0.0
  %3147 = vmatpush2.xpose.msra.mxu0 0.0
  %3148 = vmatprep.subr.mxu0 0.0
  %3149 = vmatpush2.xpose.msra.mxu0 0.0
  %3150 = vmatprep.subr.mxu0 0.0
  %3151 = vmatpush2.xpose.msra.mxu0 0.0
  %3152 = vmatprep.subr.mxu0 0.0
  %3153 = vmatpush2.xpose.msra.mxu0 0.0
  %3154 = vmatprep.subr.mxu0 0.0
  %3155 = vmatpush2.xpose.msra.mxu0 0.0
  %3156 = vmatprep.subr.mxu0 0.0
  %3157 = vmatpush2.xpose.msra.mxu0 0.0
  %3158 = vmatprep.subr.mxu0 0.0
  %3159 = vmatpush2.xpose.msra.mxu0 0.0
  %3160 = vmatprep.subr.mxu0 0.0
  %3161 = vmatpush2.xpose.msra.mxu0 0.0
  %3162 = vmatprep.subr.mxu0 0.0
  %3163 = vmatpush2.xpose.msra.mxu0 0.0
  %3164 = vmatprep.subr.mxu0 0.0
  %3165 = vmatpush2.xpose.msra.mxu0 0.0
  %3166 = vmatprep.mubr.f32.mxu0 0.0
  %3167 = vmatmul.mubr.f32.gmra.mxu0 %v3098
  %v3168 = vpop.f32.mrf.mxu0
  %v3169 = vadd.f32 %v138, %v3168
  %v3170 = vpop.f32.mrf.mxu0
  %3171 = vdwg.mxu0
  %v3172 = vsel %vm456, %v3169, -inf
  %3173 = vmax.xlane.f32.xlu0 %v3172
  %v3174 = vpop.xlane.xlu0 %3173
  %v3175 = vsub.f32 %v3169, %v3174
  %v3176 = vmul.f32 %v3175, 1.442695
  %v3177 = vpow.pop %v3176
  %v3178 = vsel %vm456, %v3177, 0.0
  %3179 = vadd.xlane.f32.xlu0 %v3178
  %v3180 = vpop.xlane.xlu0 %3179
  %v3181 = vrcp.pop %v3180
  %v3182 = vmul.f32 %v3177, %v3181
  %3183 = vrot.lane.b32.xlu0 %v2604, 96
  %v3184 = vpop.permute.xlu0 %3183
  %v3187 = vsel %vm456, %v3182, 0
  %3189 = vmatprep.subr.mxu0 0.0
  %3190 = vmatpush1.msra.mxu0 0.0
  %3191 = vmatprep.subr.mxu0 0.0
  %3192 = vmatpush1.msra.mxu0 0.0
  %3193 = vmatprep.subr.mxu0 0.0
  %3194 = vmatpush1.msra.mxu0 0.0
  %3195 = vmatprep.subr.mxu0 0.0
  %3196 = vmatpush1.msra.mxu0 0.0
  %3197 = vmatprep.subr.mxu0 0.0
  %3198 = vmatpush1.msra.mxu0 0.0
  %3199 = vmatprep.subr.mxu0 0.0
  %3200 = vmatpush1.msra.mxu0 0.0
  %3201 = vmatprep.subr.mxu0 0.0
  %3202 = vmatpush1.msra.mxu0 0.0
  %3203 = vmatprep.subr.mxu0 0.0
  %3204 = vmatpush1.msra.mxu0 0.0
  %3205 = vmatprep.subr.mxu0 0.0
  %3206 = vmatpush1.msra.mxu0 0.0
  %3207 = vmatprep.subr.mxu0 0.0
  %3208 = vmatpush1.msra.mxu0 0.0
  %3209 = vmatprep.subr.mxu0 0.0
  %3210 = vmatpush1.msra.mxu0 0.0
  %3211 = vmatprep.subr.mxu0 0.0
  %3212 = vmatpush1.msra.mxu0 0.0
  %3213 = vmatprep.subr.mxu0 0.0
  %3214 = vmatpush1.msra.mxu0 0.0
  %3215 = vmatprep.subr.mxu0 0.0
  %3216 = vmatpush1.msra.mxu0 0.0
  %3217 = vmatprep.subr.mxu0 0.0
  %3218 = vmatpush1.msra.mxu0 0.0
  %3219 = vmatprep.subr.mxu0 0.0
  %3220 = vmatpush1.msra.mxu0 %v3184
  %3221 = vmatprep.subr.mxu0 0.0
  %3222 = vmatpush2.msra.mxu0 0.0
  %3223 = vmatprep.subr.mxu0 0.0
  %3224 = vmatpush2.msra.mxu0 0.0
  %3225 = vmatprep.subr.mxu0 0.0
  %3226 = vmatpush2.msra.mxu0 0.0
  %3227 = vmatprep.subr.mxu0 0.0
  %3228 = vmatpush2.msra.mxu0 0.0
  %3229 = vmatprep.subr.mxu0 0.0
  %3230 = vmatpush2.msra.mxu0 0.0
  %3231 = vmatprep.subr.mxu0 0.0
  %3232 = vmatpush2.msra.mxu0 0.0
  %3233 = vmatprep.subr.mxu0 0.0
  %3234 = vmatpush2.msra.mxu0 0.0
  %3235 = vmatprep.subr.mxu0 0.0
  %3236 = vmatpush2.msra.mxu0 0.0
  %3237 = vmatprep.subr.mxu0 0.0
  %3238 = vmatpush2.msra.mxu0 0.0
  %3239 = vmatprep.subr.mxu0 0.0
  %3240 = vmatpush2.msra.mxu0 0.0
  %3241 = vmatprep.subr.mxu0 0.0
  %3242 = vmatpush2.msra.mxu0 0.0
  %3243 = vmatprep.subr.mxu0 0.0
  %3244 = vmatpush2.msra.mxu0 0.0
  %3245 = vmatprep.subr.mxu0 0.0
  %3246 = vmatpush2.msra.mxu0 0.0
  %3247 = vmatprep.subr.mxu0 0.0
  %3248 = vmatpush2.msra.mxu0 0.0
  %3249 = vmatprep.subr.mxu0 0.0
  %3250 = vmatpush2.msra.mxu0 0.0
  %3251 = vmatprep.subr.mxu0 0.0
  %3252 = vmatpush2.msra.mxu0 0.0
  %3253 = vmatprep.mubr.f32.mxu0 0.0
  %3254 = vmatmul.mubr.f32.gmra.mxu0 %v3187
  %v3255 = vpop.f32.mrf.mxu0
  %v3256 = vadd.f32 0.0, %v3255
  %v3257 = vpop.f32.mrf.mxu0
  %3258 = vdwg.mxu0
  %v3260 = vsel %vm381, %v3256, 0
  %3262 = vmatprep.subr.mxu0 0.0
  %3263 = vmatpush1.msra.mxu0 0.0
  %3264 = vmatprep.subr.mxu0 0.0
  %3265 = vmatpush1.msra.mxu0 0.0
  %3266 = vmatprep.subr.mxu0 0.0
  %3267 = vmatpush1.msra.mxu0 0.0
  %3268 = vmatprep.subr.mxu0 0.0
  %3269 = vmatpush1.msra.mxu0 0.0
  %3270 = vmatprep.subr.mxu0 0.0
  %3271 = vmatpush1.msra.mxu0 0.0
  %3272 = vmatprep.subr.mxu0 0.0
  %3273 = vmatpush1.msra.mxu0 0.0
  %3274 = vmatprep.subr.mxu0 0.0
  %3275 = vmatpush1.msra.mxu0 0.0
  %3276 = vmatprep.subr.mxu0 0.0
  %3277 = vmatpush1.msra.mxu0 0.0
  %3278 = vmatprep.subr.mxu0 0.0
  %3279 = vmatpush1.msra.mxu0 0.0
  %3280 = vmatprep.subr.mxu0 0.0
  %3281 = vmatpush1.msra.mxu0 0.0
  %3282 = vmatprep.subr.mxu0 0.0
  %3283 = vmatpush1.msra.mxu0 0.0
  %3284 = vmatprep.subr.mxu0 0.0
  %3285 = vmatpush1.msra.mxu0 0.0
  %3286 = vmatprep.subr.mxu0 0.0
  %3287 = vmatpush1.msra.mxu0 0.0
  %3288 = vmatprep.subr.mxu0 0.0
  %3289 = vmatpush1.msra.mxu0 0.0
  %3290 = vmatprep.subr.mxu0 0.0
  %3291 = vmatpush1.msra.mxu0 %v2618
  %3292 = vmatprep.subr.mxu0 0.0
  %3293 = vmatpush1.msra.mxu0 %v2617
  %3294 = vmatprep.subr.mxu0 0.0
  %3295 = vmatpush2.msra.mxu0 0.0
  %3296 = vmatprep.subr.mxu0 0.0
  %3297 = vmatpush2.msra.mxu0 0.0
  %3298 = vmatprep.subr.mxu0 0.0
  %3299 = vmatpush2.msra.mxu0 0.0
  %3300 = vmatprep.subr.mxu0 0.0
  %3301 = vmatpush2.msra.mxu0 0.0
  %3302 = vmatprep.subr.mxu0 0.0
  %3303 = vmatpush2.msra.mxu0 0.0
  %3304 = vmatprep.subr.mxu0 0.0
  %3305 = vmatpush2.msra.mxu0 0.0
  %3306 = vmatprep.subr.mxu0 0.0
  %3307 = vmatpush2.msra.mxu0 0.0
  %3308 = vmatprep.subr.mxu0 0.0
  %3309 = vmatpush2.msra.mxu0 0.0
  %3310 = vmatprep.subr.mxu0 0.0
  %3311 = vmatpush2.msra.mxu0 0.0
  %3312 = vmatprep.subr.mxu0 0.0
  %3313 = vmatpush2.msra.mxu0 0.0
  %3314 = vmatprep.subr.mxu0 0.0
  %3315 = vmatpush2.msra.mxu0 0.0
  %3316 = vmatprep.subr.mxu0 0.0
  %3317 = vmatpush2.msra.mxu0 0.0
  %3318 = vmatprep.subr.mxu0 0.0
  %3319 = vmatpush2.msra.mxu0 0.0
  %3320 = vmatprep.subr.mxu0 0.0
  %3321 = vmatpush2.msra.mxu0 0.0
  %3322 = vmatprep.subr.mxu0 0.0
  %3323 = vmatpush2.msra.mxu0 0.0
  %3324 = vmatprep.subr.mxu0 0.0
  %3325 = vmatpush2.msra.mxu0 0.0
  %3326 = vmatprep.mubr.f32.mxu0 0.0
  %3327 = vmatmul.mubr.f32.gmra.mxu0 %v3260
  %v3328 = vpop.f32.mrf.mxu0
  %v3329 = vadd.f32 0.0, %v3328
  %v3330 = vpop.f32.mrf.mxu0
  %3331 = vdwg.mxu0
  %v3332 = vadd.f32 %v3091, %v3329
  %3333 = vrot.lane.b32.xlu0 %v2602, 80
  %v3334 = vpop.permute.xlu0 %3333
  %3335 = vrot.lane.b32.xlu0 %v2602, 16
  %v3336 = vpop.permute.xlu0 %3335
  %v3337 = vsel %vm381, %v3334, 0
  %v3339 = vsel %vm381, %v3336, 0
  %3341 = vmatprep.subr.mxu0 0.0
  %3342 = vmatpush1.xpose.msra.mxu0 0.0
  %3343 = vmatprep.subr.mxu0 0.0
  %3344 = vmatpush1.xpose.msra.mxu0 0.0
  %3345 = vmatprep.subr.mxu0 0.0
  %3346 = vmatpush1.xpose.msra.mxu0 0.0
  %3347 = vmatprep.subr.mxu0 0.0
  %3348 = vmatpush1.xpose.msra.mxu0 0.0
  %3349 = vmatprep.subr.mxu0 0.0
  %3350 = vmatpush1.xpose.msra.mxu0 0.0
  %3351 = vmatprep.subr.mxu0 0.0
  %3352 = vmatpush1.xpose.msra.mxu0 0.0
  %3353 = vmatprep.subr.mxu0 0.0
  %3354 = vmatpush1.xpose.msra.mxu0 0.0
  %3355 = vmatprep.subr.mxu0 0.0
  %3356 = vmatpush1.xpose.msra.mxu0 0.0
  %3357 = vmatprep.subr.mxu0 0.0
  %3358 = vmatpush1.xpose.msra.mxu0 0.0
  %3359 = vmatprep.subr.mxu0 0.0
  %3360 = vmatpush1.xpose.msra.mxu0 0.0
  %3361 = vmatprep.subr.mxu0 0.0
  %3362 = vmatpush1.xpose.msra.mxu0 0.0
  %3363 = vmatprep.subr.mxu0 0.0
  %3364 = vmatpush1.xpose.msra.mxu0 0.0
  %3365 = vmatprep.subr.mxu0 0.0
  %3366 = vmatpush1.xpose.msra.mxu0 0.0
  %3367 = vmatprep.subr.mxu0 0.0
  %3368 = vmatpush1.xpose.msra.mxu0 0.0
  %3369 = vmatprep.subr.mxu0 0.0
  %3370 = vmatpush1.xpose.msra.mxu0 0.0
  %3371 = vmatprep.subr.mxu0 0.0
  %3372 = vmatpush1.xpose.msra.mxu0 %v3339
  %3373 = vmatprep.subr.mxu0 0.0
  %3374 = vmatpush2.xpose.msra.mxu0 0.0
  %3375 = vmatprep.subr.mxu0 0.0
  %3376 = vmatpush2.xpose.msra.mxu0 0.0
  %3377 = vmatprep.subr.mxu0 0.0
  %3378 = vmatpush2.xpose.msra.mxu0 0.0
  %3379 = vmatprep.subr.mxu0 0.0
  %3380 = vmatpush2.xpose.msra.mxu0 0.0
  %3381 = vmatprep.subr.mxu0 0.0
  %3382 = vmatpush2.xpose.msra.mxu0 0.0
  %3383 = vmatprep.subr.mxu0 0.0
  %3384 = vmatpush2.xpose.msra.mxu0 0.0
  %3385 = vmatprep.subr.mxu0 0.0
  %3386 = vmatpush2.xpose.msra.mxu0 0.0
  %3387 = vmatprep.subr.mxu0 0.0
  %3388 = vmatpush2.xpose.msra.mxu0 0.0
  %3389 = vmatprep.subr.mxu0 0.0
  %3390 = vmatpush2.xpose.msra.mxu0 0.0
  %3391 = vmatprep.subr.mxu0 0.0
  %3392 = vmatpush2.xpose.msra.mxu0 0.0
  %3393 = vmatprep.subr.mxu0 0.0
  %3394 = vmatpush2.xpose.msra.mxu0 0.0
  %3395 = vmatprep.subr.mxu0 0.0
  %3396 = vmatpush2.xpose.msra.mxu0 0.0
  %3397 = vmatprep.subr.mxu0 0.0
  %3398 = vmatpush2.xpose.msra.mxu0 0.0
  %3399 = vmatprep.subr.mxu0 0.0
  %3400 = vmatpush2.xpose.msra.mxu0 0.0
  %3401 = vmatprep.subr.mxu0 0.0
  %3402 = vmatpush2.xpose.msra.mxu0 0.0
  %3403 = vmatprep.subr.mxu0 0.0
  %3404 = vmatpush2.xpose.msra.mxu0 0.0
  %3405 = vmatprep.mubr.f32.mxu0 0.0
  %3406 = vmatmul.mubr.f32.gmra.mxu0 %v3337
  %v3407 = vpop.f32.mrf.mxu0
  %v3408 = vadd.f32 %v141, %v3407
  %v3409 = vpop.f32.mrf.mxu0
  %3410 = vdwg.mxu0
  %v3411 = vsel %vm456, %v3408, -inf
  %3412 = vmax.xlane.f32.xlu0 %v3411
  %v3413 = vpop.xlane.xlu0 %3412
  %v3414 = vsub.f32 %v3408, %v3413
  %v3415 = vmul.f32 %v3414, 1.442695
  %v3416 = vpow.pop %v3415
  %v3417 = vsel %vm456, %v3416, 0.0
  %3418 = vadd.xlane.f32.xlu0 %v3417
  %v3419 = vpop.xlane.xlu0 %3418
  %v3420 = vrcp.pop %v3419
  %v3421 = vmul.f32 %v3416, %v3420
  %3422 = vrot.lane.b32.xlu0 %v2604, 80
  %v3423 = vpop.permute.xlu0 %3422
  %v3426 = vsel %vm456, %v3421, 0
  %3428 = vmatprep.subr.mxu0 0.0
  %3429 = vmatpush1.msra.mxu0 0.0
  %3430 = vmatprep.subr.mxu0 0.0
  %3431 = vmatpush1.msra.mxu0 0.0
  %3432 = vmatprep.subr.mxu0 0.0
  %3433 = vmatpush1.msra.mxu0 0.0
  %3434 = vmatprep.subr.mxu0 0.0
  %3435 = vmatpush1.msra.mxu0 0.0
  %3436 = vmatprep.subr.mxu0 0.0
  %3437 = vmatpush1.msra.mxu0 0.0
  %3438 = vmatprep.subr.mxu0 0.0
  %3439 = vmatpush1.msra.mxu0 0.0
  %3440 = vmatprep.subr.mxu0 0.0
  %3441 = vmatpush1.msra.mxu0 0.0
  %3442 = vmatprep.subr.mxu0 0.0
  %3443 = vmatpush1.msra.mxu0 0.0
  %3444 = vmatprep.subr.mxu0 0.0
  %3445 = vmatpush1.msra.mxu0 0.0
  %3446 = vmatprep.subr.mxu0 0.0
  %3447 = vmatpush1.msra.mxu0 0.0
  %3448 = vmatprep.subr.mxu0 0.0
  %3449 = vmatpush1.msra.mxu0 0.0
  %3450 = vmatprep.subr.mxu0 0.0
  %3451 = vmatpush1.msra.mxu0 0.0
  %3452 = vmatprep.subr.mxu0 0.0
  %3453 = vmatpush1.msra.mxu0 0.0
  %3454 = vmatprep.subr.mxu0 0.0
  %3455 = vmatpush1.msra.mxu0 0.0
  %3456 = vmatprep.subr.mxu0 0.0
  %3457 = vmatpush1.msra.mxu0 0.0
  %3458 = vmatprep.subr.mxu0 0.0
  %3459 = vmatpush1.msra.mxu0 %v3423
  %3460 = vmatprep.subr.mxu0 0.0
  %3461 = vmatpush2.msra.mxu0 0.0
  %3462 = vmatprep.subr.mxu0 0.0
  %3463 = vmatpush2.msra.mxu0 0.0
  %3464 = vmatprep.subr.mxu0 0.0
  %3465 = vmatpush2.msra.mxu0 0.0
  %3466 = vmatprep.subr.mxu0 0.0
  %3467 = vmatpush2.msra.mxu0 0.0
  %3468 = vmatprep.subr.mxu0 0.0
  %3469 = vmatpush2.msra.mxu0 0.0
  %3470 = vmatprep.subr.mxu0 0.0
  %3471 = vmatpush2.msra.mxu0 0.0
  %3472 = vmatprep.subr.mxu0 0.0
  %3473 = vmatpush2.msra.mxu0 0.0
  %3474 = vmatprep.subr.mxu0 0.0
  %3475 = vmatpush2.msra.mxu0 0.0
  %3476 = vmatprep.subr.mxu0 0.0
  %3477 = vmatpush2.msra.mxu0 0.0
  %3478 = vmatprep.subr.mxu0 0.0
  %3479 = vmatpush2.msra.mxu0 0.0
  %3480 = vmatprep.subr.mxu0 0.0
  %3481 = vmatpush2.msra.mxu0 0.0
  %3482 = vmatprep.subr.mxu0 0.0
  %3483 = vmatpush2.msra.mxu0 0.0
  %3484 = vmatprep.subr.mxu0 0.0
  %3485 = vmatpush2.msra.mxu0 0.0
  %3486 = vmatprep.subr.mxu0 0.0
  %3487 = vmatpush2.msra.mxu0 0.0
  %3488 = vmatprep.subr.mxu0 0.0
  %3489 = vmatpush2.msra.mxu0 0.0
  %3490 = vmatprep.subr.mxu0 0.0
  %3491 = vmatpush2.msra.mxu0 0.0
  %3492 = vmatprep.mubr.f32.mxu0 0.0
  %3493 = vmatmul.mubr.f32.gmra.mxu0 %v3426
  %v3494 = vpop.f32.mrf.mxu0
  %v3495 = vadd.f32 0.0, %v3494
  %v3496 = vpop.f32.mrf.mxu0
  %3497 = vdwg.mxu0
  %v3499 = vsel %vm381, %v3495, 0
  %3501 = vmatprep.subr.mxu0 0.0
  %3502 = vmatpush1.msra.mxu0 0.0
  %3503 = vmatprep.subr.mxu0 0.0
  %3504 = vmatpush1.msra.mxu0 0.0
  %3505 = vmatprep.subr.mxu0 0.0
  %3506 = vmatpush1.msra.mxu0 0.0
  %3507 = vmatprep.subr.mxu0 0.0
  %3508 = vmatpush1.msra.mxu0 0.0
  %3509 = vmatprep.subr.mxu0 0.0
  %3510 = vmatpush1.msra.mxu0 0.0
  %3511 = vmatprep.subr.mxu0 0.0
  %3512 = vmatpush1.msra.mxu0 0.0
  %3513 = vmatprep.subr.mxu0 0.0
  %3514 = vmatpush1.msra.mxu0 0.0
  %3515 = vmatprep.subr.mxu0 0.0
  %3516 = vmatpush1.msra.mxu0 0.0
  %3517 = vmatprep.subr.mxu0 0.0
  %3518 = vmatpush1.msra.mxu0 0.0
  %3519 = vmatprep.subr.mxu0 0.0
  %3520 = vmatpush1.msra.mxu0 0.0
  %3521 = vmatprep.subr.mxu0 0.0
  %3522 = vmatpush1.msra.mxu0 0.0
  %3523 = vmatprep.subr.mxu0 0.0
  %3524 = vmatpush1.msra.mxu0 0.0
  %3525 = vmatprep.subr.mxu0 0.0
  %3526 = vmatpush1.msra.mxu0 0.0
  %3527 = vmatprep.subr.mxu0 0.0
  %3528 = vmatpush1.msra.mxu0 0.0
  %3529 = vmatprep.subr.mxu0 0.0
  %3530 = vmatpush1.msra.mxu0 %v2620
  %3531 = vmatprep.subr.mxu0 0.0
  %3532 = vmatpush1.msra.mxu0 %v2619
  %3533 = vmatprep.subr.mxu0 0.0
  %3534 = vmatpush2.msra.mxu0 0.0
  %3535 = vmatprep.subr.mxu0 0.0
  %3536 = vmatpush2.msra.mxu0 0.0
  %3537 = vmatprep.subr.mxu0 0.0
  %3538 = vmatpush2.msra.mxu0 0.0
  %3539 = vmatprep.subr.mxu0 0.0
  %3540 = vmatpush2.msra.mxu0 0.0
  %3541 = vmatprep.subr.mxu0 0.0
  %3542 = vmatpush2.msra.mxu0 0.0
  %3543 = vmatprep.subr.mxu0 0.0
  %3544 = vmatpush2.msra.mxu0 0.0
  %3545 = vmatprep.subr.mxu0 0.0
  %3546 = vmatpush2.msra.mxu0 0.0
  %3547 = vmatprep.subr.mxu0 0.0
  %3548 = vmatpush2.msra.mxu0 0.0
  %3549 = vmatprep.subr.mxu0 0.0
  %3550 = vmatpush2.msra.mxu0 0.0
  %3551 = vmatprep.subr.mxu0 0.0
  %3552 = vmatpush2.msra.mxu0 0.0
  %3553 = vmatprep.subr.mxu0 0.0
  %3554 = vmatpush2.msra.mxu0 0.0
  %3555 = vmatprep.subr.mxu0 0.0
  %3556 = vmatpush2.msra.mxu0 0.0
  %3557 = vmatprep.subr.mxu0 0.0
  %3558 = vmatpush2.msra.mxu0 0.0
  %3559 = vmatprep.subr.mxu0 0.0
  %3560 = vmatpush2.msra.mxu0 0.0
  %3561 = vmatprep.subr.mxu0 0.0
  %3562 = vmatpush2.msra.mxu0 0.0
  %3563 = vmatprep.subr.mxu0 0.0
  %3564 = vmatpush2.msra.mxu0 0.0
  %3565 = vmatprep.mubr.f32.mxu0 0.0
  %3566 = vmatmul.mubr.f32.gmra.mxu0 %v3499
  %v3567 = vpop.f32.mrf.mxu0
  %v3568 = vadd.f32 0.0, %v3567
  %v3569 = vpop.f32.mrf.mxu0
  %3570 = vdwg.mxu0
  %v3571 = vadd.f32 %v3332, %v3568
  %3573 = vrot.lane.b32.xlu0 %v2608, 64
  %v3574 = vpop.permute.xlu0 %3573
  %v3575 = vsel %vm381, %v2608, 0
  %v3577 = vsel %vm381, %v3574, 0
  %3579 = vmatprep.subr.mxu0 0.0
  %3580 = vmatpush1.xpose.msra.mxu0 0.0
  %3581 = vmatprep.subr.mxu0 0.0
  %3582 = vmatpush1.xpose.msra.mxu0 0.0
  %3583 = vmatprep.subr.mxu0 0.0
  %3584 = vmatpush1.xpose.msra.mxu0 0.0
  %3585 = vmatprep.subr.mxu0 0.0
  %3586 = vmatpush1.xpose.msra.mxu0 0.0
  %3587 = vmatprep.subr.mxu0 0.0
  %3588 = vmatpush1.xpose.msra.mxu0 0.0
  %3589 = vmatprep.subr.mxu0 0.0
  %3590 = vmatpush1.xpose.msra.mxu0 0.0
  %3591 = vmatprep.subr.mxu0 0.0
  %3592 = vmatpush1.xpose.msra.mxu0 0.0
  %3593 = vmatprep.subr.mxu0 0.0
  %3594 = vmatpush1.xpose.msra.mxu0 0.0
  %3595 = vmatprep.subr.mxu0 0.0
  %3596 = vmatpush1.xpose.msra.mxu0 0.0
  %3597 = vmatprep.subr.mxu0 0.0
  %3598 = vmatpush1.xpose.msra.mxu0 0.0
  %3599 = vmatprep.subr.mxu0 0.0
  %3600 = vmatpush1.xpose.msra.mxu0 0.0
  %3601 = vmatprep.subr.mxu0 0.0
  %3602 = vmatpush1.xpose.msra.mxu0 0.0
  %3603 = vmatprep.subr.mxu0 0.0
  %3604 = vmatpush1.xpose.msra.mxu0 0.0
  %3605 = vmatprep.subr.mxu0 0.0
  %3606 = vmatpush1.xpose.msra.mxu0 0.0
  %3607 = vmatprep.subr.mxu0 0.0
  %3608 = vmatpush1.xpose.msra.mxu0 0.0
  %3609 = vmatprep.subr.mxu0 0.0
  %3610 = vmatpush1.xpose.msra.mxu0 %v3577
  %3611 = vmatprep.subr.mxu0 0.0
  %3612 = vmatpush2.xpose.msra.mxu0 0.0
  %3613 = vmatprep.subr.mxu0 0.0
  %3614 = vmatpush2.xpose.msra.mxu0 0.0
  %3615 = vmatprep.subr.mxu0 0.0
  %3616 = vmatpush2.xpose.msra.mxu0 0.0
  %3617 = vmatprep.subr.mxu0 0.0
  %3618 = vmatpush2.xpose.msra.mxu0 0.0
  %3619 = vmatprep.subr.mxu0 0.0
  %3620 = vmatpush2.xpose.msra.mxu0 0.0
  %3621 = vmatprep.subr.mxu0 0.0
  %3622 = vmatpush2.xpose.msra.mxu0 0.0
  %3623 = vmatprep.subr.mxu0 0.0
  %3624 = vmatpush2.xpose.msra.mxu0 0.0
  %3625 = vmatprep.subr.mxu0 0.0
  %3626 = vmatpush2.xpose.msra.mxu0 0.0
  %3627 = vmatprep.subr.mxu0 0.0
  %3628 = vmatpush2.xpose.msra.mxu0 0.0
  %3629 = vmatprep.subr.mxu0 0.0
  %3630 = vmatpush2.xpose.msra.mxu0 0.0
  %3631 = vmatprep.subr.mxu0 0.0
  %3632 = vmatpush2.xpose.msra.mxu0 0.0
  %3633 = vmatprep.subr.mxu0 0.0
  %3634 = vmatpush2.xpose.msra.mxu0 0.0
  %3635 = vmatprep.subr.mxu0 0.0
  %3636 = vmatpush2.xpose.msra.mxu0 0.0
  %3637 = vmatprep.subr.mxu0 0.0
  %3638 = vmatpush2.xpose.msra.mxu0 0.0
  %3639 = vmatprep.subr.mxu0 0.0
  %3640 = vmatpush2.xpose.msra.mxu0 0.0
  %3641 = vmatprep.subr.mxu0 0.0
  %3642 = vmatpush2.xpose.msra.mxu0 0.0
  %3643 = vmatprep.mubr.f32.mxu0 0.0
  %3644 = vmatmul.mubr.f32.gmra.mxu0 %v3575
  %v3645 = vpop.f32.mrf.mxu0
  %v3646 = vadd.f32 %v146, %v3645
  %v3647 = vpop.f32.mrf.mxu0
  %3648 = vdwg.mxu0
  %v3649 = vsel %vm456, %v3646, -inf
  %3650 = vmax.xlane.f32.xlu0 %v3649
  %v3651 = vpop.xlane.xlu0 %3650
  %v3652 = vsub.f32 %v3646, %v3651
  %v3653 = vmul.f32 %v3652, 1.442695
  %v3654 = vpow.pop %v3653
  %v3655 = vsel %vm456, %v3654, 0.0
  %3656 = vadd.xlane.f32.xlu0 %v3655
  %v3657 = vpop.xlane.xlu0 %3656
  %v3658 = vrcp.pop %v3657
  %v3659 = vmul.f32 %v3654, %v3658
  %v3661 = vsel %vm456, %v3659, 0
  %3663 = vmatprep.subr.mxu0 0.0
  %3664 = vmatpush1.msra.mxu0 0.0
  %3665 = vmatprep.subr.mxu0 0.0
  %3666 = vmatpush1.msra.mxu0 0.0
  %3667 = vmatprep.subr.mxu0 0.0
  %3668 = vmatpush1.msra.mxu0 0.0
  %3669 = vmatprep.subr.mxu0 0.0
  %3670 = vmatpush1.msra.mxu0 0.0
  %3671 = vmatprep.subr.mxu0 0.0
  %3672 = vmatpush1.msra.mxu0 0.0
  %3673 = vmatprep.subr.mxu0 0.0
  %3674 = vmatpush1.msra.mxu0 0.0
  %3675 = vmatprep.subr.mxu0 0.0
  %3676 = vmatpush1.msra.mxu0 0.0
  %3677 = vmatprep.subr.mxu0 0.0
  %3678 = vmatpush1.msra.mxu0 0.0
  %3679 = vmatprep.subr.mxu0 0.0
  %3680 = vmatpush1.msra.mxu0 0.0
  %3681 = vmatprep.subr.mxu0 0.0
  %3682 = vmatpush1.msra.mxu0 0.0
  %3683 = vmatprep.subr.mxu0 0.0
  %3684 = vmatpush1.msra.mxu0 0.0
  %3685 = vmatprep.subr.mxu0 0.0
  %3686 = vmatpush1.msra.mxu0 0.0
  %3687 = vmatprep.subr.mxu0 0.0
  %3688 = vmatpush1.msra.mxu0 0.0
  %3689 = vmatprep.subr.mxu0 0.0
  %3690 = vmatpush1.msra.mxu0 0.0
  %3691 = vmatprep.subr.mxu0 0.0
  %3692 = vmatpush1.msra.mxu0 0.0
  %3693 = vmatprep.subr.mxu0 0.0
  %3694 = vmatpush1.msra.mxu0 %v2610
  %3695 = vmatprep.subr.mxu0 0.0
  %3696 = vmatpush2.msra.mxu0 0.0
  %3697 = vmatprep.subr.mxu0 0.0
  %3698 = vmatpush2.msra.mxu0 0.0
  %3699 = vmatprep.subr.mxu0 0.0
  %3700 = vmatpush2.msra.mxu0 0.0
  %3701 = vmatprep.subr.mxu0 0.0
  %3702 = vmatpush2.msra.mxu0 0.0
  %3703 = vmatprep.subr.mxu0 0.0
  %3704 = vmatpush2.msra.mxu0 0.0
  %3705 = vmatprep.subr.mxu0 0.0
  %3706 = vmatpush2.msra.mxu0 0.0
  %3707 = vmatprep.subr.mxu0 0.0
  %3708 = vmatpush2.msra.mxu0 0.0
  %3709 = vmatprep.subr.mxu0 0.0
  %3710 = vmatpush2.msra.mxu0 0.0
  %3711 = vmatprep.subr.mxu0 0.0
  %3712 = vmatpush2.msra.mxu0 0.0
  %3713 = vmatprep.subr.mxu0 0.0
  %3714 = vmatpush2.msra.mxu0 0.0
  %3715 = vmatprep.subr.mxu0 0.0
  %3716 = vmatpush2.msra.mxu0 0.0
  %3717 = vmatprep.subr.mxu0 0.0
  %3718 = vmatpush2.msra.mxu0 0.0
  %3719 = vmatprep.subr.mxu0 0.0
  %3720 = vmatpush2.msra.mxu0 0.0
  %3721 = vmatprep.subr.mxu0 0.0
  %3722 = vmatpush2.msra.mxu0 0.0
  %3723 = vmatprep.subr.mxu0 0.0
  %3724 = vmatpush2.msra.mxu0 0.0
  %3725 = vmatprep.subr.mxu0 0.0
  %3726 = vmatpush2.msra.mxu0 0.0
  %3727 = vmatprep.mubr.f32.mxu0 0.0
  %3728 = vmatmul.mubr.f32.gmra.mxu0 %v3661
  %v3729 = vpop.f32.mrf.mxu0
  %v3730 = vadd.f32 0.0, %v3729
  %v3731 = vpop.f32.mrf.mxu0
  %3732 = vdwg.mxu0
  %3733 = vrot.lane.b32.xlu0 %v2608, 112
  %v3734 = vpop.permute.xlu0 %3733
  %3735 = vrot.lane.b32.xlu0 %v2608, 48
  %v3736 = vpop.permute.xlu0 %3735
  %v3737 = vsel %vm381, %v3734, 0
  %v3739 = vsel %vm381, %v3736, 0
  %3741 = vmatprep.subr.mxu0 0.0
  %3742 = vmatpush1.xpose.msra.mxu0 0.0
  %3743 = vmatprep.subr.mxu0 0.0
  %3744 = vmatpush1.xpose.msra.mxu0 0.0
  %3745 = vmatprep.subr.mxu0 0.0
  %3746 = vmatpush1.xpose.msra.mxu0 0.0
  %3747 = vmatprep.subr.mxu0 0.0
  %3748 = vmatpush1.xpose.msra.mxu0 0.0
  %3749 = vmatprep.subr.mxu0 0.0
  %3750 = vmatpush1.xpose.msra.mxu0 0.0
  %3751 = vmatprep.subr.mxu0 0.0
  %3752 = vmatpush1.xpose.msra.mxu0 0.0
  %3753 = vmatprep.subr.mxu0 0.0
  %3754 = vmatpush1.xpose.msra.mxu0 0.0
  %3755 = vmatprep.subr.mxu0 0.0
  %3756 = vmatpush1.xpose.msra.mxu0 0.0
  %3757 = vmatprep.subr.mxu0 0.0
  %3758 = vmatpush1.xpose.msra.mxu0 0.0
  %3759 = vmatprep.subr.mxu0 0.0
  %3760 = vmatpush1.xpose.msra.mxu0 0.0
  %3761 = vmatprep.subr.mxu0 0.0
  %3762 = vmatpush1.xpose.msra.mxu0 0.0
  %3763 = vmatprep.subr.mxu0 0.0
  %3764 = vmatpush1.xpose.msra.mxu0 0.0
  %3765 = vmatprep.subr.mxu0 0.0
  %3766 = vmatpush1.xpose.msra.mxu0 0.0
  %3767 = vmatprep.subr.mxu0 0.0
  %3768 = vmatpush1.xpose.msra.mxu0 0.0
  %3769 = vmatprep.subr.mxu0 0.0
  %3770 = vmatpush1.xpose.msra.mxu0 0.0
  %3771 = vmatprep.subr.mxu0 0.0
  %3772 = vmatpush1.xpose.msra.mxu0 %v3739
  %3773 = vmatprep.subr.mxu0 0.0
  %3774 = vmatpush2.xpose.msra.mxu0 0.0
  %3775 = vmatprep.subr.mxu0 0.0
  %3776 = vmatpush2.xpose.msra.mxu0 0.0
  %3777 = vmatprep.subr.mxu0 0.0
  %3778 = vmatpush2.xpose.msra.mxu0 0.0
  %3779 = vmatprep.subr.mxu0 0.0
  %3780 = vmatpush2.xpose.msra.mxu0 0.0
  %3781 = vmatprep.subr.mxu0 0.0
  %3782 = vmatpush2.xpose.msra.mxu0 0.0
  %3783 = vmatprep.subr.mxu0 0.0
  %3784 = vmatpush2.xpose.msra.mxu0 0.0
  %3785 = vmatprep.subr.mxu0 0.0
  %3786 = vmatpush2.xpose.msra.mxu0 0.0
  %3787 = vmatprep.subr.mxu0 0.0
  %3788 = vmatpush2.xpose.msra.mxu0 0.0
  %3789 = vmatprep.subr.mxu0 0.0
  %3790 = vmatpush2.xpose.msra.mxu0 0.0
  %3791 = vmatprep.subr.mxu0 0.0
  %3792 = vmatpush2.xpose.msra.mxu0 0.0
  %3793 = vmatprep.subr.mxu0 0.0
  %3794 = vmatpush2.xpose.msra.mxu0 0.0
  %3795 = vmatprep.subr.mxu0 0.0
  %3796 = vmatpush2.xpose.msra.mxu0 0.0
  %3797 = vmatprep.subr.mxu0 0.0
  %3798 = vmatpush2.xpose.msra.mxu0 0.0
  %3799 = vmatprep.subr.mxu0 0.0
  %3800 = vmatpush2.xpose.msra.mxu0 0.0
  %3801 = vmatprep.subr.mxu0 0.0
  %3802 = vmatpush2.xpose.msra.mxu0 0.0
  %3803 = vmatprep.subr.mxu0 0.0
  %3804 = vmatpush2.xpose.msra.mxu0 0.0
  %3805 = vmatprep.mubr.f32.mxu0 0.0
  %3806 = vmatmul.mubr.f32.gmra.mxu0 %v3737
  %v3807 = vpop.f32.mrf.mxu0
  %v3808 = vadd.f32 %v147, %v3807
  %v3809 = vpop.f32.mrf.mxu0
  %3810 = vdwg.mxu0
  %v3811 = vsel %vm456, %v3808, -inf
  %3812 = vmax.xlane.f32.xlu0 %v3811
  %v3813 = vpop.xlane.xlu0 %3812
  %v3814 = vsub.f32 %v3808, %v3813
  %v3815 = vmul.f32 %v3814, 1.442695
  %v3816 = vpow.pop %v3815
  %v3817 = vsel %vm456, %v3816, 0.0
  %3818 = vadd.xlane.f32.xlu0 %v3817
  %v3819 = vpop.xlane.xlu0 %3818
  %v3820 = vrcp.pop %v3819
  %v3821 = vmul.f32 %v3816, %v3820
  %3823 = vrot.lane.b32.xlu0 %v2610, 112
  %v3824 = vpop.permute.xlu0 %3823
  %v3827 = vsel %vm456, %v3821, 0
  %3829 = vmatprep.subr.mxu0 0.0
  %3830 = vmatpush1.msra.mxu0 0.0
  %3831 = vmatprep.subr.mxu0 0.0
  %3832 = vmatpush1.msra.mxu0 0.0
  %3833 = vmatprep.subr.mxu0 0.0
  %3834 = vmatpush1.msra.mxu0 0.0
  %3835 = vmatprep.subr.mxu0 0.0
  %3836 = vmatpush1.msra.mxu0 0.0
  %3837 = vmatprep.subr.mxu0 0.0
  %3838 = vmatpush1.msra.mxu0 0.0
  %3839 = vmatprep.subr.mxu0 0.0
  %3840 = vmatpush1.msra.mxu0 0.0
  %3841 = vmatprep.subr.mxu0 0.0
  %3842 = vmatpush1.msra.mxu0 0.0
  %3843 = vmatprep.subr.mxu0 0.0
  %3844 = vmatpush1.msra.mxu0 0.0
  %3845 = vmatprep.subr.mxu0 0.0
  %3846 = vmatpush1.msra.mxu0 0.0
  %3847 = vmatprep.subr.mxu0 0.0
  %3848 = vmatpush1.msra.mxu0 0.0
  %3849 = vmatprep.subr.mxu0 0.0
  %3850 = vmatpush1.msra.mxu0 0.0
  %3851 = vmatprep.subr.mxu0 0.0
  %3852 = vmatpush1.msra.mxu0 0.0
  %3853 = vmatprep.subr.mxu0 0.0
  %3854 = vmatpush1.msra.mxu0 0.0
  %3855 = vmatprep.subr.mxu0 0.0
  %3856 = vmatpush1.msra.mxu0 0.0
  %3857 = vmatprep.subr.mxu0 0.0
  %3858 = vmatpush1.msra.mxu0 0.0
  %3859 = vmatprep.subr.mxu0 0.0
  %3860 = vmatpush1.msra.mxu0 %v3824
  %3861 = vmatprep.subr.mxu0 0.0
  %3862 = vmatpush2.msra.mxu0 0.0
  %3863 = vmatprep.subr.mxu0 0.0
  %3864 = vmatpush2.msra.mxu0 0.0
  %3865 = vmatprep.subr.mxu0 0.0
  %3866 = vmatpush2.msra.mxu0 0.0
  %3867 = vmatprep.subr.mxu0 0.0
  %3868 = vmatpush2.msra.mxu0 0.0
  %3869 = vmatprep.subr.mxu0 0.0
  %3870 = vmatpush2.msra.mxu0 0.0
  %3871 = vmatprep.subr.mxu0 0.0
  %3872 = vmatpush2.msra.mxu0 0.0
  %3873 = vmatprep.subr.mxu0 0.0
  %3874 = vmatpush2.msra.mxu0 0.0
  %3875 = vmatprep.subr.mxu0 0.0
  %3876 = vmatpush2.msra.mxu0 0.0
  %3877 = vmatprep.subr.mxu0 0.0
  %3878 = vmatpush2.msra.mxu0 0.0
  %3879 = vmatprep.subr.mxu0 0.0
  %3880 = vmatpush2.msra.mxu0 0.0
  %3881 = vmatprep.subr.mxu0 0.0
  %3882 = vmatpush2.msra.mxu0 0.0
  %3883 = vmatprep.subr.mxu0 0.0
  %3884 = vmatpush2.msra.mxu0 0.0
  %3885 = vmatprep.subr.mxu0 0.0
  %3886 = vmatpush2.msra.mxu0 0.0
  %3887 = vmatprep.subr.mxu0 0.0
  %3888 = vmatpush2.msra.mxu0 0.0
  %3889 = vmatprep.subr.mxu0 0.0
  %3890 = vmatpush2.msra.mxu0 0.0
  %3891 = vmatprep.subr.mxu0 0.0
  %3892 = vmatpush2.msra.mxu0 0.0
  %3893 = vmatprep.mubr.f32.mxu0 0.0
  %3894 = vmatmul.mubr.f32.gmra.mxu0 %v3827
  %v3895 = vpop.f32.mrf.mxu0
  %v3896 = vadd.f32 0.0, %v3895
  %v3897 = vpop.f32.mrf.mxu0
  %3898 = vdwg.mxu0
  %v3900 = vsel %vm381, %v3896, 0
  %3902 = vmatprep.subr.mxu0 0.0
  %3903 = vmatpush1.msra.mxu0 0.0
  %3904 = vmatprep.subr.mxu0 0.0
  %3905 = vmatpush1.msra.mxu0 0.0
  %3906 = vmatprep.subr.mxu0 0.0
  %3907 = vmatpush1.msra.mxu0 0.0
  %3908 = vmatprep.subr.mxu0 0.0
  %3909 = vmatpush1.msra.mxu0 0.0
  %3910 = vmatprep.subr.mxu0 0.0
  %3911 = vmatpush1.msra.mxu0 0.0
  %3912 = vmatprep.subr.mxu0 0.0
  %3913 = vmatpush1.msra.mxu0 0.0
  %3914 = vmatprep.subr.mxu0 0.0
  %3915 = vmatpush1.msra.mxu0 0.0
  %3916 = vmatprep.subr.mxu0 0.0
  %3917 = vmatpush1.msra.mxu0 0.0
  %3918 = vmatprep.subr.mxu0 0.0
  %3919 = vmatpush1.msra.mxu0 0.0
  %3920 = vmatprep.subr.mxu0 0.0
  %3921 = vmatpush1.msra.mxu0 0.0
  %3922 = vmatprep.subr.mxu0 0.0
  %3923 = vmatpush1.msra.mxu0 0.0
  %3924 = vmatprep.subr.mxu0 0.0
  %3925 = vmatpush1.msra.mxu0 0.0
  %3926 = vmatprep.subr.mxu0 0.0
  %3927 = vmatpush1.msra.mxu0 0.0
  %3928 = vmatprep.subr.mxu0 0.0
  %3929 = vmatpush1.msra.mxu0 0.0
  %3930 = vmatprep.subr.mxu0 0.0
  %3931 = vmatpush1.msra.mxu0 %v2616
  %3932 = vmatprep.subr.mxu0 0.0
  %3933 = vmatpush1.msra.mxu0 %v2615
  %3934 = vmatprep.subr.mxu0 0.0
  %3935 = vmatpush2.msra.mxu0 0.0
  %3936 = vmatprep.subr.mxu0 0.0
  %3937 = vmatpush2.msra.mxu0 0.0
  %3938 = vmatprep.subr.mxu0 0.0
  %3939 = vmatpush2.msra.mxu0 0.0
  %3940 = vmatprep.subr.mxu0 0.0
  %3941 = vmatpush2.msra.mxu0 0.0
  %3942 = vmatprep.subr.mxu0 0.0
  %3943 = vmatpush2.msra.mxu0 0.0
  %3944 = vmatprep.subr.mxu0 0.0
  %3945 = vmatpush2.msra.mxu0 0.0
  %3946 = vmatprep.subr.mxu0 0.0
  %3947 = vmatpush2.msra.mxu0 0.0
  %3948 = vmatprep.subr.mxu0 0.0
  %3949 = vmatpush2.msra.mxu0 0.0
  %3950 = vmatprep.subr.mxu0 0.0
  %3951 = vmatpush2.msra.mxu0 0.0
  %3952 = vmatprep.subr.mxu0 0.0
  %3953 = vmatpush2.msra.mxu0 0.0
  %3954 = vmatprep.subr.mxu0 0.0
  %3955 = vmatpush2.msra.mxu0 0.0
  %3956 = vmatprep.subr.mxu0 0.0
  %3957 = vmatpush2.msra.mxu0 0.0
  %3958 = vmatprep.subr.mxu0 0.0
  %3959 = vmatpush2.msra.mxu0 0.0
  %3960 = vmatprep.subr.mxu0 0.0
  %3961 = vmatpush2.msra.mxu0 0.0
  %3962 = vmatprep.subr.mxu0 0.0
  %3963 = vmatpush2.msra.mxu0 0.0
  %3964 = vmatprep.subr.mxu0 0.0
  %3965 = vmatpush2.msra.mxu0 0.0
  %3966 = vmatprep.mubr.f32.mxu0 0.0
  %3967 = vmatmul.mubr.f32.gmra.mxu0 %v3900
  %v3968 = vpop.f32.mrf.mxu0
  %v3969 = vadd.f32 0.0, %v3968
  %v3970 = vpop.f32.mrf.mxu0
  %3971 = vdwg.mxu0
  %v3973 = vsel %vm381, %v3730, 0
  %3975 = vmatprep.subr.mxu0 0.0
  %3976 = vmatpush1.msra.mxu0 0.0
  %3977 = vmatprep.subr.mxu0 0.0
  %3978 = vmatpush1.msra.mxu0 0.0
  %3979 = vmatprep.subr.mxu0 0.0
  %3980 = vmatpush1.msra.mxu0 0.0
  %3981 = vmatprep.subr.mxu0 0.0
  %3982 = vmatpush1.msra.mxu0 0.0
  %3983 = vmatprep.subr.mxu0 0.0
  %3984 = vmatpush1.msra.mxu0 0.0
  %3985 = vmatprep.subr.mxu0 0.0
  %3986 = vmatpush1.msra.mxu0 0.0
  %3987 = vmatprep.subr.mxu0 0.0
  %3988 = vmatpush1.msra.mxu0 0.0
  %3989 = vmatprep.subr.mxu0 0.0
  %3990 = vmatpush1.msra.mxu0 0.0
  %3991 = vmatprep.subr.mxu0 0.0
  %3992 = vmatpush1.msra.mxu0 0.0
  %3993 = vmatprep.subr.mxu0 0.0
  %3994 = vmatpush1.msra.mxu0 0.0
  %3995 = vmatprep.subr.mxu0 0.0
  %3996 = vmatpush1.msra.mxu0 0.0
  %3997 = vmatprep.subr.mxu0 0.0
  %3998 = vmatpush1.msra.mxu0 0.0
  %3999 = vmatprep.subr.mxu0 0.0
  %4000 = vmatpush1.msra.mxu0 0.0
  %4001 = vmatprep.subr.mxu0 0.0
  %4002 = vmatpush1.msra.mxu0 0.0
  %4003 = vmatprep.subr.mxu0 0.0
  %4004 = vmatpush1.msra.mxu0 %v2614
  %4005 = vmatprep.subr.mxu0 0.0
  %4006 = vmatpush1.msra.mxu0 %v2613
  %4007 = vmatprep.subr.mxu0 0.0
  %4008 = vmatpush2.msra.mxu0 0.0
  %4009 = vmatprep.subr.mxu0 0.0
  %4010 = vmatpush2.msra.mxu0 0.0
  %4011 = vmatprep.subr.mxu0 0.0
  %4012 = vmatpush2.msra.mxu0 0.0
  %4013 = vmatprep.subr.mxu0 0.0
  %4014 = vmatpush2.msra.mxu0 0.0
  %4015 = vmatprep.subr.mxu0 0.0
  %4016 = vmatpush2.msra.mxu0 0.0
  %4017 = vmatprep.subr.mxu0 0.0
  %4018 = vmatpush2.msra.mxu0 0.0
  %4019 = vmatprep.subr.mxu0 0.0
  %4020 = vmatpush2.msra.mxu0 0.0
  %4021 = vmatprep.subr.mxu0 0.0
  %4022 = vmatpush2.msra.mxu0 0.0
  %4023 = vmatprep.subr.mxu0 0.0
  %4024 = vmatpush2.msra.mxu0 0.0
  %4025 = vmatprep.subr.mxu0 0.0
  %4026 = vmatpush2.msra.mxu0 0.0
  %4027 = vmatprep.subr.mxu0 0.0
  %4028 = vmatpush2.msra.mxu0 0.0
  %4029 = vmatprep.subr.mxu0 0.0
  %4030 = vmatpush2.msra.mxu0 0.0
  %4031 = vmatprep.subr.mxu0 0.0
  %4032 = vmatpush2.msra.mxu0 0.0
  %4033 = vmatprep.subr.mxu0 0.0
  %4034 = vmatpush2.msra.mxu0 0.0
  %4035 = vmatprep.subr.mxu0 0.0
  %4036 = vmatpush2.msra.mxu0 0.0
  %4037 = vmatprep.subr.mxu0 0.0
  %4038 = vmatpush2.msra.mxu0 0.0
  %4039 = vmatprep.mubr.f32.mxu0 0.0
  %4040 = vmatmul.mubr.f32.gmra.mxu0 %v3973
  %v4041 = vpop.f32.mrf.mxu0
  %v4042 = vadd.f32 %v3969, %v4041
  %v4043 = vpop.f32.mrf.mxu0
  %4044 = vdwg.mxu0
  %4045 = vrot.lane.b32.xlu0 %v2608, 96
  %v4046 = vpop.permute.xlu0 %4045
  %4047 = vrot.lane.b32.xlu0 %v2608, 32
  %v4048 = vpop.permute.xlu0 %4047
  %v4049 = vsel %vm381, %v4046, 0
  %v4051 = vsel %vm381, %v4048, 0
  %4053 = vmatprep.subr.mxu0 0.0
  %4054 = vmatpush1.xpose.msra.mxu0 0.0
  %4055 = vmatprep.subr.mxu0 0.0
  %4056 = vmatpush1.xpose.msra.mxu0 0.0
  %4057 = vmatprep.subr.mxu0 0.0
  %4058 = vmatpush1.xpose.msra.mxu0 0.0
  %4059 = vmatprep.subr.mxu0 0.0
  %4060 = vmatpush1.xpose.msra.mxu0 0.0
  %4061 = vmatprep.subr.mxu0 0.0
  %4062 = vmatpush1.xpose.msra.mxu0 0.0
  %4063 = vmatprep.subr.mxu0 0.0
  %4064 = vmatpush1.xpose.msra.mxu0 0.0
  %4065 = vmatprep.subr.mxu0 0.0
  %4066 = vmatpush1.xpose.msra.mxu0 0.0
  %4067 = vmatprep.subr.mxu0 0.0
  %4068 = vmatpush1.xpose.msra.mxu0 0.0
  %4069 = vmatprep.subr.mxu0 0.0
  %4070 = vmatpush1.xpose.msra.mxu0 0.0
  %4071 = vmatprep.subr.mxu0 0.0
  %4072 = vmatpush1.xpose.msra.mxu0 0.0
  %4073 = vmatprep.subr.mxu0 0.0
  %4074 = vmatpush1.xpose.msra.mxu0 0.0
  %4075 = vmatprep.subr.mxu0 0.0
  %4076 = vmatpush1.xpose.msra.mxu0 0.0
  %4077 = vmatprep.subr.mxu0 0.0
  %4078 = vmatpush1.xpose.msra.mxu0 0.0
  %4079 = vmatprep.subr.mxu0 0.0
  %4080 = vmatpush1.xpose.msra.mxu0 0.0
  %4081 = vmatprep.subr.mxu0 0.0
  %4082 = vmatpush1.xpose.msra.mxu0 0.0
  %4083 = vmatprep.subr.mxu0 0.0
  %4084 = vmatpush1.xpose.msra.mxu0 %v4051
  %4085 = vmatprep.subr.mxu0 0.0
  %4086 = vmatpush2.xpose.msra.mxu0 0.0
  %4087 = vmatprep.subr.mxu0 0.0
  %4088 = vmatpush2.xpose.msra.mxu0 0.0
  %4089 = vmatprep.subr.mxu0 0.0
  %4090 = vmatpush2.xpose.msra.mxu0 0.0
  %4091 = vmatprep.subr.mxu0 0.0
  %4092 = vmatpush2.xpose.msra.mxu0 0.0
  %4093 = vmatprep.subr.mxu0 0.0
  %4094 = vmatpush2.xpose.msra.mxu0 0.0
  %4095 = vmatprep.subr.mxu0 0.0
  %4096 = vmatpush2.xpose.msra.mxu0 0.0
  %4097 = vmatprep.subr.mxu0 0.0
  %4098 = vmatpush2.xpose.msra.mxu0 0.0
  %4099 = vmatprep.subr.mxu0 0.0
  %4100 = vmatpush2.xpose.msra.mxu0 0.0
  %4101 = vmatprep.subr.mxu0 0.0
  %4102 = vmatpush2.xpose.msra.mxu0 0.0
  %4103 = vmatprep.subr.mxu0 0.0
  %4104 = vmatpush2.xpose.msra.mxu0 0.0
  %4105 = vmatprep.subr.mxu0 0.0
  %4106 = vmatpush2.xpose.msra.mxu0 0.0
  %4107 = vmatprep.subr.mxu0 0.0
  %4108 = vmatpush2.xpose.msra.mxu0 0.0
  %4109 = vmatprep.subr.mxu0 0.0
  %4110 = vmatpush2.xpose.msra.mxu0 0.0
  %4111 = vmatprep.subr.mxu0 0.0
  %4112 = vmatpush2.xpose.msra.mxu0 0.0
  %4113 = vmatprep.subr.mxu0 0.0
  %4114 = vmatpush2.xpose.msra.mxu0 0.0
  %4115 = vmatprep.subr.mxu0 0.0
  %4116 = vmatpush2.xpose.msra.mxu0 0.0
  %4117 = vmatprep.mubr.f32.mxu0 0.0
  %4118 = vmatmul.mubr.f32.gmra.mxu0 %v4049
  %v4119 = vpop.f32.mrf.mxu0
  %v4120 = vadd.f32 %v148, %v4119
  %v4121 = vpop.f32.mrf.mxu0
  %4122 = vdwg.mxu0
  %v4123 = vsel %vm456, %v4120, -inf
  %4124 = vmax.xlane.f32.xlu0 %v4123
  %v4125 = vpop.xlane.xlu0 %4124
  %v4126 = vsub.f32 %v4120, %v4125
  %v4127 = vmul.f32 %v4126, 1.442695
  %v4128 = vpow.pop %v4127
  %v4129 = vsel %vm456, %v4128, 0.0
  %4130 = vadd.xlane.f32.xlu0 %v4129
  %v4131 = vpop.xlane.xlu0 %4130
  %v4132 = vrcp.pop %v4131
  %v4133 = vmul.f32 %v4128, %v4132
  %4134 = vrot.lane.b32.xlu0 %v2610, 96
  %v4135 = vpop.permute.xlu0 %4134
  %v4138 = vsel %vm456, %v4133, 0
  %4140 = vmatprep.subr.mxu0 0.0
  %4141 = vmatpush1.msra.mxu0 0.0
  %4142 = vmatprep.subr.mxu0 0.0
  %4143 = vmatpush1.msra.mxu0 0.0
  %4144 = vmatprep.subr.mxu0 0.0
  %4145 = vmatpush1.msra.mxu0 0.0
  %4146 = vmatprep.subr.mxu0 0.0
  %4147 = vmatpush1.msra.mxu0 0.0
  %4148 = vmatprep.subr.mxu0 0.0
  %4149 = vmatpush1.msra.mxu0 0.0
  %4150 = vmatprep.subr.mxu0 0.0
  %4151 = vmatpush1.msra.mxu0 0.0
  %4152 = vmatprep.subr.mxu0 0.0
  %4153 = vmatpush1.msra.mxu0 0.0
  %4154 = vmatprep.subr.mxu0 0.0
  %4155 = vmatpush1.msra.mxu0 0.0
  %4156 = vmatprep.subr.mxu0 0.0
  %4157 = vmatpush1.msra.mxu0 0.0
  %4158 = vmatprep.subr.mxu0 0.0
  %4159 = vmatpush1.msra.mxu0 0.0
  %4160 = vmatprep.subr.mxu0 0.0
  %4161 = vmatpush1.msra.mxu0 0.0
  %4162 = vmatprep.subr.mxu0 0.0
  %4163 = vmatpush1.msra.mxu0 0.0
  %4164 = vmatprep.subr.mxu0 0.0
  %4165 = vmatpush1.msra.mxu0 0.0
  %4166 = vmatprep.subr.mxu0 0.0
  %4167 = vmatpush1.msra.mxu0 0.0
  %4168 = vmatprep.subr.mxu0 0.0
  %4169 = vmatpush1.msra.mxu0 0.0
  %4170 = vmatprep.subr.mxu0 0.0
  %4171 = vmatpush1.msra.mxu0 %v4135
  %4172 = vmatprep.subr.mxu0 0.0
  %4173 = vmatpush2.msra.mxu0 0.0
  %4174 = vmatprep.subr.mxu0 0.0
  %4175 = vmatpush2.msra.mxu0 0.0
  %4176 = vmatprep.subr.mxu0 0.0
  %4177 = vmatpush2.msra.mxu0 0.0
  %4178 = vmatprep.subr.mxu0 0.0
  %4179 = vmatpush2.msra.mxu0 0.0
  %4180 = vmatprep.subr.mxu0 0.0
  %4181 = vmatpush2.msra.mxu0 0.0
  %4182 = vmatprep.subr.mxu0 0.0
  %4183 = vmatpush2.msra.mxu0 0.0
  %4184 = vmatprep.subr.mxu0 0.0
  %4185 = vmatpush2.msra.mxu0 0.0
  %4186 = vmatprep.subr.mxu0 0.0
  %4187 = vmatpush2.msra.mxu0 0.0
  %4188 = vmatprep.subr.mxu0 0.0
  %4189 = vmatpush2.msra.mxu0 0.0
  %4190 = vmatprep.subr.mxu0 0.0
  %4191 = vmatpush2.msra.mxu0 0.0
  %4192 = vmatprep.subr.mxu0 0.0
  %4193 = vmatpush2.msra.mxu0 0.0
  %4194 = vmatprep.subr.mxu0 0.0
  %4195 = vmatpush2.msra.mxu0 0.0
  %4196 = vmatprep.subr.mxu0 0.0
  %4197 = vmatpush2.msra.mxu0 0.0
  %4198 = vmatprep.subr.mxu0 0.0
  %4199 = vmatpush2.msra.mxu0 0.0
  %4200 = vmatprep.subr.mxu0 0.0
  %4201 = vmatpush2.msra.mxu0 0.0
  %4202 = vmatprep.subr.mxu0 0.0
  %4203 = vmatpush2.msra.mxu0 0.0
  %4204 = vmatprep.mubr.f32.mxu0 0.0
  %4205 = vmatmul.mubr.f32.gmra.mxu0 %v4138
  %v4206 = vpop.f32.mrf.mxu0
  %v4207 = vadd.f32 0.0, %v4206
  %v4208 = vpop.f32.mrf.mxu0
  %4209 = vdwg.mxu0
  %v4211 = vsel %vm381, %v4207, 0
  %4213 = vmatprep.subr.mxu0 0.0
  %4214 = vmatpush1.msra.mxu0 0.0
  %4215 = vmatprep.subr.mxu0 0.0
  %4216 = vmatpush1.msra.mxu0 0.0
  %4217 = vmatprep.subr.mxu0 0.0
  %4218 = vmatpush1.msra.mxu0 0.0
  %4219 = vmatprep.subr.mxu0 0.0
  %4220 = vmatpush1.msra.mxu0 0.0
  %4221 = vmatprep.subr.mxu0 0.0
  %4222 = vmatpush1.msra.mxu0 0.0
  %4223 = vmatprep.subr.mxu0 0.0
  %4224 = vmatpush1.msra.mxu0 0.0
  %4225 = vmatprep.subr.mxu0 0.0
  %4226 = vmatpush1.msra.mxu0 0.0
  %4227 = vmatprep.subr.mxu0 0.0
  %4228 = vmatpush1.msra.mxu0 0.0
  %4229 = vmatprep.subr.mxu0 0.0
  %4230 = vmatpush1.msra.mxu0 0.0
  %4231 = vmatprep.subr.mxu0 0.0
  %4232 = vmatpush1.msra.mxu0 0.0
  %4233 = vmatprep.subr.mxu0 0.0
  %4234 = vmatpush1.msra.mxu0 0.0
  %4235 = vmatprep.subr.mxu0 0.0
  %4236 = vmatpush1.msra.mxu0 0.0
  %4237 = vmatprep.subr.mxu0 0.0
  %4238 = vmatpush1.msra.mxu0 0.0
  %4239 = vmatprep.subr.mxu0 0.0
  %4240 = vmatpush1.msra.mxu0 0.0
  %4241 = vmatprep.subr.mxu0 0.0
  %4242 = vmatpush1.msra.mxu0 %v2618
  %4243 = vmatprep.subr.mxu0 0.0
  %4244 = vmatpush1.msra.mxu0 %v2617
  %4245 = vmatprep.subr.mxu0 0.0
  %4246 = vmatpush2.msra.mxu0 0.0
  %4247 = vmatprep.subr.mxu0 0.0
  %4248 = vmatpush2.msra.mxu0 0.0
  %4249 = vmatprep.subr.mxu0 0.0
  %4250 = vmatpush2.msra.mxu0 0.0
  %4251 = vmatprep.subr.mxu0 0.0
  %4252 = vmatpush2.msra.mxu0 0.0
  %4253 = vmatprep.subr.mxu0 0.0
  %4254 = vmatpush2.msra.mxu0 0.0
  %4255 = vmatprep.subr.mxu0 0.0
  %4256 = vmatpush2.msra.mxu0 0.0
  %4257 = vmatprep.subr.mxu0 0.0
  %4258 = vmatpush2.msra.mxu0 0.0
  %4259 = vmatprep.subr.mxu0 0.0
  %4260 = vmatpush2.msra.mxu0 0.0
  %4261 = vmatprep.subr.mxu0 0.0
  %4262 = vmatpush2.msra.mxu0 0.0
  %4263 = vmatprep.subr.mxu0 0.0
  %4264 = vmatpush2.msra.mxu0 0.0
  %4265 = vmatprep.subr.mxu0 0.0
  %4266 = vmatpush2.msra.mxu0 0.0
  %4267 = vmatprep.subr.mxu0 0.0
  %4268 = vmatpush2.msra.mxu0 0.0
  %4269 = vmatprep.subr.mxu0 0.0
  %4270 = vmatpush2.msra.mxu0 0.0
  %4271 = vmatprep.subr.mxu0 0.0
  %4272 = vmatpush2.msra.mxu0 0.0
  %4273 = vmatprep.subr.mxu0 0.0
  %4274 = vmatpush2.msra.mxu0 0.0
  %4275 = vmatprep.subr.mxu0 0.0
  %4276 = vmatpush2.msra.mxu0 0.0
  %4277 = vmatprep.mubr.f32.mxu0 0.0
  %4278 = vmatmul.mubr.f32.gmra.mxu0 %v4211
  %v4279 = vpop.f32.mrf.mxu0
  %v4280 = vadd.f32 0.0, %v4279
  %v4281 = vpop.f32.mrf.mxu0
  %4282 = vdwg.mxu0
  %v4283 = vadd.f32 %v4042, %v4280
  %4284 = vrot.lane.b32.xlu0 %v2608, 80
  %v4285 = vpop.permute.xlu0 %4284
  %4286 = vrot.lane.b32.xlu0 %v2608, 16
  %v4287 = vpop.permute.xlu0 %4286
  %v4288 = vsel %vm381, %v4285, 0
  %v4290 = vsel %vm381, %v4287, 0
  %4292 = vmatprep.subr.mxu0 0.0
  %4293 = vmatpush1.xpose.msra.mxu0 0.0
  %4294 = vmatprep.subr.mxu0 0.0
  %4295 = vmatpush1.xpose.msra.mxu0 0.0
  %4296 = vmatprep.subr.mxu0 0.0
  %4297 = vmatpush1.xpose.msra.mxu0 0.0
  %4298 = vmatprep.subr.mxu0 0.0
  %4299 = vmatpush1.xpose.msra.mxu0 0.0
  %4300 = vmatprep.subr.mxu0 0.0
  %4301 = vmatpush1.xpose.msra.mxu0 0.0
  %4302 = vmatprep.subr.mxu0 0.0
  %4303 = vmatpush1.xpose.msra.mxu0 0.0
  %4304 = vmatprep.subr.mxu0 0.0
  %4305 = vmatpush1.xpose.msra.mxu0 0.0
  %4306 = vmatprep.subr.mxu0 0.0
  %4307 = vmatpush1.xpose.msra.mxu0 0.0
  %4308 = vmatprep.subr.mxu0 0.0
  %4309 = vmatpush1.xpose.msra.mxu0 0.0
  %4310 = vmatprep.subr.mxu0 0.0
  %4311 = vmatpush1.xpose.msra.mxu0 0.0
  %4312 = vmatprep.subr.mxu0 0.0
  %4313 = vmatpush1.xpose.msra.mxu0 0.0
  %4314 = vmatprep.subr.mxu0 0.0
  %4315 = vmatpush1.xpose.msra.mxu0 0.0
  %4316 = vmatprep.subr.mxu0 0.0
  %4317 = vmatpush1.xpose.msra.mxu0 0.0
  %4318 = vmatprep.subr.mxu0 0.0
  %4319 = vmatpush1.xpose.msra.mxu0 0.0
  %4320 = vmatprep.subr.mxu0 0.0
  %4321 = vmatpush1.xpose.msra.mxu0 0.0
  %4322 = vmatprep.subr.mxu0 0.0
  %4323 = vmatpush1.xpose.msra.mxu0 %v4290
  %4324 = vmatprep.subr.mxu0 0.0
  %4325 = vmatpush2.xpose.msra.mxu0 0.0
  %4326 = vmatprep.subr.mxu0 0.0
  %4327 = vmatpush2.xpose.msra.mxu0 0.0
  %4328 = vmatprep.subr.mxu0 0.0
  %4329 = vmatpush2.xpose.msra.mxu0 0.0
  %4330 = vmatprep.subr.mxu0 0.0
  %4331 = vmatpush2.xpose.msra.mxu0 0.0
  %4332 = vmatprep.subr.mxu0 0.0
  %4333 = vmatpush2.xpose.msra.mxu0 0.0
  %4334 = vmatprep.subr.mxu0 0.0
  %4335 = vmatpush2.xpose.msra.mxu0 0.0
  %4336 = vmatprep.subr.mxu0 0.0
  %4337 = vmatpush2.xpose.msra.mxu0 0.0
  %4338 = vmatprep.subr.mxu0 0.0
  %4339 = vmatpush2.xpose.msra.mxu0 0.0
  %4340 = vmatprep.subr.mxu0 0.0
  %4341 = vmatpush2.xpose.msra.mxu0 0.0
  %4342 = vmatprep.subr.mxu0 0.0
  %4343 = vmatpush2.xpose.msra.mxu0 0.0
  %4344 = vmatprep.subr.mxu0 0.0
  %4345 = vmatpush2.xpose.msra.mxu0 0.0
  %4346 = vmatprep.subr.mxu0 0.0
  %4347 = vmatpush2.xpose.msra.mxu0 0.0
  %4348 = vmatprep.subr.mxu0 0.0
  %4349 = vmatpush2.xpose.msra.mxu0 0.0
  %4350 = vmatprep.subr.mxu0 0.0
  %4351 = vmatpush2.xpose.msra.mxu0 0.0
  %4352 = vmatprep.subr.mxu0 0.0
  %4353 = vmatpush2.xpose.msra.mxu0 0.0
  %4354 = vmatprep.subr.mxu0 0.0
  %4355 = vmatpush2.xpose.msra.mxu0 0.0
  %4356 = vmatprep.mubr.f32.mxu0 0.0
  %4357 = vmatmul.mubr.f32.gmra.mxu0 %v4288
  %v4358 = vpop.f32.mrf.mxu0
  %v4359 = vadd.f32 %v149, %v4358
  %v4360 = vpop.f32.mrf.mxu0
  %4361 = vdwg.mxu0
  %v4362 = vsel %vm456, %v4359, -inf
  %4363 = vmax.xlane.f32.xlu0 %v4362
  %v4364 = vpop.xlane.xlu0 %4363
  %v4365 = vsub.f32 %v4359, %v4364
  %v4366 = vmul.f32 %v4365, 1.442695
  %v4367 = vpow.pop %v4366
  %v4368 = vsel %vm456, %v4367, 0.0
  %4369 = vadd.xlane.f32.xlu0 %v4368
  %v4370 = vpop.xlane.xlu0 %4369
  %v4371 = vrcp.pop %v4370
  %v4372 = vmul.f32 %v4367, %v4371
  %4373 = vrot.lane.b32.xlu0 %v2610, 80
  %v4374 = vpop.permute.xlu0 %4373
  %v4377 = vsel %vm456, %v4372, 0
  %4379 = vmatprep.subr.mxu0 0.0
  %4380 = vmatpush1.msra.mxu0 0.0
  %4381 = vmatprep.subr.mxu0 0.0
  %4382 = vmatpush1.msra.mxu0 0.0
  %4383 = vmatprep.subr.mxu0 0.0
  %4384 = vmatpush1.msra.mxu0 0.0
  %4385 = vmatprep.subr.mxu0 0.0
  %4386 = vmatpush1.msra.mxu0 0.0
  %4387 = vmatprep.subr.mxu0 0.0
  %4388 = vmatpush1.msra.mxu0 0.0
  %4389 = vmatprep.subr.mxu0 0.0
  %4390 = vmatpush1.msra.mxu0 0.0
  %4391 = vmatprep.subr.mxu0 0.0
  %4392 = vmatpush1.msra.mxu0 0.0
  %4393 = vmatprep.subr.mxu0 0.0
  %4394 = vmatpush1.msra.mxu0 0.0
  %4395 = vmatprep.subr.mxu0 0.0
  %4396 = vmatpush1.msra.mxu0 0.0
  %4397 = vmatprep.subr.mxu0 0.0
  %4398 = vmatpush1.msra.mxu0 0.0
  %4399 = vmatprep.subr.mxu0 0.0
  %4400 = vmatpush1.msra.mxu0 0.0
  %4401 = vmatprep.subr.mxu0 0.0
  %4402 = vmatpush1.msra.mxu0 0.0
  %4403 = vmatprep.subr.mxu0 0.0
  %4404 = vmatpush1.msra.mxu0 0.0
  %4405 = vmatprep.subr.mxu0 0.0
  %4406 = vmatpush1.msra.mxu0 0.0
  %4407 = vmatprep.subr.mxu0 0.0
  %4408 = vmatpush1.msra.mxu0 0.0
  %4409 = vmatprep.subr.mxu0 0.0
  %4410 = vmatpush1.msra.mxu0 %v4374
  %4411 = vmatprep.subr.mxu0 0.0
  %4412 = vmatpush2.msra.mxu0 0.0
  %4413 = vmatprep.subr.mxu0 0.0
  %4414 = vmatpush2.msra.mxu0 0.0
  %4415 = vmatprep.subr.mxu0 0.0
  %4416 = vmatpush2.msra.mxu0 0.0
  %4417 = vmatprep.subr.mxu0 0.0
  %4418 = vmatpush2.msra.mxu0 0.0
  %4419 = vmatprep.subr.mxu0 0.0
  %4420 = vmatpush2.msra.mxu0 0.0
  %4421 = vmatprep.subr.mxu0 0.0
  %4422 = vmatpush2.msra.mxu0 0.0
  %4423 = vmatprep.subr.mxu0 0.0
  %4424 = vmatpush2.msra.mxu0 0.0
  %4425 = vmatprep.subr.mxu0 0.0
  %4426 = vmatpush2.msra.mxu0 0.0
  %4427 = vmatprep.subr.mxu0 0.0
  %4428 = vmatpush2.msra.mxu0 0.0
  %4429 = vmatprep.subr.mxu0 0.0
  %4430 = vmatpush2.msra.mxu0 0.0
  %4431 = vmatprep.subr.mxu0 0.0
  %4432 = vmatpush2.msra.mxu0 0.0
  %4433 = vmatprep.subr.mxu0 0.0
  %4434 = vmatpush2.msra.mxu0 0.0
  %4435 = vmatprep.subr.mxu0 0.0
  %4436 = vmatpush2.msra.mxu0 0.0
  %4437 = vmatprep.subr.mxu0 0.0
  %4438 = vmatpush2.msra.mxu0 0.0
  %4439 = vmatprep.subr.mxu0 0.0
  %4440 = vmatpush2.msra.mxu0 0.0
  %4441 = vmatprep.subr.mxu0 0.0
  %4442 = vmatpush2.msra.mxu0 0.0
  %4443 = vmatprep.mubr.f32.mxu0 0.0
  %4444 = vmatmul.mubr.f32.gmra.mxu0 %v4377
  %v4445 = vpop.f32.mrf.mxu0
  %v4446 = vadd.f32 0.0, %v4445
  %v4447 = vpop.f32.mrf.mxu0
  %4448 = vdwg.mxu0
  %v4450 = vsel %vm381, %v4446, 0
  %4452 = vmatprep.subr.mxu0 0.0
  %4453 = vmatpush1.msra.mxu0 0.0
  %4454 = vmatprep.subr.mxu0 0.0
  %4455 = vmatpush1.msra.mxu0 0.0
  %4456 = vmatprep.subr.mxu0 0.0
  %4457 = vmatpush1.msra.mxu0 0.0
  %4458 = vmatprep.subr.mxu0 0.0
  %4459 = vmatpush1.msra.mxu0 0.0
  %4460 = vmatprep.subr.mxu0 0.0
  %4461 = vmatpush1.msra.mxu0 0.0
  %4462 = vmatprep.subr.mxu0 0.0
  %4463 = vmatpush1.msra.mxu0 0.0
  %4464 = vmatprep.subr.mxu0 0.0
  %4465 = vmatpush1.msra.mxu0 0.0
  %4466 = vmatprep.subr.mxu0 0.0
  %4467 = vmatpush1.msra.mxu0 0.0
  %4468 = vmatprep.subr.mxu0 0.0
  %4469 = vmatpush1.msra.mxu0 0.0
  %4470 = vmatprep.subr.mxu0 0.0
  %4471 = vmatpush1.msra.mxu0 0.0
  %4472 = vmatprep.subr.mxu0 0.0
  %4473 = vmatpush1.msra.mxu0 0.0
  %4474 = vmatprep.subr.mxu0 0.0
  %4475 = vmatpush1.msra.mxu0 0.0
  %4476 = vmatprep.subr.mxu0 0.0
  %4477 = vmatpush1.msra.mxu0 0.0
  %4478 = vmatprep.subr.mxu0 0.0
  %4479 = vmatpush1.msra.mxu0 0.0
  %4480 = vmatprep.subr.mxu0 0.0
  %4481 = vmatpush1.msra.mxu0 %v2620
  %4482 = vmatprep.subr.mxu0 0.0
  %4483 = vmatpush1.msra.mxu0 %v2619
  %4484 = vmatprep.subr.mxu0 0.0
  %4485 = vmatpush2.msra.mxu0 0.0
  %4486 = vmatprep.subr.mxu0 0.0
  %4487 = vmatpush2.msra.mxu0 0.0
  %4488 = vmatprep.subr.mxu0 0.0
  %4489 = vmatpush2.msra.mxu0 0.0
  %4490 = vmatprep.subr.mxu0 0.0
  %4491 = vmatpush2.msra.mxu0 0.0
  %4492 = vmatprep.subr.mxu0 0.0
  %4493 = vmatpush2.msra.mxu0 0.0
  %4494 = vmatprep.subr.mxu0 0.0
  %4495 = vmatpush2.msra.mxu0 0.0
  %4496 = vmatprep.subr.mxu0 0.0
  %4497 = vmatpush2.msra.mxu0 0.0
  %4498 = vmatprep.subr.mxu0 0.0
  %4499 = vmatpush2.msra.mxu0 0.0
  %4500 = vmatprep.subr.mxu0 0.0
  %4501 = vmatpush2.msra.mxu0 0.0
  %4502 = vmatprep.subr.mxu0 0.0
  %4503 = vmatpush2.msra.mxu0 0.0
  %4504 = vmatprep.subr.mxu0 0.0
  %4505 = vmatpush2.msra.mxu0 0.0
  %4506 = vmatprep.subr.mxu0 0.0
  %4507 = vmatpush2.msra.mxu0 0.0
  %4508 = vmatprep.subr.mxu0 0.0
  %4509 = vmatpush2.msra.mxu0 0.0
  %4510 = vmatprep.subr.mxu0 0.0
  %4511 = vmatpush2.msra.mxu0 0.0
  %4512 = vmatprep.subr.mxu0 0.0
  %4513 = vmatpush2.msra.mxu0 0.0
  %4514 = vmatprep.subr.mxu0 0.0
  %4515 = vmatpush2.msra.mxu0 0.0
  %4516 = vmatprep.mubr.f32.mxu0 0.0
  %4517 = vmatmul.mubr.f32.gmra.mxu0 %v4450
  %v4518 = vpop.f32.mrf.mxu0
  %v4519 = vadd.f32 0.0, %v4518
  %v4520 = vpop.f32.mrf.mxu0
  %4521 = vdwg.mxu0
  %v4522 = vadd.f32 %v4283, %v4519
  %v4523 = vadd.f32 %v2488, %v3571
  %v4524 = vadd.f32 %v2489, %v4522
  %v4525 = vmul.f32 %v4523, %v4523
  %v4526 = vmul.f32 %v4524, %v4524
  %v4527 = vsel %vm249, %v4525, 0.0
  %4528 = vadd.xlane.f32.xlu0 %v4527
  %v4529 = vpop.xlane.xlu0 %4528
  %v4530 = vsel %vm249, %v4526, 0.0
  %4531 = vadd.xlane.f32.xlu0 %v4530
  %v4532 = vpop.xlane.xlu0 %4531
  %v4533 = vmul.f32 %v4529, %v256
  %v4534 = vmul.f32 %v4532, %v256
  %v4535 = vadd.f32 %v4533, 1e-06
  %v4536 = vadd.f32 %v4534, 1e-06
  %v4537 = vrsqrt.pop %v4535
  %v4538 = vrsqrt.pop %v4536
  %v4539 = vmul.f32 %v4523, %v4537
  %v4540 = vmul.f32 %v4524, %v4538
  %v4541 = vlaneseq
  %v4542 = vshrl.u32 %v4541, 7
  %v4543 = vsub.s32 1, %v4542
  %v4544 = vrot.slane %v246, %v4543
  %v4545 = vmul.f32 %v4539, %v4544
  %v4546 = vmul.f32 %v4540, %v4544
  %s4547 = scalar_lea.vmem %s19, 64
  %v4548 = vld [vmem:[%s4547] sm:$0xff]
  %v4549 = vld [vmem:[%s4547 + $0x8] sm:$0xff]
  %v4550 = vld [vmem:[%s4547 + $0x10] sm:$0xff]
  %v4551 = vld [vmem:[%s4547 + $0x18] sm:$0xff]
  %v4552 = vld [vmem:[%s4547 + $0x20] sm:$0xff]
  %v4553 = vld [vmem:[%s4547 + $0x28] sm:$0xff]
  %v4554 = vld [vmem:[%s4547 + $0x30] sm:$0xff]
  %v4555 = vld [vmem:[%s4547 + $0x38] sm:$0xff]
  %v4557 = vsel %vm249, %v4545, 0
  %v4560 = vsel %vm249, %v4546, 0
  %4562 = vmatprep.subr.mxu0 0.0
  %4563 = vmatpush1.msra.mxu0 0.0
  %4564 = vmatprep.subr.mxu0 0.0
  %4565 = vmatpush1.msra.mxu0 0.0
  %4566 = vmatprep.subr.mxu0 0.0
  %4567 = vmatpush1.msra.mxu0 0.0
  %4568 = vmatprep.subr.mxu0 0.0
  %4569 = vmatpush1.msra.mxu0 0.0
  %4570 = vmatprep.subr.mxu0 0.0
  %4571 = vmatpush1.msra.mxu0 0.0
  %4572 = vmatprep.subr.mxu0 0.0
  %4573 = vmatpush1.msra.mxu0 0.0
  %4574 = vmatprep.subr.mxu0 0.0
  %4575 = vmatpush1.msra.mxu0 0.0
  %4576 = vmatprep.subr.mxu0 0.0
  %4577 = vmatpush1.msra.mxu0 0.0
  %4578 = vmatprep.subr.mxu0 0.0
  %4579 = vmatpush1.msra.mxu0 %v4555
  %4580 = vmatprep.subr.mxu0 0.0
  %4581 = vmatpush1.msra.mxu0 %v4554
  %4582 = vmatprep.subr.mxu0 0.0
  %4583 = vmatpush1.msra.mxu0 %v4553
  %4584 = vmatprep.subr.mxu0 0.0
  %4585 = vmatpush1.msra.mxu0 %v4552
  %4586 = vmatprep.subr.mxu0 0.0
  %4587 = vmatpush1.msra.mxu0 %v4551
  %4588 = vmatprep.subr.mxu0 0.0
  %4589 = vmatpush1.msra.mxu0 %v4550
  %4590 = vmatprep.subr.mxu0 0.0
  %4591 = vmatpush1.msra.mxu0 %v4549
  %4592 = vmatprep.subr.mxu0 0.0
  %4593 = vmatpush1.msra.mxu0 %v4548
  %4594 = vmatprep.subr.mxu0 0.0
  %4595 = vmatpush2.msra.mxu0 0.0
  %4596 = vmatprep.subr.mxu0 0.0
  %4597 = vmatpush2.msra.mxu0 0.0
  %4598 = vmatprep.subr.mxu0 0.0
  %4599 = vmatpush2.msra.mxu0 0.0
  %4600 = vmatprep.subr.mxu0 0.0
  %4601 = vmatpush2.msra.mxu0 0.0
  %4602 = vmatprep.subr.mxu0 0.0
  %4603 = vmatpush2.msra.mxu0 0.0
  %4604 = vmatprep.subr.mxu0 0.0
  %4605 = vmatpush2.msra.mxu0 0.0
  %4606 = vmatprep.subr.mxu0 0.0
  %4607 = vmatpush2.msra.mxu0 0.0
  %4608 = vmatprep.subr.mxu0 0.0
  %4609 = vmatpush2.msra.mxu0 0.0
  %4610 = vmatprep.subr.mxu0 0.0
  %4611 = vmatpush2.msra.mxu0 0.0
  %4612 = vmatprep.subr.mxu0 0.0
  %4613 = vmatpush2.msra.mxu0 0.0
  %4614 = vmatprep.subr.mxu0 0.0
  %4615 = vmatpush2.msra.mxu0 0.0
  %4616 = vmatprep.subr.mxu0 0.0
  %4617 = vmatpush2.msra.mxu0 0.0
  %4618 = vmatprep.subr.mxu0 0.0
  %4619 = vmatpush2.msra.mxu0 0.0
  %4620 = vmatprep.subr.mxu0 0.0
  %4621 = vmatpush2.msra.mxu0 0.0
  %4622 = vmatprep.subr.mxu0 0.0
  %4623 = vmatpush2.msra.mxu0 0.0
  %4624 = vmatprep.subr.mxu0 0.0
  %4625 = vmatpush2.msra.mxu0 0.0
  %4626 = vmatprep.mubr.f32.mxu0 0.0
  %4627 = vmatmul.mubr.f32.gmra.mxu0 %v4557
  %v4628 = vpop.f32.mrf.mxu0
  %v4629 = vadd.f32 0.0, %v4628
  %v4630 = vpop.f32.mrf.mxu0
  %4631 = vmatprep.mubr.f32.mxu0 0.0
  %4632 = vmatmul.mubr.f32.gmra.mxu0 %v4560
  %v4633 = vpop.f32.mrf.mxu0
  %v4634 = vadd.f32 0.0, %v4633
  %v4635 = vpop.f32.mrf.mxu0
  %4636 = vdwg.mxu0
  %v4637 = vmax.f32 %v4629, 0.0
  %v4638 = vmax.f32 %v4634, 0.0
  %s4639 = scalar_lea.vmem %s21, 128
  %v4640 = vld [vmem:[%s4639] sm:$0xff]
  %v4641 = vld [vmem:[%s4639 + $0x8] sm:$0xff]
  %v4642 = vld [vmem:[%s4639 + $0x10] sm:$0xff]
  %v4643 = vld [vmem:[%s4639 + $0x18] sm:$0xff]
  %v4644 = vld [vmem:[%s4639 + $0x20] sm:$0xff]
  %v4645 = vld [vmem:[%s4639 + $0x28] sm:$0xff]
  %v4646 = vld [vmem:[%s4639 + $0x30] sm:$0xff]
  %v4647 = vld [vmem:[%s4639 + $0x38] sm:$0xff]
  %v4648 = vld [vmem:[%s4639 + $0x40] sm:$0xff]
  %v4649 = vld [vmem:[%s4639 + $0x48] sm:$0xff]
  %v4650 = vld [vmem:[%s4639 + $0x50] sm:$0xff]
  %v4651 = vld [vmem:[%s4639 + $0x58] sm:$0xff]
  %v4652 = vld [vmem:[%s4639 + $0x60] sm:$0xff]
  %v4653 = vld [vmem:[%s4639 + $0x68] sm:$0xff]
  %v4654 = vld [vmem:[%s4639 + $0x70] sm:$0xff]
  %v4655 = vld [vmem:[%s4639 + $0x78] sm:$0xff]
  %4656 = vmatprep.subr.mxu0 0.0
  %4657 = vmatpush1.msra.mxu0 %v4655
  %4658 = vmatprep.subr.mxu0 0.0
  %4659 = vmatpush1.msra.mxu0 %v4654
  %4660 = vmatprep.subr.mxu0 0.0
  %4661 = vmatpush1.msra.mxu0 %v4653
  %4662 = vmatprep.subr.mxu0 0.0
  %4663 = vmatpush1.msra.mxu0 %v4652
  %4664 = vmatprep.subr.mxu0 0.0
  %4665 = vmatpush1.msra.mxu0 %v4651
  %4666 = vmatprep.subr.mxu0 0.0
  %4667 = vmatpush1.msra.mxu0 %v4650
  %4668 = vmatprep.subr.mxu0 0.0
  %4669 = vmatpush1.msra.mxu0 %v4649
  %4670 = vmatprep.subr.mxu0 0.0
  %4671 = vmatpush1.msra.mxu0 %v4648
  %4672 = vmatprep.subr.mxu0 0.0
  %4673 = vmatpush1.msra.mxu0 %v4647
  %4674 = vmatprep.subr.mxu0 0.0
  %4675 = vmatpush1.msra.mxu0 %v4646
  %4676 = vmatprep.subr.mxu0 0.0
  %4677 = vmatpush1.msra.mxu0 %v4645
  %4678 = vmatprep.subr.mxu0 0.0
  %4679 = vmatpush1.msra.mxu0 %v4644
  %4680 = vmatprep.subr.mxu0 0.0
  %4681 = vmatpush1.msra.mxu0 %v4643
  %4682 = vmatprep.subr.mxu0 0.0
  %4683 = vmatpush1.msra.mxu0 %v4642
  %4684 = vmatprep.subr.mxu0 0.0
  %4685 = vmatpush1.msra.mxu0 %v4641
  %4686 = vmatprep.subr.mxu0 0.0
  %4687 = vmatpush1.msra.mxu0 %v4640
  %4688 = vmatprep.subr.mxu0 0.0
  %4689 = vmatpush2.msra.mxu0 0.0
  %4690 = vmatprep.subr.mxu0 0.0
  %4691 = vmatpush2.msra.mxu0 0.0
  %4692 = vmatprep.subr.mxu0 0.0
  %4693 = vmatpush2.msra.mxu0 0.0
  %4694 = vmatprep.subr.mxu0 0.0
  %4695 = vmatpush2.msra.mxu0 0.0
  %4696 = vmatprep.subr.mxu0 0.0
  %4697 = vmatpush2.msra.mxu0 0.0
  %4698 = vmatprep.subr.mxu0 0.0
  %4699 = vmatpush2.msra.mxu0 0.0
  %4700 = vmatprep.subr.mxu0 0.0
  %4701 = vmatpush2.msra.mxu0 0.0
  %4702 = vmatprep.subr.mxu0 0.0
  %4703 = vmatpush2.msra.mxu0 0.0
  %4704 = vmatprep.subr.mxu0 0.0
  %4705 = vmatpush2.msra.mxu0 0.0
  %4706 = vmatprep.subr.mxu0 0.0
  %4707 = vmatpush2.msra.mxu0 0.0
  %4708 = vmatprep.subr.mxu0 0.0
  %4709 = vmatpush2.msra.mxu0 0.0
  %4710 = vmatprep.subr.mxu0 0.0
  %4711 = vmatpush2.msra.mxu0 0.0
  %4712 = vmatprep.subr.mxu0 0.0
  %4713 = vmatpush2.msra.mxu0 0.0
  %4714 = vmatprep.subr.mxu0 0.0
  %4715 = vmatpush2.msra.mxu0 0.0
  %4716 = vmatprep.subr.mxu0 0.0
  %4717 = vmatpush2.msra.mxu0 0.0
  %4718 = vmatprep.subr.mxu0 0.0
  %4719 = vmatpush2.msra.mxu0 0.0
  %4720 = vmatprep.mubr.f32.mxu0 0.0
  %4721 = vmatmul.mubr.f32.gmra.mxu0 %v4637
  %v4722 = vpop.f32.mrf.mxu0
  %v4723 = vadd.f32 0.0, %v4722
  %v4724 = vpop.f32.mrf.mxu0
  %4725 = vmatprep.mubr.f32.mxu0 0.0
  %4726 = vmatmul.mubr.f32.gmra.mxu0 %v4638
  %v4727 = vpop.f32.mrf.mxu0
  %v4728 = vadd.f32 0.0, %v4727
  %v4729 = vpop.f32.mrf.mxu0
  %4730 = vdwg.mxu0
  %v4731 = vadd.f32 %v4523, %v4723
  %v4732 = vadd.f32 %v4524, %v4728
  %v4733 = vld [vmem:[%s23] sm:$0x1]
  %v4734 = vmul.f32 %v4731, %v4731
  %v4735 = vmul.f32 %v4732, %v4732
  %v4736 = vsel %vm249, %v4734, 0.0
  %4737 = vadd.xlane.f32.xlu0 %v4736
  %v4738 = vpop.xlane.xlu0 %4737
  %v4739 = vsel %vm249, %v4735, 0.0
  %4740 = vadd.xlane.f32.xlu0 %v4739
  %v4741 = vpop.xlane.xlu0 %4740
  %v4742 = vmul.f32 %v4738, %v256
  %v4743 = vmul.f32 %v4741, %v256
  %v4744 = vadd.f32 %v4742, 1e-06
  %v4745 = vadd.f32 %v4743, 1e-06
  %v4746 = vrsqrt.pop %v4744
  %v4747 = vrsqrt.pop %v4745
  %v4748 = vmul.f32 %v4731, %v4746
  %v4749 = vmul.f32 %v4732, %v4747
  %v4751 = vlaneseq
  %v4752 = vshrl.u32 %v4751, 7
  %v4753 = vsub.s32 0, %v4752
  %v4754 = vrot.slane %v4733, %v4753
  %v4756 = vmul.f32 %v4748, %v4754
  %v4757 = vmul.f32 %v4749, %v4754
  %v4758 = vld [vmem:[%s25] sm:$0xff]
  %v4759 = vld [vmem:[%s25 + $0x8] sm:$0xff]
  %v4760 = vld [vmem:[%s25 + $0x10] sm:$0xff]
  %v4761 = vld [vmem:[%s25 + $0x18] sm:$0xff]
  %v4762 = vld [vmem:[%s25 + $0x20] sm:$0xff]
  %v4763 = vld [vmem:[%s25 + $0x28] sm:$0xff]
  %v4764 = vld [vmem:[%s25 + $0x30] sm:$0xff]
  %v4765 = vld [vmem:[%s25 + $0x38] sm:$0xff]
  %v4766 = vld [vmem:[%s27] sm:$0x1]
  %v4768 = vlaneseq
  %v4769 = vshrl.u32 %v4768, 7
  %v4770 = vsub.s32 0, %v4769
  %v4771 = vrot.slane %v4766, %v4770
  %v4774 = vsel %vm249, %v4756, 0
  %v4777 = vsel %vm249, %v4757, 0
  %4779 = vmatprep.subr.mxu0 0.0
  %4780 = vmatpush1.msra.mxu0 0.0
  %4781 = vmatprep.subr.mxu0 0.0
  %4782 = vmatpush1.msra.mxu0 0.0
  %4783 = vmatprep.subr.mxu0 0.0
  %4784 = vmatpush1.msra.mxu0 0.0
  %4785 = vmatprep.subr.mxu0 0.0
  %4786 = vmatpush1.msra.mxu0 0.0
  %4787 = vmatprep.subr.mxu0 0.0
  %4788 = vmatpush1.msra.mxu0 0.0
  %4789 = vmatprep.subr.mxu0 0.0
  %4790 = vmatpush1.msra.mxu0 0.0
  %4791 = vmatprep.subr.mxu0 0.0
  %4792 = vmatpush1.msra.mxu0 0.0
  %4793 = vmatprep.subr.mxu0 0.0
  %4794 = vmatpush1.msra.mxu0 0.0
  %4795 = vmatprep.subr.mxu0 0.0
  %4796 = vmatpush1.msra.mxu0 %v4765
  %4797 = vmatprep.subr.mxu0 0.0
  %4798 = vmatpush1.msra.mxu0 %v4764
  %4799 = vmatprep.subr.mxu0 0.0
  %4800 = vmatpush1.msra.mxu0 %v4763
  %4801 = vmatprep.subr.mxu0 0.0
  %4802 = vmatpush1.msra.mxu0 %v4762
  %4803 = vmatprep.subr.mxu0 0.0
  %4804 = vmatpush1.msra.mxu0 %v4761
  %4805 = vmatprep.subr.mxu0 0.0
  %4806 = vmatpush1.msra.mxu0 %v4760
  %4807 = vmatprep.subr.mxu0 0.0
  %4808 = vmatpush1.msra.mxu0 %v4759
  %4809 = vmatprep.subr.mxu0 0.0
  %4810 = vmatpush1.msra.mxu0 %v4758
  %4811 = vmatprep.subr.mxu0 0.0
  %4812 = vmatpush2.msra.mxu0 0.0
  %4813 = vmatprep.subr.mxu0 0.0
  %4814 = vmatpush2.msra.mxu0 0.0
  %4815 = vmatprep.subr.mxu0 0.0
  %4816 = vmatpush2.msra.mxu0 0.0
  %4817 = vmatprep.subr.mxu0 0.0
  %4818 = vmatpush2.msra.mxu0 0.0
  %4819 = vmatprep.subr.mxu0 0.0
  %4820 = vmatpush2.msra.mxu0 0.0
  %4821 = vmatprep.subr.mxu0 0.0
  %4822 = vmatpush2.msra.mxu0 0.0
  %4823 = vmatprep.subr.mxu0 0.0
  %4824 = vmatpush2.msra.mxu0 0.0
  %4825 = vmatprep.subr.mxu0 0.0
  %4826 = vmatpush2.msra.mxu0 0.0
  %4827 = vmatprep.subr.mxu0 0.0
  %4828 = vmatpush2.msra.mxu0 0.0
  %4829 = vmatprep.subr.mxu0 0.0
  %4830 = vmatpush2.msra.mxu0 0.0
  %4831 = vmatprep.subr.mxu0 0.0
  %4832 = vmatpush2.msra.mxu0 0.0
  %4833 = vmatprep.subr.mxu0 0.0
  %4834 = vmatpush2.msra.mxu0 0.0
  %4835 = vmatprep.subr.mxu0 0.0
  %4836 = vmatpush2.msra.mxu0 0.0
  %4837 = vmatprep.subr.mxu0 0.0
  %4838 = vmatpush2.msra.mxu0 0.0
  %4839 = vmatprep.subr.mxu0 0.0
  %4840 = vmatpush2.msra.mxu0 0.0
  %4841 = vmatprep.subr.mxu0 0.0
  %4842 = vmatpush2.msra.mxu0 0.0
  %4843 = vmatprep.mubr.f32.mxu0 0.0
  %4844 = vmatmul.mubr.f32.gmra.mxu0 %v4774
  %v4845 = vpop.f32.mrf.mxu0
  %v4846 = vadd.f32 %v4771, %v4845
  %v4847 = vpop.f32.mrf.mxu0
  %4848 = vmatprep.mubr.f32.mxu0 0.0
  %4849 = vmatmul.mubr.f32.gmra.mxu0 %v4777
  %v4850 = vpop.f32.mrf.mxu0
  %v4851 = vadd.f32 %v4771, %v4850
  %v4852 = vpop.f32.mrf.mxu0
  %4853 = vdwg.mxu0
  %v4854 = vld [vmem:[%s29] sm:$0x1]
  %v4855 = vld [vmem:[%s31] sm:$0x1]
  %v4856 = vsel %vm249, %v4846, 0.0
  %4857 = vadd.xlane.f32.xlu0 %v4856
  %v4858 = vpop.xlane.xlu0 %4857
  %v4859 = vsel %vm249, %v4851, 0.0
  %4860 = vadd.xlane.f32.xlu0 %v4859
  %v4861 = vpop.xlane.xlu0 %4860
  %v4862 = vmul.f32 %v4858, %v256
  %v4863 = vmul.f32 %v4861, %v256
  %v4864 = vsub.f32 %v4846, %v4862
  %v4865 = vsub.f32 %v4851, %v4863
  %v4866 = vmul.f32 %v4864, %v4864
  %v4867 = vmul.f32 %v4865, %v4865
  %v4868 = vsel %vm249, %v4866, 0.0
  %4869 = vadd.xlane.f32.xlu0 %v4868
  %v4870 = vpop.xlane.xlu0 %4869
  %v4871 = vsel %vm249, %v4867, 0.0
  %4872 = vadd.xlane.f32.xlu0 %v4871
  %v4873 = vpop.xlane.xlu0 %4872
  %v4874 = vmul.f32 %v4870, %v256
  %v4875 = vmul.f32 %v4873, %v256
  %v4876 = vadd.f32 %v4874, 1e-05
  %v4877 = vadd.f32 %v4875, 1e-05
  %v4878 = vrsqrt.pop %v4876
  %v4879 = vrsqrt.pop %v4877
  %v4880 = vmul.f32 %v4864, %v4878
  %v4881 = vmul.f32 %v4865, %v4879
  %v4883 = vlaneseq
  %v4884 = vshrl.u32 %v4883, 7
  %v4885 = vsub.s32 0, %v4884
  %v4886 = vrot.slane %v4854, %v4885
  %v4888 = vmul.f32 %v4880, %v4886
  %v4889 = vmul.f32 %v4881, %v4886
  %v4891 = vlaneseq
  %v4892 = vshrl.u32 %v4891, 7
  %v4893 = vsub.s32 0, %v4892
  %v4894 = vrot.slane %v4855, %v4893
  %v4896 = vadd.f32 %v4888, %v4894
  %v4897 = vadd.f32 %v4889, %v4894
  %v4898 = vld [vmem:[%s33] sm:$0xff]
  %v4899 = vld [vmem:[%s33 + $0x8] sm:$0xff]
  %v4900 = vld [vmem:[%s33 + $0x10] sm:$0xff]
  %v4901 = vld [vmem:[%s33 + $0x18] sm:$0xff]
  %v4902 = vld [vmem:[%s33 + $0x20] sm:$0xff]
  %v4903 = vld [vmem:[%s33 + $0x28] sm:$0xff]
  %v4904 = vld [vmem:[%s33 + $0x30] sm:$0xff]
  %v4905 = vld [vmem:[%s33 + $0x38] sm:$0xff]
  %v4906 = vld [vmem:[%s33 + $0x40] sm:$0xff]
  %v4907 = vld [vmem:[%s33 + $0x48] sm:$0xff]
  %v4908 = vld [vmem:[%s33 + $0x50] sm:$0xff]
  %v4909 = vld [vmem:[%s33 + $0x58] sm:$0xff]
  %v4910 = vld [vmem:[%s33 + $0x60] sm:$0xff]
  %v4911 = vld [vmem:[%s33 + $0x68] sm:$0xff]
  %v4912 = vld [vmem:[%s33 + $0x70] sm:$0xff]
  %v4913 = vld [vmem:[%s33 + $0x78] sm:$0xff]
  %v4914 = vld [vmem:[%s35] sm:$0x3]
  %v4916 = vlaneseq
  %v4917 = vshrl.u32 %v4916, 7
  %v4918 = vsub.s32 0, %v4917
  %v4919 = vrot.slane %v4914, %v4918
  %v4920 = vlaneseq
  %v4921 = vshrl.u32 %v4920, 7
  %v4922 = vsub.s32 1, %v4921
  %v4923 = vrot.slane %v4914, %v4922
  %v4927 = vsel %vm249, %v4896, 0
  %v4930 = vsel %vm249, %v4897, 0
  %4932 = vmatprep.subr.mxu0 0.0
  %4933 = vmatpush1.msra.mxu0 0.0
  %4934 = vmatprep.subr.mxu0 0.0
  %4935 = vmatpush1.msra.mxu0 0.0
  %4936 = vmatprep.subr.mxu0 0.0
  %4937 = vmatpush1.msra.mxu0 0.0
  %4938 = vmatprep.subr.mxu0 0.0
  %4939 = vmatpush1.msra.mxu0 0.0
  %4940 = vmatprep.subr.mxu0 0.0
  %4941 = vmatpush1.msra.mxu0 0.0
  %4942 = vmatprep.subr.mxu0 0.0
  %4943 = vmatpush1.msra.mxu0 0.0
  %4944 = vmatprep.subr.mxu0 0.0
  %4945 = vmatpush1.msra.mxu0 0.0
  %4946 = vmatprep.subr.mxu0 0.0
  %4947 = vmatpush1.msra.mxu0 0.0
  %4948 = vmatprep.subr.mxu0 %v4913
  %4949 = vmatpush1.msra.mxu0 %v4912
  %4950 = vmatprep.subr.mxu0 %v4911
  %4951 = vmatpush1.msra.mxu0 %v4910
  %4952 = vmatprep.subr.mxu0 %v4909
  %4953 = vmatpush1.msra.mxu0 %v4908
  %4954 = vmatprep.subr.mxu0 %v4907
  %4955 = vmatpush1.msra.mxu0 %v4906
  %4956 = vmatprep.subr.mxu0 %v4905
  %4957 = vmatpush1.msra.mxu0 %v4904
  %4958 = vmatprep.subr.mxu0 %v4903
  %4959 = vmatpush1.msra.mxu0 %v4902
  %4960 = vmatprep.subr.mxu0 %v4901
  %4961 = vmatpush1.msra.mxu0 %v4900
  %4962 = vmatprep.subr.mxu0 %v4899
  %4963 = vmatpush1.msra.mxu0 %v4898
  %4964 = vmatprep.subr.mxu0 0.0
  %4965 = vmatpush2.msra.mxu0 0.0
  %4966 = vmatprep.subr.mxu0 0.0
  %4967 = vmatpush2.msra.mxu0 0.0
  %4968 = vmatprep.subr.mxu0 0.0
  %4969 = vmatpush2.msra.mxu0 0.0
  %4970 = vmatprep.subr.mxu0 0.0
  %4971 = vmatpush2.msra.mxu0 0.0
  %4972 = vmatprep.subr.mxu0 0.0
  %4973 = vmatpush2.msra.mxu0 0.0
  %4974 = vmatprep.subr.mxu0 0.0
  %4975 = vmatpush2.msra.mxu0 0.0
  %4976 = vmatprep.subr.mxu0 0.0
  %4977 = vmatpush2.msra.mxu0 0.0
  %4978 = vmatprep.subr.mxu0 0.0
  %4979 = vmatpush2.msra.mxu0 0.0
  %4980 = vmatprep.subr.mxu0 0.0
  %4981 = vmatpush2.msra.mxu0 0.0
  %4982 = vmatprep.subr.mxu0 0.0
  %4983 = vmatpush2.msra.mxu0 0.0
  %4984 = vmatprep.subr.mxu0 0.0
  %4985 = vmatpush2.msra.mxu0 0.0
  %4986 = vmatprep.subr.mxu0 0.0
  %4987 = vmatpush2.msra.mxu0 0.0
  %4988 = vmatprep.subr.mxu0 0.0
  %4989 = vmatpush2.msra.mxu0 0.0
  %4990 = vmatprep.subr.mxu0 0.0
  %4991 = vmatpush2.msra.mxu0 0.0
  %4992 = vmatprep.subr.mxu0 0.0
  %4993 = vmatpush2.msra.mxu0 0.0
  %4994 = vmatprep.subr.mxu0 0.0
  %4995 = vmatpush2.msra.mxu0 0.0
  %4996 = vmatprep.mubr.f32.mxu0 0.0
  %4997 = vmatmul.mubr.f32.gmra.mxu0 %v4927
  %v4998 = vpop.f32.mrf.mxu0
  %v4999 = vadd.f32 %v4919, %v4998
  %v5000 = vpop.f32.mrf.mxu0
  %v5001 = vadd.f32 %v4923, %v5000
  %5002 = vmatprep.mubr.f32.mxu0 0.0
  %5003 = vmatmul.mubr.f32.gmra.mxu0 %v4930
  %v5004 = vpop.f32.mrf.mxu0
  %v5005 = vadd.f32 %v4919, %v5004
  %v5006 = vpop.f32.mrf.mxu0
  %v5007 = vadd.f32 %v4923, %v5006
  %5008 = vdwg.mxu0
  %v5009 = vld [vmem:[%s37] sm:$0xff]
  %v5010 = vld [vmem:[%s37 + $0x8] sm:$0xff]
  %v5011 = vld [vmem:[%s37 + $0x10] sm:$0xff]
  %v5012 = vld [vmem:[%s37 + $0x18] sm:$0xff]
  %v5013 = vld [vmem:[%s37 + $0x20] sm:$0xff]
  %v5014 = vld [vmem:[%s37 + $0x28] sm:$0xff]
  %v5015 = vld [vmem:[%s37 + $0x30] sm:$0xff]
  %v5016 = vld [vmem:[%s37 + $0x38] sm:$0xff]
  %5018 = vrot.lane.b32.xlu0 %v4999, 64
  %v5019 = vpop.permute.xlu0 %5018
  %v5020 = vsel %vm381, %v4999, 0
  %v5022 = vsel %vm381, %v5019, 0
  %5024 = vmatprep.subr.mxu0 0.0
  %5025 = vmatpush1.xpose.msra.mxu0 0.0
  %5026 = vmatprep.subr.mxu0 0.0
  %5027 = vmatpush1.xpose.msra.mxu0 0.0
  %5028 = vmatprep.subr.mxu0 0.0
  %5029 = vmatpush1.xpose.msra.mxu0 0.0
  %5030 = vmatprep.subr.mxu0 0.0
  %5031 = vmatpush1.xpose.msra.mxu0 0.0
  %5032 = vmatprep.subr.mxu0 0.0
  %5033 = vmatpush1.xpose.msra.mxu0 0.0
  %5034 = vmatprep.subr.mxu0 0.0
  %5035 = vmatpush1.xpose.msra.mxu0 0.0
  %5036 = vmatprep.subr.mxu0 0.0
  %5037 = vmatpush1.xpose.msra.mxu0 0.0
  %5038 = vmatprep.subr.mxu0 0.0
  %5039 = vmatpush1.xpose.msra.mxu0 0.0
  %5040 = vmatprep.subr.mxu0 0.0
  %5041 = vmatpush1.xpose.msra.mxu0 0.0
  %5042 = vmatprep.subr.mxu0 0.0
  %5043 = vmatpush1.xpose.msra.mxu0 0.0
  %5044 = vmatprep.subr.mxu0 0.0
  %5045 = vmatpush1.xpose.msra.mxu0 0.0
  %5046 = vmatprep.subr.mxu0 0.0
  %5047 = vmatpush1.xpose.msra.mxu0 0.0
  %5048 = vmatprep.subr.mxu0 0.0
  %5049 = vmatpush1.xpose.msra.mxu0 0.0
  %5050 = vmatprep.subr.mxu0 0.0
  %5051 = vmatpush1.xpose.msra.mxu0 0.0
  %5052 = vmatprep.subr.mxu0 0.0
  %5053 = vmatpush1.xpose.msra.mxu0 0.0
  %5054 = vmatprep.subr.mxu0 0.0
  %5055 = vmatpush1.xpose.msra.mxu0 %v5022
  %5056 = vmatprep.subr.mxu0 0.0
  %5057 = vmatpush2.xpose.msra.mxu0 0.0
  %5058 = vmatprep.subr.mxu0 0.0
  %5059 = vmatpush2.xpose.msra.mxu0 0.0
  %5060 = vmatprep.subr.mxu0 0.0
  %5061 = vmatpush2.xpose.msra.mxu0 0.0
  %5062 = vmatprep.subr.mxu0 0.0
  %5063 = vmatpush2.xpose.msra.mxu0 0.0
  %5064 = vmatprep.subr.mxu0 0.0
  %5065 = vmatpush2.xpose.msra.mxu0 0.0
  %5066 = vmatprep.subr.mxu0 0.0
  %5067 = vmatpush2.xpose.msra.mxu0 0.0
  %5068 = vmatprep.subr.mxu0 0.0
  %5069 = vmatpush2.xpose.msra.mxu0 0.0
  %5070 = vmatprep.subr.mxu0 0.0
  %5071 = vmatpush2.xpose.msra.mxu0 0.0
  %5072 = vmatprep.subr.mxu0 0.0
  %5073 = vmatpush2.xpose.msra.mxu0 0.0
  %5074 = vmatprep.subr.mxu0 0.0
  %5075 = vmatpush2.xpose.msra.mxu0 0.0
  %5076 = vmatprep.subr.mxu0 0.0
  %5077 = vmatpush2.xpose.msra.mxu0 0.0
  %5078 = vmatprep.subr.mxu0 0.0
  %5079 = vmatpush2.xpose.msra.mxu0 0.0
  %5080 = vmatprep.subr.mxu0 0.0
  %5081 = vmatpush2.xpose.msra.mxu0 0.0
  %5082 = vmatprep.subr.mxu0 0.0
  %5083 = vmatpush2.xpose.msra.mxu0 0.0
  %5084 = vmatprep.subr.mxu0 0.0
  %5085 = vmatpush2.xpose.msra.mxu0 0.0
  %5086 = vmatprep.subr.mxu0 0.0
  %5087 = vmatpush2.xpose.msra.mxu0 0.0
  %5088 = vmatprep.mubr.f32.mxu0 0.0
  %5089 = vmatmul.mubr.f32.gmra.mxu0 %v5020
  %v5090 = vpop.f32.mrf.mxu0
  %v5091 = vadd.f32 0.0, %v5090
  %v5092 = vpop.f32.mrf.mxu0
  %5093 = vdwg.mxu0
  %v5094 = vmul.f32 %v5091, 0.25
  %v5095 = vadd.f32 %v5094, %v131
  %v5096 = vsel %vm456, %v5095, -inf
  %5097 = vmax.xlane.f32.xlu0 %v5096
  %v5098 = vpop.xlane.xlu0 %5097
  %v5099 = vsub.f32 %v5095, %v5098
  %v5100 = vmul.f32 %v5099, 1.442695
  %v5101 = vpow.pop %v5100
  %v5102 = vsel %vm456, %v5101, 0.0
  %5103 = vadd.xlane.f32.xlu0 %v5102
  %v5104 = vpop.xlane.xlu0 %5103
  %v5105 = vrcp.pop %v5104
  %v5106 = vmul.f32 %v5101, %v5105
  %v5108 = vsel %vm456, %v5106, 0
  %5110 = vmatprep.subr.mxu0 0.0
  %5111 = vmatpush1.msra.mxu0 0.0
  %5112 = vmatprep.subr.mxu0 0.0
  %5113 = vmatpush1.msra.mxu0 0.0
  %5114 = vmatprep.subr.mxu0 0.0
  %5115 = vmatpush1.msra.mxu0 0.0
  %5116 = vmatprep.subr.mxu0 0.0
  %5117 = vmatpush1.msra.mxu0 0.0
  %5118 = vmatprep.subr.mxu0 0.0
  %5119 = vmatpush1.msra.mxu0 0.0
  %5120 = vmatprep.subr.mxu0 0.0
  %5121 = vmatpush1.msra.mxu0 0.0
  %5122 = vmatprep.subr.mxu0 0.0
  %5123 = vmatpush1.msra.mxu0 0.0
  %5124 = vmatprep.subr.mxu0 0.0
  %5125 = vmatpush1.msra.mxu0 0.0
  %5126 = vmatprep.subr.mxu0 0.0
  %5127 = vmatpush1.msra.mxu0 0.0
  %5128 = vmatprep.subr.mxu0 0.0
  %5129 = vmatpush1.msra.mxu0 0.0
  %5130 = vmatprep.subr.mxu0 0.0
  %5131 = vmatpush1.msra.mxu0 0.0
  %5132 = vmatprep.subr.mxu0 0.0
  %5133 = vmatpush1.msra.mxu0 0.0
  %5134 = vmatprep.subr.mxu0 0.0
  %5135 = vmatpush1.msra.mxu0 0.0
  %5136 = vmatprep.subr.mxu0 0.0
  %5137 = vmatpush1.msra.mxu0 0.0
  %5138 = vmatprep.subr.mxu0 0.0
  %5139 = vmatpush1.msra.mxu0 0.0
  %5140 = vmatprep.subr.mxu0 0.0
  %5141 = vmatpush1.msra.mxu0 %v5001
  %5142 = vmatprep.subr.mxu0 0.0
  %5143 = vmatpush2.msra.mxu0 0.0
  %5144 = vmatprep.subr.mxu0 0.0
  %5145 = vmatpush2.msra.mxu0 0.0
  %5146 = vmatprep.subr.mxu0 0.0
  %5147 = vmatpush2.msra.mxu0 0.0
  %5148 = vmatprep.subr.mxu0 0.0
  %5149 = vmatpush2.msra.mxu0 0.0
  %5150 = vmatprep.subr.mxu0 0.0
  %5151 = vmatpush2.msra.mxu0 0.0
  %5152 = vmatprep.subr.mxu0 0.0
  %5153 = vmatpush2.msra.mxu0 0.0
  %5154 = vmatprep.subr.mxu0 0.0
  %5155 = vmatpush2.msra.mxu0 0.0
  %5156 = vmatprep.subr.mxu0 0.0
  %5157 = vmatpush2.msra.mxu0 0.0
  %5158 = vmatprep.subr.mxu0 0.0
  %5159 = vmatpush2.msra.mxu0 0.0
  %5160 = vmatprep.subr.mxu0 0.0
  %5161 = vmatpush2.msra.mxu0 0.0
  %5162 = vmatprep.subr.mxu0 0.0
  %5163 = vmatpush2.msra.mxu0 0.0
  %5164 = vmatprep.subr.mxu0 0.0
  %5165 = vmatpush2.msra.mxu0 0.0
  %5166 = vmatprep.subr.mxu0 0.0
  %5167 = vmatpush2.msra.mxu0 0.0
  %5168 = vmatprep.subr.mxu0 0.0
  %5169 = vmatpush2.msra.mxu0 0.0
  %5170 = vmatprep.subr.mxu0 0.0
  %5171 = vmatpush2.msra.mxu0 0.0
  %5172 = vmatprep.subr.mxu0 0.0
  %5173 = vmatpush2.msra.mxu0 0.0
  %5174 = vmatprep.mubr.f32.mxu0 0.0
  %5175 = vmatmul.mubr.f32.gmra.mxu0 %v5108
  %v5176 = vpop.f32.mrf.mxu0
  %v5177 = vadd.f32 0.0, %v5176
  %v5178 = vpop.f32.mrf.mxu0
  %5179 = vdwg.mxu0
  %5180 = vrot.lane.b32.xlu0 %v4999, 112
  %v5181 = vpop.permute.xlu0 %5180
  %5182 = vrot.lane.b32.xlu0 %v4999, 48
  %v5183 = vpop.permute.xlu0 %5182
  %v5184 = vsel %vm381, %v5181, 0
  %v5186 = vsel %vm381, %v5183, 0
  %5188 = vmatprep.subr.mxu0 0.0
  %5189 = vmatpush1.xpose.msra.mxu0 0.0
  %5190 = vmatprep.subr.mxu0 0.0
  %5191 = vmatpush1.xpose.msra.mxu0 0.0
  %5192 = vmatprep.subr.mxu0 0.0
  %5193 = vmatpush1.xpose.msra.mxu0 0.0
  %5194 = vmatprep.subr.mxu0 0.0
  %5195 = vmatpush1.xpose.msra.mxu0 0.0
  %5196 = vmatprep.subr.mxu0 0.0
  %5197 = vmatpush1.xpose.msra.mxu0 0.0
  %5198 = vmatprep.subr.mxu0 0.0
  %5199 = vmatpush1.xpose.msra.mxu0 0.0
  %5200 = vmatprep.subr.mxu0 0.0
  %5201 = vmatpush1.xpose.msra.mxu0 0.0
  %5202 = vmatprep.subr.mxu0 0.0
  %5203 = vmatpush1.xpose.msra.mxu0 0.0
  %5204 = vmatprep.subr.mxu0 0.0
  %5205 = vmatpush1.xpose.msra.mxu0 0.0
  %5206 = vmatprep.subr.mxu0 0.0
  %5207 = vmatpush1.xpose.msra.mxu0 0.0
  %5208 = vmatprep.subr.mxu0 0.0
  %5209 = vmatpush1.xpose.msra.mxu0 0.0
  %5210 = vmatprep.subr.mxu0 0.0
  %5211 = vmatpush1.xpose.msra.mxu0 0.0
  %5212 = vmatprep.subr.mxu0 0.0
  %5213 = vmatpush1.xpose.msra.mxu0 0.0
  %5214 = vmatprep.subr.mxu0 0.0
  %5215 = vmatpush1.xpose.msra.mxu0 0.0
  %5216 = vmatprep.subr.mxu0 0.0
  %5217 = vmatpush1.xpose.msra.mxu0 0.0
  %5218 = vmatprep.subr.mxu0 0.0
  %5219 = vmatpush1.xpose.msra.mxu0 %v5186
  %5220 = vmatprep.subr.mxu0 0.0
  %5221 = vmatpush2.xpose.msra.mxu0 0.0
  %5222 = vmatprep.subr.mxu0 0.0
  %5223 = vmatpush2.xpose.msra.mxu0 0.0
  %5224 = vmatprep.subr.mxu0 0.0
  %5225 = vmatpush2.xpose.msra.mxu0 0.0
  %5226 = vmatprep.subr.mxu0 0.0
  %5227 = vmatpush2.xpose.msra.mxu0 0.0
  %5228 = vmatprep.subr.mxu0 0.0
  %5229 = vmatpush2.xpose.msra.mxu0 0.0
  %5230 = vmatprep.subr.mxu0 0.0
  %5231 = vmatpush2.xpose.msra.mxu0 0.0
  %5232 = vmatprep.subr.mxu0 0.0
  %5233 = vmatpush2.xpose.msra.mxu0 0.0
  %5234 = vmatprep.subr.mxu0 0.0
  %5235 = vmatpush2.xpose.msra.mxu0 0.0
  %5236 = vmatprep.subr.mxu0 0.0
  %5237 = vmatpush2.xpose.msra.mxu0 0.0
  %5238 = vmatprep.subr.mxu0 0.0
  %5239 = vmatpush2.xpose.msra.mxu0 0.0
  %5240 = vmatprep.subr.mxu0 0.0
  %5241 = vmatpush2.xpose.msra.mxu0 0.0
  %5242 = vmatprep.subr.mxu0 0.0
  %5243 = vmatpush2.xpose.msra.mxu0 0.0
  %5244 = vmatprep.subr.mxu0 0.0
  %5245 = vmatpush2.xpose.msra.mxu0 0.0
  %5246 = vmatprep.subr.mxu0 0.0
  %5247 = vmatpush2.xpose.msra.mxu0 0.0
  %5248 = vmatprep.subr.mxu0 0.0
  %5249 = vmatpush2.xpose.msra.mxu0 0.0
  %5250 = vmatprep.subr.mxu0 0.0
  %5251 = vmatpush2.xpose.msra.mxu0 0.0
  %5252 = vmatprep.mubr.f32.mxu0 0.0
  %5253 = vmatmul.mubr.f32.gmra.mxu0 %v5184
  %v5254 = vpop.f32.mrf.mxu0
  %v5255 = vadd.f32 0.0, %v5254
  %v5256 = vpop.f32.mrf.mxu0
  %5257 = vdwg.mxu0
  %v5258 = vmul.f32 %v5255, 0.25
  %v5259 = vadd.f32 %v5258, %v131
  %v5260 = vsel %vm456, %v5259, -inf
  %5261 = vmax.xlane.f32.xlu0 %v5260
  %v5262 = vpop.xlane.xlu0 %5261
  %v5263 = vsub.f32 %v5259, %v5262
  %v5264 = vmul.f32 %v5263, 1.442695
  %v5265 = vpow.pop %v5264
  %v5266 = vsel %vm456, %v5265, 0.0
  %5267 = vadd.xlane.f32.xlu0 %v5266
  %v5268 = vpop.xlane.xlu0 %5267
  %v5269 = vrcp.pop %v5268
  %v5270 = vmul.f32 %v5265, %v5269
  %5272 = vrot.lane.b32.xlu0 %v5001, 112
  %v5273 = vpop.permute.xlu0 %5272
  %v5276 = vsel %vm456, %v5270, 0
  %5278 = vmatprep.subr.mxu0 0.0
  %5279 = vmatpush1.msra.mxu0 0.0
  %5280 = vmatprep.subr.mxu0 0.0
  %5281 = vmatpush1.msra.mxu0 0.0
  %5282 = vmatprep.subr.mxu0 0.0
  %5283 = vmatpush1.msra.mxu0 0.0
  %5284 = vmatprep.subr.mxu0 0.0
  %5285 = vmatpush1.msra.mxu0 0.0
  %5286 = vmatprep.subr.mxu0 0.0
  %5287 = vmatpush1.msra.mxu0 0.0
  %5288 = vmatprep.subr.mxu0 0.0
  %5289 = vmatpush1.msra.mxu0 0.0
  %5290 = vmatprep.subr.mxu0 0.0
  %5291 = vmatpush1.msra.mxu0 0.0
  %5292 = vmatprep.subr.mxu0 0.0
  %5293 = vmatpush1.msra.mxu0 0.0
  %5294 = vmatprep.subr.mxu0 0.0
  %5295 = vmatpush1.msra.mxu0 0.0
  %5296 = vmatprep.subr.mxu0 0.0
  %5297 = vmatpush1.msra.mxu0 0.0
  %5298 = vmatprep.subr.mxu0 0.0
  %5299 = vmatpush1.msra.mxu0 0.0
  %5300 = vmatprep.subr.mxu0 0.0
  %5301 = vmatpush1.msra.mxu0 0.0
  %5302 = vmatprep.subr.mxu0 0.0
  %5303 = vmatpush1.msra.mxu0 0.0
  %5304 = vmatprep.subr.mxu0 0.0
  %5305 = vmatpush1.msra.mxu0 0.0
  %5306 = vmatprep.subr.mxu0 0.0
  %5307 = vmatpush1.msra.mxu0 0.0
  %5308 = vmatprep.subr.mxu0 0.0
  %5309 = vmatpush1.msra.mxu0 %v5273
  %5310 = vmatprep.subr.mxu0 0.0
  %5311 = vmatpush2.msra.mxu0 0.0
  %5312 = vmatprep.subr.mxu0 0.0
  %5313 = vmatpush2.msra.mxu0 0.0
  %5314 = vmatprep.subr.mxu0 0.0
  %5315 = vmatpush2.msra.mxu0 0.0
  %5316 = vmatprep.subr.mxu0 0.0
  %5317 = vmatpush2.msra.mxu0 0.0
  %5318 = vmatprep.subr.mxu0 0.0
  %5319 = vmatpush2.msra.mxu0 0.0
  %5320 = vmatprep.subr.mxu0 0.0
  %5321 = vmatpush2.msra.mxu0 0.0
  %5322 = vmatprep.subr.mxu0 0.0
  %5323 = vmatpush2.msra.mxu0 0.0
  %5324 = vmatprep.subr.mxu0 0.0
  %5325 = vmatpush2.msra.mxu0 0.0
  %5326 = vmatprep.subr.mxu0 0.0
  %5327 = vmatpush2.msra.mxu0 0.0
  %5328 = vmatprep.subr.mxu0 0.0
  %5329 = vmatpush2.msra.mxu0 0.0
  %5330 = vmatprep.subr.mxu0 0.0
  %5331 = vmatpush2.msra.mxu0 0.0
  %5332 = vmatprep.subr.mxu0 0.0
  %5333 = vmatpush2.msra.mxu0 0.0
  %5334 = vmatprep.subr.mxu0 0.0
  %5335 = vmatpush2.msra.mxu0 0.0
  %5336 = vmatprep.subr.mxu0 0.0
  %5337 = vmatpush2.msra.mxu0 0.0
  %5338 = vmatprep.subr.mxu0 0.0
  %5339 = vmatpush2.msra.mxu0 0.0
  %5340 = vmatprep.subr.mxu0 0.0
  %5341 = vmatpush2.msra.mxu0 0.0
  %5342 = vmatprep.mubr.f32.mxu0 0.0
  %5343 = vmatmul.mubr.f32.gmra.mxu0 %v5276
  %v5344 = vpop.f32.mrf.mxu0
  %v5345 = vadd.f32 0.0, %v5344
  %v5346 = vpop.f32.mrf.mxu0
  %5347 = vdwg.mxu0
  %v5349 = vsel %vm381, %v5345, 0
  %5351 = vmatprep.subr.mxu0 0.0
  %5352 = vmatpush1.msra.mxu0 0.0
  %5353 = vmatprep.subr.mxu0 0.0
  %5354 = vmatpush1.msra.mxu0 0.0
  %5355 = vmatprep.subr.mxu0 0.0
  %5356 = vmatpush1.msra.mxu0 0.0
  %5357 = vmatprep.subr.mxu0 0.0
  %5358 = vmatpush1.msra.mxu0 0.0
  %5359 = vmatprep.subr.mxu0 0.0
  %5360 = vmatpush1.msra.mxu0 0.0
  %5361 = vmatprep.subr.mxu0 0.0
  %5362 = vmatpush1.msra.mxu0 0.0
  %5363 = vmatprep.subr.mxu0 0.0
  %5364 = vmatpush1.msra.mxu0 0.0
  %5365 = vmatprep.subr.mxu0 0.0
  %5366 = vmatpush1.msra.mxu0 0.0
  %5367 = vmatprep.subr.mxu0 0.0
  %5368 = vmatpush1.msra.mxu0 0.0
  %5369 = vmatprep.subr.mxu0 0.0
  %5370 = vmatpush1.msra.mxu0 0.0
  %5371 = vmatprep.subr.mxu0 0.0
  %5372 = vmatpush1.msra.mxu0 0.0
  %5373 = vmatprep.subr.mxu0 0.0
  %5374 = vmatpush1.msra.mxu0 0.0
  %5375 = vmatprep.subr.mxu0 0.0
  %5376 = vmatpush1.msra.mxu0 0.0
  %5377 = vmatprep.subr.mxu0 0.0
  %5378 = vmatpush1.msra.mxu0 0.0
  %5379 = vmatprep.subr.mxu0 0.0
  %5380 = vmatpush1.msra.mxu0 %v5012
  %5381 = vmatprep.subr.mxu0 0.0
  %5382 = vmatpush1.msra.mxu0 %v5011
  %5383 = vmatprep.subr.mxu0 0.0
  %5384 = vmatpush2.msra.mxu0 0.0
  %5385 = vmatprep.subr.mxu0 0.0
  %5386 = vmatpush2.msra.mxu0 0.0
  %5387 = vmatprep.subr.mxu0 0.0
  %5388 = vmatpush2.msra.mxu0 0.0
  %5389 = vmatprep.subr.mxu0 0.0
  %5390 = vmatpush2.msra.mxu0 0.0
  %5391 = vmatprep.subr.mxu0 0.0
  %5392 = vmatpush2.msra.mxu0 0.0
  %5393 = vmatprep.subr.mxu0 0.0
  %5394 = vmatpush2.msra.mxu0 0.0
  %5395 = vmatprep.subr.mxu0 0.0
  %5396 = vmatpush2.msra.mxu0 0.0
  %5397 = vmatprep.subr.mxu0 0.0
  %5398 = vmatpush2.msra.mxu0 0.0
  %5399 = vmatprep.subr.mxu0 0.0
  %5400 = vmatpush2.msra.mxu0 0.0
  %5401 = vmatprep.subr.mxu0 0.0
  %5402 = vmatpush2.msra.mxu0 0.0
  %5403 = vmatprep.subr.mxu0 0.0
  %5404 = vmatpush2.msra.mxu0 0.0
  %5405 = vmatprep.subr.mxu0 0.0
  %5406 = vmatpush2.msra.mxu0 0.0
  %5407 = vmatprep.subr.mxu0 0.0
  %5408 = vmatpush2.msra.mxu0 0.0
  %5409 = vmatprep.subr.mxu0 0.0
  %5410 = vmatpush2.msra.mxu0 0.0
  %5411 = vmatprep.subr.mxu0 0.0
  %5412 = vmatpush2.msra.mxu0 0.0
  %5413 = vmatprep.subr.mxu0 0.0
  %5414 = vmatpush2.msra.mxu0 0.0
  %5415 = vmatprep.mubr.f32.mxu0 0.0
  %5416 = vmatmul.mubr.f32.gmra.mxu0 %v5349
  %v5417 = vpop.f32.mrf.mxu0
  %v5418 = vadd.f32 0.0, %v5417
  %v5419 = vpop.f32.mrf.mxu0
  %5420 = vdwg.mxu0
  %v5422 = vsel %vm381, %v5177, 0
  %5424 = vmatprep.subr.mxu0 0.0
  %5425 = vmatpush1.msra.mxu0 0.0
  %5426 = vmatprep.subr.mxu0 0.0
  %5427 = vmatpush1.msra.mxu0 0.0
  %5428 = vmatprep.subr.mxu0 0.0
  %5429 = vmatpush1.msra.mxu0 0.0
  %5430 = vmatprep.subr.mxu0 0.0
  %5431 = vmatpush1.msra.mxu0 0.0
  %5432 = vmatprep.subr.mxu0 0.0
  %5433 = vmatpush1.msra.mxu0 0.0
  %5434 = vmatprep.subr.mxu0 0.0
  %5435 = vmatpush1.msra.mxu0 0.0
  %5436 = vmatprep.subr.mxu0 0.0
  %5437 = vmatpush1.msra.mxu0 0.0
  %5438 = vmatprep.subr.mxu0 0.0
  %5439 = vmatpush1.msra.mxu0 0.0
  %5440 = vmatprep.subr.mxu0 0.0
  %5441 = vmatpush1.msra.mxu0 0.0
  %5442 = vmatprep.subr.mxu0 0.0
  %5443 = vmatpush1.msra.mxu0 0.0
  %5444 = vmatprep.subr.mxu0 0.0
  %5445 = vmatpush1.msra.mxu0 0.0
  %5446 = vmatprep.subr.mxu0 0.0
  %5447 = vmatpush1.msra.mxu0 0.0
  %5448 = vmatprep.subr.mxu0 0.0
  %5449 = vmatpush1.msra.mxu0 0.0
  %5450 = vmatprep.subr.mxu0 0.0
  %5451 = vmatpush1.msra.mxu0 0.0
  %5452 = vmatprep.subr.mxu0 0.0
  %5453 = vmatpush1.msra.mxu0 %v5010
  %5454 = vmatprep.subr.mxu0 0.0
  %5455 = vmatpush1.msra.mxu0 %v5009
  %5456 = vmatprep.subr.mxu0 0.0
  %5457 = vmatpush2.msra.mxu0 0.0
  %5458 = vmatprep.subr.mxu0 0.0
  %5459 = vmatpush2.msra.mxu0 0.0
  %5460 = vmatprep.subr.mxu0 0.0
  %5461 = vmatpush2.msra.mxu0 0.0
  %5462 = vmatprep.subr.mxu0 0.0
  %5463 = vmatpush2.msra.mxu0 0.0
  %5464 = vmatprep.subr.mxu0 0.0
  %5465 = vmatpush2.msra.mxu0 0.0
  %5466 = vmatprep.subr.mxu0 0.0
  %5467 = vmatpush2.msra.mxu0 0.0
  %5468 = vmatprep.subr.mxu0 0.0
  %5469 = vmatpush2.msra.mxu0 0.0
  %5470 = vmatprep.subr.mxu0 0.0
  %5471 = vmatpush2.msra.mxu0 0.0
  %5472 = vmatprep.subr.mxu0 0.0
  %5473 = vmatpush2.msra.mxu0 0.0
  %5474 = vmatprep.subr.mxu0 0.0
  %5475 = vmatpush2.msra.mxu0 0.0
  %5476 = vmatprep.subr.mxu0 0.0
  %5477 = vmatpush2.msra.mxu0 0.0
  %5478 = vmatprep.subr.mxu0 0.0
  %5479 = vmatpush2.msra.mxu0 0.0
  %5480 = vmatprep.subr.mxu0 0.0
  %5481 = vmatpush2.msra.mxu0 0.0
  %5482 = vmatprep.subr.mxu0 0.0
  %5483 = vmatpush2.msra.mxu0 0.0
  %5484 = vmatprep.subr.mxu0 0.0
  %5485 = vmatpush2.msra.mxu0 0.0
  %5486 = vmatprep.subr.mxu0 0.0
  %5487 = vmatpush2.msra.mxu0 0.0
  %5488 = vmatprep.mubr.f32.mxu0 0.0
  %5489 = vmatmul.mubr.f32.gmra.mxu0 %v5422
  %v5490 = vpop.f32.mrf.mxu0
  %v5491 = vadd.f32 %v5418, %v5490
  %v5492 = vpop.f32.mrf.mxu0
  %5493 = vdwg.mxu0
  %5494 = vrot.lane.b32.xlu0 %v4999, 96
  %v5495 = vpop.permute.xlu0 %5494
  %5496 = vrot.lane.b32.xlu0 %v4999, 32
  %v5497 = vpop.permute.xlu0 %5496
  %v5498 = vsel %vm381, %v5495, 0
  %v5500 = vsel %vm381, %v5497, 0
  %5502 = vmatprep.subr.mxu0 0.0
  %5503 = vmatpush1.xpose.msra.mxu0 0.0
  %5504 = vmatprep.subr.mxu0 0.0
  %5505 = vmatpush1.xpose.msra.mxu0 0.0
  %5506 = vmatprep.subr.mxu0 0.0
  %5507 = vmatpush1.xpose.msra.mxu0 0.0
  %5508 = vmatprep.subr.mxu0 0.0
  %5509 = vmatpush1.xpose.msra.mxu0 0.0
  %5510 = vmatprep.subr.mxu0 0.0
  %5511 = vmatpush1.xpose.msra.mxu0 0.0
  %5512 = vmatprep.subr.mxu0 0.0
  %5513 = vmatpush1.xpose.msra.mxu0 0.0
  %5514 = vmatprep.subr.mxu0 0.0
  %5515 = vmatpush1.xpose.msra.mxu0 0.0
  %5516 = vmatprep.subr.mxu0 0.0
  %5517 = vmatpush1.xpose.msra.mxu0 0.0
  %5518 = vmatprep.subr.mxu0 0.0
  %5519 = vmatpush1.xpose.msra.mxu0 0.0
  %5520 = vmatprep.subr.mxu0 0.0
  %5521 = vmatpush1.xpose.msra.mxu0 0.0
  %5522 = vmatprep.subr.mxu0 0.0
  %5523 = vmatpush1.xpose.msra.mxu0 0.0
  %5524 = vmatprep.subr.mxu0 0.0
  %5525 = vmatpush1.xpose.msra.mxu0 0.0
  %5526 = vmatprep.subr.mxu0 0.0
  %5527 = vmatpush1.xpose.msra.mxu0 0.0
  %5528 = vmatprep.subr.mxu0 0.0
  %5529 = vmatpush1.xpose.msra.mxu0 0.0
  %5530 = vmatprep.subr.mxu0 0.0
  %5531 = vmatpush1.xpose.msra.mxu0 0.0
  %5532 = vmatprep.subr.mxu0 0.0
  %5533 = vmatpush1.xpose.msra.mxu0 %v5500
  %5534 = vmatprep.subr.mxu0 0.0
  %5535 = vmatpush2.xpose.msra.mxu0 0.0
  %5536 = vmatprep.subr.mxu0 0.0
  %5537 = vmatpush2.xpose.msra.mxu0 0.0
  %5538 = vmatprep.subr.mxu0 0.0
  %5539 = vmatpush2.xpose.msra.mxu0 0.0
  %5540 = vmatprep.subr.mxu0 0.0
  %5541 = vmatpush2.xpose.msra.mxu0 0.0
  %5542 = vmatprep.subr.mxu0 0.0
  %5543 = vmatpush2.xpose.msra.mxu0 0.0
  %5544 = vmatprep.subr.mxu0 0.0
  %5545 = vmatpush2.xpose.msra.mxu0 0.0
  %5546 = vmatprep.subr.mxu0 0.0
  %5547 = vmatpush2.xpose.msra.mxu0 0.0
  %5548 = vmatprep.subr.mxu0 0.0
  %5549 = vmatpush2.xpose.msra.mxu0 0.0
  %5550 = vmatprep.subr.mxu0 0.0
  %5551 = vmatpush2.xpose.msra.mxu0 0.0
  %5552 = vmatprep.subr.mxu0 0.0
  %5553 = vmatpush2.xpose.msra.mxu0 0.0
  %5554 = vmatprep.subr.mxu0 0.0
  %5555 = vmatpush2.xpose.msra.mxu0 0.0
  %5556 = vmatprep.subr.mxu0 0.0
  %5557 = vmatpush2.xpose.msra.mxu0 0.0
  %5558 = vmatprep.subr.mxu0 0.0
  %5559 = vmatpush2.xpose.msra.mxu0 0.0
  %5560 = vmatprep.subr.mxu0 0.0
  %5561 = vmatpush2.xpose.msra.mxu0 0.0
  %5562 = vmatprep.subr.mxu0 0.0
  %5563 = vmatpush2.xpose.msra.mxu0 0.0
  %5564 = vmatprep.subr.mxu0 0.0
  %5565 = vmatpush2.xpose.msra.mxu0 0.0
  %5566 = vmatprep.mubr.f32.mxu0 0.0
  %5567 = vmatmul.mubr.f32.gmra.mxu0 %v5498
  %v5568 = vpop.f32.mrf.mxu0
  %v5569 = vadd.f32 0.0, %v5568
  %v5570 = vpop.f32.mrf.mxu0
  %5571 = vdwg.mxu0
  %v5572 = vmul.f32 %v5569, 0.25
  %v5573 = vadd.f32 %v5572, %v131
  %v5574 = vsel %vm456, %v5573, -inf
  %5575 = vmax.xlane.f32.xlu0 %v5574
  %v5576 = vpop.xlane.xlu0 %5575
  %v5577 = vsub.f32 %v5573, %v5576
  %v5578 = vmul.f32 %v5577, 1.442695
  %v5579 = vpow.pop %v5578
  %v5580 = vsel %vm456, %v5579, 0.0
  %5581 = vadd.xlane.f32.xlu0 %v5580
  %v5582 = vpop.xlane.xlu0 %5581
  %v5583 = vrcp.pop %v5582
  %v5584 = vmul.f32 %v5579, %v5583
  %5585 = vrot.lane.b32.xlu0 %v5001, 96
  %v5586 = vpop.permute.xlu0 %5585
  %v5589 = vsel %vm456, %v5584, 0
  %5591 = vmatprep.subr.mxu0 0.0
  %5592 = vmatpush1.msra.mxu0 0.0
  %5593 = vmatprep.subr.mxu0 0.0
  %5594 = vmatpush1.msra.mxu0 0.0
  %5595 = vmatprep.subr.mxu0 0.0
  %5596 = vmatpush1.msra.mxu0 0.0
  %5597 = vmatprep.subr.mxu0 0.0
  %5598 = vmatpush1.msra.mxu0 0.0
  %5599 = vmatprep.subr.mxu0 0.0
  %5600 = vmatpush1.msra.mxu0 0.0
  %5601 = vmatprep.subr.mxu0 0.0
  %5602 = vmatpush1.msra.mxu0 0.0
  %5603 = vmatprep.subr.mxu0 0.0
  %5604 = vmatpush1.msra.mxu0 0.0
  %5605 = vmatprep.subr.mxu0 0.0
  %5606 = vmatpush1.msra.mxu0 0.0
  %5607 = vmatprep.subr.mxu0 0.0
  %5608 = vmatpush1.msra.mxu0 0.0
  %5609 = vmatprep.subr.mxu0 0.0
  %5610 = vmatpush1.msra.mxu0 0.0
  %5611 = vmatprep.subr.mxu0 0.0
  %5612 = vmatpush1.msra.mxu0 0.0
  %5613 = vmatprep.subr.mxu0 0.0
  %5614 = vmatpush1.msra.mxu0 0.0
  %5615 = vmatprep.subr.mxu0 0.0
  %5616 = vmatpush1.msra.mxu0 0.0
  %5617 = vmatprep.subr.mxu0 0.0
  %5618 = vmatpush1.msra.mxu0 0.0
  %5619 = vmatprep.subr.mxu0 0.0
  %5620 = vmatpush1.msra.mxu0 0.0
  %5621 = vmatprep.subr.mxu0 0.0
  %5622 = vmatpush1.msra.mxu0 %v5586
  %5623 = vmatprep.subr.mxu0 0.0
  %5624 = vmatpush2.msra.mxu0 0.0
  %5625 = vmatprep.subr.mxu0 0.0
  %5626 = vmatpush2.msra.mxu0 0.0
  %5627 = vmatprep.subr.mxu0 0.0
  %5628 = vmatpush2.msra.mxu0 0.0
  %5629 = vmatprep.subr.mxu0 0.0
  %5630 = vmatpush2.msra.mxu0 0.0
  %5631 = vmatprep.subr.mxu0 0.0
  %5632 = vmatpush2.msra.mxu0 0.0
  %5633 = vmatprep.subr.mxu0 0.0
  %5634 = vmatpush2.msra.mxu0 0.0
  %5635 = vmatprep.subr.mxu0 0.0
  %5636 = vmatpush2.msra.mxu0 0.0
  %5637 = vmatprep.subr.mxu0 0.0
  %5638 = vmatpush2.msra.mxu0 0.0
  %5639 = vmatprep.subr.mxu0 0.0
  %5640 = vmatpush2.msra.mxu0 0.0
  %5641 = vmatprep.subr.mxu0 0.0
  %5642 = vmatpush2.msra.mxu0 0.0
  %5643 = vmatprep.subr.mxu0 0.0
  %5644 = vmatpush2.msra.mxu0 0.0
  %5645 = vmatprep.subr.mxu0 0.0
  %5646 = vmatpush2.msra.mxu0 0.0
  %5647 = vmatprep.subr.mxu0 0.0
  %5648 = vmatpush2.msra.mxu0 0.0
  %5649 = vmatprep.subr.mxu0 0.0
  %5650 = vmatpush2.msra.mxu0 0.0
  %5651 = vmatprep.subr.mxu0 0.0
  %5652 = vmatpush2.msra.mxu0 0.0
  %5653 = vmatprep.subr.mxu0 0.0
  %5654 = vmatpush2.msra.mxu0 0.0
  %5655 = vmatprep.mubr.f32.mxu0 0.0
  %5656 = vmatmul.mubr.f32.gmra.mxu0 %v5589
  %v5657 = vpop.f32.mrf.mxu0
  %v5658 = vadd.f32 0.0, %v5657
  %v5659 = vpop.f32.mrf.mxu0
  %5660 = vdwg.mxu0
  %v5662 = vsel %vm381, %v5658, 0
  %5664 = vmatprep.subr.mxu0 0.0
  %5665 = vmatpush1.msra.mxu0 0.0
  %5666 = vmatprep.subr.mxu0 0.0
  %5667 = vmatpush1.msra.mxu0 0.0
  %5668 = vmatprep.subr.mxu0 0.0
  %5669 = vmatpush1.msra.mxu0 0.0
  %5670 = vmatprep.subr.mxu0 0.0
  %5671 = vmatpush1.msra.mxu0 0.0
  %5672 = vmatprep.subr.mxu0 0.0
  %5673 = vmatpush1.msra.mxu0 0.0
  %5674 = vmatprep.subr.mxu0 0.0
  %5675 = vmatpush1.msra.mxu0 0.0
  %5676 = vmatprep.subr.mxu0 0.0
  %5677 = vmatpush1.msra.mxu0 0.0
  %5678 = vmatprep.subr.mxu0 0.0
  %5679 = vmatpush1.msra.mxu0 0.0
  %5680 = vmatprep.subr.mxu0 0.0
  %5681 = vmatpush1.msra.mxu0 0.0
  %5682 = vmatprep.subr.mxu0 0.0
  %5683 = vmatpush1.msra.mxu0 0.0
  %5684 = vmatprep.subr.mxu0 0.0
  %5685 = vmatpush1.msra.mxu0 0.0
  %5686 = vmatprep.subr.mxu0 0.0
  %5687 = vmatpush1.msra.mxu0 0.0
  %5688 = vmatprep.subr.mxu0 0.0
  %5689 = vmatpush1.msra.mxu0 0.0
  %5690 = vmatprep.subr.mxu0 0.0
  %5691 = vmatpush1.msra.mxu0 0.0
  %5692 = vmatprep.subr.mxu0 0.0
  %5693 = vmatpush1.msra.mxu0 %v5014
  %5694 = vmatprep.subr.mxu0 0.0
  %5695 = vmatpush1.msra.mxu0 %v5013
  %5696 = vmatprep.subr.mxu0 0.0
  %5697 = vmatpush2.msra.mxu0 0.0
  %5698 = vmatprep.subr.mxu0 0.0
  %5699 = vmatpush2.msra.mxu0 0.0
  %5700 = vmatprep.subr.mxu0 0.0
  %5701 = vmatpush2.msra.mxu0 0.0
  %5702 = vmatprep.subr.mxu0 0.0
  %5703 = vmatpush2.msra.mxu0 0.0
  %5704 = vmatprep.subr.mxu0 0.0
  %5705 = vmatpush2.msra.mxu0 0.0
  %5706 = vmatprep.subr.mxu0 0.0
  %5707 = vmatpush2.msra.mxu0 0.0
  %5708 = vmatprep.subr.mxu0 0.0
  %5709 = vmatpush2.msra.mxu0 0.0
  %5710 = vmatprep.subr.mxu0 0.0
  %5711 = vmatpush2.msra.mxu0 0.0
  %5712 = vmatprep.subr.mxu0 0.0
  %5713 = vmatpush2.msra.mxu0 0.0
  %5714 = vmatprep.subr.mxu0 0.0
  %5715 = vmatpush2.msra.mxu0 0.0
  %5716 = vmatprep.subr.mxu0 0.0
  %5717 = vmatpush2.msra.mxu0 0.0
  %5718 = vmatprep.subr.mxu0 0.0
  %5719 = vmatpush2.msra.mxu0 0.0
  %5720 = vmatprep.subr.mxu0 0.0
  %5721 = vmatpush2.msra.mxu0 0.0
  %5722 = vmatprep.subr.mxu0 0.0
  %5723 = vmatpush2.msra.mxu0 0.0
  %5724 = vmatprep.subr.mxu0 0.0
  %5725 = vmatpush2.msra.mxu0 0.0
  %5726 = vmatprep.subr.mxu0 0.0
  %5727 = vmatpush2.msra.mxu0 0.0
  %5728 = vmatprep.mubr.f32.mxu0 0.0
  %5729 = vmatmul.mubr.f32.gmra.mxu0 %v5662
  %v5730 = vpop.f32.mrf.mxu0
  %v5731 = vadd.f32 0.0, %v5730
  %v5732 = vpop.f32.mrf.mxu0
  %5733 = vdwg.mxu0
  %v5734 = vadd.f32 %v5491, %v5731
  %5735 = vrot.lane.b32.xlu0 %v4999, 80
  %v5736 = vpop.permute.xlu0 %5735
  %5737 = vrot.lane.b32.xlu0 %v4999, 16
  %v5738 = vpop.permute.xlu0 %5737
  %v5739 = vsel %vm381, %v5736, 0
  %v5741 = vsel %vm381, %v5738, 0
  %5743 = vmatprep.subr.mxu0 0.0
  %5744 = vmatpush1.xpose.msra.mxu0 0.0
  %5745 = vmatprep.subr.mxu0 0.0
  %5746 = vmatpush1.xpose.msra.mxu0 0.0
  %5747 = vmatprep.subr.mxu0 0.0
  %5748 = vmatpush1.xpose.msra.mxu0 0.0
  %5749 = vmatprep.subr.mxu0 0.0
  %5750 = vmatpush1.xpose.msra.mxu0 0.0
  %5751 = vmatprep.subr.mxu0 0.0
  %5752 = vmatpush1.xpose.msra.mxu0 0.0
  %5753 = vmatprep.subr.mxu0 0.0
  %5754 = vmatpush1.xpose.msra.mxu0 0.0
  %5755 = vmatprep.subr.mxu0 0.0
  %5756 = vmatpush1.xpose.msra.mxu0 0.0
  %5757 = vmatprep.subr.mxu0 0.0
  %5758 = vmatpush1.xpose.msra.mxu0 0.0
  %5759 = vmatprep.subr.mxu0 0.0
  %5760 = vmatpush1.xpose.msra.mxu0 0.0
  %5761 = vmatprep.subr.mxu0 0.0
  %5762 = vmatpush1.xpose.msra.mxu0 0.0
  %5763 = vmatprep.subr.mxu0 0.0
  %5764 = vmatpush1.xpose.msra.mxu0 0.0
  %5765 = vmatprep.subr.mxu0 0.0
  %5766 = vmatpush1.xpose.msra.mxu0 0.0
  %5767 = vmatprep.subr.mxu0 0.0
  %5768 = vmatpush1.xpose.msra.mxu0 0.0
  %5769 = vmatprep.subr.mxu0 0.0
  %5770 = vmatpush1.xpose.msra.mxu0 0.0
  %5771 = vmatprep.subr.mxu0 0.0
  %5772 = vmatpush1.xpose.msra.mxu0 0.0
  %5773 = vmatprep.subr.mxu0 0.0
  %5774 = vmatpush1.xpose.msra.mxu0 %v5741
  %5775 = vmatprep.subr.mxu0 0.0
  %5776 = vmatpush2.xpose.msra.mxu0 0.0
  %5777 = vmatprep.subr.mxu0 0.0
  %5778 = vmatpush2.xpose.msra.mxu0 0.0
  %5779 = vmatprep.subr.mxu0 0.0
  %5780 = vmatpush2.xpose.msra.mxu0 0.0
  %5781 = vmatprep.subr.mxu0 0.0
  %5782 = vmatpush2.xpose.msra.mxu0 0.0
  %5783 = vmatprep.subr.mxu0 0.0
  %5784 = vmatpush2.xpose.msra.mxu0 0.0
  %5785 = vmatprep.subr.mxu0 0.0
  %5786 = vmatpush2.xpose.msra.mxu0 0.0
  %5787 = vmatprep.subr.mxu0 0.0
  %5788 = vmatpush2.xpose.msra.mxu0 0.0
  %5789 = vmatprep.subr.mxu0 0.0
  %5790 = vmatpush2.xpose.msra.mxu0 0.0
  %5791 = vmatprep.subr.mxu0 0.0
  %5792 = vmatpush2.xpose.msra.mxu0 0.0
  %5793 = vmatprep.subr.mxu0 0.0
  %5794 = vmatpush2.xpose.msra.mxu0 0.0
  %5795 = vmatprep.subr.mxu0 0.0
  %5796 = vmatpush2.xpose.msra.mxu0 0.0
  %5797 = vmatprep.subr.mxu0 0.0
  %5798 = vmatpush2.xpose.msra.mxu0 0.0
  %5799 = vmatprep.subr.mxu0 0.0
  %5800 = vmatpush2.xpose.msra.mxu0 0.0
  %5801 = vmatprep.subr.mxu0 0.0
  %5802 = vmatpush2.xpose.msra.mxu0 0.0
  %5803 = vmatprep.subr.mxu0 0.0
  %5804 = vmatpush2.xpose.msra.mxu0 0.0
  %5805 = vmatprep.subr.mxu0 0.0
  %5806 = vmatpush2.xpose.msra.mxu0 0.0
  %5807 = vmatprep.mubr.f32.mxu0 0.0
  %5808 = vmatmul.mubr.f32.gmra.mxu0 %v5739
  %v5809 = vpop.f32.mrf.mxu0
  %v5810 = vadd.f32 0.0, %v5809
  %v5811 = vpop.f32.mrf.mxu0
  %5812 = vdwg.mxu0
  %v5813 = vmul.f32 %v5810, 0.25
  %v5814 = vadd.f32 %v5813, %v131
  %v5815 = vsel %vm456, %v5814, -inf
  %5816 = vmax.xlane.f32.xlu0 %v5815
  %v5817 = vpop.xlane.xlu0 %5816
  %v5818 = vsub.f32 %v5814, %v5817
  %v5819 = vmul.f32 %v5818, 1.442695
  %v5820 = vpow.pop %v5819
  %v5821 = vsel %vm456, %v5820, 0.0
  %5822 = vadd.xlane.f32.xlu0 %v5821
  %v5823 = vpop.xlane.xlu0 %5822
  %v5824 = vrcp.pop %v5823
  %v5825 = vmul.f32 %v5820, %v5824
  %5826 = vrot.lane.b32.xlu0 %v5001, 80
  %v5827 = vpop.permute.xlu0 %5826
  %v5830 = vsel %vm456, %v5825, 0
  %5832 = vmatprep.subr.mxu0 0.0
  %5833 = vmatpush1.msra.mxu0 0.0
  %5834 = vmatprep.subr.mxu0 0.0
  %5835 = vmatpush1.msra.mxu0 0.0
  %5836 = vmatprep.subr.mxu0 0.0
  %5837 = vmatpush1.msra.mxu0 0.0
  %5838 = vmatprep.subr.mxu0 0.0
  %5839 = vmatpush1.msra.mxu0 0.0
  %5840 = vmatprep.subr.mxu0 0.0
  %5841 = vmatpush1.msra.mxu0 0.0
  %5842 = vmatprep.subr.mxu0 0.0
  %5843 = vmatpush1.msra.mxu0 0.0
  %5844 = vmatprep.subr.mxu0 0.0
  %5845 = vmatpush1.msra.mxu0 0.0
  %5846 = vmatprep.subr.mxu0 0.0
  %5847 = vmatpush1.msra.mxu0 0.0
  %5848 = vmatprep.subr.mxu0 0.0
  %5849 = vmatpush1.msra.mxu0 0.0
  %5850 = vmatprep.subr.mxu0 0.0
  %5851 = vmatpush1.msra.mxu0 0.0
  %5852 = vmatprep.subr.mxu0 0.0
  %5853 = vmatpush1.msra.mxu0 0.0
  %5854 = vmatprep.subr.mxu0 0.0
  %5855 = vmatpush1.msra.mxu0 0.0
  %5856 = vmatprep.subr.mxu0 0.0
  %5857 = vmatpush1.msra.mxu0 0.0
  %5858 = vmatprep.subr.mxu0 0.0
  %5859 = vmatpush1.msra.mxu0 0.0
  %5860 = vmatprep.subr.mxu0 0.0
  %5861 = vmatpush1.msra.mxu0 0.0
  %5862 = vmatprep.subr.mxu0 0.0
  %5863 = vmatpush1.msra.mxu0 %v5827
  %5864 = vmatprep.subr.mxu0 0.0
  %5865 = vmatpush2.msra.mxu0 0.0
  %5866 = vmatprep.subr.mxu0 0.0
  %5867 = vmatpush2.msra.mxu0 0.0
  %5868 = vmatprep.subr.mxu0 0.0
  %5869 = vmatpush2.msra.mxu0 0.0
  %5870 = vmatprep.subr.mxu0 0.0
  %5871 = vmatpush2.msra.mxu0 0.0
  %5872 = vmatprep.subr.mxu0 0.0
  %5873 = vmatpush2.msra.mxu0 0.0
  %5874 = vmatprep.subr.mxu0 0.0
  %5875 = vmatpush2.msra.mxu0 0.0
  %5876 = vmatprep.subr.mxu0 0.0
  %5877 = vmatpush2.msra.mxu0 0.0
  %5878 = vmatprep.subr.mxu0 0.0
  %5879 = vmatpush2.msra.mxu0 0.0
  %5880 = vmatprep.subr.mxu0 0.0
  %5881 = vmatpush2.msra.mxu0 0.0
  %5882 = vmatprep.subr.mxu0 0.0
  %5883 = vmatpush2.msra.mxu0 0.0
  %5884 = vmatprep.subr.mxu0 0.0
  %5885 = vmatpush2.msra.mxu0 0.0
  %5886 = vmatprep.subr.mxu0 0.0
  %5887 = vmatpush2.msra.mxu0 0.0
  %5888 = vmatprep.subr.mxu0 0.0
  %5889 = vmatpush2.msra.mxu0 0.0
  %5890 = vmatprep.subr.mxu0 0.0
  %5891 = vmatpush2.msra.mxu0 0.0
  %5892 = vmatprep.subr.mxu0 0.0
  %5893 = vmatpush2.msra.mxu0 0.0
  %5894 = vmatprep.subr.mxu0 0.0
  %5895 = vmatpush2.msra.mxu0 0.0
  %5896 = vmatprep.mubr.f32.mxu0 0.0
  %5897 = vmatmul.mubr.f32.gmra.mxu0 %v5830
  %v5898 = vpop.f32.mrf.mxu0
  %v5899 = vadd.f32 0.0, %v5898
  %v5900 = vpop.f32.mrf.mxu0
  %5901 = vdwg.mxu0
  %v5903 = vsel %vm381, %v5899, 0
  %5905 = vmatprep.subr.mxu0 0.0
  %5906 = vmatpush1.msra.mxu0 0.0
  %5907 = vmatprep.subr.mxu0 0.0
  %5908 = vmatpush1.msra.mxu0 0.0
  %5909 = vmatprep.subr.mxu0 0.0
  %5910 = vmatpush1.msra.mxu0 0.0
  %5911 = vmatprep.subr.mxu0 0.0
  %5912 = vmatpush1.msra.mxu0 0.0
  %5913 = vmatprep.subr.mxu0 0.0
  %5914 = vmatpush1.msra.mxu0 0.0
  %5915 = vmatprep.subr.mxu0 0.0
  %5916 = vmatpush1.msra.mxu0 0.0
  %5917 = vmatprep.subr.mxu0 0.0
  %5918 = vmatpush1.msra.mxu0 0.0
  %5919 = vmatprep.subr.mxu0 0.0
  %5920 = vmatpush1.msra.mxu0 0.0
  %5921 = vmatprep.subr.mxu0 0.0
  %5922 = vmatpush1.msra.mxu0 0.0
  %5923 = vmatprep.subr.mxu0 0.0
  %5924 = vmatpush1.msra.mxu0 0.0
  %5925 = vmatprep.subr.mxu0 0.0
  %5926 = vmatpush1.msra.mxu0 0.0
  %5927 = vmatprep.subr.mxu0 0.0
  %5928 = vmatpush1.msra.mxu0 0.0
  %5929 = vmatprep.subr.mxu0 0.0
  %5930 = vmatpush1.msra.mxu0 0.0
  %5931 = vmatprep.subr.mxu0 0.0
  %5932 = vmatpush1.msra.mxu0 0.0
  %5933 = vmatprep.subr.mxu0 0.0
  %5934 = vmatpush1.msra.mxu0 %v5016
  %5935 = vmatprep.subr.mxu0 0.0
  %5936 = vmatpush1.msra.mxu0 %v5015
  %5937 = vmatprep.subr.mxu0 0.0
  %5938 = vmatpush2.msra.mxu0 0.0
  %5939 = vmatprep.subr.mxu0 0.0
  %5940 = vmatpush2.msra.mxu0 0.0
  %5941 = vmatprep.subr.mxu0 0.0
  %5942 = vmatpush2.msra.mxu0 0.0
  %5943 = vmatprep.subr.mxu0 0.0
  %5944 = vmatpush2.msra.mxu0 0.0
  %5945 = vmatprep.subr.mxu0 0.0
  %5946 = vmatpush2.msra.mxu0 0.0
  %5947 = vmatprep.subr.mxu0 0.0
  %5948 = vmatpush2.msra.mxu0 0.0
  %5949 = vmatprep.subr.mxu0 0.0
  %5950 = vmatpush2.msra.mxu0 0.0
  %5951 = vmatprep.subr.mxu0 0.0
  %5952 = vmatpush2.msra.mxu0 0.0
  %5953 = vmatprep.subr.mxu0 0.0
  %5954 = vmatpush2.msra.mxu0 0.0
  %5955 = vmatprep.subr.mxu0 0.0
  %5956 = vmatpush2.msra.mxu0 0.0
  %5957 = vmatprep.subr.mxu0 0.0
  %5958 = vmatpush2.msra.mxu0 0.0
  %5959 = vmatprep.subr.mxu0 0.0
  %5960 = vmatpush2.msra.mxu0 0.0
  %5961 = vmatprep.subr.mxu0 0.0
  %5962 = vmatpush2.msra.mxu0 0.0
  %5963 = vmatprep.subr.mxu0 0.0
  %5964 = vmatpush2.msra.mxu0 0.0
  %5965 = vmatprep.subr.mxu0 0.0
  %5966 = vmatpush2.msra.mxu0 0.0
  %5967 = vmatprep.subr.mxu0 0.0
  %5968 = vmatpush2.msra.mxu0 0.0
  %5969 = vmatprep.mubr.f32.mxu0 0.0
  %5970 = vmatmul.mubr.f32.gmra.mxu0 %v5903
  %v5971 = vpop.f32.mrf.mxu0
  %v5972 = vadd.f32 0.0, %v5971
  %v5973 = vpop.f32.mrf.mxu0
  %5974 = vdwg.mxu0
  %v5975 = vadd.f32 %v5734, %v5972
  %5977 = vrot.lane.b32.xlu0 %v5005, 64
  %v5978 = vpop.permute.xlu0 %5977
  %v5979 = vsel %vm381, %v5005, 0
  %v5981 = vsel %vm381, %v5978, 0
  %5983 = vmatprep.subr.mxu0 0.0
  %5984 = vmatpush1.xpose.msra.mxu0 0.0
  %5985 = vmatprep.subr.mxu0 0.0
  %5986 = vmatpush1.xpose.msra.mxu0 0.0
  %5987 = vmatprep.subr.mxu0 0.0
  %5988 = vmatpush1.xpose.msra.mxu0 0.0
  %5989 = vmatprep.subr.mxu0 0.0
  %5990 = vmatpush1.xpose.msra.mxu0 0.0
  %5991 = vmatprep.subr.mxu0 0.0
  %5992 = vmatpush1.xpose.msra.mxu0 0.0
  %5993 = vmatprep.subr.mxu0 0.0
  %5994 = vmatpush1.xpose.msra.mxu0 0.0
  %5995 = vmatprep.subr.mxu0 0.0
  %5996 = vmatpush1.xpose.msra.mxu0 0.0
  %5997 = vmatprep.subr.mxu0 0.0
  %5998 = vmatpush1.xpose.msra.mxu0 0.0
  %5999 = vmatprep.subr.mxu0 0.0
  %6000 = vmatpush1.xpose.msra.mxu0 0.0
  %6001 = vmatprep.subr.mxu0 0.0
  %6002 = vmatpush1.xpose.msra.mxu0 0.0
  %6003 = vmatprep.subr.mxu0 0.0
  %6004 = vmatpush1.xpose.msra.mxu0 0.0
  %6005 = vmatprep.subr.mxu0 0.0
  %6006 = vmatpush1.xpose.msra.mxu0 0.0
  %6007 = vmatprep.subr.mxu0 0.0
  %6008 = vmatpush1.xpose.msra.mxu0 0.0
  %6009 = vmatprep.subr.mxu0 0.0
  %6010 = vmatpush1.xpose.msra.mxu0 0.0
  %6011 = vmatprep.subr.mxu0 0.0
  %6012 = vmatpush1.xpose.msra.mxu0 0.0
  %6013 = vmatprep.subr.mxu0 0.0
  %6014 = vmatpush1.xpose.msra.mxu0 %v5981
  %6015 = vmatprep.subr.mxu0 0.0
  %6016 = vmatpush2.xpose.msra.mxu0 0.0
  %6017 = vmatprep.subr.mxu0 0.0
  %6018 = vmatpush2.xpose.msra.mxu0 0.0
  %6019 = vmatprep.subr.mxu0 0.0
  %6020 = vmatpush2.xpose.msra.mxu0 0.0
  %6021 = vmatprep.subr.mxu0 0.0
  %6022 = vmatpush2.xpose.msra.mxu0 0.0
  %6023 = vmatprep.subr.mxu0 0.0
  %6024 = vmatpush2.xpose.msra.mxu0 0.0
  %6025 = vmatprep.subr.mxu0 0.0
  %6026 = vmatpush2.xpose.msra.mxu0 0.0
  %6027 = vmatprep.subr.mxu0 0.0
  %6028 = vmatpush2.xpose.msra.mxu0 0.0
  %6029 = vmatprep.subr.mxu0 0.0
  %6030 = vmatpush2.xpose.msra.mxu0 0.0
  %6031 = vmatprep.subr.mxu0 0.0
  %6032 = vmatpush2.xpose.msra.mxu0 0.0
  %6033 = vmatprep.subr.mxu0 0.0
  %6034 = vmatpush2.xpose.msra.mxu0 0.0
  %6035 = vmatprep.subr.mxu0 0.0
  %6036 = vmatpush2.xpose.msra.mxu0 0.0
  %6037 = vmatprep.subr.mxu0 0.0
  %6038 = vmatpush2.xpose.msra.mxu0 0.0
  %6039 = vmatprep.subr.mxu0 0.0
  %6040 = vmatpush2.xpose.msra.mxu0 0.0
  %6041 = vmatprep.subr.mxu0 0.0
  %6042 = vmatpush2.xpose.msra.mxu0 0.0
  %6043 = vmatprep.subr.mxu0 0.0
  %6044 = vmatpush2.xpose.msra.mxu0 0.0
  %6045 = vmatprep.subr.mxu0 0.0
  %6046 = vmatpush2.xpose.msra.mxu0 0.0
  %6047 = vmatprep.mubr.f32.mxu0 0.0
  %6048 = vmatmul.mubr.f32.gmra.mxu0 %v5979
  %v6049 = vpop.f32.mrf.mxu0
  %v6050 = vadd.f32 0.0, %v6049
  %v6051 = vpop.f32.mrf.mxu0
  %6052 = vdwg.mxu0
  %v6053 = vmul.f32 %v6050, 0.25
  %v6054 = vadd.f32 %v6053, %v145
  %v6055 = vsel %vm456, %v6054, -inf
  %6056 = vmax.xlane.f32.xlu0 %v6055
  %v6057 = vpop.xlane.xlu0 %6056
  %v6058 = vsub.f32 %v6054, %v6057
  %v6059 = vmul.f32 %v6058, 1.442695
  %v6060 = vpow.pop %v6059
  %v6061 = vsel %vm456, %v6060, 0.0
  %6062 = vadd.xlane.f32.xlu0 %v6061
  %v6063 = vpop.xlane.xlu0 %6062
  %v6064 = vrcp.pop %v6063
  %v6065 = vmul.f32 %v6060, %v6064
  %v6067 = vsel %vm456, %v6065, 0
  %6069 = vmatprep.subr.mxu0 0.0
  %6070 = vmatpush1.msra.mxu0 0.0
  %6071 = vmatprep.subr.mxu0 0.0
  %6072 = vmatpush1.msra.mxu0 0.0
  %6073 = vmatprep.subr.mxu0 0.0
  %6074 = vmatpush1.msra.mxu0 0.0
  %6075 = vmatprep.subr.mxu0 0.0
  %6076 = vmatpush1.msra.mxu0 0.0
  %6077 = vmatprep.subr.mxu0 0.0
  %6078 = vmatpush1.msra.mxu0 0.0
  %6079 = vmatprep.subr.mxu0 0.0
  %6080 = vmatpush1.msra.mxu0 0.0
  %6081 = vmatprep.subr.mxu0 0.0
  %6082 = vmatpush1.msra.mxu0 0.0
  %6083 = vmatprep.subr.mxu0 0.0
  %6084 = vmatpush1.msra.mxu0 0.0
  %6085 = vmatprep.subr.mxu0 0.0
  %6086 = vmatpush1.msra.mxu0 0.0
  %6087 = vmatprep.subr.mxu0 0.0
  %6088 = vmatpush1.msra.mxu0 0.0
  %6089 = vmatprep.subr.mxu0 0.0
  %6090 = vmatpush1.msra.mxu0 0.0
  %6091 = vmatprep.subr.mxu0 0.0
  %6092 = vmatpush1.msra.mxu0 0.0
  %6093 = vmatprep.subr.mxu0 0.0
  %6094 = vmatpush1.msra.mxu0 0.0
  %6095 = vmatprep.subr.mxu0 0.0
  %6096 = vmatpush1.msra.mxu0 0.0
  %6097 = vmatprep.subr.mxu0 0.0
  %6098 = vmatpush1.msra.mxu0 0.0
  %6099 = vmatprep.subr.mxu0 0.0
  %6100 = vmatpush1.msra.mxu0 %v5007
  %6101 = vmatprep.subr.mxu0 0.0
  %6102 = vmatpush2.msra.mxu0 0.0
  %6103 = vmatprep.subr.mxu0 0.0
  %6104 = vmatpush2.msra.mxu0 0.0
  %6105 = vmatprep.subr.mxu0 0.0
  %6106 = vmatpush2.msra.mxu0 0.0
  %6107 = vmatprep.subr.mxu0 0.0
  %6108 = vmatpush2.msra.mxu0 0.0
  %6109 = vmatprep.subr.mxu0 0.0
  %6110 = vmatpush2.msra.mxu0 0.0
  %6111 = vmatprep.subr.mxu0 0.0
  %6112 = vmatpush2.msra.mxu0 0.0
  %6113 = vmatprep.subr.mxu0 0.0
  %6114 = vmatpush2.msra.mxu0 0.0
  %6115 = vmatprep.subr.mxu0 0.0
  %6116 = vmatpush2.msra.mxu0 0.0
  %6117 = vmatprep.subr.mxu0 0.0
  %6118 = vmatpush2.msra.mxu0 0.0
  %6119 = vmatprep.subr.mxu0 0.0
  %6120 = vmatpush2.msra.mxu0 0.0
  %6121 = vmatprep.subr.mxu0 0.0
  %6122 = vmatpush2.msra.mxu0 0.0
  %6123 = vmatprep.subr.mxu0 0.0
  %6124 = vmatpush2.msra.mxu0 0.0
  %6125 = vmatprep.subr.mxu0 0.0
  %6126 = vmatpush2.msra.mxu0 0.0
  %6127 = vmatprep.subr.mxu0 0.0
  %6128 = vmatpush2.msra.mxu0 0.0
  %6129 = vmatprep.subr.mxu0 0.0
  %6130 = vmatpush2.msra.mxu0 0.0
  %6131 = vmatprep.subr.mxu0 0.0
  %6132 = vmatpush2.msra.mxu0 0.0
  %6133 = vmatprep.mubr.f32.mxu0 0.0
  %6134 = vmatmul.mubr.f32.gmra.mxu0 %v6067
  %v6135 = vpop.f32.mrf.mxu0
  %v6136 = vadd.f32 0.0, %v6135
  %v6137 = vpop.f32.mrf.mxu0
  %6138 = vdwg.mxu0
  %6139 = vrot.lane.b32.xlu0 %v5005, 112
  %v6140 = vpop.permute.xlu0 %6139
  %6141 = vrot.lane.b32.xlu0 %v5005, 48
  %v6142 = vpop.permute.xlu0 %6141
  %v6143 = vsel %vm381, %v6140, 0
  %v6145 = vsel %vm381, %v6142, 0
  %6147 = vmatprep.subr.mxu0 0.0
  %6148 = vmatpush1.xpose.msra.mxu0 0.0
  %6149 = vmatprep.subr.mxu0 0.0
  %6150 = vmatpush1.xpose.msra.mxu0 0.0
  %6151 = vmatprep.subr.mxu0 0.0
  %6152 = vmatpush1.xpose.msra.mxu0 0.0
  %6153 = vmatprep.subr.mxu0 0.0
  %6154 = vmatpush1.xpose.msra.mxu0 0.0
  %6155 = vmatprep.subr.mxu0 0.0
  %6156 = vmatpush1.xpose.msra.mxu0 0.0
  %6157 = vmatprep.subr.mxu0 0.0
  %6158 = vmatpush1.xpose.msra.mxu0 0.0
  %6159 = vmatprep.subr.mxu0 0.0
  %6160 = vmatpush1.xpose.msra.mxu0 0.0
  %6161 = vmatprep.subr.mxu0 0.0
  %6162 = vmatpush1.xpose.msra.mxu0 0.0
  %6163 = vmatprep.subr.mxu0 0.0
  %6164 = vmatpush1.xpose.msra.mxu0 0.0
  %6165 = vmatprep.subr.mxu0 0.0
  %6166 = vmatpush1.xpose.msra.mxu0 0.0
  %6167 = vmatprep.subr.mxu0 0.0
  %6168 = vmatpush1.xpose.msra.mxu0 0.0
  %6169 = vmatprep.subr.mxu0 0.0
  %6170 = vmatpush1.xpose.msra.mxu0 0.0
  %6171 = vmatprep.subr.mxu0 0.0
  %6172 = vmatpush1.xpose.msra.mxu0 0.0
  %6173 = vmatprep.subr.mxu0 0.0
  %6174 = vmatpush1.xpose.msra.mxu0 0.0
  %6175 = vmatprep.subr.mxu0 0.0
  %6176 = vmatpush1.xpose.msra.mxu0 0.0
  %6177 = vmatprep.subr.mxu0 0.0
  %6178 = vmatpush1.xpose.msra.mxu0 %v6145
  %6179 = vmatprep.subr.mxu0 0.0
  %6180 = vmatpush2.xpose.msra.mxu0 0.0
  %6181 = vmatprep.subr.mxu0 0.0
  %6182 = vmatpush2.xpose.msra.mxu0 0.0
  %6183 = vmatprep.subr.mxu0 0.0
  %6184 = vmatpush2.xpose.msra.mxu0 0.0
  %6185 = vmatprep.subr.mxu0 0.0
  %6186 = vmatpush2.xpose.msra.mxu0 0.0
  %6187 = vmatprep.subr.mxu0 0.0
  %6188 = vmatpush2.xpose.msra.mxu0 0.0
  %6189 = vmatprep.subr.mxu0 0.0
  %6190 = vmatpush2.xpose.msra.mxu0 0.0
  %6191 = vmatprep.subr.mxu0 0.0
  %6192 = vmatpush2.xpose.msra.mxu0 0.0
  %6193 = vmatprep.subr.mxu0 0.0
  %6194 = vmatpush2.xpose.msra.mxu0 0.0
  %6195 = vmatprep.subr.mxu0 0.0
  %6196 = vmatpush2.xpose.msra.mxu0 0.0
  %6197 = vmatprep.subr.mxu0 0.0
  %6198 = vmatpush2.xpose.msra.mxu0 0.0
  %6199 = vmatprep.subr.mxu0 0.0
  %6200 = vmatpush2.xpose.msra.mxu0 0.0
  %6201 = vmatprep.subr.mxu0 0.0
  %6202 = vmatpush2.xpose.msra.mxu0 0.0
  %6203 = vmatprep.subr.mxu0 0.0
  %6204 = vmatpush2.xpose.msra.mxu0 0.0
  %6205 = vmatprep.subr.mxu0 0.0
  %6206 = vmatpush2.xpose.msra.mxu0 0.0
  %6207 = vmatprep.subr.mxu0 0.0
  %6208 = vmatpush2.xpose.msra.mxu0 0.0
  %6209 = vmatprep.subr.mxu0 0.0
  %6210 = vmatpush2.xpose.msra.mxu0 0.0
  %6211 = vmatprep.mubr.f32.mxu0 0.0
  %6212 = vmatmul.mubr.f32.gmra.mxu0 %v6143
  %v6213 = vpop.f32.mrf.mxu0
  %v6214 = vadd.f32 0.0, %v6213
  %v6215 = vpop.f32.mrf.mxu0
  %6216 = vdwg.mxu0
  %v6217 = vmul.f32 %v6214, 0.25
  %v6218 = vadd.f32 %v6217, %v145
  %v6219 = vsel %vm456, %v6218, -inf
  %6220 = vmax.xlane.f32.xlu0 %v6219
  %v6221 = vpop.xlane.xlu0 %6220
  %v6222 = vsub.f32 %v6218, %v6221
  %v6223 = vmul.f32 %v6222, 1.442695
  %v6224 = vpow.pop %v6223
  %v6225 = vsel %vm456, %v6224, 0.0
  %6226 = vadd.xlane.f32.xlu0 %v6225
  %v6227 = vpop.xlane.xlu0 %6226
  %v6228 = vrcp.pop %v6227
  %v6229 = vmul.f32 %v6224, %v6228
  %6231 = vrot.lane.b32.xlu0 %v5007, 112
  %v6232 = vpop.permute.xlu0 %6231
  %v6235 = vsel %vm456, %v6229, 0
  %6237 = vmatprep.subr.mxu0 0.0
  %6238 = vmatpush1.msra.mxu0 0.0
  %6239 = vmatprep.subr.mxu0 0.0
  %6240 = vmatpush1.msra.mxu0 0.0
  %6241 = vmatprep.subr.mxu0 0.0
  %6242 = vmatpush1.msra.mxu0 0.0
  %6243 = vmatprep.subr.mxu0 0.0
  %6244 = vmatpush1.msra.mxu0 0.0
  %6245 = vmatprep.subr.mxu0 0.0
  %6246 = vmatpush1.msra.mxu0 0.0
  %6247 = vmatprep.subr.mxu0 0.0
  %6248 = vmatpush1.msra.mxu0 0.0
  %6249 = vmatprep.subr.mxu0 0.0
  %6250 = vmatpush1.msra.mxu0 0.0
  %6251 = vmatprep.subr.mxu0 0.0
  %6252 = vmatpush1.msra.mxu0 0.0
  %6253 = vmatprep.subr.mxu0 0.0
  %6254 = vmatpush1.msra.mxu0 0.0
  %6255 = vmatprep.subr.mxu0 0.0
  %6256 = vmatpush1.msra.mxu0 0.0
  %6257 = vmatprep.subr.mxu0 0.0
  %6258 = vmatpush1.msra.mxu0 0.0
  %6259 = vmatprep.subr.mxu0 0.0
  %6260 = vmatpush1.msra.mxu0 0.0
  %6261 = vmatprep.subr.mxu0 0.0
  %6262 = vmatpush1.msra.mxu0 0.0
  %6263 = vmatprep.subr.mxu0 0.0
  %6264 = vmatpush1.msra.mxu0 0.0
  %6265 = vmatprep.subr.mxu0 0.0
  %6266 = vmatpush1.msra.mxu0 0.0
  %6267 = vmatprep.subr.mxu0 0.0
  %6268 = vmatpush1.msra.mxu0 %v6232
  %6269 = vmatprep.subr.mxu0 0.0
  %6270 = vmatpush2.msra.mxu0 0.0
  %6271 = vmatprep.subr.mxu0 0.0
  %6272 = vmatpush2.msra.mxu0 0.0
  %6273 = vmatprep.subr.mxu0 0.0
  %6274 = vmatpush2.msra.mxu0 0.0
  %6275 = vmatprep.subr.mxu0 0.0
  %6276 = vmatpush2.msra.mxu0 0.0
  %6277 = vmatprep.subr.mxu0 0.0
  %6278 = vmatpush2.msra.mxu0 0.0
  %6279 = vmatprep.subr.mxu0 0.0
  %6280 = vmatpush2.msra.mxu0 0.0
  %6281 = vmatprep.subr.mxu0 0.0
  %6282 = vmatpush2.msra.mxu0 0.0
  %6283 = vmatprep.subr.mxu0 0.0
  %6284 = vmatpush2.msra.mxu0 0.0
  %6285 = vmatprep.subr.mxu0 0.0
  %6286 = vmatpush2.msra.mxu0 0.0
  %6287 = vmatprep.subr.mxu0 0.0
  %6288 = vmatpush2.msra.mxu0 0.0
  %6289 = vmatprep.subr.mxu0 0.0
  %6290 = vmatpush2.msra.mxu0 0.0
  %6291 = vmatprep.subr.mxu0 0.0
  %6292 = vmatpush2.msra.mxu0 0.0
  %6293 = vmatprep.subr.mxu0 0.0
  %6294 = vmatpush2.msra.mxu0 0.0
  %6295 = vmatprep.subr.mxu0 0.0
  %6296 = vmatpush2.msra.mxu0 0.0
  %6297 = vmatprep.subr.mxu0 0.0
  %6298 = vmatpush2.msra.mxu0 0.0
  %6299 = vmatprep.subr.mxu0 0.0
  %6300 = vmatpush2.msra.mxu0 0.0
  %6301 = vmatprep.mubr.f32.mxu0 0.0
  %6302 = vmatmul.mubr.f32.gmra.mxu0 %v6235
  %v6303 = vpop.f32.mrf.mxu0
  %v6304 = vadd.f32 0.0, %v6303
  %v6305 = vpop.f32.mrf.mxu0
  %6306 = vdwg.mxu0
  %v6308 = vsel %vm381, %v6304, 0
  %6310 = vmatprep.subr.mxu0 0.0
  %6311 = vmatpush1.msra.mxu0 0.0
  %6312 = vmatprep.subr.mxu0 0.0
  %6313 = vmatpush1.msra.mxu0 0.0
  %6314 = vmatprep.subr.mxu0 0.0
  %6315 = vmatpush1.msra.mxu0 0.0
  %6316 = vmatprep.subr.mxu0 0.0
  %6317 = vmatpush1.msra.mxu0 0.0
  %6318 = vmatprep.subr.mxu0 0.0
  %6319 = vmatpush1.msra.mxu0 0.0
  %6320 = vmatprep.subr.mxu0 0.0
  %6321 = vmatpush1.msra.mxu0 0.0
  %6322 = vmatprep.subr.mxu0 0.0
  %6323 = vmatpush1.msra.mxu0 0.0
  %6324 = vmatprep.subr.mxu0 0.0
  %6325 = vmatpush1.msra.mxu0 0.0
  %6326 = vmatprep.subr.mxu0 0.0
  %6327 = vmatpush1.msra.mxu0 0.0
  %6328 = vmatprep.subr.mxu0 0.0
  %6329 = vmatpush1.msra.mxu0 0.0
  %6330 = vmatprep.subr.mxu0 0.0
  %6331 = vmatpush1.msra.mxu0 0.0
  %6332 = vmatprep.subr.mxu0 0.0
  %6333 = vmatpush1.msra.mxu0 0.0
  %6334 = vmatprep.subr.mxu0 0.0
  %6335 = vmatpush1.msra.mxu0 0.0
  %6336 = vmatprep.subr.mxu0 0.0
  %6337 = vmatpush1.msra.mxu0 0.0
  %6338 = vmatprep.subr.mxu0 0.0
  %6339 = vmatpush1.msra.mxu0 %v5012
  %6340 = vmatprep.subr.mxu0 0.0
  %6341 = vmatpush1.msra.mxu0 %v5011
  %6342 = vmatprep.subr.mxu0 0.0
  %6343 = vmatpush2.msra.mxu0 0.0
  %6344 = vmatprep.subr.mxu0 0.0
  %6345 = vmatpush2.msra.mxu0 0.0
  %6346 = vmatprep.subr.mxu0 0.0
  %6347 = vmatpush2.msra.mxu0 0.0
  %6348 = vmatprep.subr.mxu0 0.0
  %6349 = vmatpush2.msra.mxu0 0.0
  %6350 = vmatprep.subr.mxu0 0.0
  %6351 = vmatpush2.msra.mxu0 0.0
  %6352 = vmatprep.subr.mxu0 0.0
  %6353 = vmatpush2.msra.mxu0 0.0
  %6354 = vmatprep.subr.mxu0 0.0
  %6355 = vmatpush2.msra.mxu0 0.0
  %6356 = vmatprep.subr.mxu0 0.0
  %6357 = vmatpush2.msra.mxu0 0.0
  %6358 = vmatprep.subr.mxu0 0.0
  %6359 = vmatpush2.msra.mxu0 0.0
  %6360 = vmatprep.subr.mxu0 0.0
  %6361 = vmatpush2.msra.mxu0 0.0
  %6362 = vmatprep.subr.mxu0 0.0
  %6363 = vmatpush2.msra.mxu0 0.0
  %6364 = vmatprep.subr.mxu0 0.0
  %6365 = vmatpush2.msra.mxu0 0.0
  %6366 = vmatprep.subr.mxu0 0.0
  %6367 = vmatpush2.msra.mxu0 0.0
  %6368 = vmatprep.subr.mxu0 0.0
  %6369 = vmatpush2.msra.mxu0 0.0
  %6370 = vmatprep.subr.mxu0 0.0
  %6371 = vmatpush2.msra.mxu0 0.0
  %6372 = vmatprep.subr.mxu0 0.0
  %6373 = vmatpush2.msra.mxu0 0.0
  %6374 = vmatprep.mubr.f32.mxu0 0.0
  %6375 = vmatmul.mubr.f32.gmra.mxu0 %v6308
  %v6376 = vpop.f32.mrf.mxu0
  %v6377 = vadd.f32 0.0, %v6376
  %v6378 = vpop.f32.mrf.mxu0
  %6379 = vdwg.mxu0
  %v6381 = vsel %vm381, %v6136, 0
  %6383 = vmatprep.subr.mxu0 0.0
  %6384 = vmatpush1.msra.mxu0 0.0
  %6385 = vmatprep.subr.mxu0 0.0
  %6386 = vmatpush1.msra.mxu0 0.0
  %6387 = vmatprep.subr.mxu0 0.0
  %6388 = vmatpush1.msra.mxu0 0.0
  %6389 = vmatprep.subr.mxu0 0.0
  %6390 = vmatpush1.msra.mxu0 0.0
  %6391 = vmatprep.subr.mxu0 0.0
  %6392 = vmatpush1.msra.mxu0 0.0
  %6393 = vmatprep.subr.mxu0 0.0
  %6394 = vmatpush1.msra.mxu0 0.0
  %6395 = vmatprep.subr.mxu0 0.0
  %6396 = vmatpush1.msra.mxu0 0.0
  %6397 = vmatprep.subr.mxu0 0.0
  %6398 = vmatpush1.msra.mxu0 0.0
  %6399 = vmatprep.subr.mxu0 0.0
  %6400 = vmatpush1.msra.mxu0 0.0
  %6401 = vmatprep.subr.mxu0 0.0
  %6402 = vmatpush1.msra.mxu0 0.0
  %6403 = vmatprep.subr.mxu0 0.0
  %6404 = vmatpush1.msra.mxu0 0.0
  %6405 = vmatprep.subr.mxu0 0.0
  %6406 = vmatpush1.msra.mxu0 0.0
  %6407 = vmatprep.subr.mxu0 0.0
  %6408 = vmatpush1.msra.mxu0 0.0
  %6409 = vmatprep.subr.mxu0 0.0
  %6410 = vmatpush1.msra.mxu0 0.0
  %6411 = vmatprep.subr.mxu0 0.0
  %6412 = vmatpush1.msra.mxu0 %v5010
  %6413 = vmatprep.subr.mxu0 0.0
  %6414 = vmatpush1.msra.mxu0 %v5009
  %6415 = vmatprep.subr.mxu0 0.0
  %6416 = vmatpush2.msra.mxu0 0.0
  %6417 = vmatprep.subr.mxu0 0.0
  %6418 = vmatpush2.msra.mxu0 0.0
  %6419 = vmatprep.subr.mxu0 0.0
  %6420 = vmatpush2.msra.mxu0 0.0
  %6421 = vmatprep.subr.mxu0 0.0
  %6422 = vmatpush2.msra.mxu0 0.0
  %6423 = vmatprep.subr.mxu0 0.0
  %6424 = vmatpush2.msra.mxu0 0.0
  %6425 = vmatprep.subr.mxu0 0.0
  %6426 = vmatpush2.msra.mxu0 0.0
  %6427 = vmatprep.subr.mxu0 0.0
  %6428 = vmatpush2.msra.mxu0 0.0
  %6429 = vmatprep.subr.mxu0 0.0
  %6430 = vmatpush2.msra.mxu0 0.0
  %6431 = vmatprep.subr.mxu0 0.0
  %6432 = vmatpush2.msra.mxu0 0.0
  %6433 = vmatprep.subr.mxu0 0.0
  %6434 = vmatpush2.msra.mxu0 0.0
  %6435 = vmatprep.subr.mxu0 0.0
  %6436 = vmatpush2.msra.mxu0 0.0
  %6437 = vmatprep.subr.mxu0 0.0
  %6438 = vmatpush2.msra.mxu0 0.0
  %6439 = vmatprep.subr.mxu0 0.0
  %6440 = vmatpush2.msra.mxu0 0.0
  %6441 = vmatprep.subr.mxu0 0.0
  %6442 = vmatpush2.msra.mxu0 0.0
  %6443 = vmatprep.subr.mxu0 0.0
  %6444 = vmatpush2.msra.mxu0 0.0
  %6445 = vmatprep.subr.mxu0 0.0
  %6446 = vmatpush2.msra.mxu0 0.0
  %6447 = vmatprep.mubr.f32.mxu0 0.0
  %6448 = vmatmul.mubr.f32.gmra.mxu0 %v6381
  %v6449 = vpop.f32.mrf.mxu0
  %v6450 = vadd.f32 %v6377, %v6449
  %v6451 = vpop.f32.mrf.mxu0
  %6452 = vdwg.mxu0
  %6453 = vrot.lane.b32.xlu0 %v5005, 96
  %v6454 = vpop.permute.xlu0 %6453
  %6455 = vrot.lane.b32.xlu0 %v5005, 32
  %v6456 = vpop.permute.xlu0 %6455
  %v6457 = vsel %vm381, %v6454, 0
  %v6459 = vsel %vm381, %v6456, 0
  %6461 = vmatprep.subr.mxu0 0.0
  %6462 = vmatpush1.xpose.msra.mxu0 0.0
  %6463 = vmatprep.subr.mxu0 0.0
  %6464 = vmatpush1.xpose.msra.mxu0 0.0
  %6465 = vmatprep.subr.mxu0 0.0
  %6466 = vmatpush1.xpose.msra.mxu0 0.0
  %6467 = vmatprep.subr.mxu0 0.0
  %6468 = vmatpush1.xpose.msra.mxu0 0.0
  %6469 = vmatprep.subr.mxu0 0.0
  %6470 = vmatpush1.xpose.msra.mxu0 0.0
  %6471 = vmatprep.subr.mxu0 0.0
  %6472 = vmatpush1.xpose.msra.mxu0 0.0
  %6473 = vmatprep.subr.mxu0 0.0
  %6474 = vmatpush1.xpose.msra.mxu0 0.0
  %6475 = vmatprep.subr.mxu0 0.0
  %6476 = vmatpush1.xpose.msra.mxu0 0.0
  %6477 = vmatprep.subr.mxu0 0.0
  %6478 = vmatpush1.xpose.msra.mxu0 0.0
  %6479 = vmatprep.subr.mxu0 0.0
  %6480 = vmatpush1.xpose.msra.mxu0 0.0
  %6481 = vmatprep.subr.mxu0 0.0
  %6482 = vmatpush1.xpose.msra.mxu0 0.0
  %6483 = vmatprep.subr.mxu0 0.0
  %6484 = vmatpush1.xpose.msra.mxu0 0.0
  %6485 = vmatprep.subr.mxu0 0.0
  %6486 = vmatpush1.xpose.msra.mxu0 0.0
  %6487 = vmatprep.subr.mxu0 0.0
  %6488 = vmatpush1.xpose.msra.mxu0 0.0
  %6489 = vmatprep.subr.mxu0 0.0
  %6490 = vmatpush1.xpose.msra.mxu0 0.0
  %6491 = vmatprep.subr.mxu0 0.0
  %6492 = vmatpush1.xpose.msra.mxu0 %v6459
  %6493 = vmatprep.subr.mxu0 0.0
  %6494 = vmatpush2.xpose.msra.mxu0 0.0
  %6495 = vmatprep.subr.mxu0 0.0
  %6496 = vmatpush2.xpose.msra.mxu0 0.0
  %6497 = vmatprep.subr.mxu0 0.0
  %6498 = vmatpush2.xpose.msra.mxu0 0.0
  %6499 = vmatprep.subr.mxu0 0.0
  %6500 = vmatpush2.xpose.msra.mxu0 0.0
  %6501 = vmatprep.subr.mxu0 0.0
  %6502 = vmatpush2.xpose.msra.mxu0 0.0
  %6503 = vmatprep.subr.mxu0 0.0
  %6504 = vmatpush2.xpose.msra.mxu0 0.0
  %6505 = vmatprep.subr.mxu0 0.0
  %6506 = vmatpush2.xpose.msra.mxu0 0.0
  %6507 = vmatprep.subr.mxu0 0.0
  %6508 = vmatpush2.xpose.msra.mxu0 0.0
  %6509 = vmatprep.subr.mxu0 0.0
  %6510 = vmatpush2.xpose.msra.mxu0 0.0
  %6511 = vmatprep.subr.mxu0 0.0
  %6512 = vmatpush2.xpose.msra.mxu0 0.0
  %6513 = vmatprep.subr.mxu0 0.0
  %6514 = vmatpush2.xpose.msra.mxu0 0.0
  %6515 = vmatprep.subr.mxu0 0.0
  %6516 = vmatpush2.xpose.msra.mxu0 0.0
  %6517 = vmatprep.subr.mxu0 0.0
  %6518 = vmatpush2.xpose.msra.mxu0 0.0
  %6519 = vmatprep.subr.mxu0 0.0
  %6520 = vmatpush2.xpose.msra.mxu0 0.0
  %6521 = vmatprep.subr.mxu0 0.0
  %6522 = vmatpush2.xpose.msra.mxu0 0.0
  %6523 = vmatprep.subr.mxu0 0.0
  %6524 = vmatpush2.xpose.msra.mxu0 0.0
  %6525 = vmatprep.mubr.f32.mxu0 0.0
  %6526 = vmatmul.mubr.f32.gmra.mxu0 %v6457
  %v6527 = vpop.f32.mrf.mxu0
  %v6528 = vadd.f32 0.0, %v6527
  %v6529 = vpop.f32.mrf.mxu0
  %6530 = vdwg.mxu0
  %v6531 = vmul.f32 %v6528, 0.25
  %v6532 = vadd.f32 %v6531, %v145
  %v6533 = vsel %vm456, %v6532, -inf
  %6534 = vmax.xlane.f32.xlu0 %v6533
  %v6535 = vpop.xlane.xlu0 %6534
  %v6536 = vsub.f32 %v6532, %v6535
  %v6537 = vmul.f32 %v6536, 1.442695
  %v6538 = vpow.pop %v6537
  %v6539 = vsel %vm456, %v6538, 0.0
  %6540 = vadd.xlane.f32.xlu0 %v6539
  %v6541 = vpop.xlane.xlu0 %6540
  %v6542 = vrcp.pop %v6541
  %v6543 = vmul.f32 %v6538, %v6542
  %6544 = vrot.lane.b32.xlu0 %v5007, 96
  %v6545 = vpop.permute.xlu0 %6544
  %v6548 = vsel %vm456, %v6543, 0
  %6550 = vmatprep.subr.mxu0 0.0
  %6551 = vmatpush1.msra.mxu0 0.0
  %6552 = vmatprep.subr.mxu0 0.0
  %6553 = vmatpush1.msra.mxu0 0.0
  %6554 = vmatprep.subr.mxu0 0.0
  %6555 = vmatpush1.msra.mxu0 0.0
  %6556 = vmatprep.subr.mxu0 0.0
  %6557 = vmatpush1.msra.mxu0 0.0
  %6558 = vmatprep.subr.mxu0 0.0
  %6559 = vmatpush1.msra.mxu0 0.0
  %6560 = vmatprep.subr.mxu0 0.0
  %6561 = vmatpush1.msra.mxu0 0.0
  %6562 = vmatprep.subr.mxu0 0.0
  %6563 = vmatpush1.msra.mxu0 0.0
  %6564 = vmatprep.subr.mxu0 0.0
  %6565 = vmatpush1.msra.mxu0 0.0
  %6566 = vmatprep.subr.mxu0 0.0
  %6567 = vmatpush1.msra.mxu0 0.0
  %6568 = vmatprep.subr.mxu0 0.0
  %6569 = vmatpush1.msra.mxu0 0.0
  %6570 = vmatprep.subr.mxu0 0.0
  %6571 = vmatpush1.msra.mxu0 0.0
  %6572 = vmatprep.subr.mxu0 0.0
  %6573 = vmatpush1.msra.mxu0 0.0
  %6574 = vmatprep.subr.mxu0 0.0
  %6575 = vmatpush1.msra.mxu0 0.0
  %6576 = vmatprep.subr.mxu0 0.0
  %6577 = vmatpush1.msra.mxu0 0.0
  %6578 = vmatprep.subr.mxu0 0.0
  %6579 = vmatpush1.msra.mxu0 0.0
  %6580 = vmatprep.subr.mxu0 0.0
  %6581 = vmatpush1.msra.mxu0 %v6545
  %6582 = vmatprep.subr.mxu0 0.0
  %6583 = vmatpush2.msra.mxu0 0.0
  %6584 = vmatprep.subr.mxu0 0.0
  %6585 = vmatpush2.msra.mxu0 0.0
  %6586 = vmatprep.subr.mxu0 0.0
  %6587 = vmatpush2.msra.mxu0 0.0
  %6588 = vmatprep.subr.mxu0 0.0
  %6589 = vmatpush2.msra.mxu0 0.0
  %6590 = vmatprep.subr.mxu0 0.0
  %6591 = vmatpush2.msra.mxu0 0.0
  %6592 = vmatprep.subr.mxu0 0.0
  %6593 = vmatpush2.msra.mxu0 0.0
  %6594 = vmatprep.subr.mxu0 0.0
  %6595 = vmatpush2.msra.mxu0 0.0
  %6596 = vmatprep.subr.mxu0 0.0
  %6597 = vmatpush2.msra.mxu0 0.0
  %6598 = vmatprep.subr.mxu0 0.0
  %6599 = vmatpush2.msra.mxu0 0.0
  %6600 = vmatprep.subr.mxu0 0.0
  %6601 = vmatpush2.msra.mxu0 0.0
  %6602 = vmatprep.subr.mxu0 0.0
  %6603 = vmatpush2.msra.mxu0 0.0
  %6604 = vmatprep.subr.mxu0 0.0
  %6605 = vmatpush2.msra.mxu0 0.0
  %6606 = vmatprep.subr.mxu0 0.0
  %6607 = vmatpush2.msra.mxu0 0.0
  %6608 = vmatprep.subr.mxu0 0.0
  %6609 = vmatpush2.msra.mxu0 0.0
  %6610 = vmatprep.subr.mxu0 0.0
  %6611 = vmatpush2.msra.mxu0 0.0
  %6612 = vmatprep.subr.mxu0 0.0
  %6613 = vmatpush2.msra.mxu0 0.0
  %6614 = vmatprep.mubr.f32.mxu0 0.0
  %6615 = vmatmul.mubr.f32.gmra.mxu0 %v6548
  %v6616 = vpop.f32.mrf.mxu0
  %v6617 = vadd.f32 0.0, %v6616
  %v6618 = vpop.f32.mrf.mxu0
  %6619 = vdwg.mxu0
  %v6621 = vsel %vm381, %v6617, 0
  %6623 = vmatprep.subr.mxu0 0.0
  %6624 = vmatpush1.msra.mxu0 0.0
  %6625 = vmatprep.subr.mxu0 0.0
  %6626 = vmatpush1.msra.mxu0 0.0
  %6627 = vmatprep.subr.mxu0 0.0
  %6628 = vmatpush1.msra.mxu0 0.0
  %6629 = vmatprep.subr.mxu0 0.0
  %6630 = vmatpush1.msra.mxu0 0.0
  %6631 = vmatprep.subr.mxu0 0.0
  %6632 = vmatpush1.msra.mxu0 0.0
  %6633 = vmatprep.subr.mxu0 0.0
  %6634 = vmatpush1.msra.mxu0 0.0
  %6635 = vmatprep.subr.mxu0 0.0
  %6636 = vmatpush1.msra.mxu0 0.0
  %6637 = vmatprep.subr.mxu0 0.0
  %6638 = vmatpush1.msra.mxu0 0.0
  %6639 = vmatprep.subr.mxu0 0.0
  %6640 = vmatpush1.msra.mxu0 0.0
  %6641 = vmatprep.subr.mxu0 0.0
  %6642 = vmatpush1.msra.mxu0 0.0
  %6643 = vmatprep.subr.mxu0 0.0
  %6644 = vmatpush1.msra.mxu0 0.0
  %6645 = vmatprep.subr.mxu0 0.0
  %6646 = vmatpush1.msra.mxu0 0.0
  %6647 = vmatprep.subr.mxu0 0.0
  %6648 = vmatpush1.msra.mxu0 0.0
  %6649 = vmatprep.subr.mxu0 0.0
  %6650 = vmatpush1.msra.mxu0 0.0
  %6651 = vmatprep.subr.mxu0 0.0
  %6652 = vmatpush1.msra.mxu0 %v5014
  %6653 = vmatprep.subr.mxu0 0.0
  %6654 = vmatpush1.msra.mxu0 %v5013
  %6655 = vmatprep.subr.mxu0 0.0
  %6656 = vmatpush2.msra.mxu0 0.0
  %6657 = vmatprep.subr.mxu0 0.0
  %6658 = vmatpush2.msra.mxu0 0.0
  %6659 = vmatprep.subr.mxu0 0.0
  %6660 = vmatpush2.msra.mxu0 0.0
  %6661 = vmatprep.subr.mxu0 0.0
  %6662 = vmatpush2.msra.mxu0 0.0
  %6663 = vmatprep.subr.mxu0 0.0
  %6664 = vmatpush2.msra.mxu0 0.0
  %6665 = vmatprep.subr.mxu0 0.0
  %6666 = vmatpush2.msra.mxu0 0.0
  %6667 = vmatprep.subr.mxu0 0.0
  %6668 = vmatpush2.msra.mxu0 0.0
  %6669 = vmatprep.subr.mxu0 0.0
  %6670 = vmatpush2.msra.mxu0 0.0
  %6671 = vmatprep.subr.mxu0 0.0
  %6672 = vmatpush2.msra.mxu0 0.0
  %6673 = vmatprep.subr.mxu0 0.0
  %6674 = vmatpush2.msra.mxu0 0.0
  %6675 = vmatprep.subr.mxu0 0.0
  %6676 = vmatpush2.msra.mxu0 0.0
  %6677 = vmatprep.subr.mxu0 0.0
  %6678 = vmatpush2.msra.mxu0 0.0
  %6679 = vmatprep.subr.mxu0 0.0
  %6680 = vmatpush2.msra.mxu0 0.0
  %6681 = vmatprep.subr.mxu0 0.0
  %6682 = vmatpush2.msra.mxu0 0.0
  %6683 = vmatprep.subr.mxu0 0.0
  %6684 = vmatpush2.msra.mxu0 0.0
  %6685 = vmatprep.subr.mxu0 0.0
  %6686 = vmatpush2.msra.mxu0 0.0
  %6687 = vmatprep.mubr.f32.mxu0 0.0
  %6688 = vmatmul.mubr.f32.gmra.mxu0 %v6621
  %v6689 = vpop.f32.mrf.mxu0
  %v6690 = vadd.f32 0.0, %v6689
  %v6691 = vpop.f32.mrf.mxu0
  %6692 = vdwg.mxu0
  %v6693 = vadd.f32 %v6450, %v6690
  %6694 = vrot.lane.b32.xlu0 %v5005, 80
  %v6695 = vpop.permute.xlu0 %6694
  %6696 = vrot.lane.b32.xlu0 %v5005, 16
  %v6697 = vpop.permute.xlu0 %6696
  %v6698 = vsel %vm381, %v6695, 0
  %v6700 = vsel %vm381, %v6697, 0
  %6702 = vmatprep.subr.mxu0 0.0
  %6703 = vmatpush1.xpose.msra.mxu0 0.0
  %6704 = vmatprep.subr.mxu0 0.0
  %6705 = vmatpush1.xpose.msra.mxu0 0.0
  %6706 = vmatprep.subr.mxu0 0.0
  %6707 = vmatpush1.xpose.msra.mxu0 0.0
  %6708 = vmatprep.subr.mxu0 0.0
  %6709 = vmatpush1.xpose.msra.mxu0 0.0
  %6710 = vmatprep.subr.mxu0 0.0
  %6711 = vmatpush1.xpose.msra.mxu0 0.0
  %6712 = vmatprep.subr.mxu0 0.0
  %6713 = vmatpush1.xpose.msra.mxu0 0.0
  %6714 = vmatprep.subr.mxu0 0.0
  %6715 = vmatpush1.xpose.msra.mxu0 0.0
  %6716 = vmatprep.subr.mxu0 0.0
  %6717 = vmatpush1.xpose.msra.mxu0 0.0
  %6718 = vmatprep.subr.mxu0 0.0
  %6719 = vmatpush1.xpose.msra.mxu0 0.0
  %6720 = vmatprep.subr.mxu0 0.0
  %6721 = vmatpush1.xpose.msra.mxu0 0.0
  %6722 = vmatprep.subr.mxu0 0.0
  %6723 = vmatpush1.xpose.msra.mxu0 0.0
  %6724 = vmatprep.subr.mxu0 0.0
  %6725 = vmatpush1.xpose.msra.mxu0 0.0
  %6726 = vmatprep.subr.mxu0 0.0
  %6727 = vmatpush1.xpose.msra.mxu0 0.0
  %6728 = vmatprep.subr.mxu0 0.0
  %6729 = vmatpush1.xpose.msra.mxu0 0.0
  %6730 = vmatprep.subr.mxu0 0.0
  %6731 = vmatpush1.xpose.msra.mxu0 0.0
  %6732 = vmatprep.subr.mxu0 0.0
  %6733 = vmatpush1.xpose.msra.mxu0 %v6700
  %6734 = vmatprep.subr.mxu0 0.0
  %6735 = vmatpush2.xpose.msra.mxu0 0.0
  %6736 = vmatprep.subr.mxu0 0.0
  %6737 = vmatpush2.xpose.msra.mxu0 0.0
  %6738 = vmatprep.subr.mxu0 0.0
  %6739 = vmatpush2.xpose.msra.mxu0 0.0
  %6740 = vmatprep.subr.mxu0 0.0
  %6741 = vmatpush2.xpose.msra.mxu0 0.0
  %6742 = vmatprep.subr.mxu0 0.0
  %6743 = vmatpush2.xpose.msra.mxu0 0.0
  %6744 = vmatprep.subr.mxu0 0.0
  %6745 = vmatpush2.xpose.msra.mxu0 0.0
  %6746 = vmatprep.subr.mxu0 0.0
  %6747 = vmatpush2.xpose.msra.mxu0 0.0
  %6748 = vmatprep.subr.mxu0 0.0
  %6749 = vmatpush2.xpose.msra.mxu0 0.0
  %6750 = vmatprep.subr.mxu0 0.0
  %6751 = vmatpush2.xpose.msra.mxu0 0.0
  %6752 = vmatprep.subr.mxu0 0.0
  %6753 = vmatpush2.xpose.msra.mxu0 0.0
  %6754 = vmatprep.subr.mxu0 0.0
  %6755 = vmatpush2.xpose.msra.mxu0 0.0
  %6756 = vmatprep.subr.mxu0 0.0
  %6757 = vmatpush2.xpose.msra.mxu0 0.0
  %6758 = vmatprep.subr.mxu0 0.0
  %6759 = vmatpush2.xpose.msra.mxu0 0.0
  %6760 = vmatprep.subr.mxu0 0.0
  %6761 = vmatpush2.xpose.msra.mxu0 0.0
  %6762 = vmatprep.subr.mxu0 0.0
  %6763 = vmatpush2.xpose.msra.mxu0 0.0
  %6764 = vmatprep.subr.mxu0 0.0
  %6765 = vmatpush2.xpose.msra.mxu0 0.0
  %6766 = vmatprep.mubr.f32.mxu0 0.0
  %6767 = vmatmul.mubr.f32.gmra.mxu0 %v6698
  %v6768 = vpop.f32.mrf.mxu0
  %v6769 = vadd.f32 0.0, %v6768
  %v6770 = vpop.f32.mrf.mxu0
  %6771 = vdwg.mxu0
  %v6772 = vmul.f32 %v6769, 0.25
  %v6773 = vadd.f32 %v6772, %v145
  %v6774 = vsel %vm456, %v6773, -inf
  %6775 = vmax.xlane.f32.xlu0 %v6774
  %v6776 = vpop.xlane.xlu0 %6775
  %v6777 = vsub.f32 %v6773, %v6776
  %v6778 = vmul.f32 %v6777, 1.442695
  %v6779 = vpow.pop %v6778
  %v6780 = vsel %vm456, %v6779, 0.0
  %6781 = vadd.xlane.f32.xlu0 %v6780
  %v6782 = vpop.xlane.xlu0 %6781
  %v6783 = vrcp.pop %v6782
  %v6784 = vmul.f32 %v6779, %v6783
  %6785 = vrot.lane.b32.xlu0 %v5007, 80
  %v6786 = vpop.permute.xlu0 %6785
  %v6789 = vsel %vm456, %v6784, 0
  %6791 = vmatprep.subr.mxu0 0.0
  %6792 = vmatpush1.msra.mxu0 0.0
  %6793 = vmatprep.subr.mxu0 0.0
  %6794 = vmatpush1.msra.mxu0 0.0
  %6795 = vmatprep.subr.mxu0 0.0
  %6796 = vmatpush1.msra.mxu0 0.0
  %6797 = vmatprep.subr.mxu0 0.0
  %6798 = vmatpush1.msra.mxu0 0.0
  %6799 = vmatprep.subr.mxu0 0.0
  %6800 = vmatpush1.msra.mxu0 0.0
  %6801 = vmatprep.subr.mxu0 0.0
  %6802 = vmatpush1.msra.mxu0 0.0
  %6803 = vmatprep.subr.mxu0 0.0
  %6804 = vmatpush1.msra.mxu0 0.0
  %6805 = vmatprep.subr.mxu0 0.0
  %6806 = vmatpush1.msra.mxu0 0.0
  %6807 = vmatprep.subr.mxu0 0.0
  %6808 = vmatpush1.msra.mxu0 0.0
  %6809 = vmatprep.subr.mxu0 0.0
  %6810 = vmatpush1.msra.mxu0 0.0
  %6811 = vmatprep.subr.mxu0 0.0
  %6812 = vmatpush1.msra.mxu0 0.0
  %6813 = vmatprep.subr.mxu0 0.0
  %6814 = vmatpush1.msra.mxu0 0.0
  %6815 = vmatprep.subr.mxu0 0.0
  %6816 = vmatpush1.msra.mxu0 0.0
  %6817 = vmatprep.subr.mxu0 0.0
  %6818 = vmatpush1.msra.mxu0 0.0
  %6819 = vmatprep.subr.mxu0 0.0
  %6820 = vmatpush1.msra.mxu0 0.0
  %6821 = vmatprep.subr.mxu0 0.0
  %6822 = vmatpush1.msra.mxu0 %v6786
  %6823 = vmatprep.subr.mxu0 0.0
  %6824 = vmatpush2.msra.mxu0 0.0
  %6825 = vmatprep.subr.mxu0 0.0
  %6826 = vmatpush2.msra.mxu0 0.0
  %6827 = vmatprep.subr.mxu0 0.0
  %6828 = vmatpush2.msra.mxu0 0.0
  %6829 = vmatprep.subr.mxu0 0.0
  %6830 = vmatpush2.msra.mxu0 0.0
  %6831 = vmatprep.subr.mxu0 0.0
  %6832 = vmatpush2.msra.mxu0 0.0
  %6833 = vmatprep.subr.mxu0 0.0
  %6834 = vmatpush2.msra.mxu0 0.0
  %6835 = vmatprep.subr.mxu0 0.0
  %6836 = vmatpush2.msra.mxu0 0.0
  %6837 = vmatprep.subr.mxu0 0.0
  %6838 = vmatpush2.msra.mxu0 0.0
  %6839 = vmatprep.subr.mxu0 0.0
  %6840 = vmatpush2.msra.mxu0 0.0
  %6841 = vmatprep.subr.mxu0 0.0
  %6842 = vmatpush2.msra.mxu0 0.0
  %6843 = vmatprep.subr.mxu0 0.0
  %6844 = vmatpush2.msra.mxu0 0.0
  %6845 = vmatprep.subr.mxu0 0.0
  %6846 = vmatpush2.msra.mxu0 0.0
  %6847 = vmatprep.subr.mxu0 0.0
  %6848 = vmatpush2.msra.mxu0 0.0
  %6849 = vmatprep.subr.mxu0 0.0
  %6850 = vmatpush2.msra.mxu0 0.0
  %6851 = vmatprep.subr.mxu0 0.0
  %6852 = vmatpush2.msra.mxu0 0.0
  %6853 = vmatprep.subr.mxu0 0.0
  %6854 = vmatpush2.msra.mxu0 0.0
  %6855 = vmatprep.mubr.f32.mxu0 0.0
  %6856 = vmatmul.mubr.f32.gmra.mxu0 %v6789
  %v6857 = vpop.f32.mrf.mxu0
  %v6858 = vadd.f32 0.0, %v6857
  %v6859 = vpop.f32.mrf.mxu0
  %6860 = vdwg.mxu0
  %v6862 = vsel %vm381, %v6858, 0
  %6864 = vmatprep.subr.mxu0 0.0
  %6865 = vmatpush1.msra.mxu0 0.0
  %6866 = vmatprep.subr.mxu0 0.0
  %6867 = vmatpush1.msra.mxu0 0.0
  %6868 = vmatprep.subr.mxu0 0.0
  %6869 = vmatpush1.msra.mxu0 0.0
  %6870 = vmatprep.subr.mxu0 0.0
  %6871 = vmatpush1.msra.mxu0 0.0
  %6872 = vmatprep.subr.mxu0 0.0
  %6873 = vmatpush1.msra.mxu0 0.0
  %6874 = vmatprep.subr.mxu0 0.0
  %6875 = vmatpush1.msra.mxu0 0.0
  %6876 = vmatprep.subr.mxu0 0.0
  %6877 = vmatpush1.msra.mxu0 0.0
  %6878 = vmatprep.subr.mxu0 0.0
  %6879 = vmatpush1.msra.mxu0 0.0
  %6880 = vmatprep.subr.mxu0 0.0
  %6881 = vmatpush1.msra.mxu0 0.0
  %6882 = vmatprep.subr.mxu0 0.0
  %6883 = vmatpush1.msra.mxu0 0.0
  %6884 = vmatprep.subr.mxu0 0.0
  %6885 = vmatpush1.msra.mxu0 0.0
  %6886 = vmatprep.subr.mxu0 0.0
  %6887 = vmatpush1.msra.mxu0 0.0
  %6888 = vmatprep.subr.mxu0 0.0
  %6889 = vmatpush1.msra.mxu0 0.0
  %6890 = vmatprep.subr.mxu0 0.0
  %6891 = vmatpush1.msra.mxu0 0.0
  %6892 = vmatprep.subr.mxu0 0.0
  %6893 = vmatpush1.msra.mxu0 %v5016
  %6894 = vmatprep.subr.mxu0 0.0
  %6895 = vmatpush1.msra.mxu0 %v5015
  %6896 = vmatprep.subr.mxu0 0.0
  %6897 = vmatpush2.msra.mxu0 0.0
  %6898 = vmatprep.subr.mxu0 0.0
  %6899 = vmatpush2.msra.mxu0 0.0
  %6900 = vmatprep.subr.mxu0 0.0
  %6901 = vmatpush2.msra.mxu0 0.0
  %6902 = vmatprep.subr.mxu0 0.0
  %6903 = vmatpush2.msra.mxu0 0.0
  %6904 = vmatprep.subr.mxu0 0.0
  %6905 = vmatpush2.msra.mxu0 0.0
  %6906 = vmatprep.subr.mxu0 0.0
  %6907 = vmatpush2.msra.mxu0 0.0
  %6908 = vmatprep.subr.mxu0 0.0
  %6909 = vmatpush2.msra.mxu0 0.0
  %6910 = vmatprep.subr.mxu0 0.0
  %6911 = vmatpush2.msra.mxu0 0.0
  %6912 = vmatprep.subr.mxu0 0.0
  %6913 = vmatpush2.msra.mxu0 0.0
  %6914 = vmatprep.subr.mxu0 0.0
  %6915 = vmatpush2.msra.mxu0 0.0
  %6916 = vmatprep.subr.mxu0 0.0
  %6917 = vmatpush2.msra.mxu0 0.0
  %6918 = vmatprep.subr.mxu0 0.0
  %6919 = vmatpush2.msra.mxu0 0.0
  %6920 = vmatprep.subr.mxu0 0.0
  %6921 = vmatpush2.msra.mxu0 0.0
  %6922 = vmatprep.subr.mxu0 0.0
  %6923 = vmatpush2.msra.mxu0 0.0
  %6924 = vmatprep.subr.mxu0 0.0
  %6925 = vmatpush2.msra.mxu0 0.0
  %6926 = vmatprep.subr.mxu0 0.0
  %6927 = vmatpush2.msra.mxu0 0.0
  %6928 = vmatprep.mubr.f32.mxu0 0.0
  %6929 = vmatmul.mubr.f32.gmra.mxu0 %v6862
  %v6930 = vpop.f32.mrf.mxu0
  %v6931 = vadd.f32 0.0, %v6930
  %v6932 = vpop.f32.mrf.mxu0
  %6933 = vdwg.mxu0
  %v6934 = vadd.f32 %v6693, %v6931
  %v6935 = vld [vmem:[%s39] sm:$0x1]
  %v6937 = vlaneseq
  %v6938 = vshrl.u32 %v6937, 7
  %v6939 = vsub.s32 0, %v6938
  %v6940 = vrot.slane %v6935, %v6939
  %v6942 = vadd.f32 %v5975, %v6940
  %v6943 = vadd.f32 %v6934, %v6940
  %v6944 = vadd.f32 %v4896, %v6942
  %v6945 = vadd.f32 %v4897, %v6943
  %v6946 = vld [vmem:[%s41] sm:$0x1]
  %v6947 = vld [vmem:[%s43] sm:$0x1]
  %v6948 = vsel %vm249, %v6944, 0.0
  %6949 = vadd.xlane.f32.xlu0 %v6948
  %v6950 = vpop.xlane.xlu0 %6949
  %v6951 = vsel %vm249, %v6945, 0.0
  %6952 = vadd.xlane.f32.xlu0 %v6951
  %v6953 = vpop.xlane.xlu0 %6952
  %v6954 = vmul.f32 %v6950, %v256
  %v6955 = vmul.f32 %v6953, %v256
  %v6956 = vsub.f32 %v6944, %v6954
  %v6957 = vsub.f32 %v6945, %v6955
  %v6958 = vmul.f32 %v6956, %v6956
  %v6959 = vmul.f32 %v6957, %v6957
  %v6960 = vsel %vm249, %v6958, 0.0
  %6961 = vadd.xlane.f32.xlu0 %v6960
  %v6962 = vpop.xlane.xlu0 %6961
  %v6963 = vsel %vm249, %v6959, 0.0
  %6964 = vadd.xlane.f32.xlu0 %v6963
  %v6965 = vpop.xlane.xlu0 %6964
  %v6966 = vmul.f32 %v6962, %v256
  %v6967 = vmul.f32 %v6965, %v256
  %v6968 = vadd.f32 %v6966, 1e-05
  %v6969 = vadd.f32 %v6967, 1e-05
  %v6970 = vrsqrt.pop %v6968
  %v6971 = vrsqrt.pop %v6969
  %v6972 = vmul.f32 %v6956, %v6970
  %v6973 = vmul.f32 %v6957, %v6971
  %v6975 = vlaneseq
  %v6976 = vshrl.u32 %v6975, 7
  %v6977 = vsub.s32 0, %v6976
  %v6978 = vrot.slane %v6946, %v6977
  %v6980 = vmul.f32 %v6972, %v6978
  %v6981 = vmul.f32 %v6973, %v6978
  %v6983 = vlaneseq
  %v6984 = vshrl.u32 %v6983, 7
  %v6985 = vsub.s32 0, %v6984
  %v6986 = vrot.slane %v6947, %v6985
  %v6988 = vadd.f32 %v6980, %v6986
  %v6989 = vadd.f32 %v6981, %v6986
  %v6990 = vld [vmem:[%s45] sm:$0xff]
  %v6991 = vld [vmem:[%s45 + $0x8] sm:$0xff]
  %v6992 = vld [vmem:[%s45 + $0x10] sm:$0xff]
  %v6993 = vld [vmem:[%s45 + $0x18] sm:$0xff]
  %v6994 = vld [vmem:[%s45 + $0x20] sm:$0xff]
  %v6995 = vld [vmem:[%s45 + $0x28] sm:$0xff]
  %v6996 = vld [vmem:[%s45 + $0x30] sm:$0xff]
  %v6997 = vld [vmem:[%s45 + $0x38] sm:$0xff]
  %v6998 = vld [vmem:[%s47] sm:$0x1]
  %v7000 = vlaneseq
  %v7001 = vshrl.u32 %v7000, 7
  %v7002 = vsub.s32 0, %v7001
  %v7003 = vrot.slane %v6998, %v7002
  %v7006 = vsel %vm249, %v6988, 0
  %v7009 = vsel %vm249, %v6989, 0
  %7011 = vmatprep.subr.mxu0 0.0
  %7012 = vmatpush1.msra.mxu0 0.0
  %7013 = vmatprep.subr.mxu0 0.0
  %7014 = vmatpush1.msra.mxu0 0.0
  %7015 = vmatprep.subr.mxu0 0.0
  %7016 = vmatpush1.msra.mxu0 0.0
  %7017 = vmatprep.subr.mxu0 0.0
  %7018 = vmatpush1.msra.mxu0 0.0
  %7019 = vmatprep.subr.mxu0 0.0
  %7020 = vmatpush1.msra.mxu0 0.0
  %7021 = vmatprep.subr.mxu0 0.0
  %7022 = vmatpush1.msra.mxu0 0.0
  %7023 = vmatprep.subr.mxu0 0.0
  %7024 = vmatpush1.msra.mxu0 0.0
  %7025 = vmatprep.subr.mxu0 0.0
  %7026 = vmatpush1.msra.mxu0 0.0
  %7027 = vmatprep.subr.mxu0 0.0
  %7028 = vmatpush1.msra.mxu0 %v6997
  %7029 = vmatprep.subr.mxu0 0.0
  %7030 = vmatpush1.msra.mxu0 %v6996
  %7031 = vmatprep.subr.mxu0 0.0
  %7032 = vmatpush1.msra.mxu0 %v6995
  %7033 = vmatprep.subr.mxu0 0.0
  %7034 = vmatpush1.msra.mxu0 %v6994
  %7035 = vmatprep.subr.mxu0 0.0
  %7036 = vmatpush1.msra.mxu0 %v6993
  %7037 = vmatprep.subr.mxu0 0.0
  %7038 = vmatpush1.msra.mxu0 %v6992
  %7039 = vmatprep.subr.mxu0 0.0
  %7040 = vmatpush1.msra.mxu0 %v6991
  %7041 = vmatprep.subr.mxu0 0.0
  %7042 = vmatpush1.msra.mxu0 %v6990
  %7043 = vmatprep.subr.mxu0 0.0
  %7044 = vmatpush2.msra.mxu0 0.0
  %7045 = vmatprep.subr.mxu0 0.0
  %7046 = vmatpush2.msra.mxu0 0.0
  %7047 = vmatprep.subr.mxu0 0.0
  %7048 = vmatpush2.msra.mxu0 0.0
  %7049 = vmatprep.subr.mxu0 0.0
  %7050 = vmatpush2.msra.mxu0 0.0
  %7051 = vmatprep.subr.mxu0 0.0
  %7052 = vmatpush2.msra.mxu0 0.0
  %7053 = vmatprep.subr.mxu0 0.0
  %7054 = vmatpush2.msra.mxu0 0.0
  %7055 = vmatprep.subr.mxu0 0.0
  %7056 = vmatpush2.msra.mxu0 0.0
  %7057 = vmatprep.subr.mxu0 0.0
  %7058 = vmatpush2.msra.mxu0 0.0
  %7059 = vmatprep.subr.mxu0 0.0
  %7060 = vmatpush2.msra.mxu0 0.0
  %7061 = vmatprep.subr.mxu0 0.0
  %7062 = vmatpush2.msra.mxu0 0.0
  %7063 = vmatprep.subr.mxu0 0.0
  %7064 = vmatpush2.msra.mxu0 0.0
  %7065 = vmatprep.subr.mxu0 0.0
  %7066 = vmatpush2.msra.mxu0 0.0
  %7067 = vmatprep.subr.mxu0 0.0
  %7068 = vmatpush2.msra.mxu0 0.0
  %7069 = vmatprep.subr.mxu0 0.0
  %7070 = vmatpush2.msra.mxu0 0.0
  %7071 = vmatprep.subr.mxu0 0.0
  %7072 = vmatpush2.msra.mxu0 0.0
  %7073 = vmatprep.subr.mxu0 0.0
  %7074 = vmatpush2.msra.mxu0 0.0
  %7075 = vmatprep.mubr.f32.mxu0 0.0
  %7076 = vmatmul.mubr.f32.gmra.mxu0 %v7006
  %v7077 = vpop.f32.mrf.mxu0
  %v7078 = vadd.f32 %v7003, %v7077
  %v7079 = vpop.f32.mrf.mxu0
  %7080 = vmatprep.mubr.f32.mxu0 0.0
  %7081 = vmatmul.mubr.f32.gmra.mxu0 %v7009
  %v7082 = vpop.f32.mrf.mxu0
  %v7083 = vadd.f32 %v7003, %v7082
  %v7084 = vpop.f32.mrf.mxu0
  %7085 = vdwg.mxu0
  %v7086 = vmax.f32 %v7078, 0.0
  %v7087 = vmax.f32 %v7083, 0.0
  %v7088 = vld [vmem:[%s49] sm:$0xff]
  %v7089 = vld [vmem:[%s49 + $0x8] sm:$0xff]
  %v7090 = vld [vmem:[%s49 + $0x10] sm:$0xff]
  %v7091 = vld [vmem:[%s49 + $0x18] sm:$0xff]
  %v7092 = vld [vmem:[%s49 + $0x20] sm:$0xff]
  %v7093 = vld [vmem:[%s49 + $0x28] sm:$0xff]
  %v7094 = vld [vmem:[%s49 + $0x30] sm:$0xff]
  %v7095 = vld [vmem:[%s49 + $0x38] sm:$0xff]
  %v7096 = vld [vmem:[%s49 + $0x40] sm:$0xff]
  %v7097 = vld [vmem:[%s49 + $0x48] sm:$0xff]
  %v7098 = vld [vmem:[%s49 + $0x50] sm:$0xff]
  %v7099 = vld [vmem:[%s49 + $0x58] sm:$0xff]
  %v7100 = vld [vmem:[%s49 + $0x60] sm:$0xff]
  %v7101 = vld [vmem:[%s49 + $0x68] sm:$0xff]
  %v7102 = vld [vmem:[%s49 + $0x70] sm:$0xff]
  %v7103 = vld [vmem:[%s49 + $0x78] sm:$0xff]
  %v7104 = vld [vmem:[%s51] sm:$0x1]
  %v7106 = vlaneseq
  %v7107 = vshrl.u32 %v7106, 7
  %v7108 = vsub.s32 0, %v7107
  %v7109 = vrot.slane %v7104, %v7108
  %7111 = vmatprep.subr.mxu0 0.0
  %7112 = vmatpush1.msra.mxu0 %v7103
  %7113 = vmatprep.subr.mxu0 0.0
  %7114 = vmatpush1.msra.mxu0 %v7102
  %7115 = vmatprep.subr.mxu0 0.0
  %7116 = vmatpush1.msra.mxu0 %v7101
  %7117 = vmatprep.subr.mxu0 0.0
  %7118 = vmatpush1.msra.mxu0 %v7100
  %7119 = vmatprep.subr.mxu0 0.0
  %7120 = vmatpush1.msra.mxu0 %v7099
  %7121 = vmatprep.subr.mxu0 0.0
  %7122 = vmatpush1.msra.mxu0 %v7098
  %7123 = vmatprep.subr.mxu0 0.0
  %7124 = vmatpush1.msra.mxu0 %v7097
  %7125 = vmatprep.subr.mxu0 0.0
  %7126 = vmatpush1.msra.mxu0 %v7096
  %7127 = vmatprep.subr.mxu0 0.0
  %7128 = vmatpush1.msra.mxu0 %v7095
  %7129 = vmatprep.subr.mxu0 0.0
  %7130 = vmatpush1.msra.mxu0 %v7094
  %7131 = vmatprep.subr.mxu0 0.0
  %7132 = vmatpush1.msra.mxu0 %v7093
  %7133 = vmatprep.subr.mxu0 0.0
  %7134 = vmatpush1.msra.mxu0 %v7092
  %7135 = vmatprep.subr.mxu0 0.0
  %7136 = vmatpush1.msra.mxu0 %v7091
  %7137 = vmatprep.subr.mxu0 0.0
  %7138 = vmatpush1.msra.mxu0 %v7090
  %7139 = vmatprep.subr.mxu0 0.0
  %7140 = vmatpush1.msra.mxu0 %v7089
  %7141 = vmatprep.subr.mxu0 0.0
  %7142 = vmatpush1.msra.mxu0 %v7088
  %7143 = vmatprep.subr.mxu0 0.0
  %7144 = vmatpush2.msra.mxu0 0.0
  %7145 = vmatprep.subr.mxu0 0.0
  %7146 = vmatpush2.msra.mxu0 0.0
  %7147 = vmatprep.subr.mxu0 0.0
  %7148 = vmatpush2.msra.mxu0 0.0
  %7149 = vmatprep.subr.mxu0 0.0
  %7150 = vmatpush2.msra.mxu0 0.0
  %7151 = vmatprep.subr.mxu0 0.0
  %7152 = vmatpush2.msra.mxu0 0.0
  %7153 = vmatprep.subr.mxu0 0.0
  %7154 = vmatpush2.msra.mxu0 0.0
  %7155 = vmatprep.subr.mxu0 0.0
  %7156 = vmatpush2.msra.mxu0 0.0
  %7157 = vmatprep.subr.mxu0 0.0
  %7158 = vmatpush2.msra.mxu0 0.0
  %7159 = vmatprep.subr.mxu0 0.0
  %7160 = vmatpush2.msra.mxu0 0.0
  %7161 = vmatprep.subr.mxu0 0.0
  %7162 = vmatpush2.msra.mxu0 0.0
  %7163 = vmatprep.subr.mxu0 0.0
  %7164 = vmatpush2.msra.mxu0 0.0
  %7165 = vmatprep.subr.mxu0 0.0
  %7166 = vmatpush2.msra.mxu0 0.0
  %7167 = vmatprep.subr.mxu0 0.0
  %7168 = vmatpush2.msra.mxu0 0.0
  %7169 = vmatprep.subr.mxu0 0.0
  %7170 = vmatpush2.msra.mxu0 0.0
  %7171 = vmatprep.subr.mxu0 0.0
  %7172 = vmatpush2.msra.mxu0 0.0
  %7173 = vmatprep.subr.mxu0 0.0
  %7174 = vmatpush2.msra.mxu0 0.0
  %7175 = vmatprep.mubr.f32.mxu0 0.0
  %7176 = vmatmul.mubr.f32.gmra.mxu0 %v7086
  %v7177 = vpop.f32.mrf.mxu0
  %v7178 = vadd.f32 %v7109, %v7177
  %v7179 = vpop.f32.mrf.mxu0
  %7180 = vmatprep.mubr.f32.mxu0 0.0
  %7181 = vmatmul.mubr.f32.gmra.mxu0 %v7087
  %v7182 = vpop.f32.mrf.mxu0
  %v7183 = vadd.f32 %v7109, %v7182
  %v7184 = vpop.f32.mrf.mxu0
  %7185 = vdwg.mxu0
  %v7186 = vadd.f32 %v6988, %v7178
  %v7187 = vadd.f32 %v6989, %v7183
  %v7188 = vld [vmem:[%s53] sm:$0x1]
  %v7189 = vld [vmem:[%s55] sm:$0x1]
  %v7190 = vsel %vm249, %v7186, 0.0
  %7191 = vadd.xlane.f32.xlu0 %v7190
  %v7192 = vpop.xlane.xlu0 %7191
  %v7193 = vsel %vm249, %v7187, 0.0
  %7194 = vadd.xlane.f32.xlu0 %v7193
  %v7195 = vpop.xlane.xlu0 %7194
  %v7196 = vmul.f32 %v7192, %v256
  %v7197 = vmul.f32 %v7195, %v256
  %v7198 = vsub.f32 %v7186, %v7196
  %v7199 = vsub.f32 %v7187, %v7197
  %v7200 = vmul.f32 %v7198, %v7198
  %v7201 = vmul.f32 %v7199, %v7199
  %v7202 = vsel %vm249, %v7200, 0.0
  %7203 = vadd.xlane.f32.xlu0 %v7202
  %v7204 = vpop.xlane.xlu0 %7203
  %v7205 = vsel %vm249, %v7201, 0.0
  %7206 = vadd.xlane.f32.xlu0 %v7205
  %v7207 = vpop.xlane.xlu0 %7206
  %v7208 = vmul.f32 %v7204, %v256
  %v7209 = vmul.f32 %v7207, %v256
  %v7210 = vadd.f32 %v7208, 1e-05
  %v7211 = vadd.f32 %v7209, 1e-05
  %v7212 = vrsqrt.pop %v7210
  %v7213 = vrsqrt.pop %v7211
  %v7214 = vmul.f32 %v7198, %v7212
  %v7215 = vmul.f32 %v7199, %v7213
  %v7217 = vlaneseq
  %v7218 = vshrl.u32 %v7217, 7
  %v7219 = vsub.s32 0, %v7218
  %v7220 = vrot.slane %v7188, %v7219
  %v7222 = vmul.f32 %v7214, %v7220
  %v7223 = vmul.f32 %v7215, %v7220
  %v7225 = vlaneseq
  %v7226 = vshrl.u32 %v7225, 7
  %v7227 = vsub.s32 0, %v7226
  %v7228 = vrot.slane %v7189, %v7227
  %v7230 = vadd.f32 %v7222, %v7228
  %v7231 = vadd.f32 %v7223, %v7228
  %v7232 = vld [vmem:[%s57] sm:$0xff]
  %v7233 = vld [vmem:[%s57 + $0x8] sm:$0xff]
  %v7234 = vld [vmem:[%s57 + $0x10] sm:$0xff]
  %v7235 = vld [vmem:[%s57 + $0x18] sm:$0xff]
  %v7236 = vld [vmem:[%s57 + $0x20] sm:$0xff]
  %v7237 = vld [vmem:[%s57 + $0x28] sm:$0xff]
  %v7238 = vld [vmem:[%s57 + $0x30] sm:$0xff]
  %v7239 = vld [vmem:[%s57 + $0x38] sm:$0xff]
  %v7240 = vld [vmem:[%s59] sm:$0x1]
  %v7242 = vlaneseq
  %v7243 = vshrl.u32 %v7242, 7
  %v7244 = vsub.s32 0, %v7243
  %v7245 = vrot.slane %v7240, %v7244
  %v7248 = vsel %vm249, %v7230, 0
  %v7251 = vsel %vm249, %v7231, 0
  %7253 = vmatprep.subr.mxu0 0.0
  %7254 = vmatpush1.msra.mxu0 0.0
  %7255 = vmatprep.subr.mxu0 0.0
  %7256 = vmatpush1.msra.mxu0 0.0
  %7257 = vmatprep.subr.mxu0 0.0
  %7258 = vmatpush1.msra.mxu0 0.0
  %7259 = vmatprep.subr.mxu0 0.0
  %7260 = vmatpush1.msra.mxu0 0.0
  %7261 = vmatprep.subr.mxu0 0.0
  %7262 = vmatpush1.msra.mxu0 0.0
  %7263 = vmatprep.subr.mxu0 0.0
  %7264 = vmatpush1.msra.mxu0 0.0
  %7265 = vmatprep.subr.mxu0 0.0
  %7266 = vmatpush1.msra.mxu0 0.0
  %7267 = vmatprep.subr.mxu0 0.0
  %7268 = vmatpush1.msra.mxu0 0.0
  %7269 = vmatprep.subr.mxu0 0.0
  %7270 = vmatpush1.msra.mxu0 %v7239
  %7271 = vmatprep.subr.mxu0 0.0
  %7272 = vmatpush1.msra.mxu0 %v7238
  %7273 = vmatprep.subr.mxu0 0.0
  %7274 = vmatpush1.msra.mxu0 %v7237
  %7275 = vmatprep.subr.mxu0 0.0
  %7276 = vmatpush1.msra.mxu0 %v7236
  %7277 = vmatprep.subr.mxu0 0.0
  %7278 = vmatpush1.msra.mxu0 %v7235
  %7279 = vmatprep.subr.mxu0 0.0
  %7280 = vmatpush1.msra.mxu0 %v7234
  %7281 = vmatprep.subr.mxu0 0.0
  %7282 = vmatpush1.msra.mxu0 %v7233
  %7283 = vmatprep.subr.mxu0 0.0
  %7284 = vmatpush1.msra.mxu0 %v7232
  %7285 = vmatprep.subr.mxu0 0.0
  %7286 = vmatpush2.msra.mxu0 0.0
  %7287 = vmatprep.subr.mxu0 0.0
  %7288 = vmatpush2.msra.mxu0 0.0
  %7289 = vmatprep.subr.mxu0 0.0
  %7290 = vmatpush2.msra.mxu0 0.0
  %7291 = vmatprep.subr.mxu0 0.0
  %7292 = vmatpush2.msra.mxu0 0.0
  %7293 = vmatprep.subr.mxu0 0.0
  %7294 = vmatpush2.msra.mxu0 0.0
  %7295 = vmatprep.subr.mxu0 0.0
  %7296 = vmatpush2.msra.mxu0 0.0
  %7297 = vmatprep.subr.mxu0 0.0
  %7298 = vmatpush2.msra.mxu0 0.0
  %7299 = vmatprep.subr.mxu0 0.0
  %7300 = vmatpush2.msra.mxu0 0.0
  %7301 = vmatprep.subr.mxu0 0.0
  %7302 = vmatpush2.msra.mxu0 0.0
  %7303 = vmatprep.subr.mxu0 0.0
  %7304 = vmatpush2.msra.mxu0 0.0
  %7305 = vmatprep.subr.mxu0 0.0
  %7306 = vmatpush2.msra.mxu0 0.0
  %7307 = vmatprep.subr.mxu0 0.0
  %7308 = vmatpush2.msra.mxu0 0.0
  %7309 = vmatprep.subr.mxu0 0.0
  %7310 = vmatpush2.msra.mxu0 0.0
  %7311 = vmatprep.subr.mxu0 0.0
  %7312 = vmatpush2.msra.mxu0 0.0
  %7313 = vmatprep.subr.mxu0 0.0
  %7314 = vmatpush2.msra.mxu0 0.0
  %7315 = vmatprep.subr.mxu0 0.0
  %7316 = vmatpush2.msra.mxu0 0.0
  %7317 = vmatprep.mubr.f32.mxu0 0.0
  %7318 = vmatmul.mubr.f32.gmra.mxu0 %v7248
  %v7319 = vpop.f32.mrf.mxu0
  %v7320 = vadd.f32 %v7245, %v7319
  %v7321 = vpop.f32.mrf.mxu0
  %7322 = vmatprep.mubr.f32.mxu0 0.0
  %7323 = vmatmul.mubr.f32.gmra.mxu0 %v7251
  %v7324 = vpop.f32.mrf.mxu0
  %v7325 = vadd.f32 %v7245, %v7324
  %v7326 = vpop.f32.mrf.mxu0
  %7327 = vdwg.mxu0
  %7328 = vst [vmem:[%s61] sm:$0xff] %v7320
  %7329 = vst [vmem:[%s61 + $0x8] sm:$0xff] %v7325
  // Predicated region
  $region122: #{forward.1} parent=0 // pred_check
    _
  $region123: #{forward.1} parent=0 // pred_check_branch
    %7331 = sbr.rel (0) target = $region125
  $region124: #{forward.1} parent=0 // pred_region
    _
  $region125: #{forward.1} parent=0 // pred_fallthru
    _
  // Predicated region
  $region126: #{forward.1} parent=0 // pred_check
    _
  $region127: #{forward.1} parent=0 // pred_check_branch
    %7333 = sbr.rel (0) target = $region129
  $region128: #{forward.1} parent=0 // pred_region
    _
  $region129: #{forward.1} parent=0 // pred_fallthru
    _

</llo_original>
